<compile_context>
chip_gen: v7x
topology: tpu7x:2x2x1
jax: 0.10.0
libtpu: 0.0.40
codegen_flags: <defaults>
</compile_context>

<pallas_src>
import jax
import jax.numpy as jnp
from jax import lax
from jax.experimental import pallas as pl
from jax.experimental.pallas import tpu as pltpu

DIM = 128            # cfg.DIMENSION
ENTRIES = 64         # cfg.BOX_REGISTRY.ENTRIES
MAX_TILE_ROWS = 4096  # rows gathered per grid step (overhead-amortizing)
MIN_PALLAS_N = 1024   # below this, jnp.take is faster than a kernel launch


def _gather_kernel(idx_ref, w_ref, o_ref):
    # idx_ref: VMEM (1, TR) int32      -- lane-dense index block for this tile
    # w_ref:   VMEM (ENTRIES, DIM)     -- full embedding table (resident)
    # o_ref:   VMEM (TR, DIM)          -- output tile (lane-dense store)
    entries = w_ref.shape[0]

    # In-kernel clamp: a couple of VPU ops hidden under the output DMA, and
    # required because the ragged tail of the last index block is unspecified
    # (those rows' stores are masked, but garbage must never address memory).
    idx = jnp.clip(idx_ref[...], 0, entries - 1)              # (1, TR)
    tr = idx.shape[1]

    # Transposed one-hot: onehot_t[e, r] = (idx[r] == e); sublane iota vs a
    # lane vector broadcast over sublanes -- no cross-lane data movement.
    rows = lax.broadcasted_iota(jnp.int32, (entries, tr), 0)  # (E, TR)
    onehot_t = (idx == rows).astype(w_ref.dtype)              # (E, TR)

    # out[r, d] = sum_e onehot_t[e, r] * w[e, d]  (contract dim 0 of both).
    # HIGHEST precision keeps the f32 gather bit-exact (1.0 * w == w).
    gathered = lax.dot_general(
        onehot_t, w_ref[...],
        dimension_numbers=(((0,), (0,)), ((), ())),
        precision=lax.Precision.HIGHEST,
        preferred_element_type=jnp.float32,
    )                                                         # (TR, DIM)
    o_ref[...] = gathered.astype(o_ref.dtype)


def cone_registry_forward(weight, x, *, max_tile_rows=MAX_TILE_ROWS,
                          min_pallas_n=MIN_PALLAS_N, out_dtype=None):
    """Equivalent of ConeRegistry.forward: embedding row lookup.

    out_dtype: optionally emit bf16 output (halves output HBM traffic on the
    write-bound path) if the downstream consumer tolerates it; defaults to
    the weight dtype for bit-exact lookup.
    """
    entries, dim = weight.shape
    out_dtype = weight.dtype if out_dtype is None else out_dtype

    idx = x.reshape(-1).astype(jnp.int32)
    n = idx.shape[0]

    # Tiny lookups: pallas_call launch + one grid step of fixed overhead
    # dwarfs the work; XLA's gather is at roofline for a 32 KiB table.
    if n < min_pallas_n:
        out = jnp.take(weight, jnp.clip(idx, 0, entries - 1), axis=0)
        return out.astype(out_dtype).reshape(*x.shape, dim)

    # Tile rows: as large as possible (amortize per-step overhead) but aim
    # for >= ~4 grid steps so the v7x megacore can shard the "parallel" axis.
    # Multiple of 128 satisfies both the (1, tr) index-block lane rule and
    # the (tr, DIM) output sublane rule; ragged last block is masked.
    tr = min(max_tile_rows, ((pl.cdiv(n, 4) + 127) // 128) * 128)
    grid_n = pl.cdiv(n, tr)

    idx2d = idx.reshape(1, n)  # lane-dense index layout; no host-side pad

    out = pl.pallas_call(
        _gather_kernel,
        out_shape=jax.ShapeDtypeStruct((n, dim), out_dtype),
        grid_spec=pl.GridSpec(
            grid=(grid_n,),
            in_specs=[
                # indices: one contiguous lane-dense (1, tr) block per step
                pl.BlockSpec((1, tr), lambda i: (0, i)),
                # full embedding table, resident in VMEM (constant block idx)
                pl.BlockSpec((entries, dim), lambda i: (0, 0)),
            ],
            # one lane-dense (tr, DIM) output slab per step (last one ragged)
            out_specs=pl.BlockSpec((tr, dim), lambda i: (i, 0)),
        ),
        compiler_params=pltpu.CompilerParams(
            dimension_semantics=("parallel",)),
    )(idx2d, weight)

    return out.reshape(*x.shape, dim)


def init_cone_weights(key, entries=ENTRIES, dim=DIM):
    """Mirror of _init_embedding_: Tensor(entries, dim).normal_().abs_()"""
    return jnp.abs(jax.random.normal(key, (entries, dim), dtype=jnp.float32))


if __name__ == "__main__":
    key = jax.random.PRNGKey(0)
    k_w, k1, k2, k3 = jax.random.split(key, 4)

    weight = init_cone_weights(k_w)                       # (64, 128)

    def ref_lookup(xx):
        return jnp.take(weight, xx.reshape(-1), axis=0).reshape(*xx.shape, DIM)

    # 1) Small module-scale lookup (batch=2, seq=8) -> jnp.take fast path.
    x_small = jax.random.randint(k1, (2, 8), 0, ENTRIES)
    out_small = jax.block_until_ready(cone_registry_forward(weight, x_small))
    assert out_small.shape == (2, 8, DIM)
    assert jnp.allclose(out_small, ref_lookup(x_small)), "mismatch (small path)"

    # 2) Tile-aligned lookup through the Pallas kernel (4096 indices).
    x_big = jax.random.randint(k2, (8, 512), 0, ENTRIES)
    out_big = jax.block_until_ready(cone_registry_forward(weight, x_big))
    assert out_big.shape == (8, 512, DIM)
    assert jnp.allclose(out_big, ref_lookup(x_big)), "mismatch (aligned kernel)"

    # 3) Ragged index count (1500) exercises the masked trailing block.
    x_rag = jax.random.randint(k3, (3, 500), 0, ENTRIES)
    out_rag = jax.block_until_ready(cone_registry_forward(weight, x_rag))
    assert out_rag.shape == (3, 500, DIM)
    assert jnp.allclose(out_rag, ref_lookup(x_rag)), "mismatch (ragged kernel)"

    print("KERNEL_OK")
</pallas_src>

<mosaic_0001>
module attributes {stable_mosaic.version = 11 : i64} {
  func.func @_gather_kernel(%arg0: i32, %arg1: memref<1x1024xi32, #tpu.memory_space<vmem>>, %arg2: memref<64x128xf32, #tpu.memory_space<vmem>>, %arg3: memref<1024x128xf32, #tpu.memory_space<vmem>>) attributes {dimension_semantics = [#tpu.dimension_semantics<parallel>], iteration_bounds = array<i64: 4>, scalar_prefetch = 0 : i64, scratch_operands = 0 : i64, tpu.core_type = #tpu.core_type<tc>, window_params = [{transform_indices = @transform_0, window_bounds = array<i64: 1, 1024>}, {pipeline_mode = #tpu.pipeline_mode<synchronous>, transform_indices = @transform_1, window_bounds = array<i64: 64, 128>}, {transform_indices = @transform_2, window_bounds = array<i64: 1024, 128>}]} {
    %c0 = arith.constant 0 : index
    %c0_0 = arith.constant 0 : index
    %0 = vector.load %arg1[%c0, %c0_0] : memref<1x1024xi32, #tpu.memory_space<vmem>>, vector<1x1024xi32>
    %c0_i32 = arith.constant 0 : i32
    %c63_i32 = arith.constant 63 : i32
    %1 = vector.broadcast %c0_i32 : i32 to vector<1x1024xi32>
    %2 = arith.maxsi %1, %0 : vector<1x1024xi32>
    %3 = vector.broadcast %c63_i32 : i32 to vector<1x1024xi32>
    %4 = arith.minsi %3, %2 : vector<1x1024xi32>
    %5 = tpu.iota {dimensions = array<i32: 0>} : vector<64x1024xi32>
    %6 = vector.broadcast %4 : vector<1x1024xi32> to vector<64x1024xi32>
    %7 = arith.cmpi eq, %6, %5 : vector<64x1024xi32>
    %8 = arith.extui %7 : vector<64x1024xi1> to vector<64x1024xi32>
    %9 = arith.sitofp %8 : vector<64x1024xi32> to vector<64x1024xf32>
    %c0_1 = arith.constant 0 : index
    %c0_2 = arith.constant 0 : index
    %10 = vector.load %arg2[%c0_1, %c0_2] : memref<64x128xf32, #tpu.memory_space<vmem>>, vector<64x128xf32>
    %cst = arith.constant dense<0.000000e+00> : vector<1024x128xf32>
    %11 = tpu.matmul %9, %10, %cst {dimension_numbers = #tpu.dot_dimension_numbers<[0], [0], [1], [1], [0, 1, 1, 1], [], []>, precision = #tpu.contract_precision<fp32>} : vector<64x1024xf32>, vector<64x128xf32>, vector<1024x128xf32> -> vector<1024x128xf32>
    %c0_3 = arith.constant 0 : index
    %c0_4 = arith.constant 0 : index
    %12 = vector.load %arg3[%c0_3, %c0_4] : memref<1024x128xf32, #tpu.memory_space<vmem>>, vector<1024x128xf32>
    tpu.vector_store %arg3[%c0_3, %c0_4], %11 {strides = array<i32>} : memref<1024x128xf32, #tpu.memory_space<vmem>>, vector<1024x128xf32>,
    return
  }
  func.func @transform_0(%arg0: i32) -> (i32, i32) {
    %c0_i32 = arith.constant 0 : i32
    %c0_i32_0 = arith.constant 0 : i32
    return %c0_i32, %arg0 : i32, i32
  }
  func.func @transform_1(%arg0: i32) -> (i32, i32) {
    %c0_i32 = arith.constant 0 : i32
    %c0_i32_0 = arith.constant 0 : i32
    %c0_i32_1 = arith.constant 0 : i32
    return %c0_i32, %c0_i32_0 : i32, i32
  }
  func.func @transform_2(%arg0: i32) -> (i32, i32) {
    %c0_i32 = arith.constant 0 : i32
    %c0_i32_0 = arith.constant 0 : i32
    return %arg0, %c0_i32 : i32, i32
  }
}

</mosaic_0001>

<llo_original>
// kernel: tpu_custom_call.1
$region0: #{tpu_custom_call.1}
  #allocation0 [shape = 'u32[]', space=smem, size = 0x4, offset = 0x4, fixed_abs, tag = 'smem constant byte address 0x4 - core index']
  #allocation1 [shape = 'u32[144,128]{1,0:T(1,128)}', space=vmem, size = 0x12000, scoped, tag = 'internal scratch']
  %s0 = inlined_call_operand.hbm [shape: s32[1,4096], index: 0, kind: input, shape index: {}]
  %s1 = inlined_call_operand.hbm [shape: f32[64,128], index: 1, kind: input, shape index: {}]
  %s2 = inlined_call_operand.hbm [shape: f32[4096,128], index: 2, kind: output, shape index: {}]
  %s3 = sld [smem:[#allocation0]]
  $region49: #{tpu_custom_call.1} parent=0
    _
  %s5 = ssub.s32 1, %s3
  %s6 = scalar_select 0, %s5, %s3
  $region1: #{tpu_custom_call.1} parent=0
    #allocation2 [shape = 'u8[8192]{0}', space=vmem, size = 0x2000, scoped, tag = 'input window, operand 0']
    #allocation3 [shape = 's32[2]{0}', space=sflag, size = 0x8, scoped, tag = 'scoped memory for tpu_custom_call.1']
    #allocation4 [shape = 's32[2]{0}', space=sflag, size = 0x8, scoped, tag = 'scoped memory for tpu_custom_call.1']
    #allocation5 [shape = 'u8[32768]{0}', space=vmem, size = 0x8000, scoped, tag = 'input window, operand 1, single buffered']
    #allocation6 [shape = 's32[1]{0}', space=sflag, size = 0x4, scoped, tag = 'scoped memory for tpu_custom_call.1']
    #allocation7 [shape = 'u8[1048576]{0}', space=vmem, size = 0x100000, scoped, tag = 'output window, operand 0']
    %7 = vsyncpa [#allocation3], 0
    %s8 = scalar_lea.sflag [#allocation3], 1
    %9 = vsyncpa %s8, 0
    %10 = vsyncpa [#allocation6], 0
    %11 = vsyncpa [#allocation4], 0
    %s12 = scalar_lea.sflag [#allocation4], 1
    %13 = vsyncpa %s12, 0
    loop: start=0, step=1, limit=6
    $region2: #{tpu_custom_call.1} parent=1 // loop_pre_header
      _
    $region3: #{tpu_custom_call.1} parent=1 // loop_header
      %s15 = sphi 0, %s19
      %p16 = scmp.ge.s32.totalorder %s15, 6
      %s25 = sphi 0, %s27
      %s28 = sphi 0, %s25
      %s29 = sphi 0, %s28
      %s45 = sphi 0, %s29
      %s49 = sphi 0, %s49
      %s51 = sphi 0, %s49
      %s52 = sphi 0, %s51
      %s66 = sphi 0, %s52
      %s72 = sphi 0, %s74
      %s75 = sphi 0, %s72
      %s76 = sphi 0, %s75
      %s92 = sphi 0, %s76
    $region4: #{tpu_custom_call.1} parent=1 // loop_header_branch
      %18 = sbr.rel (%p16) target = $region8
    $region5: #{tpu_custom_call.1} parent=1 // loop_body
      %s20 = ssub.s32 %s15, 1
      %s21 = ssub.s32 %s15, 2
      %s22 = sadd.s32 %s15, 1
      %s23 = ssub.s32 %s15, %s22
      %p24 = scmp.eq.s32.totalorder %s23, 0
      %s26 = sadd.s32 %s25, 1
      %s27 = scalar_select %p24, %s25, %s26
      %p30 = pneg %p24
      %p31 = scmp.eq.s32.totalorder %s15, 3
      %p32 = por %p30, %p31
      %p33 = scmp.ne.s32.totalorder %s25, %s28
      %p34 = scmp.eq.s32.totalorder %s15, 0
      %p35 = por %p33, %p34
      %p36 = scmp.ne.s32.totalorder %s25, %s28
      %p37 = scmp.eq.s32.totalorder %s20, 3
      %p38 = por %p36, %p37
      %p39 = scmp.ne.s32.totalorder %s28, %s29
      %p40 = scmp.eq.s32.totalorder %s20, 0
      %p41 = por %p39, %p40
      %p42 = scmp.ne.s32.totalorder %s28, %s29
      %p43 = scmp.eq.s32.totalorder %s21, 3
      %p44 = por %p42, %p43
      %p46 = scmp.ne.s32.totalorder %s29, %s45
      %p47 = scmp.eq.s32.totalorder %s21, 0
      %p48 = por %p46, %p47
      %s50 = sadd.s32 %s49, 1
      %p53 = scmp.eq.s32.totalorder %s15, 3
      %p54 = scmp.ne.s32.totalorder %s49, %s51
      %p55 = scmp.eq.s32.totalorder %s15, 0
      %p56 = por %p54, %p55
      %p57 = scmp.ne.s32.totalorder %s49, %s51
      %p58 = scmp.eq.s32.totalorder %s20, 3
      %p59 = por %p57, %p58
      %p60 = scmp.ne.s32.totalorder %s51, %s52
      %p61 = scmp.eq.s32.totalorder %s20, 0
      %p62 = por %p60, %p61
      %p63 = scmp.ne.s32.totalorder %s51, %s52
      %p64 = scmp.eq.s32.totalorder %s21, 3
      %p65 = por %p63, %p64
      %p67 = scmp.ne.s32.totalorder %s52, %s66
      %p68 = scmp.eq.s32.totalorder %s21, 0
      %p69 = por %p67, %p68
      %s70 = ssub.s32 %s15, %s22
      %p71 = scmp.eq.s32.totalorder %s70, 0
      %s73 = sadd.s32 %s72, 1
      %s74 = scalar_select %p71, %s72, %s73
      %p77 = pneg %p71
      %p78 = scmp.eq.s32.totalorder %s15, 3
      %p79 = por %p77, %p78
      %p80 = scmp.ne.s32.totalorder %s72, %s75
      %p81 = scmp.eq.s32.totalorder %s15, 0
      %p82 = por %p80, %p81
      %p83 = scmp.ne.s32.totalorder %s72, %s75
      %p84 = scmp.eq.s32.totalorder %s20, 3
      %p85 = por %p83, %p84
      %p86 = scmp.ne.s32.totalorder %s75, %s76
      %p87 = scmp.eq.s32.totalorder %s20, 0
      %p88 = por %p86, %p87
      %p89 = scmp.ne.s32.totalorder %s75, %s76
      %p90 = scmp.eq.s32.totalorder %s21, 3
      %p91 = por %p89, %p90
      %p93 = scmp.ne.s32.totalorder %s76, %s92
      %p94 = scmp.eq.s32.totalorder %s21, 0
      %p95 = por %p93, %p94
      %p96 = scmp.le.s32.totalorder 1, %s15
      %p97 = scmp.lt.s32.totalorder %s15, 5
      %p98 = pnand %p96, %p97
      %p99 = pneg %p98
      // Predicated region
      $region9: #{tpu_custom_call.1} parent=5 // pred_check
        _
      $region10: #{tpu_custom_call.1} parent=5 // pred_check_branch
        %101 = sbr.rel (%p98) target = $region12
      $region11: #{tpu_custom_call.1} parent=5 // pred_region
        %s102 = ssub.s32 %s15, 1
        // Predicated region
        $region13: #{tpu_custom_call.1} parent=11 // pred_check
          %p103 = pneg %p62
        $region14: #{tpu_custom_call.1} parent=11 // pred_check_branch
          %105 = sbr.rel (%p103) target = $region16
        $region15: #{tpu_custom_call.1} parent=11 // pred_region
          %s107 = ssub.s32 1024, 1024
          %108 = vsyncadd [#allocation6], %s107
          %s109 = sshll.u32 [#allocation5], 4
          %s110 = int_to_ptr.vmem [resolvable:$true] %s109
          %115 = dma.hbm_to_vmem [thread:$0]  %s1, 1024, %s110, [#allocation6], 128, 128, 8
        $region16: #{tpu_custom_call.1} parent=11 // pred_fallthru
          _
      $region12: #{tpu_custom_call.1} parent=5 // pred_fallthru
        _
      %p116 = scmp.lt.s32.totalorder %s15, 4
      // Predicated region
      $region17: #{tpu_custom_call.1} parent=5 // pred_check
        %p117 = pneg %p116
      $region18: #{tpu_custom_call.1} parent=5 // pred_check_branch
        %119 = sbr.rel (%p117) target = $region20
      $region19: #{tpu_custom_call.1} parent=5 // pred_region
        // Predicated region
        $region21: #{tpu_custom_call.1} parent=19 // pred_check
          %p120 = pneg %p35
        $region22: #{tpu_custom_call.1} parent=19 // pred_check_branch
          %122 = sbr.rel (%p120) target = $region24
        $region23: #{tpu_custom_call.1} parent=19 // pred_region
          %s123 = sand.u32 %s25, 1
          %s124 = scalar_lea.sflag [#allocation3], %s123
          %s125 = sand.u32 %s25, 1
          %s126 = smul.addr %s125, 8
          %s127 = scalar_lea.vmem [#allocation2], %s126
          %s128 = smul.u32 8, %s15
          %s130 = ssub.s32 128, 128
          %131 = vsyncadd %s124, %s130
          %s132 = smul.addr %s128, 16
          %s133 = scalar_lea.hbm %s0, %s132
          %s135 = sshll.u32 %s127, 4
          %s136 = int_to_ptr.vmem [resolvable:$true] %s135
          %138 = dma.hbm_to_vmem [thread:$0]  %s133, 128, %s136, %s124
        $region24: #{tpu_custom_call.1} parent=19 // pred_fallthru
          _
      $region20: #{tpu_custom_call.1} parent=5 // pred_fallthru
        _
      %p139 = scmp.le.s32.totalorder 1, %s15
      %p140 = scmp.lt.s32.totalorder %s15, 5
      %p141 = pnand %p139, %p140
      %p142 = pneg %p141
      // Predicated region
      $region25: #{tpu_custom_call.1} parent=5 // pred_check
        _
      $region26: #{tpu_custom_call.1} parent=5 // pred_check_branch
        %144 = sbr.rel (%p141) target = $region28
      $region27: #{tpu_custom_call.1} parent=5 // pred_region
        %s145 = ssub.s32 %s15, 1
        %s146 = sand.u32 %s28, 1
        %s147 = scalar_lea.sflag [#allocation3], %s146
        %s148 = sand.u32 %s28, 1
        %s149 = smul.addr %s148, 8
        %s150 = scalar_lea.vmem [#allocation2], %s149
        // Predicated region
        $region29: #{tpu_custom_call.1} parent=27 // pred_check
          %p151 = pneg %p41
        $region30: #{tpu_custom_call.1} parent=27 // pred_check_branch
          %153 = sbr.rel (%p151) target = $region32
        $region31: #{tpu_custom_call.1} parent=27 // pred_region
          %154 = dma.done %s147, 128
        $region32: #{tpu_custom_call.1} parent=27 // pred_fallthru
          _
        // Predicated region
        $region33: #{tpu_custom_call.1} parent=27 // pred_check
          %p155 = pneg %p62
        $region34: #{tpu_custom_call.1} parent=27 // pred_check_branch
          %157 = sbr.rel (%p155) target = $region36
        $region35: #{tpu_custom_call.1} parent=27 // pred_region
          %158 = dma.done [#allocation6], 1024
        $region36: #{tpu_custom_call.1} parent=27 // pred_fallthru
          _
        %s159 = sand.u32 %s28, 1
        %s160 = scalar_lea.sflag [#allocation3], %s159
        %s161 = sand.u32 %s28, 1
        %s162 = smul.addr %s161, 8
        %s163 = scalar_lea.vmem [#allocation2], %s162
        %p164 = pneg %p41
        %p165 = pneg %p38
        %p166 = pneg %p62
        %p167 = pneg %p59
        %p168 = pneg %p88
        %p169 = pneg %p85
        %s170 = sand.u32 %s75, 1
        %s171 = scalar_lea.sflag [#allocation4], %s170
        %s172 = sand.u32 %s75, 1
        %s173 = smul.addr %s172, 1024
        %s174 = scalar_lea.vmem [#allocation7], %s173
        %s175 = smul.u32 8, %s20
        %s176 = smul.u32 128, %s20
        %v177 = vld [vmem:[%s150] sm:$0xff]
        %vm178 = vcmp.gt.s32.totalorder %v177, 0
        %v179 = vsel %vm178, %v177, 0
        %vm180 = vcmp.lt.s32.totalorder %v179, 63
        %v181 = vsel %vm180, %v179, 63
        %v182 = vlaneseq
        %v183 = vshrl.u32 %v182, 7
        %v184 = vadd.s32 %v183, 8
        %v185 = vadd.s32 %v183, 16
        %v186 = vadd.s32 %v183, 24
        %v187 = vadd.s32 %v183, 32
        %v188 = vadd.s32 %v183, 40
        %v189 = vadd.s32 %v183, 48
        %v190 = vadd.s32 %v183, 56
        %v191 = vlaneseq
        %v192 = vshrl.u32 %v191, 7
        %v193 = vsub.s32 0, %v192
        %v194 = vrot.slane %v181, %v193
        %v195 = vlaneseq
        %v196 = vshrl.u32 %v195, 7
        %v197 = vsub.s32 1, %v196
        %v198 = vrot.slane %v181, %v197
        %v199 = vlaneseq
        %v200 = vshrl.u32 %v199, 7
        %v201 = vsub.s32 2, %v200
        %v202 = vrot.slane %v181, %v201
        %v203 = vlaneseq
        %v204 = vshrl.u32 %v203, 7
        %v205 = vsub.s32 3, %v204
        %v206 = vrot.slane %v181, %v205
        %v207 = vlaneseq
        %v208 = vshrl.u32 %v207, 7
        %v209 = vsub.s32 4, %v208
        %v210 = vrot.slane %v181, %v209
        %v211 = vlaneseq
        %v212 = vshrl.u32 %v211, 7
        %v213 = vsub.s32 5, %v212
        %v214 = vrot.slane %v181, %v213
        %v215 = vlaneseq
        %v216 = vshrl.u32 %v215, 7
        %v217 = vsub.s32 6, %v216
        %v218 = vrot.slane %v181, %v217
        %v219 = vlaneseq
        %v220 = vshrl.u32 %v219, 7
        %v221 = vsub.s32 7, %v220
        %v222 = vrot.slane %v181, %v221
        %vm223 = vcmp.eq.s32.totalorder %v194, %v183
        %vm224 = vcmp.eq.s32.totalorder %v198, %v183
        %vm225 = vcmp.eq.s32.totalorder %v202, %v183
        %vm226 = vcmp.eq.s32.totalorder %v206, %v183
        %vm227 = vcmp.eq.s32.totalorder %v210, %v183
        %vm228 = vcmp.eq.s32.totalorder %v214, %v183
        %vm229 = vcmp.eq.s32.totalorder %v218, %v183
        %vm230 = vcmp.eq.s32.totalorder %v222, %v183
        %vm231 = vcmp.eq.s32.totalorder %v194, %v184
        %vm232 = vcmp.eq.s32.totalorder %v198, %v184
        %vm233 = vcmp.eq.s32.totalorder %v202, %v184
        %vm234 = vcmp.eq.s32.totalorder %v206, %v184
        %vm235 = vcmp.eq.s32.totalorder %v210, %v184
        %vm236 = vcmp.eq.s32.totalorder %v214, %v184
        %vm237 = vcmp.eq.s32.totalorder %v218, %v184
        %vm238 = vcmp.eq.s32.totalorder %v222, %v184
        %vm239 = vcmp.eq.s32.totalorder %v194, %v185
        %vm240 = vcmp.eq.s32.totalorder %v198, %v185
        %vm241 = vcmp.eq.s32.totalorder %v202, %v185
        %vm242 = vcmp.eq.s32.totalorder %v206, %v185
        %vm243 = vcmp.eq.s32.totalorder %v210, %v185
        %vm244 = vcmp.eq.s32.totalorder %v214, %v185
        %vm245 = vcmp.eq.s32.totalorder %v218, %v185
        %vm246 = vcmp.eq.s32.totalorder %v222, %v185
        %vm247 = vcmp.eq.s32.totalorder %v194, %v186
        %vm248 = vcmp.eq.s32.totalorder %v198, %v186
        %vm249 = vcmp.eq.s32.totalorder %v202, %v186
        %vm250 = vcmp.eq.s32.totalorder %v206, %v186
        %vm251 = vcmp.eq.s32.totalorder %v210, %v186
        %vm252 = vcmp.eq.s32.totalorder %v214, %v186
        %vm253 = vcmp.eq.s32.totalorder %v218, %v186
        %vm254 = vcmp.eq.s32.totalorder %v222, %v186
        %vm255 = vcmp.eq.s32.totalorder %v194, %v187
        %vm256 = vcmp.eq.s32.totalorder %v198, %v187
        %vm257 = vcmp.eq.s32.totalorder %v202, %v187
        %vm258 = vcmp.eq.s32.totalorder %v206, %v187
        %vm259 = vcmp.eq.s32.totalorder %v210, %v187
        %vm260 = vcmp.eq.s32.totalorder %v214, %v187
        %vm261 = vcmp.eq.s32.totalorder %v218, %v187
        %vm262 = vcmp.eq.s32.totalorder %v222, %v187
        %vm263 = vcmp.eq.s32.totalorder %v194, %v188
        %vm264 = vcmp.eq.s32.totalorder %v198, %v188
        %vm265 = vcmp.eq.s32.totalorder %v202, %v188
        %vm266 = vcmp.eq.s32.totalorder %v206, %v188
        %vm267 = vcmp.eq.s32.totalorder %v210, %v188
        %vm268 = vcmp.eq.s32.totalorder %v214, %v188
        %vm269 = vcmp.eq.s32.totalorder %v218, %v188
        %vm270 = vcmp.eq.s32.totalorder %v222, %v188
        %vm271 = vcmp.eq.s32.totalorder %v194, %v189
        %vm272 = vcmp.eq.s32.totalorder %v198, %v189
        %vm273 = vcmp.eq.s32.totalorder %v202, %v189
        %vm274 = vcmp.eq.s32.totalorder %v206, %v189
        %vm275 = vcmp.eq.s32.totalorder %v210, %v189
        %vm276 = vcmp.eq.s32.totalorder %v214, %v189
        %vm277 = vcmp.eq.s32.totalorder %v218, %v189
        %vm278 = vcmp.eq.s32.totalorder %v222, %v189
        %vm279 = vcmp.eq.s32.totalorder %v194, %v190
        %vm280 = vcmp.eq.s32.totalorder %v198, %v190
        %vm281 = vcmp.eq.s32.totalorder %v202, %v190
        %vm282 = vcmp.eq.s32.totalorder %v206, %v190
        %vm283 = vcmp.eq.s32.totalorder %v210, %v190
        %vm284 = vcmp.eq.s32.totalorder %v214, %v190
        %vm285 = vcmp.eq.s32.totalorder %v218, %v190
        %vm286 = vcmp.eq.s32.totalorder %v222, %v190
        %v287 = vsel %vm223, 1, 0
        %v288 = vsel %vm224, 1, 0
        %v289 = vsel %vm225, 1, 0
        %v290 = vsel %vm226, 1, 0
        %v291 = vsel %vm227, 1, 0
        %v292 = vsel %vm228, 1, 0
        %v293 = vsel %vm229, 1, 0
        %v294 = vsel %vm230, 1, 0
        %v295 = vsel %vm231, 1, 0
        %v296 = vsel %vm232, 1, 0
        %v297 = vsel %vm233, 1, 0
        %v298 = vsel %vm234, 1, 0
        %v299 = vsel %vm235, 1, 0
        %v300 = vsel %vm236, 1, 0
        %v301 = vsel %vm237, 1, 0
        %v302 = vsel %vm238, 1, 0
        %v303 = vsel %vm239, 1, 0
        %v304 = vsel %vm240, 1, 0
        %v305 = vsel %vm241, 1, 0
        %v306 = vsel %vm242, 1, 0
        %v307 = vsel %vm243, 1, 0
        %v308 = vsel %vm244, 1, 0
        %v309 = vsel %vm245, 1, 0
        %v310 = vsel %vm246, 1, 0
        %v311 = vsel %vm247, 1, 0
        %v312 = vsel %vm248, 1, 0
        %v313 = vsel %vm249, 1, 0
        %v314 = vsel %vm250, 1, 0
        %v315 = vsel %vm251, 1, 0
        %v316 = vsel %vm252, 1, 0
        %v317 = vsel %vm253, 1, 0
        %v318 = vsel %vm254, 1, 0
        %v319 = vsel %vm255, 1, 0
        %v320 = vsel %vm256, 1, 0
        %v321 = vsel %vm257, 1, 0
        %v322 = vsel %vm258, 1, 0
        %v323 = vsel %vm259, 1, 0
        %v324 = vsel %vm260, 1, 0
        %v325 = vsel %vm261, 1, 0
        %v326 = vsel %vm262, 1, 0
        %v327 = vsel %vm263, 1, 0
        %v328 = vsel %vm264, 1, 0
        %v329 = vsel %vm265, 1, 0
        %v330 = vsel %vm266, 1, 0
        %v331 = vsel %vm267, 1, 0
        %v332 = vsel %vm268, 1, 0
        %v333 = vsel %vm269, 1, 0
        %v334 = vsel %vm270, 1, 0
        %v335 = vsel %vm271, 1, 0
        %v336 = vsel %vm272, 1, 0
        %v337 = vsel %vm273, 1, 0
        %v338 = vsel %vm274, 1, 0
        %v339 = vsel %vm275, 1, 0
        %v340 = vsel %vm276, 1, 0
        %v341 = vsel %vm277, 1, 0
        %v342 = vsel %vm278, 1, 0
        %v343 = vsel %vm279, 1, 0
        %v344 = vsel %vm280, 1, 0
        %v345 = vsel %vm281, 1, 0
        %v346 = vsel %vm282, 1, 0
        %v347 = vsel %vm283, 1, 0
        %v348 = vsel %vm284, 1, 0
        %v349 = vsel %vm285, 1, 0
        %v350 = vsel %vm286, 1, 0
        %v351 = vcvt.s32.f32 %v287
        %v352 = vcvt.s32.f32 %v288
        %v353 = vcvt.s32.f32 %v289
        %v354 = vcvt.s32.f32 %v290
        %v355 = vcvt.s32.f32 %v291
        %v356 = vcvt.s32.f32 %v292
        %v357 = vcvt.s32.f32 %v293
        %v358 = vcvt.s32.f32 %v294
        %v359 = vcvt.s32.f32 %v295
        %v360 = vcvt.s32.f32 %v296
        %v361 = vcvt.s32.f32 %v297
        %v362 = vcvt.s32.f32 %v298
        %v363 = vcvt.s32.f32 %v299
        %v364 = vcvt.s32.f32 %v300
        %v365 = vcvt.s32.f32 %v301
        %v366 = vcvt.s32.f32 %v302
        %v367 = vcvt.s32.f32 %v303
        %v368 = vcvt.s32.f32 %v304
        %v369 = vcvt.s32.f32 %v305
        %v370 = vcvt.s32.f32 %v306
        %v371 = vcvt.s32.f32 %v307
        %v372 = vcvt.s32.f32 %v308
        %v373 = vcvt.s32.f32 %v309
        %v374 = vcvt.s32.f32 %v310
        %v375 = vcvt.s32.f32 %v311
        %v376 = vcvt.s32.f32 %v312
        %v377 = vcvt.s32.f32 %v313
        %v378 = vcvt.s32.f32 %v314
        %v379 = vcvt.s32.f32 %v315
        %v380 = vcvt.s32.f32 %v316
        %v381 = vcvt.s32.f32 %v317
        %v382 = vcvt.s32.f32 %v318
        %v383 = vcvt.s32.f32 %v319
        %v384 = vcvt.s32.f32 %v320
        %v385 = vcvt.s32.f32 %v321
        %v386 = vcvt.s32.f32 %v322
        %v387 = vcvt.s32.f32 %v323
        %v388 = vcvt.s32.f32 %v324
        %v389 = vcvt.s32.f32 %v325
        %v390 = vcvt.s32.f32 %v326
        %v391 = vcvt.s32.f32 %v327
        %v392 = vcvt.s32.f32 %v328
        %v393 = vcvt.s32.f32 %v329
        %v394 = vcvt.s32.f32 %v330
        %v395 = vcvt.s32.f32 %v331
        %v396 = vcvt.s32.f32 %v332
        %v397 = vcvt.s32.f32 %v333
        %v398 = vcvt.s32.f32 %v334
        %v399 = vcvt.s32.f32 %v335
        %v400 = vcvt.s32.f32 %v336
        %v401 = vcvt.s32.f32 %v337
        %v402 = vcvt.s32.f32 %v338
        %v403 = vcvt.s32.f32 %v339
        %v404 = vcvt.s32.f32 %v340
        %v405 = vcvt.s32.f32 %v341
        %v406 = vcvt.s32.f32 %v342
        %v407 = vcvt.s32.f32 %v343
        %v408 = vcvt.s32.f32 %v344
        %v409 = vcvt.s32.f32 %v345
        %v410 = vcvt.s32.f32 %v346
        %v411 = vcvt.s32.f32 %v347
        %v412 = vcvt.s32.f32 %v348
        %v413 = vcvt.s32.f32 %v349
        %v414 = vcvt.s32.f32 %v350
        %v415 = vld [vmem:[#allocation5] sm:$0xff]
        %v416 = vld [vmem:[#allocation5 + $0x8] sm:$0xff]
        %v417 = vld [vmem:[#allocation5 + $0x10] sm:$0xff]
        %v418 = vld [vmem:[#allocation5 + $0x18] sm:$0xff]
        %v419 = vld [vmem:[#allocation5 + $0x20] sm:$0xff]
        %v420 = vld [vmem:[#allocation5 + $0x28] sm:$0xff]
        %v421 = vld [vmem:[#allocation5 + $0x30] sm:$0xff]
        %v422 = vld [vmem:[#allocation5 + $0x38] sm:$0xff]
        %423 = vxpose.xlu0.b32.start [1/16] %v351, 128
        %424 = vxpose.xlu0.b32.cont [2/16] %v359, 128
        %425 = vxpose.xlu0.b32.cont [3/16] %v367, 128
        %426 = vxpose.xlu0.b32.cont [4/16] %v375, 128
        %427 = vxpose.xlu0.b32.cont [5/16] %v383, 128
        %428 = vxpose.xlu0.b32.cont [6/16] %v391, 128
        %429 = vxpose.xlu0.b32.cont [7/16] %v399, 128
        %430 = vxpose.xlu0.b32.cont [8/16] %v407, 128
        %431 = vxpose.xlu0.b32.cont [9/16] 0.0, 128
        %432 = vxpose.xlu0.b32.cont [10/16] 0.0, 128
        %433 = vxpose.xlu0.b32.cont [11/16] 0.0, 128
        %434 = vxpose.xlu0.b32.cont [12/16] 0.0, 128
        %435 = vxpose.xlu0.b32.cont [13/16] 0.0, 128
        %436 = vxpose.xlu0.b32.cont [14/16] 0.0, 128
        %437 = vxpose.xlu0.b32.cont [15/16] 0.0, 128
        %438 = vxpose.xlu0.b32.end [16/16] 0.0, 128
        %v439 = vpop.trf.xlu0
        %v440 = vpop.trf.xlu0
        %v441 = vpop.trf.xlu0
        %v442 = vpop.trf.xlu0
        %v443 = vpop.trf.xlu0
        %v444 = vpop.trf.xlu0
        %v445 = vpop.trf.xlu0
        %v446 = vpop.trf.xlu0
        %v447 = vpop.trf.xlu0
        %v448 = vpop.trf.xlu0
        %v449 = vpop.trf.xlu0
        %v450 = vpop.trf.xlu0
        %v451 = vpop.trf.xlu0
        %v452 = vpop.trf.xlu0
        %v453 = vpop.trf.xlu0
        %v454 = vpop.trf.xlu0
        %455 = vxpose.xlu0.b32.start [1/16] %v352, 128
        %456 = vxpose.xlu0.b32.cont [2/16] %v360, 128
        %457 = vxpose.xlu0.b32.cont [3/16] %v368, 128
        %458 = vxpose.xlu0.b32.cont [4/16] %v376, 128
        %459 = vxpose.xlu0.b32.cont [5/16] %v384, 128
        %460 = vxpose.xlu0.b32.cont [6/16] %v392, 128
        %461 = vxpose.xlu0.b32.cont [7/16] %v400, 128
        %462 = vxpose.xlu0.b32.cont [8/16] %v408, 128
        %463 = vxpose.xlu0.b32.cont [9/16] 0.0, 128
        %464 = vxpose.xlu0.b32.cont [10/16] 0.0, 128
        %465 = vxpose.xlu0.b32.cont [11/16] 0.0, 128
        %466 = vxpose.xlu0.b32.cont [12/16] 0.0, 128
        %467 = vxpose.xlu0.b32.cont [13/16] 0.0, 128
        %468 = vxpose.xlu0.b32.cont [14/16] 0.0, 128
        %469 = vxpose.xlu0.b32.cont [15/16] 0.0, 128
        %470 = vxpose.xlu0.b32.end [16/16] 0.0, 128
        %v471 = vpop.trf.xlu0
        %v472 = vpop.trf.xlu0
        %v473 = vpop.trf.xlu0
        %v474 = vpop.trf.xlu0
        %v475 = vpop.trf.xlu0
        %v476 = vpop.trf.xlu0
        %v477 = vpop.trf.xlu0
        %v478 = vpop.trf.xlu0
        %v479 = vpop.trf.xlu0
        %v480 = vpop.trf.xlu0
        %v481 = vpop.trf.xlu0
        %v482 = vpop.trf.xlu0
        %v483 = vpop.trf.xlu0
        %v484 = vpop.trf.xlu0
        %v485 = vpop.trf.xlu0
        %v486 = vpop.trf.xlu0
        %487 = vxpose.xlu0.b32.start [1/16] %v353, 128
        %488 = vxpose.xlu0.b32.cont [2/16] %v361, 128
        %489 = vxpose.xlu0.b32.cont [3/16] %v369, 128
        %490 = vxpose.xlu0.b32.cont [4/16] %v377, 128
        %491 = vxpose.xlu0.b32.cont [5/16] %v385, 128
        %492 = vxpose.xlu0.b32.cont [6/16] %v393, 128
        %493 = vxpose.xlu0.b32.cont [7/16] %v401, 128
        %494 = vxpose.xlu0.b32.cont [8/16] %v409, 128
        %495 = vxpose.xlu0.b32.cont [9/16] 0.0, 128
        %496 = vxpose.xlu0.b32.cont [10/16] 0.0, 128
        %497 = vxpose.xlu0.b32.cont [11/16] 0.0, 128
        %498 = vxpose.xlu0.b32.cont [12/16] 0.0, 128
        %499 = vxpose.xlu0.b32.cont [13/16] 0.0, 128
        %500 = vxpose.xlu0.b32.cont [14/16] 0.0, 128
        %501 = vxpose.xlu0.b32.cont [15/16] 0.0, 128
        %502 = vxpose.xlu0.b32.end [16/16] 0.0, 128
        %v503 = vpop.trf.xlu0
        %v504 = vpop.trf.xlu0
        %v505 = vpop.trf.xlu0
        %v506 = vpop.trf.xlu0
        %v507 = vpop.trf.xlu0
        %v508 = vpop.trf.xlu0
        %v509 = vpop.trf.xlu0
        %v510 = vpop.trf.xlu0
        %v511 = vpop.trf.xlu0
        %v512 = vpop.trf.xlu0
        %v513 = vpop.trf.xlu0
        %v514 = vpop.trf.xlu0
        %v515 = vpop.trf.xlu0
        %v516 = vpop.trf.xlu0
        %v517 = vpop.trf.xlu0
        %v518 = vpop.trf.xlu0
        %519 = vxpose.xlu0.b32.start [1/16] %v354, 128
        %520 = vxpose.xlu0.b32.cont [2/16] %v362, 128
        %521 = vxpose.xlu0.b32.cont [3/16] %v370, 128
        %522 = vxpose.xlu0.b32.cont [4/16] %v378, 128
        %523 = vxpose.xlu0.b32.cont [5/16] %v386, 128
        %524 = vxpose.xlu0.b32.cont [6/16] %v394, 128
        %525 = vxpose.xlu0.b32.cont [7/16] %v402, 128
        %526 = vxpose.xlu0.b32.cont [8/16] %v410, 128
        %527 = vxpose.xlu0.b32.cont [9/16] 0.0, 128
        %528 = vxpose.xlu0.b32.cont [10/16] 0.0, 128
        %529 = vxpose.xlu0.b32.cont [11/16] 0.0, 128
        %530 = vxpose.xlu0.b32.cont [12/16] 0.0, 128
        %531 = vxpose.xlu0.b32.cont [13/16] 0.0, 128
        %532 = vxpose.xlu0.b32.cont [14/16] 0.0, 128
        %533 = vxpose.xlu0.b32.cont [15/16] 0.0, 128
        %534 = vxpose.xlu0.b32.end [16/16] 0.0, 128
        %v535 = vpop.trf.xlu0
        %v536 = vpop.trf.xlu0
        %v537 = vpop.trf.xlu0
        %v538 = vpop.trf.xlu0
        %v539 = vpop.trf.xlu0
        %v540 = vpop.trf.xlu0
        %v541 = vpop.trf.xlu0
        %v542 = vpop.trf.xlu0
        %v543 = vpop.trf.xlu0
        %v544 = vpop.trf.xlu0
        %v545 = vpop.trf.xlu0
        %v546 = vpop.trf.xlu0
        %v547 = vpop.trf.xlu0
        %v548 = vpop.trf.xlu0
        %v549 = vpop.trf.xlu0
        %v550 = vpop.trf.xlu0
        %551 = vxpose.xlu0.b32.start [1/16] %v355, 128
        %552 = vxpose.xlu0.b32.cont [2/16] %v363, 128
        %553 = vxpose.xlu0.b32.cont [3/16] %v371, 128
        %554 = vxpose.xlu0.b32.cont [4/16] %v379, 128
        %555 = vxpose.xlu0.b32.cont [5/16] %v387, 128
        %556 = vxpose.xlu0.b32.cont [6/16] %v395, 128
        %557 = vxpose.xlu0.b32.cont [7/16] %v403, 128
        %558 = vxpose.xlu0.b32.cont [8/16] %v411, 128
        %559 = vxpose.xlu0.b32.cont [9/16] 0.0, 128
        %560 = vxpose.xlu0.b32.cont [10/16] 0.0, 128
        %561 = vxpose.xlu0.b32.cont [11/16] 0.0, 128
        %562 = vxpose.xlu0.b32.cont [12/16] 0.0, 128
        %563 = vxpose.xlu0.b32.cont [13/16] 0.0, 128
        %564 = vxpose.xlu0.b32.cont [14/16] 0.0, 128
        %565 = vxpose.xlu0.b32.cont [15/16] 0.0, 128
        %566 = vxpose.xlu0.b32.end [16/16] 0.0, 128
        %v567 = vpop.trf.xlu0
        %v568 = vpop.trf.xlu0
        %v569 = vpop.trf.xlu0
        %v570 = vpop.trf.xlu0
        %v571 = vpop.trf.xlu0
        %v572 = vpop.trf.xlu0
        %v573 = vpop.trf.xlu0
        %v574 = vpop.trf.xlu0
        %v575 = vpop.trf.xlu0
        %v576 = vpop.trf.xlu0
        %v577 = vpop.trf.xlu0
        %v578 = vpop.trf.xlu0
        %v579 = vpop.trf.xlu0
        %v580 = vpop.trf.xlu0
        %v581 = vpop.trf.xlu0
        %v582 = vpop.trf.xlu0
        %583 = vxpose.xlu0.b32.start [1/16] %v356, 128
        %584 = vxpose.xlu0.b32.cont [2/16] %v364, 128
        %585 = vxpose.xlu0.b32.cont [3/16] %v372, 128
        %586 = vxpose.xlu0.b32.cont [4/16] %v380, 128
        %587 = vxpose.xlu0.b32.cont [5/16] %v388, 128
        %588 = vxpose.xlu0.b32.cont [6/16] %v396, 128
        %589 = vxpose.xlu0.b32.cont [7/16] %v404, 128
        %590 = vxpose.xlu0.b32.cont [8/16] %v412, 128
        %591 = vxpose.xlu0.b32.cont [9/16] 0.0, 128
        %592 = vxpose.xlu0.b32.cont [10/16] 0.0, 128
        %593 = vxpose.xlu0.b32.cont [11/16] 0.0, 128
        %594 = vxpose.xlu0.b32.cont [12/16] 0.0, 128
        %595 = vxpose.xlu0.b32.cont [13/16] 0.0, 128
        %596 = vxpose.xlu0.b32.cont [14/16] 0.0, 128
        %597 = vxpose.xlu0.b32.cont [15/16] 0.0, 128
        %598 = vxpose.xlu0.b32.end [16/16] 0.0, 128
        %v599 = vpop.trf.xlu0
        %v600 = vpop.trf.xlu0
        %v601 = vpop.trf.xlu0
        %v602 = vpop.trf.xlu0
        %v603 = vpop.trf.xlu0
        %v604 = vpop.trf.xlu0
        %v605 = vpop.trf.xlu0
        %v606 = vpop.trf.xlu0
        %v607 = vpop.trf.xlu0
        %v608 = vpop.trf.xlu0
        %v609 = vpop.trf.xlu0
        %v610 = vpop.trf.xlu0
        %v611 = vpop.trf.xlu0
        %v612 = vpop.trf.xlu0
        %v613 = vpop.trf.xlu0
        %v614 = vpop.trf.xlu0
        %615 = vxpose.xlu0.b32.start [1/16] %v357, 128
        %616 = vxpose.xlu0.b32.cont [2/16] %v365, 128
        %617 = vxpose.xlu0.b32.cont [3/16] %v373, 128
        %618 = vxpose.xlu0.b32.cont [4/16] %v381, 128
        %619 = vxpose.xlu0.b32.cont [5/16] %v389, 128
        %620 = vxpose.xlu0.b32.cont [6/16] %v397, 128
        %621 = vxpose.xlu0.b32.cont [7/16] %v405, 128
        %622 = vxpose.xlu0.b32.cont [8/16] %v413, 128
        %623 = vxpose.xlu0.b32.cont [9/16] 0.0, 128
        %624 = vxpose.xlu0.b32.cont [10/16] 0.0, 128
        %625 = vxpose.xlu0.b32.cont [11/16] 0.0, 128
        %626 = vxpose.xlu0.b32.cont [12/16] 0.0, 128
        %627 = vxpose.xlu0.b32.cont [13/16] 0.0, 128
        %628 = vxpose.xlu0.b32.cont [14/16] 0.0, 128
        %629 = vxpose.xlu0.b32.cont [15/16] 0.0, 128
        %630 = vxpose.xlu0.b32.end [16/16] 0.0, 128
        %v631 = vpop.trf.xlu0
        %v632 = vpop.trf.xlu0
        %v633 = vpop.trf.xlu0
        %v634 = vpop.trf.xlu0
        %v635 = vpop.trf.xlu0
        %v636 = vpop.trf.xlu0
        %v637 = vpop.trf.xlu0
        %v638 = vpop.trf.xlu0
        %v639 = vpop.trf.xlu0
        %v640 = vpop.trf.xlu0
        %v641 = vpop.trf.xlu0
        %v642 = vpop.trf.xlu0
        %v643 = vpop.trf.xlu0
        %v644 = vpop.trf.xlu0
        %v645 = vpop.trf.xlu0
        %v646 = vpop.trf.xlu0
        %647 = vxpose.xlu0.b32.start [1/16] %v358, 128
        %648 = vxpose.xlu0.b32.cont [2/16] %v366, 128
        %649 = vxpose.xlu0.b32.cont [3/16] %v374, 128
        %650 = vxpose.xlu0.b32.cont [4/16] %v382, 128
        %651 = vxpose.xlu0.b32.cont [5/16] %v390, 128
        %652 = vxpose.xlu0.b32.cont [6/16] %v398, 128
        %653 = vxpose.xlu0.b32.cont [7/16] %v406, 128
        %654 = vxpose.xlu0.b32.cont [8/16] %v414, 128
        %655 = vxpose.xlu0.b32.cont [9/16] 0.0, 128
        %656 = vxpose.xlu0.b32.cont [10/16] 0.0, 128
        %657 = vxpose.xlu0.b32.cont [11/16] 0.0, 128
        %658 = vxpose.xlu0.b32.cont [12/16] 0.0, 128
        %659 = vxpose.xlu0.b32.cont [13/16] 0.0, 128
        %660 = vxpose.xlu0.b32.cont [14/16] 0.0, 128
        %661 = vxpose.xlu0.b32.cont [15/16] 0.0, 128
        %662 = vxpose.xlu0.b32.end [16/16] 0.0, 128
        %v663 = vpop.trf.xlu0
        %v664 = vpop.trf.xlu0
        %v665 = vpop.trf.xlu0
        %v666 = vpop.trf.xlu0
        %v667 = vpop.trf.xlu0
        %v668 = vpop.trf.xlu0
        %v669 = vpop.trf.xlu0
        %v670 = vpop.trf.xlu0
        %v671 = vpop.trf.xlu0
        %v672 = vpop.trf.xlu0
        %v673 = vpop.trf.xlu0
        %v674 = vpop.trf.xlu0
        %v675 = vpop.trf.xlu0
        %v676 = vpop.trf.xlu0
        %v677 = vpop.trf.xlu0
        %v678 = vpop.trf.xlu0
        %vm679 = vcmask 523264
        %v681 = vsel %vm679, %v439, 0
        %v684 = vsel %vm679, %v440, 0
        %v687 = vsel %vm679, %v441, 0
        %v690 = vsel %vm679, %v442, 0
        %v693 = vsel %vm679, %v443, 0
        %v696 = vsel %vm679, %v444, 0
        %v699 = vsel %vm679, %v445, 0
        %v702 = vsel %vm679, %v446, 0
        %v705 = vsel %vm679, %v447, 0
        %v708 = vsel %vm679, %v448, 0
        %v711 = vsel %vm679, %v449, 0
        %v714 = vsel %vm679, %v450, 0
        %v717 = vsel %vm679, %v451, 0
        %v720 = vsel %vm679, %v452, 0
        %v723 = vsel %vm679, %v453, 0
        %v726 = vsel %vm679, %v454, 0
        %v729 = vsel %vm679, %v471, 0
        %v732 = vsel %vm679, %v472, 0
        %v735 = vsel %vm679, %v473, 0
        %v738 = vsel %vm679, %v474, 0
        %v741 = vsel %vm679, %v475, 0
        %v744 = vsel %vm679, %v476, 0
        %v747 = vsel %vm679, %v477, 0
        %v750 = vsel %vm679, %v478, 0
        %v753 = vsel %vm679, %v479, 0
        %v756 = vsel %vm679, %v480, 0
        %v759 = vsel %vm679, %v481, 0
        %v762 = vsel %vm679, %v482, 0
        %v765 = vsel %vm679, %v483, 0
        %v768 = vsel %vm679, %v484, 0
        %v771 = vsel %vm679, %v485, 0
        %v774 = vsel %vm679, %v486, 0
        %v777 = vsel %vm679, %v503, 0
        %v780 = vsel %vm679, %v504, 0
        %v783 = vsel %vm679, %v505, 0
        %v786 = vsel %vm679, %v506, 0
        %v789 = vsel %vm679, %v507, 0
        %v792 = vsel %vm679, %v508, 0
        %v795 = vsel %vm679, %v509, 0
        %v798 = vsel %vm679, %v510, 0
        %v801 = vsel %vm679, %v511, 0
        %v804 = vsel %vm679, %v512, 0
        %v807 = vsel %vm679, %v513, 0
        %v810 = vsel %vm679, %v514, 0
        %v813 = vsel %vm679, %v515, 0
        %v816 = vsel %vm679, %v516, 0
        %v819 = vsel %vm679, %v517, 0
        %v822 = vsel %vm679, %v518, 0
        %v825 = vsel %vm679, %v535, 0
        %v828 = vsel %vm679, %v536, 0
        %v831 = vsel %vm679, %v537, 0
        %v834 = vsel %vm679, %v538, 0
        %v837 = vsel %vm679, %v539, 0
        %v840 = vsel %vm679, %v540, 0
        %v843 = vsel %vm679, %v541, 0
        %v846 = vsel %vm679, %v542, 0
        %v849 = vsel %vm679, %v543, 0
        %v852 = vsel %vm679, %v544, 0
        %v855 = vsel %vm679, %v545, 0
        %v858 = vsel %vm679, %v546, 0
        %v861 = vsel %vm679, %v547, 0
        %v864 = vsel %vm679, %v548, 0
        %v867 = vsel %vm679, %v549, 0
        %v870 = vsel %vm679, %v550, 0
        %v873 = vsel %vm679, %v567, 0
        %v876 = vsel %vm679, %v568, 0
        %v879 = vsel %vm679, %v569, 0
        %v882 = vsel %vm679, %v570, 0
        %v885 = vsel %vm679, %v571, 0
        %v888 = vsel %vm679, %v572, 0
        %v891 = vsel %vm679, %v573, 0
        %v894 = vsel %vm679, %v574, 0
        %v897 = vsel %vm679, %v575, 0
        %v900 = vsel %vm679, %v576, 0
        %v903 = vsel %vm679, %v577, 0
        %v906 = vsel %vm679, %v578, 0
        %v909 = vsel %vm679, %v579, 0
        %v912 = vsel %vm679, %v580, 0
        %v915 = vsel %vm679, %v581, 0
        %v918 = vsel %vm679, %v582, 0
        %v921 = vsel %vm679, %v599, 0
        %v924 = vsel %vm679, %v600, 0
        %v927 = vsel %vm679, %v601, 0
        %v930 = vsel %vm679, %v602, 0
        %v933 = vsel %vm679, %v603, 0
        %v936 = vsel %vm679, %v604, 0
        %v939 = vsel %vm679, %v605, 0
        %v942 = vsel %vm679, %v606, 0
        %v945 = vsel %vm679, %v607, 0
        %v948 = vsel %vm679, %v608, 0
        %v951 = vsel %vm679, %v609, 0
        %v954 = vsel %vm679, %v610, 0
        %v957 = vsel %vm679, %v611, 0
        %v960 = vsel %vm679, %v612, 0
        %v963 = vsel %vm679, %v613, 0
        %v966 = vsel %vm679, %v614, 0
        %v969 = vsel %vm679, %v631, 0
        %v972 = vsel %vm679, %v632, 0
        %v975 = vsel %vm679, %v633, 0
        %v978 = vsel %vm679, %v634, 0
        %v981 = vsel %vm679, %v635, 0
        %v984 = vsel %vm679, %v636, 0
        %v987 = vsel %vm679, %v637, 0
        %v990 = vsel %vm679, %v638, 0
        %v993 = vsel %vm679, %v639, 0
        %v996 = vsel %vm679, %v640, 0
        %v999 = vsel %vm679, %v641, 0
        %v1002 = vsel %vm679, %v642, 0
        %v1005 = vsel %vm679, %v643, 0
        %v1008 = vsel %vm679, %v644, 0
        %v1011 = vsel %vm679, %v645, 0
        %v1014 = vsel %vm679, %v646, 0
        %v1017 = vsel %vm679, %v663, 0
        %v1020 = vsel %vm679, %v664, 0
        %v1023 = vsel %vm679, %v665, 0
        %v1026 = vsel %vm679, %v666, 0
        %v1029 = vsel %vm679, %v667, 0
        %v1032 = vsel %vm679, %v668, 0
        %v1035 = vsel %vm679, %v669, 0
        %v1038 = vsel %vm679, %v670, 0
        %v1041 = vsel %vm679, %v671, 0
        %v1044 = vsel %vm679, %v672, 0
        %v1047 = vsel %vm679, %v673, 0
        %v1050 = vsel %vm679, %v674, 0
        %v1053 = vsel %vm679, %v675, 0
        %v1056 = vsel %vm679, %v676, 0
        %v1059 = vsel %vm679, %v677, 0
        %v1062 = vsel %vm679, %v678, 0
        %1064 = vmatprep.subr.mxu0 0.0
        %v1065 = vand.u32 %v415, 4294901760
        %1066 = vmatpush1.msra.mxu0 %v1065
        %1067 = vmatprep.subr.mxu0 0.0
        %v1068 = vand.u32 %v416, 4294901760
        %1069 = vmatpush1.msra.mxu0 %v1068
        %1070 = vmatprep.subr.mxu0 0.0
        %v1071 = vand.u32 %v417, 4294901760
        %1072 = vmatpush1.msra.mxu0 %v1071
        %1073 = vmatprep.subr.mxu0 0.0
        %v1074 = vand.u32 %v418, 4294901760
        %1075 = vmatpush1.msra.mxu0 %v1074
        %1076 = vmatprep.subr.mxu0 0.0
        %v1077 = vand.u32 %v419, 4294901760
        %1078 = vmatpush1.msra.mxu0 %v1077
        %1079 = vmatprep.subr.mxu0 0.0
        %v1080 = vand.u32 %v420, 4294901760
        %1081 = vmatpush1.msra.mxu0 %v1080
        %1082 = vmatprep.subr.mxu0 0.0
        %v1083 = vand.u32 %v421, 4294901760
        %1084 = vmatpush1.msra.mxu0 %v1083
        %1085 = vmatprep.subr.mxu0 0.0
        %v1086 = vand.u32 %v422, 4294901760
        %1087 = vmatpush1.msra.mxu0 %v1086
        %1088 = vmatprep.subr.mxu0 0.0
        %1089 = vmatpush1.msra.mxu0 0.0
        %1090 = vmatprep.subr.mxu0 0.0
        %1091 = vmatpush1.msra.mxu0 0.0
        %1092 = vmatprep.subr.mxu0 0.0
        %1093 = vmatpush1.msra.mxu0 0.0
        %1094 = vmatprep.subr.mxu0 0.0
        %1095 = vmatpush1.msra.mxu0 0.0
        %1096 = vmatprep.subr.mxu0 0.0
        %1097 = vmatpush1.msra.mxu0 0.0
        %1098 = vmatprep.subr.mxu0 0.0
        %1099 = vmatpush1.msra.mxu0 0.0
        %1100 = vmatprep.subr.mxu0 0.0
        %1101 = vmatpush1.msra.mxu0 0.0
        %1102 = vmatprep.subr.mxu0 0.0
        %1103 = vmatpush1.msra.mxu0 0.0
        %1104 = vmatprep.subr.mxu0 0.0
        %1105 = vmatpush1.msra.mxu0 0.0
        %1106 = vmatprep.subr.mxu0 0.0
        %1107 = vmatpush1.msra.mxu0 0.0
        %1108 = vmatprep.subr.mxu0 0.0
        %1109 = vmatpush1.msra.mxu0 0.0
        %1110 = vmatprep.subr.mxu0 0.0
        %1111 = vmatpush1.msra.mxu0 0.0
        %1112 = vmatprep.subr.mxu0 0.0
        %1113 = vmatpush1.msra.mxu0 0.0
        %1114 = vmatprep.subr.mxu0 0.0
        %1115 = vmatpush1.msra.mxu0 0.0
        %1116 = vmatprep.subr.mxu0 0.0
        %1117 = vmatpush1.msra.mxu0 0.0
        %1118 = vmatprep.subr.mxu0 0.0
        %1119 = vmatpush1.msra.mxu0 0.0
        %1120 = vmatprep.subr.mxu0 0.0
        %1121 = vmatpush1.msra.mxu0 0.0
        %1122 = vmatprep.subr.mxu0 0.0
        %1123 = vmatpush1.msra.mxu0 0.0
        %1124 = vmatprep.subr.mxu0 0.0
        %1125 = vmatpush1.msra.mxu0 0.0
        %1126 = vmatprep.subr.mxu0 0.0
        %1127 = vmatpush1.msra.mxu0 0.0
        %1128 = vmatprep.subr.mxu0 0.0
        %1129 = vmatpush1.msra.mxu0 0.0
        %1130 = vmatprep.subr.mxu0 0.0
        %1131 = vmatpush1.msra.mxu0 0.0
        %1132 = vmatprep.subr.mxu0 0.0
        %1133 = vmatpush1.msra.mxu0 0.0
        %1134 = vmatprep.subr.mxu0 0.0
        %1135 = vmatpush1.msra.mxu0 0.0
        %1136 = vmatprep.mubr.f32.mxu0 0.0
        %v1137 = vand.u32 %v681, 4294901760
        %v1138 = vsub.f32 %v681, %v1137
        %v1139 = vand.u32 %v1138, 4294901760
        %v1140 = vsub.f32 %v1138, %v1139
        %v1141 = vand.u32 %v1140, 4294901760
        %1142 = vmatmul.mubr.f32.gmra.mrb[0].mxu0 %v1141
        %v1143 = vpop.f32.mrb[0].mxu0
        %v1144 = vadd.f32 0.0, %v1143
        %v1145 = vpop.f32.mrb[0].mxu0
        %1146 = vmatprep.mubr.f32.mxu0 0.0
        %v1147 = vand.u32 %v684, 4294901760
        %v1148 = vsub.f32 %v684, %v1147
        %v1149 = vand.u32 %v1148, 4294901760
        %v1150 = vsub.f32 %v1148, %v1149
        %v1151 = vand.u32 %v1150, 4294901760
        %1152 = vmatmul.mubr.f32.gmra.mrb[0].mxu0 %v1151
        %v1153 = vpop.f32.mrb[0].mxu0
        %v1154 = vadd.f32 0.0, %v1153
        %v1155 = vpop.f32.mrb[0].mxu0
        %1156 = vmatprep.mubr.f32.mxu0 0.0
        %v1157 = vand.u32 %v687, 4294901760
        %v1158 = vsub.f32 %v687, %v1157
        %v1159 = vand.u32 %v1158, 4294901760
        %v1160 = vsub.f32 %v1158, %v1159
        %v1161 = vand.u32 %v1160, 4294901760
        %1162 = vmatmul.mubr.f32.gmra.mrb[0].mxu0 %v1161
        %v1163 = vpop.f32.mrb[0].mxu0
        %v1164 = vadd.f32 0.0, %v1163
        %v1165 = vpop.f32.mrb[0].mxu0
        %1166 = vmatprep.mubr.f32.mxu0 0.0
        %v1167 = vand.u32 %v690, 4294901760
        %v1168 = vsub.f32 %v690, %v1167
        %v1169 = vand.u32 %v1168, 4294901760
        %v1170 = vsub.f32 %v1168, %v1169
        %v1171 = vand.u32 %v1170, 4294901760
        %1172 = vmatmul.mubr.f32.gmra.mrb[0].mxu0 %v1171
        %v1173 = vpop.f32.mrb[0].mxu0
        %v1174 = vadd.f32 0.0, %v1173
        %v1175 = vpop.f32.mrb[0].mxu0
        %1176 = vmatprep.mubr.f32.mxu0 0.0
        %v1177 = vand.u32 %v693, 4294901760
        %v1178 = vsub.f32 %v693, %v1177
        %v1179 = vand.u32 %v1178, 4294901760
        %v1180 = vsub.f32 %v1178, %v1179
        %v1181 = vand.u32 %v1180, 4294901760
        %1182 = vmatmul.mubr.f32.gmra.mrb[0].mxu0 %v1181
        %v1183 = vpop.f32.mrb[0].mxu0
        %v1184 = vadd.f32 0.0, %v1183
        %v1185 = vpop.f32.mrb[0].mxu0
        %1186 = vmatprep.mubr.f32.mxu0 0.0
        %v1187 = vand.u32 %v696, 4294901760
        %v1188 = vsub.f32 %v696, %v1187
        %v1189 = vand.u32 %v1188, 4294901760
        %v1190 = vsub.f32 %v1188, %v1189
        %v1191 = vand.u32 %v1190, 4294901760
        %1192 = vmatmul.mubr.f32.gmra.mrb[0].mxu0 %v1191
        %v1193 = vpop.f32.mrb[0].mxu0
        %v1194 = vadd.f32 0.0, %v1193
        %v1195 = vpop.f32.mrb[0].mxu0
        %1196 = vmatprep.mubr.f32.mxu0 0.0
        %v1197 = vand.u32 %v699, 4294901760
        %v1198 = vsub.f32 %v699, %v1197
        %v1199 = vand.u32 %v1198, 4294901760
        %v1200 = vsub.f32 %v1198, %v1199
        %v1201 = vand.u32 %v1200, 4294901760
        %1202 = vmatmul.mubr.f32.gmra.mrb[0].mxu0 %v1201
        %v1203 = vpop.f32.mrb[0].mxu0
        %v1204 = vadd.f32 0.0, %v1203
        %v1205 = vpop.f32.mrb[0].mxu0
        %1206 = vmatprep.mubr.f32.mxu0 0.0
        %v1207 = vand.u32 %v702, 4294901760
        %v1208 = vsub.f32 %v702, %v1207
        %v1209 = vand.u32 %v1208, 4294901760
        %v1210 = vsub.f32 %v1208, %v1209
        %v1211 = vand.u32 %v1210, 4294901760
        %1212 = vmatmul.mubr.f32.gmra.mrb[0].mxu0 %v1211
        %v1213 = vpop.f32.mrb[0].mxu0
        %v1214 = vadd.f32 0.0, %v1213
        %v1215 = vpop.f32.mrb[0].mxu0
        %1216 = vmatprep.mubr.f32.mxu0 0.0
        %v1217 = vand.u32 %v705, 4294901760
        %v1218 = vsub.f32 %v705, %v1217
        %v1219 = vand.u32 %v1218, 4294901760
        %v1220 = vsub.f32 %v1218, %v1219
        %v1221 = vand.u32 %v1220, 4294901760
        %1222 = vmatmul.mubr.f32.gmra.mrb[0].mxu0 %v1221
        %v1223 = vpop.f32.mrb[0].mxu0
        %v1224 = vadd.f32 0.0, %v1223
        %v1225 = vpop.f32.mrb[0].mxu0
        %1226 = vmatprep.mubr.f32.mxu0 0.0
        %v1227 = vand.u32 %v708, 4294901760
        %v1228 = vsub.f32 %v708, %v1227
        %v1229 = vand.u32 %v1228, 4294901760
        %v1230 = vsub.f32 %v1228, %v1229
        %v1231 = vand.u32 %v1230, 4294901760
        %1232 = vmatmul.mubr.f32.gmra.mrb[0].mxu0 %v1231
        %v1233 = vpop.f32.mrb[0].mxu0
        %v1234 = vadd.f32 0.0, %v1233
        %v1235 = vpop.f32.mrb[0].mxu0
        %1236 = vmatprep.mubr.f32.mxu0 0.0
        %v1237 = vand.u32 %v711, 4294901760
        %v1238 = vsub.f32 %v711, %v1237
        %v1239 = vand.u32 %v1238, 4294901760
        %v1240 = vsub.f32 %v1238, %v1239
        %v1241 = vand.u32 %v1240, 4294901760
        %1242 = vmatmul.mubr.f32.gmra.mrb[0].mxu0 %v1241
        %v1243 = vpop.f32.mrb[0].mxu0
        %v1244 = vadd.f32 0.0, %v1243
        %v1245 = vpop.f32.mrb[0].mxu0
        %1246 = vmatprep.mubr.f32.mxu0 0.0
        %v1247 = vand.u32 %v714, 4294901760
        %v1248 = vsub.f32 %v714, %v1247
        %v1249 = vand.u32 %v1248, 4294901760
        %v1250 = vsub.f32 %v1248, %v1249
        %v1251 = vand.u32 %v1250, 4294901760
        %1252 = vmatmul.mubr.f32.gmra.mrb[0].mxu0 %v1251
        %v1253 = vpop.f32.mrb[0].mxu0
        %v1254 = vadd.f32 0.0, %v1253
        %v1255 = vpop.f32.mrb[0].mxu0
        %1256 = vmatprep.mubr.f32.mxu0 0.0
        %v1257 = vand.u32 %v717, 4294901760
        %v1258 = vsub.f32 %v717, %v1257
        %v1259 = vand.u32 %v1258, 4294901760
        %v1260 = vsub.f32 %v1258, %v1259
        %v1261 = vand.u32 %v1260, 4294901760
        %1262 = vmatmul.mubr.f32.gmra.mrb[0].mxu0 %v1261
        %v1263 = vpop.f32.mrb[0].mxu0
        %v1264 = vadd.f32 0.0, %v1263
        %v1265 = vpop.f32.mrb[0].mxu0
        %1266 = vmatprep.mubr.f32.mxu0 0.0
        %v1267 = vand.u32 %v720, 4294901760
        %v1268 = vsub.f32 %v720, %v1267
        %v1269 = vand.u32 %v1268, 4294901760
        %v1270 = vsub.f32 %v1268, %v1269
        %v1271 = vand.u32 %v1270, 4294901760
        %1272 = vmatmul.mubr.f32.gmra.mrb[0].mxu0 %v1271
        %v1273 = vpop.f32.mrb[0].mxu0
        %v1274 = vadd.f32 0.0, %v1273
        %v1275 = vpop.f32.mrb[0].mxu0
        %1276 = vmatprep.mubr.f32.mxu0 0.0
        %v1277 = vand.u32 %v723, 4294901760
        %v1278 = vsub.f32 %v723, %v1277
        %v1279 = vand.u32 %v1278, 4294901760
        %v1280 = vsub.f32 %v1278, %v1279
        %v1281 = vand.u32 %v1280, 4294901760
        %1282 = vmatmul.mubr.f32.gmra.mrb[0].mxu0 %v1281
        %v1283 = vpop.f32.mrb[0].mxu0
        %v1284 = vadd.f32 0.0, %v1283
        %v1285 = vpop.f32.mrb[0].mxu0
        %1286 = vmatprep.mubr.f32.mxu0 0.0
        %v1287 = vand.u32 %v726, 4294901760
        %v1288 = vsub.f32 %v726, %v1287
        %v1289 = vand.u32 %v1288, 4294901760
        %v1290 = vsub.f32 %v1288, %v1289
        %v1291 = vand.u32 %v1290, 4294901760
        %1292 = vmatmul.mubr.f32.gmra.mrb[0].mxu0 %v1291
        %v1293 = vpop.f32.mrb[0].mxu0
        %v1294 = vadd.f32 0.0, %v1293
        %v1295 = vpop.f32.mrb[0].mxu0
        %1296 = vmatprep.mubr.f32.mxu0 0.0
        %v1297 = vand.u32 %v729, 4294901760
        %v1298 = vsub.f32 %v729, %v1297
        %v1299 = vand.u32 %v1298, 4294901760
        %v1300 = vsub.f32 %v1298, %v1299
        %v1301 = vand.u32 %v1300, 4294901760
        %1302 = vmatmul.mubr.f32.gmra.mrb[0].mxu0 %v1301
        %v1303 = vpop.f32.mrb[0].mxu0
        %v1304 = vadd.f32 0.0, %v1303
        %v1305 = vpop.f32.mrb[0].mxu0
        %1306 = vmatprep.mubr.f32.mxu0 0.0
        %v1307 = vand.u32 %v732, 4294901760
        %v1308 = vsub.f32 %v732, %v1307
        %v1309 = vand.u32 %v1308, 4294901760
        %v1310 = vsub.f32 %v1308, %v1309
        %v1311 = vand.u32 %v1310, 4294901760
        %1312 = vmatmul.mubr.f32.gmra.mrb[0].mxu0 %v1311
        %v1313 = vpop.f32.mrb[0].mxu0
        %v1314 = vadd.f32 0.0, %v1313
        %v1315 = vpop.f32.mrb[0].mxu0
        %1316 = vmatprep.mubr.f32.mxu0 0.0
        %v1317 = vand.u32 %v735, 4294901760
        %v1318 = vsub.f32 %v735, %v1317
        %v1319 = vand.u32 %v1318, 4294901760
        %v1320 = vsub.f32 %v1318, %v1319
        %v1321 = vand.u32 %v1320, 4294901760
        %1322 = vmatmul.mubr.f32.gmra.mrb[0].mxu0 %v1321
        %v1323 = vpop.f32.mrb[0].mxu0
        %v1324 = vadd.f32 0.0, %v1323
        %v1325 = vpop.f32.mrb[0].mxu0
        %1326 = vmatprep.mubr.f32.mxu0 0.0
        %v1327 = vand.u32 %v738, 4294901760
        %v1328 = vsub.f32 %v738, %v1327
        %v1329 = vand.u32 %v1328, 4294901760
        %v1330 = vsub.f32 %v1328, %v1329
        %v1331 = vand.u32 %v1330, 4294901760
        %1332 = vmatmul.mubr.f32.gmra.mrb[0].mxu0 %v1331
        %v1333 = vpop.f32.mrb[0].mxu0
        %v1334 = vadd.f32 0.0, %v1333
        %v1335 = vpop.f32.mrb[0].mxu0
        %1336 = vmatprep.mubr.f32.mxu0 0.0
        %v1337 = vand.u32 %v741, 4294901760
        %v1338 = vsub.f32 %v741, %v1337
        %v1339 = vand.u32 %v1338, 4294901760
        %v1340 = vsub.f32 %v1338, %v1339
        %v1341 = vand.u32 %v1340, 4294901760
        %1342 = vmatmul.mubr.f32.gmra.mrb[0].mxu0 %v1341
        %v1343 = vpop.f32.mrb[0].mxu0
        %v1344 = vadd.f32 0.0, %v1343
        %v1345 = vpop.f32.mrb[0].mxu0
        %1346 = vmatprep.mubr.f32.mxu0 0.0
        %v1347 = vand.u32 %v744, 4294901760
        %v1348 = vsub.f32 %v744, %v1347
        %v1349 = vand.u32 %v1348, 4294901760
        %v1350 = vsub.f32 %v1348, %v1349
        %v1351 = vand.u32 %v1350, 4294901760
        %1352 = vmatmul.mubr.f32.gmra.mrb[0].mxu0 %v1351
        %v1353 = vpop.f32.mrb[0].mxu0
        %v1354 = vadd.f32 0.0, %v1353
        %v1355 = vpop.f32.mrb[0].mxu0
        %1356 = vmatprep.mubr.f32.mxu0 0.0
        %v1357 = vand.u32 %v747, 4294901760
        %v1358 = vsub.f32 %v747, %v1357
        %v1359 = vand.u32 %v1358, 4294901760
        %v1360 = vsub.f32 %v1358, %v1359
        %v1361 = vand.u32 %v1360, 4294901760
        %1362 = vmatmul.mubr.f32.gmra.mrb[0].mxu0 %v1361
        %v1363 = vpop.f32.mrb[0].mxu0
        %v1364 = vadd.f32 0.0, %v1363
        %v1365 = vpop.f32.mrb[0].mxu0
        %1366 = vmatprep.mubr.f32.mxu0 0.0
        %v1367 = vand.u32 %v750, 4294901760
        %v1368 = vsub.f32 %v750, %v1367
        %v1369 = vand.u32 %v1368, 4294901760
        %v1370 = vsub.f32 %v1368, %v1369
        %v1371 = vand.u32 %v1370, 4294901760
        %1372 = vmatmul.mubr.f32.gmra.mrb[0].mxu0 %v1371
        %v1373 = vpop.f32.mrb[0].mxu0
        %v1374 = vadd.f32 0.0, %v1373
        %v1375 = vpop.f32.mrb[0].mxu0
        %1376 = vmatprep.mubr.f32.mxu0 0.0
        %v1377 = vand.u32 %v753, 4294901760
        %v1378 = vsub.f32 %v753, %v1377
        %v1379 = vand.u32 %v1378, 4294901760
        %v1380 = vsub.f32 %v1378, %v1379
        %v1381 = vand.u32 %v1380, 4294901760
        %1382 = vmatmul.mubr.f32.gmra.mrb[0].mxu0 %v1381
        %v1383 = vpop.f32.mrb[0].mxu0
        %v1384 = vadd.f32 0.0, %v1383
        %v1385 = vpop.f32.mrb[0].mxu0
        %1386 = vmatprep.mubr.f32.mxu0 0.0
        %v1387 = vand.u32 %v756, 4294901760
        %v1388 = vsub.f32 %v756, %v1387
        %v1389 = vand.u32 %v1388, 4294901760
        %v1390 = vsub.f32 %v1388, %v1389
        %v1391 = vand.u32 %v1390, 4294901760
        %1392 = vmatmul.mubr.f32.gmra.mrb[0].mxu0 %v1391
        %v1393 = vpop.f32.mrb[0].mxu0
        %v1394 = vadd.f32 0.0, %v1393
        %v1395 = vpop.f32.mrb[0].mxu0
        %1396 = vmatprep.mubr.f32.mxu0 0.0
        %v1397 = vand.u32 %v759, 4294901760
        %v1398 = vsub.f32 %v759, %v1397
        %v1399 = vand.u32 %v1398, 4294901760
        %v1400 = vsub.f32 %v1398, %v1399
        %v1401 = vand.u32 %v1400, 4294901760
        %1402 = vmatmul.mubr.f32.gmra.mrb[0].mxu0 %v1401
        %v1403 = vpop.f32.mrb[0].mxu0
        %v1404 = vadd.f32 0.0, %v1403
        %v1405 = vpop.f32.mrb[0].mxu0
        %1406 = vmatprep.mubr.f32.mxu0 0.0
        %v1407 = vand.u32 %v762, 4294901760
        %v1408 = vsub.f32 %v762, %v1407
        %v1409 = vand.u32 %v1408, 4294901760
        %v1410 = vsub.f32 %v1408, %v1409
        %v1411 = vand.u32 %v1410, 4294901760
        %1412 = vmatmul.mubr.f32.gmra.mrb[0].mxu0 %v1411
        %v1413 = vpop.f32.mrb[0].mxu0
        %v1414 = vadd.f32 0.0, %v1413
        %v1415 = vpop.f32.mrb[0].mxu0
        %1416 = vmatprep.mubr.f32.mxu0 0.0
        %v1417 = vand.u32 %v765, 4294901760
        %v1418 = vsub.f32 %v765, %v1417
        %v1419 = vand.u32 %v1418, 4294901760
        %v1420 = vsub.f32 %v1418, %v1419
        %v1421 = vand.u32 %v1420, 4294901760
        %1422 = vmatmul.mubr.f32.gmra.mrb[0].mxu0 %v1421
        %v1423 = vpop.f32.mrb[0].mxu0
        %v1424 = vadd.f32 0.0, %v1423
        %v1425 = vpop.f32.mrb[0].mxu0
        %1426 = vmatprep.mubr.f32.mxu0 0.0
        %v1427 = vand.u32 %v768, 4294901760
        %v1428 = vsub.f32 %v768, %v1427
        %v1429 = vand.u32 %v1428, 4294901760
        %v1430 = vsub.f32 %v1428, %v1429
        %v1431 = vand.u32 %v1430, 4294901760
        %1432 = vmatmul.mubr.f32.gmra.mrb[0].mxu0 %v1431
        %v1433 = vpop.f32.mrb[0].mxu0
        %v1434 = vadd.f32 0.0, %v1433
        %v1435 = vpop.f32.mrb[0].mxu0
        %1436 = vmatprep.mubr.f32.mxu0 0.0
        %v1437 = vand.u32 %v771, 4294901760
        %v1438 = vsub.f32 %v771, %v1437
        %v1439 = vand.u32 %v1438, 4294901760
        %v1440 = vsub.f32 %v1438, %v1439
        %v1441 = vand.u32 %v1440, 4294901760
        %1442 = vmatmul.mubr.f32.gmra.mrb[0].mxu0 %v1441
        %v1443 = vpop.f32.mrb[0].mxu0
        %v1444 = vadd.f32 0.0, %v1443
        %v1445 = vpop.f32.mrb[0].mxu0
        %1446 = vmatprep.mubr.f32.mxu0 0.0
        %v1447 = vand.u32 %v774, 4294901760
        %v1448 = vsub.f32 %v774, %v1447
        %v1449 = vand.u32 %v1448, 4294901760
        %v1450 = vsub.f32 %v1448, %v1449
        %v1451 = vand.u32 %v1450, 4294901760
        %1452 = vmatmul.mubr.f32.gmra.mrb[0].mxu0 %v1451
        %v1453 = vpop.f32.mrb[0].mxu0
        %v1454 = vadd.f32 0.0, %v1453
        %v1455 = vpop.f32.mrb[0].mxu0
        %1456 = vmatprep.mubr.f32.mxu0 0.0
        %v1457 = vand.u32 %v777, 4294901760
        %v1458 = vsub.f32 %v777, %v1457
        %v1459 = vand.u32 %v1458, 4294901760
        %v1460 = vsub.f32 %v1458, %v1459
        %v1461 = vand.u32 %v1460, 4294901760
        %1462 = vmatmul.mubr.f32.gmra.mrb[0].mxu0 %v1461
        %v1463 = vpop.f32.mrb[0].mxu0
        %v1464 = vadd.f32 0.0, %v1463
        %v1465 = vpop.f32.mrb[0].mxu0
        %1466 = vmatprep.mubr.f32.mxu0 0.0
        %v1467 = vand.u32 %v780, 4294901760
        %v1468 = vsub.f32 %v780, %v1467
        %v1469 = vand.u32 %v1468, 4294901760
        %v1470 = vsub.f32 %v1468, %v1469
        %v1471 = vand.u32 %v1470, 4294901760
        %1472 = vmatmul.mubr.f32.gmra.mrb[0].mxu0 %v1471
        %v1473 = vpop.f32.mrb[0].mxu0
        %v1474 = vadd.f32 0.0, %v1473
        %v1475 = vpop.f32.mrb[0].mxu0
        %1476 = vmatprep.mubr.f32.mxu0 0.0
        %v1477 = vand.u32 %v783, 4294901760
        %v1478 = vsub.f32 %v783, %v1477
        %v1479 = vand.u32 %v1478, 4294901760
        %v1480 = vsub.f32 %v1478, %v1479
        %v1481 = vand.u32 %v1480, 4294901760
        %1482 = vmatmul.mubr.f32.gmra.mrb[0].mxu0 %v1481
        %v1483 = vpop.f32.mrb[0].mxu0
        %v1484 = vadd.f32 0.0, %v1483
        %v1485 = vpop.f32.mrb[0].mxu0
        %1486 = vmatprep.mubr.f32.mxu0 0.0
        %v1487 = vand.u32 %v786, 4294901760
        %v1488 = vsub.f32 %v786, %v1487
        %v1489 = vand.u32 %v1488, 4294901760
        %v1490 = vsub.f32 %v1488, %v1489
        %v1491 = vand.u32 %v1490, 4294901760
        %1492 = vmatmul.mubr.f32.gmra.mrb[0].mxu0 %v1491
        %v1493 = vpop.f32.mrb[0].mxu0
        %v1494 = vadd.f32 0.0, %v1493
        %v1495 = vpop.f32.mrb[0].mxu0
        %1496 = vmatprep.mubr.f32.mxu0 0.0
        %v1497 = vand.u32 %v789, 4294901760
        %v1498 = vsub.f32 %v789, %v1497
        %v1499 = vand.u32 %v1498, 4294901760
        %v1500 = vsub.f32 %v1498, %v1499
        %v1501 = vand.u32 %v1500, 4294901760
        %1502 = vmatmul.mubr.f32.gmra.mrb[0].mxu0 %v1501
        %v1503 = vpop.f32.mrb[0].mxu0
        %v1504 = vadd.f32 0.0, %v1503
        %v1505 = vpop.f32.mrb[0].mxu0
        %1506 = vmatprep.mubr.f32.mxu0 0.0
        %v1507 = vand.u32 %v792, 4294901760
        %v1508 = vsub.f32 %v792, %v1507
        %v1509 = vand.u32 %v1508, 4294901760
        %v1510 = vsub.f32 %v1508, %v1509
        %v1511 = vand.u32 %v1510, 4294901760
        %1512 = vmatmul.mubr.f32.gmra.mrb[0].mxu0 %v1511
        %v1513 = vpop.f32.mrb[0].mxu0
        %v1514 = vadd.f32 0.0, %v1513
        %v1515 = vpop.f32.mrb[0].mxu0
        %1516 = vmatprep.mubr.f32.mxu0 0.0
        %v1517 = vand.u32 %v795, 4294901760
        %v1518 = vsub.f32 %v795, %v1517
        %v1519 = vand.u32 %v1518, 4294901760
        %v1520 = vsub.f32 %v1518, %v1519
        %v1521 = vand.u32 %v1520, 4294901760
        %1522 = vmatmul.mubr.f32.gmra.mrb[0].mxu0 %v1521
        %v1523 = vpop.f32.mrb[0].mxu0
        %v1524 = vadd.f32 0.0, %v1523
        %v1525 = vpop.f32.mrb[0].mxu0
        %1526 = vmatprep.mubr.f32.mxu0 0.0
        %v1527 = vand.u32 %v798, 4294901760
        %v1528 = vsub.f32 %v798, %v1527
        %v1529 = vand.u32 %v1528, 4294901760
        %v1530 = vsub.f32 %v1528, %v1529
        %v1531 = vand.u32 %v1530, 4294901760
        %1532 = vmatmul.mubr.f32.gmra.mrb[0].mxu0 %v1531
        %v1533 = vpop.f32.mrb[0].mxu0
        %v1534 = vadd.f32 0.0, %v1533
        %v1535 = vpop.f32.mrb[0].mxu0
        %1536 = vmatprep.mubr.f32.mxu0 0.0
        %v1537 = vand.u32 %v801, 4294901760
        %v1538 = vsub.f32 %v801, %v1537
        %v1539 = vand.u32 %v1538, 4294901760
        %v1540 = vsub.f32 %v1538, %v1539
        %v1541 = vand.u32 %v1540, 4294901760
        %1542 = vmatmul.mubr.f32.gmra.mrb[0].mxu0 %v1541
        %v1543 = vpop.f32.mrb[0].mxu0
        %v1544 = vadd.f32 0.0, %v1543
        %v1545 = vpop.f32.mrb[0].mxu0
        %1546 = vmatprep.mubr.f32.mxu0 0.0
        %v1547 = vand.u32 %v804, 4294901760
        %v1548 = vsub.f32 %v804, %v1547
        %v1549 = vand.u32 %v1548, 4294901760
        %v1550 = vsub.f32 %v1548, %v1549
        %v1551 = vand.u32 %v1550, 4294901760
        %1552 = vmatmul.mubr.f32.gmra.mrb[0].mxu0 %v1551
        %v1553 = vpop.f32.mrb[0].mxu0
        %v1554 = vadd.f32 0.0, %v1553
        %v1555 = vpop.f32.mrb[0].mxu0
        %1556 = vmatprep.mubr.f32.mxu0 0.0
        %v1557 = vand.u32 %v807, 4294901760
        %v1558 = vsub.f32 %v807, %v1557
        %v1559 = vand.u32 %v1558, 4294901760
        %v1560 = vsub.f32 %v1558, %v1559
        %v1561 = vand.u32 %v1560, 4294901760
        %1562 = vmatmul.mubr.f32.gmra.mrb[0].mxu0 %v1561
        %v1563 = vpop.f32.mrb[0].mxu0
        %v1564 = vadd.f32 0.0, %v1563
        %v1565 = vpop.f32.mrb[0].mxu0
        %1566 = vmatprep.mubr.f32.mxu0 0.0
        %v1567 = vand.u32 %v810, 4294901760
        %v1568 = vsub.f32 %v810, %v1567
        %v1569 = vand.u32 %v1568, 4294901760
        %v1570 = vsub.f32 %v1568, %v1569
        %v1571 = vand.u32 %v1570, 4294901760
        %1572 = vmatmul.mubr.f32.gmra.mrb[0].mxu0 %v1571
        %v1573 = vpop.f32.mrb[0].mxu0
        %v1574 = vadd.f32 0.0, %v1573
        %v1575 = vpop.f32.mrb[0].mxu0
        %1576 = vmatprep.mubr.f32.mxu0 0.0
        %v1577 = vand.u32 %v813, 4294901760
        %v1578 = vsub.f32 %v813, %v1577
        %v1579 = vand.u32 %v1578, 4294901760
        %v1580 = vsub.f32 %v1578, %v1579
        %v1581 = vand.u32 %v1580, 4294901760
        %1582 = vmatmul.mubr.f32.gmra.mrb[0].mxu0 %v1581
        %v1583 = vpop.f32.mrb[0].mxu0
        %v1584 = vadd.f32 0.0, %v1583
        %v1585 = vpop.f32.mrb[0].mxu0
        %1586 = vmatprep.mubr.f32.mxu0 0.0
        %v1587 = vand.u32 %v816, 4294901760
        %v1588 = vsub.f32 %v816, %v1587
        %v1589 = vand.u32 %v1588, 4294901760
        %v1590 = vsub.f32 %v1588, %v1589
        %v1591 = vand.u32 %v1590, 4294901760
        %1592 = vmatmul.mubr.f32.gmra.mrb[0].mxu0 %v1591
        %v1593 = vpop.f32.mrb[0].mxu0
        %v1594 = vadd.f32 0.0, %v1593
        %v1595 = vpop.f32.mrb[0].mxu0
        %1596 = vmatprep.mubr.f32.mxu0 0.0
        %v1597 = vand.u32 %v819, 4294901760
        %v1598 = vsub.f32 %v819, %v1597
        %v1599 = vand.u32 %v1598, 4294901760
        %v1600 = vsub.f32 %v1598, %v1599
        %v1601 = vand.u32 %v1600, 4294901760
        %1602 = vmatmul.mubr.f32.gmra.mrb[0].mxu0 %v1601
        %v1603 = vpop.f32.mrb[0].mxu0
        %v1604 = vadd.f32 0.0, %v1603
        %v1605 = vpop.f32.mrb[0].mxu0
        %1606 = vmatprep.mubr.f32.mxu0 0.0
        %v1607 = vand.u32 %v822, 4294901760
        %v1608 = vsub.f32 %v822, %v1607
        %v1609 = vand.u32 %v1608, 4294901760
        %v1610 = vsub.f32 %v1608, %v1609
        %v1611 = vand.u32 %v1610, 4294901760
        %1612 = vmatmul.mubr.f32.gmra.mrb[0].mxu0 %v1611
        %v1613 = vpop.f32.mrb[0].mxu0
        %v1614 = vadd.f32 0.0, %v1613
        %v1615 = vpop.f32.mrb[0].mxu0
        %1616 = vmatprep.mubr.f32.mxu0 0.0
        %v1617 = vand.u32 %v825, 4294901760
        %v1618 = vsub.f32 %v825, %v1617
        %v1619 = vand.u32 %v1618, 4294901760
        %v1620 = vsub.f32 %v1618, %v1619
        %v1621 = vand.u32 %v1620, 4294901760
        %1622 = vmatmul.mubr.f32.gmra.mrb[0].mxu0 %v1621
        %v1623 = vpop.f32.mrb[0].mxu0
        %v1624 = vadd.f32 0.0, %v1623
        %v1625 = vpop.f32.mrb[0].mxu0
        %1626 = vmatprep.mubr.f32.mxu0 0.0
        %v1627 = vand.u32 %v828, 4294901760
        %v1628 = vsub.f32 %v828, %v1627
        %v1629 = vand.u32 %v1628, 4294901760
        %v1630 = vsub.f32 %v1628, %v1629
        %v1631 = vand.u32 %v1630, 4294901760
        %1632 = vmatmul.mubr.f32.gmra.mrb[0].mxu0 %v1631
        %v1633 = vpop.f32.mrb[0].mxu0
        %v1634 = vadd.f32 0.0, %v1633
        %v1635 = vpop.f32.mrb[0].mxu0
        %1636 = vmatprep.mubr.f32.mxu0 0.0
        %v1637 = vand.u32 %v831, 4294901760
        %v1638 = vsub.f32 %v831, %v1637
        %v1639 = vand.u32 %v1638, 4294901760
        %v1640 = vsub.f32 %v1638, %v1639
        %v1641 = vand.u32 %v1640, 4294901760
        %1642 = vmatmul.mubr.f32.gmra.mrb[0].mxu0 %v1641
        %v1643 = vpop.f32.mrb[0].mxu0
        %v1644 = vadd.f32 0.0, %v1643
        %v1645 = vpop.f32.mrb[0].mxu0
        %1646 = vmatprep.mubr.f32.mxu0 0.0
        %v1647 = vand.u32 %v834, 4294901760
        %v1648 = vsub.f32 %v834, %v1647
        %v1649 = vand.u32 %v1648, 4294901760
        %v1650 = vsub.f32 %v1648, %v1649
        %v1651 = vand.u32 %v1650, 4294901760
        %1652 = vmatmul.mubr.f32.gmra.mrb[0].mxu0 %v1651
        %v1653 = vpop.f32.mrb[0].mxu0
        %v1654 = vadd.f32 0.0, %v1653
        %v1655 = vpop.f32.mrb[0].mxu0
        %1656 = vmatprep.mubr.f32.mxu0 0.0
        %v1657 = vand.u32 %v837, 4294901760
        %v1658 = vsub.f32 %v837, %v1657
        %v1659 = vand.u32 %v1658, 4294901760
        %v1660 = vsub.f32 %v1658, %v1659
        %v1661 = vand.u32 %v1660, 4294901760
        %1662 = vmatmul.mubr.f32.gmra.mrb[0].mxu0 %v1661
        %v1663 = vpop.f32.mrb[0].mxu0
        %v1664 = vadd.f32 0.0, %v1663
        %v1665 = vpop.f32.mrb[0].mxu0
        %1666 = vmatprep.mubr.f32.mxu0 0.0
        %v1667 = vand.u32 %v840, 4294901760
        %v1668 = vsub.f32 %v840, %v1667
        %v1669 = vand.u32 %v1668, 4294901760
        %v1670 = vsub.f32 %v1668, %v1669
        %v1671 = vand.u32 %v1670, 4294901760
        %1672 = vmatmul.mubr.f32.gmra.mrb[0].mxu0 %v1671
        %v1673 = vpop.f32.mrb[0].mxu0
        %v1674 = vadd.f32 0.0, %v1673
        %v1675 = vpop.f32.mrb[0].mxu0
        %1676 = vmatprep.mubr.f32.mxu0 0.0
        %v1677 = vand.u32 %v843, 4294901760
        %v1678 = vsub.f32 %v843, %v1677
        %v1679 = vand.u32 %v1678, 4294901760
        %v1680 = vsub.f32 %v1678, %v1679
        %v1681 = vand.u32 %v1680, 4294901760
        %1682 = vmatmul.mubr.f32.gmra.mrb[0].mxu0 %v1681
        %v1683 = vpop.f32.mrb[0].mxu0
        %v1684 = vadd.f32 0.0, %v1683
        %v1685 = vpop.f32.mrb[0].mxu0
        %1686 = vmatprep.mubr.f32.mxu0 0.0
        %v1687 = vand.u32 %v846, 4294901760
        %v1688 = vsub.f32 %v846, %v1687
        %v1689 = vand.u32 %v1688, 4294901760
        %v1690 = vsub.f32 %v1688, %v1689
        %v1691 = vand.u32 %v1690, 4294901760
        %1692 = vmatmul.mubr.f32.gmra.mrb[0].mxu0 %v1691
        %v1693 = vpop.f32.mrb[0].mxu0
        %v1694 = vadd.f32 0.0, %v1693
        %v1695 = vpop.f32.mrb[0].mxu0
        %1696 = vmatprep.mubr.f32.mxu0 0.0
        %v1697 = vand.u32 %v849, 4294901760
        %v1698 = vsub.f32 %v849, %v1697
        %v1699 = vand.u32 %v1698, 4294901760
        %v1700 = vsub.f32 %v1698, %v1699
        %v1701 = vand.u32 %v1700, 4294901760
        %1702 = vmatmul.mubr.f32.gmra.mrb[0].mxu0 %v1701
        %v1703 = vpop.f32.mrb[0].mxu0
        %v1704 = vadd.f32 0.0, %v1703
        %v1705 = vpop.f32.mrb[0].mxu0
        %1706 = vmatprep.mubr.f32.mxu0 0.0
        %v1707 = vand.u32 %v852, 4294901760
        %v1708 = vsub.f32 %v852, %v1707
        %v1709 = vand.u32 %v1708, 4294901760
        %v1710 = vsub.f32 %v1708, %v1709
        %v1711 = vand.u32 %v1710, 4294901760
        %1712 = vmatmul.mubr.f32.gmra.mrb[0].mxu0 %v1711
        %v1713 = vpop.f32.mrb[0].mxu0
        %v1714 = vadd.f32 0.0, %v1713
        %v1715 = vpop.f32.mrb[0].mxu0
        %1716 = vmatprep.mubr.f32.mxu0 0.0
        %v1717 = vand.u32 %v855, 4294901760
        %v1718 = vsub.f32 %v855, %v1717
        %v1719 = vand.u32 %v1718, 4294901760
        %v1720 = vsub.f32 %v1718, %v1719
        %v1721 = vand.u32 %v1720, 4294901760
        %1722 = vmatmul.mubr.f32.gmra.mrb[0].mxu0 %v1721
        %v1723 = vpop.f32.mrb[0].mxu0
        %v1724 = vadd.f32 0.0, %v1723
        %v1725 = vpop.f32.mrb[0].mxu0
        %1726 = vmatprep.mubr.f32.mxu0 0.0
        %v1727 = vand.u32 %v858, 4294901760
        %v1728 = vsub.f32 %v858, %v1727
        %v1729 = vand.u32 %v1728, 4294901760
        %v1730 = vsub.f32 %v1728, %v1729
        %v1731 = vand.u32 %v1730, 4294901760
        %1732 = vmatmul.mubr.f32.gmra.mrb[0].mxu0 %v1731
        %v1733 = vpop.f32.mrb[0].mxu0
        %v1734 = vadd.f32 0.0, %v1733
        %v1735 = vpop.f32.mrb[0].mxu0
        %1736 = vmatprep.mubr.f32.mxu0 0.0
        %v1737 = vand.u32 %v861, 4294901760
        %v1738 = vsub.f32 %v861, %v1737
        %v1739 = vand.u32 %v1738, 4294901760
        %v1740 = vsub.f32 %v1738, %v1739
        %v1741 = vand.u32 %v1740, 4294901760
        %1742 = vmatmul.mubr.f32.gmra.mrb[0].mxu0 %v1741
        %v1743 = vpop.f32.mrb[0].mxu0
        %v1744 = vadd.f32 0.0, %v1743
        %v1745 = vpop.f32.mrb[0].mxu0
        %1746 = vmatprep.mubr.f32.mxu0 0.0
        %v1747 = vand.u32 %v864, 4294901760
        %v1748 = vsub.f32 %v864, %v1747
        %v1749 = vand.u32 %v1748, 4294901760
        %v1750 = vsub.f32 %v1748, %v1749
        %v1751 = vand.u32 %v1750, 4294901760
        %1752 = vmatmul.mubr.f32.gmra.mrb[0].mxu0 %v1751
        %v1753 = vpop.f32.mrb[0].mxu0
        %v1754 = vadd.f32 0.0, %v1753
        %v1755 = vpop.f32.mrb[0].mxu0
        %1756 = vmatprep.mubr.f32.mxu0 0.0
        %v1757 = vand.u32 %v867, 4294901760
        %v1758 = vsub.f32 %v867, %v1757
        %v1759 = vand.u32 %v1758, 4294901760
        %v1760 = vsub.f32 %v1758, %v1759
        %v1761 = vand.u32 %v1760, 4294901760
        %1762 = vmatmul.mubr.f32.gmra.mrb[0].mxu0 %v1761
        %v1763 = vpop.f32.mrb[0].mxu0
        %v1764 = vadd.f32 0.0, %v1763
        %v1765 = vpop.f32.mrb[0].mxu0
        %1766 = vmatprep.mubr.f32.mxu0 0.0
        %v1767 = vand.u32 %v870, 4294901760
        %v1768 = vsub.f32 %v870, %v1767
        %v1769 = vand.u32 %v1768, 4294901760
        %v1770 = vsub.f32 %v1768, %v1769
        %v1771 = vand.u32 %v1770, 4294901760
        %1772 = vmatmul.mubr.f32.gmra.mrb[0].mxu0 %v1771
        %v1773 = vpop.f32.mrb[0].mxu0
        %v1774 = vadd.f32 0.0, %v1773
        %v1775 = vpop.f32.mrb[0].mxu0
        %1776 = vmatprep.mubr.f32.mxu0 0.0
        %v1777 = vand.u32 %v873, 4294901760
        %v1778 = vsub.f32 %v873, %v1777
        %v1779 = vand.u32 %v1778, 4294901760
        %v1780 = vsub.f32 %v1778, %v1779
        %v1781 = vand.u32 %v1780, 4294901760
        %1782 = vmatmul.mubr.f32.gmra.mrb[0].mxu0 %v1781
        %v1783 = vpop.f32.mrb[0].mxu0
        %v1784 = vadd.f32 0.0, %v1783
        %v1785 = vpop.f32.mrb[0].mxu0
        %1786 = vmatprep.mubr.f32.mxu0 0.0
        %v1787 = vand.u32 %v876, 4294901760
        %v1788 = vsub.f32 %v876, %v1787
        %v1789 = vand.u32 %v1788, 4294901760
        %v1790 = vsub.f32 %v1788, %v1789
        %v1791 = vand.u32 %v1790, 4294901760
        %1792 = vmatmul.mubr.f32.gmra.mrb[0].mxu0 %v1791
        %v1793 = vpop.f32.mrb[0].mxu0
        %v1794 = vadd.f32 0.0, %v1793
        %v1795 = vpop.f32.mrb[0].mxu0
        %1796 = vmatprep.mubr.f32.mxu0 0.0
        %v1797 = vand.u32 %v879, 4294901760
        %v1798 = vsub.f32 %v879, %v1797
        %v1799 = vand.u32 %v1798, 4294901760
        %v1800 = vsub.f32 %v1798, %v1799
        %v1801 = vand.u32 %v1800, 4294901760
        %1802 = vmatmul.mubr.f32.gmra.mrb[0].mxu0 %v1801
        %v1803 = vpop.f32.mrb[0].mxu0
        %v1804 = vadd.f32 0.0, %v1803
        %v1805 = vpop.f32.mrb[0].mxu0
        %1806 = vmatprep.mubr.f32.mxu0 0.0
        %v1807 = vand.u32 %v882, 4294901760
        %v1808 = vsub.f32 %v882, %v1807
        %v1809 = vand.u32 %v1808, 4294901760
        %v1810 = vsub.f32 %v1808, %v1809
        %v1811 = vand.u32 %v1810, 4294901760
        %1812 = vmatmul.mubr.f32.gmra.mrb[0].mxu0 %v1811
        %v1813 = vpop.f32.mrb[0].mxu0
        %v1814 = vadd.f32 0.0, %v1813
        %v1815 = vpop.f32.mrb[0].mxu0
        %1816 = vmatprep.mubr.f32.mxu0 0.0
        %v1817 = vand.u32 %v885, 4294901760
        %v1818 = vsub.f32 %v885, %v1817
        %v1819 = vand.u32 %v1818, 4294901760
        %v1820 = vsub.f32 %v1818, %v1819
        %v1821 = vand.u32 %v1820, 4294901760
        %1822 = vmatmul.mubr.f32.gmra.mrb[0].mxu0 %v1821
        %v1823 = vpop.f32.mrb[0].mxu0
        %v1824 = vadd.f32 0.0, %v1823
        %v1825 = vpop.f32.mrb[0].mxu0
        %1826 = vmatprep.mubr.f32.mxu0 0.0
        %v1827 = vand.u32 %v888, 4294901760
        %v1828 = vsub.f32 %v888, %v1827
        %v1829 = vand.u32 %v1828, 4294901760
        %v1830 = vsub.f32 %v1828, %v1829
        %v1831 = vand.u32 %v1830, 4294901760
        %1832 = vmatmul.mubr.f32.gmra.mrb[0].mxu0 %v1831
        %v1833 = vpop.f32.mrb[0].mxu0
        %v1834 = vadd.f32 0.0, %v1833
        %v1835 = vpop.f32.mrb[0].mxu0
        %1836 = vmatprep.mubr.f32.mxu0 0.0
        %v1837 = vand.u32 %v891, 4294901760
        %v1838 = vsub.f32 %v891, %v1837
        %v1839 = vand.u32 %v1838, 4294901760
        %v1840 = vsub.f32 %v1838, %v1839
        %v1841 = vand.u32 %v1840, 4294901760
        %1842 = vmatmul.mubr.f32.gmra.mrb[0].mxu0 %v1841
        %v1843 = vpop.f32.mrb[0].mxu0
        %v1844 = vadd.f32 0.0, %v1843
        %v1845 = vpop.f32.mrb[0].mxu0
        %1846 = vmatprep.mubr.f32.mxu0 0.0
        %v1847 = vand.u32 %v894, 4294901760
        %v1848 = vsub.f32 %v894, %v1847
        %v1849 = vand.u32 %v1848, 4294901760
        %v1850 = vsub.f32 %v1848, %v1849
        %v1851 = vand.u32 %v1850, 4294901760
        %1852 = vmatmul.mubr.f32.gmra.mrb[0].mxu0 %v1851
        %v1853 = vpop.f32.mrb[0].mxu0
        %v1854 = vadd.f32 0.0, %v1853
        %v1855 = vpop.f32.mrb[0].mxu0
        %1856 = vmatprep.mubr.f32.mxu0 0.0
        %v1857 = vand.u32 %v897, 4294901760
        %v1858 = vsub.f32 %v897, %v1857
        %v1859 = vand.u32 %v1858, 4294901760
        %v1860 = vsub.f32 %v1858, %v1859
        %v1861 = vand.u32 %v1860, 4294901760
        %1862 = vmatmul.mubr.f32.gmra.mrb[0].mxu0 %v1861
        %v1863 = vpop.f32.mrb[0].mxu0
        %v1864 = vadd.f32 0.0, %v1863
        %v1865 = vpop.f32.mrb[0].mxu0
        %1866 = vmatprep.mubr.f32.mxu0 0.0
        %v1867 = vand.u32 %v900, 4294901760
        %v1868 = vsub.f32 %v900, %v1867
        %v1869 = vand.u32 %v1868, 4294901760
        %v1870 = vsub.f32 %v1868, %v1869
        %v1871 = vand.u32 %v1870, 4294901760
        %1872 = vmatmul.mubr.f32.gmra.mrb[0].mxu0 %v1871
        %v1873 = vpop.f32.mrb[0].mxu0
        %v1874 = vadd.f32 0.0, %v1873
        %v1875 = vpop.f32.mrb[0].mxu0
        %1876 = vmatprep.mubr.f32.mxu0 0.0
        %v1877 = vand.u32 %v903, 4294901760
        %v1878 = vsub.f32 %v903, %v1877
        %v1879 = vand.u32 %v1878, 4294901760
        %v1880 = vsub.f32 %v1878, %v1879
        %v1881 = vand.u32 %v1880, 4294901760
        %1882 = vmatmul.mubr.f32.gmra.mrb[0].mxu0 %v1881
        %v1883 = vpop.f32.mrb[0].mxu0
        %v1884 = vadd.f32 0.0, %v1883
        %v1885 = vpop.f32.mrb[0].mxu0
        %1886 = vmatprep.mubr.f32.mxu0 0.0
        %v1887 = vand.u32 %v906, 4294901760
        %v1888 = vsub.f32 %v906, %v1887
        %v1889 = vand.u32 %v1888, 4294901760
        %v1890 = vsub.f32 %v1888, %v1889
        %v1891 = vand.u32 %v1890, 4294901760
        %1892 = vmatmul.mubr.f32.gmra.mrb[0].mxu0 %v1891
        %v1893 = vpop.f32.mrb[0].mxu0
        %v1894 = vadd.f32 0.0, %v1893
        %v1895 = vpop.f32.mrb[0].mxu0
        %1896 = vmatprep.mubr.f32.mxu0 0.0
        %v1897 = vand.u32 %v909, 4294901760
        %v1898 = vsub.f32 %v909, %v1897
        %v1899 = vand.u32 %v1898, 4294901760
        %v1900 = vsub.f32 %v1898, %v1899
        %v1901 = vand.u32 %v1900, 4294901760
        %1902 = vmatmul.mubr.f32.gmra.mrb[0].mxu0 %v1901
        %v1903 = vpop.f32.mrb[0].mxu0
        %v1904 = vadd.f32 0.0, %v1903
        %v1905 = vpop.f32.mrb[0].mxu0
        %1906 = vmatprep.mubr.f32.mxu0 0.0
        %v1907 = vand.u32 %v912, 4294901760
        %v1908 = vsub.f32 %v912, %v1907
        %v1909 = vand.u32 %v1908, 4294901760
        %v1910 = vsub.f32 %v1908, %v1909
        %v1911 = vand.u32 %v1910, 4294901760
        %1912 = vmatmul.mubr.f32.gmra.mrb[0].mxu0 %v1911
        %v1913 = vpop.f32.mrb[0].mxu0
        %v1914 = vadd.f32 0.0, %v1913
        %v1915 = vpop.f32.mrb[0].mxu0
        %1916 = vmatprep.mubr.f32.mxu0 0.0
        %v1917 = vand.u32 %v915, 4294901760
        %v1918 = vsub.f32 %v915, %v1917
        %v1919 = vand.u32 %v1918, 4294901760
        %v1920 = vsub.f32 %v1918, %v1919
        %v1921 = vand.u32 %v1920, 4294901760
        %1922 = vmatmul.mubr.f32.gmra.mrb[0].mxu0 %v1921
        %v1923 = vpop.f32.mrb[0].mxu0
        %v1924 = vadd.f32 0.0, %v1923
        %v1925 = vpop.f32.mrb[0].mxu0
        %1926 = vmatprep.mubr.f32.mxu0 0.0
        %v1927 = vand.u32 %v918, 4294901760
        %v1928 = vsub.f32 %v918, %v1927
        %v1929 = vand.u32 %v1928, 4294901760
        %v1930 = vsub.f32 %v1928, %v1929
        %v1931 = vand.u32 %v1930, 4294901760
        %1932 = vmatmul.mubr.f32.gmra.mrb[0].mxu0 %v1931
        %v1933 = vpop.f32.mrb[0].mxu0
        %v1934 = vadd.f32 0.0, %v1933
        %v1935 = vpop.f32.mrb[0].mxu0
        %1936 = vmatprep.mubr.f32.mxu0 0.0
        %v1937 = vand.u32 %v921, 4294901760
        %v1938 = vsub.f32 %v921, %v1937
        %v1939 = vand.u32 %v1938, 4294901760
        %v1940 = vsub.f32 %v1938, %v1939
        %v1941 = vand.u32 %v1940, 4294901760
        %1942 = vmatmul.mubr.f32.gmra.mrb[0].mxu0 %v1941
        %v1943 = vpop.f32.mrb[0].mxu0
        %v1944 = vadd.f32 0.0, %v1943
        %v1945 = vpop.f32.mrb[0].mxu0
        %1946 = vmatprep.mubr.f32.mxu0 0.0
        %v1947 = vand.u32 %v924, 4294901760
        %v1948 = vsub.f32 %v924, %v1947
        %v1949 = vand.u32 %v1948, 4294901760
        %v1950 = vsub.f32 %v1948, %v1949
        %v1951 = vand.u32 %v1950, 4294901760
        %1952 = vmatmul.mubr.f32.gmra.mrb[0].mxu0 %v1951
        %v1953 = vpop.f32.mrb[0].mxu0
        %v1954 = vadd.f32 0.0, %v1953
        %v1955 = vpop.f32.mrb[0].mxu0
        %1956 = vmatprep.mubr.f32.mxu0 0.0
        %v1957 = vand.u32 %v927, 4294901760
        %v1958 = vsub.f32 %v927, %v1957
        %v1959 = vand.u32 %v1958, 4294901760
        %v1960 = vsub.f32 %v1958, %v1959
        %v1961 = vand.u32 %v1960, 4294901760
        %1962 = vmatmul.mubr.f32.gmra.mrb[0].mxu0 %v1961
        %v1963 = vpop.f32.mrb[0].mxu0
        %v1964 = vadd.f32 0.0, %v1963
        %v1965 = vpop.f32.mrb[0].mxu0
        %1966 = vmatprep.mubr.f32.mxu0 0.0
        %v1967 = vand.u32 %v930, 4294901760
        %v1968 = vsub.f32 %v930, %v1967
        %v1969 = vand.u32 %v1968, 4294901760
        %v1970 = vsub.f32 %v1968, %v1969
        %v1971 = vand.u32 %v1970, 4294901760
        %1972 = vmatmul.mubr.f32.gmra.mrb[0].mxu0 %v1971
        %v1973 = vpop.f32.mrb[0].mxu0
        %v1974 = vadd.f32 0.0, %v1973
        %v1975 = vpop.f32.mrb[0].mxu0
        %1976 = vmatprep.mubr.f32.mxu0 0.0
        %v1977 = vand.u32 %v933, 4294901760
        %v1978 = vsub.f32 %v933, %v1977
        %v1979 = vand.u32 %v1978, 4294901760
        %v1980 = vsub.f32 %v1978, %v1979
        %v1981 = vand.u32 %v1980, 4294901760
        %1982 = vmatmul.mubr.f32.gmra.mrb[0].mxu0 %v1981
        %v1983 = vpop.f32.mrb[0].mxu0
        %v1984 = vadd.f32 0.0, %v1983
        %v1985 = vpop.f32.mrb[0].mxu0
        %1986 = vmatprep.mubr.f32.mxu0 0.0
        %v1987 = vand.u32 %v936, 4294901760
        %v1988 = vsub.f32 %v936, %v1987
        %v1989 = vand.u32 %v1988, 4294901760
        %v1990 = vsub.f32 %v1988, %v1989
        %v1991 = vand.u32 %v1990, 4294901760
        %1992 = vmatmul.mubr.f32.gmra.mrb[0].mxu0 %v1991
        %v1993 = vpop.f32.mrb[0].mxu0
        %v1994 = vadd.f32 0.0, %v1993
        %v1995 = vpop.f32.mrb[0].mxu0
        %1996 = vmatprep.mubr.f32.mxu0 0.0
        %v1997 = vand.u32 %v939, 4294901760
        %v1998 = vsub.f32 %v939, %v1997
        %v1999 = vand.u32 %v1998, 4294901760
        %v2000 = vsub.f32 %v1998, %v1999
        %v2001 = vand.u32 %v2000, 4294901760
        %2002 = vmatmul.mubr.f32.gmra.mrb[0].mxu0 %v2001
        %v2003 = vpop.f32.mrb[0].mxu0
        %v2004 = vadd.f32 0.0, %v2003
        %v2005 = vpop.f32.mrb[0].mxu0
        %2006 = vmatprep.mubr.f32.mxu0 0.0
        %v2007 = vand.u32 %v942, 4294901760
        %v2008 = vsub.f32 %v942, %v2007
        %v2009 = vand.u32 %v2008, 4294901760
        %v2010 = vsub.f32 %v2008, %v2009
        %v2011 = vand.u32 %v2010, 4294901760
        %2012 = vmatmul.mubr.f32.gmra.mrb[0].mxu0 %v2011
        %v2013 = vpop.f32.mrb[0].mxu0
        %v2014 = vadd.f32 0.0, %v2013
        %v2015 = vpop.f32.mrb[0].mxu0
        %2016 = vmatprep.mubr.f32.mxu0 0.0
        %v2017 = vand.u32 %v945, 4294901760
        %v2018 = vsub.f32 %v945, %v2017
        %v2019 = vand.u32 %v2018, 4294901760
        %v2020 = vsub.f32 %v2018, %v2019
        %v2021 = vand.u32 %v2020, 4294901760
        %2022 = vmatmul.mubr.f32.gmra.mrb[0].mxu0 %v2021
        %v2023 = vpop.f32.mrb[0].mxu0
        %v2024 = vadd.f32 0.0, %v2023
        %v2025 = vpop.f32.mrb[0].mxu0
        %2026 = vmatprep.mubr.f32.mxu0 0.0
        %v2027 = vand.u32 %v948, 4294901760
        %v2028 = vsub.f32 %v948, %v2027
        %v2029 = vand.u32 %v2028, 4294901760
        %v2030 = vsub.f32 %v2028, %v2029
        %v2031 = vand.u32 %v2030, 4294901760
        %2032 = vmatmul.mubr.f32.gmra.mrb[0].mxu0 %v2031
        %v2033 = vpop.f32.mrb[0].mxu0
        %v2034 = vadd.f32 0.0, %v2033
        %v2035 = vpop.f32.mrb[0].mxu0
        %2036 = vmatprep.mubr.f32.mxu0 0.0
        %v2037 = vand.u32 %v951, 4294901760
        %v2038 = vsub.f32 %v951, %v2037
        %v2039 = vand.u32 %v2038, 4294901760
        %v2040 = vsub.f32 %v2038, %v2039
        %v2041 = vand.u32 %v2040, 4294901760
        %2042 = vmatmul.mubr.f32.gmra.mrb[0].mxu0 %v2041
        %v2043 = vpop.f32.mrb[0].mxu0
        %v2044 = vadd.f32 0.0, %v2043
        %v2045 = vpop.f32.mrb[0].mxu0
        %2046 = vmatprep.mubr.f32.mxu0 0.0
        %v2047 = vand.u32 %v954, 4294901760
        %v2048 = vsub.f32 %v954, %v2047
        %v2049 = vand.u32 %v2048, 4294901760
        %v2050 = vsub.f32 %v2048, %v2049
        %v2051 = vand.u32 %v2050, 4294901760
        %2052 = vmatmul.mubr.f32.gmra.mrb[0].mxu0 %v2051
        %v2053 = vpop.f32.mrb[0].mxu0
        %v2054 = vadd.f32 0.0, %v2053
        %v2055 = vpop.f32.mrb[0].mxu0
        %2056 = vmatprep.mubr.f32.mxu0 0.0
        %v2057 = vand.u32 %v957, 4294901760
        %v2058 = vsub.f32 %v957, %v2057
        %v2059 = vand.u32 %v2058, 4294901760
        %v2060 = vsub.f32 %v2058, %v2059
        %v2061 = vand.u32 %v2060, 4294901760
        %2062 = vmatmul.mubr.f32.gmra.mrb[0].mxu0 %v2061
        %v2063 = vpop.f32.mrb[0].mxu0
        %v2064 = vadd.f32 0.0, %v2063
        %v2065 = vpop.f32.mrb[0].mxu0
        %2066 = vmatprep.mubr.f32.mxu0 0.0
        %v2067 = vand.u32 %v960, 4294901760
        %v2068 = vsub.f32 %v960, %v2067
        %v2069 = vand.u32 %v2068, 4294901760
        %v2070 = vsub.f32 %v2068, %v2069
        %v2071 = vand.u32 %v2070, 4294901760
        %2072 = vmatmul.mubr.f32.gmra.mrb[0].mxu0 %v2071
        %v2073 = vpop.f32.mrb[0].mxu0
        %v2074 = vadd.f32 0.0, %v2073
        %v2075 = vpop.f32.mrb[0].mxu0
        %2076 = vmatprep.mubr.f32.mxu0 0.0
        %v2077 = vand.u32 %v963, 4294901760
        %v2078 = vsub.f32 %v963, %v2077
        %v2079 = vand.u32 %v2078, 4294901760
        %v2080 = vsub.f32 %v2078, %v2079
        %v2081 = vand.u32 %v2080, 4294901760
        %2082 = vmatmul.mubr.f32.gmra.mrb[0].mxu0 %v2081
        %v2083 = vpop.f32.mrb[0].mxu0
        %v2084 = vadd.f32 0.0, %v2083
        %v2085 = vpop.f32.mrb[0].mxu0
        %2086 = vmatprep.mubr.f32.mxu0 0.0
        %v2087 = vand.u32 %v966, 4294901760
        %v2088 = vsub.f32 %v966, %v2087
        %v2089 = vand.u32 %v2088, 4294901760
        %v2090 = vsub.f32 %v2088, %v2089
        %v2091 = vand.u32 %v2090, 4294901760
        %2092 = vmatmul.mubr.f32.gmra.mrb[0].mxu0 %v2091
        %v2093 = vpop.f32.mrb[0].mxu0
        %v2094 = vadd.f32 0.0, %v2093
        %v2095 = vpop.f32.mrb[0].mxu0
        %2096 = vmatprep.mubr.f32.mxu0 0.0
        %v2097 = vand.u32 %v969, 4294901760
        %v2098 = vsub.f32 %v969, %v2097
        %v2099 = vand.u32 %v2098, 4294901760
        %v2100 = vsub.f32 %v2098, %v2099
        %v2101 = vand.u32 %v2100, 4294901760
        %2102 = vmatmul.mubr.f32.gmra.mrb[0].mxu0 %v2101
        %v2103 = vpop.f32.mrb[0].mxu0
        %v2104 = vadd.f32 0.0, %v2103
        %v2105 = vpop.f32.mrb[0].mxu0
        %2106 = vmatprep.mubr.f32.mxu0 0.0
        %v2107 = vand.u32 %v972, 4294901760
        %v2108 = vsub.f32 %v972, %v2107
        %v2109 = vand.u32 %v2108, 4294901760
        %v2110 = vsub.f32 %v2108, %v2109
        %v2111 = vand.u32 %v2110, 4294901760
        %2112 = vmatmul.mubr.f32.gmra.mrb[0].mxu0 %v2111
        %v2113 = vpop.f32.mrb[0].mxu0
        %v2114 = vadd.f32 0.0, %v2113
        %v2115 = vpop.f32.mrb[0].mxu0
        %2116 = vmatprep.mubr.f32.mxu0 0.0
        %v2117 = vand.u32 %v975, 4294901760
        %v2118 = vsub.f32 %v975, %v2117
        %v2119 = vand.u32 %v2118, 4294901760
        %v2120 = vsub.f32 %v2118, %v2119
        %v2121 = vand.u32 %v2120, 4294901760
        %2122 = vmatmul.mubr.f32.gmra.mrb[0].mxu0 %v2121
        %v2123 = vpop.f32.mrb[0].mxu0
        %v2124 = vadd.f32 0.0, %v2123
        %v2125 = vpop.f32.mrb[0].mxu0
        %2126 = vmatprep.mubr.f32.mxu0 0.0
        %v2127 = vand.u32 %v978, 4294901760
        %v2128 = vsub.f32 %v978, %v2127
        %v2129 = vand.u32 %v2128, 4294901760
        %v2130 = vsub.f32 %v2128, %v2129
        %v2131 = vand.u32 %v2130, 4294901760
        %2132 = vmatmul.mubr.f32.gmra.mrb[0].mxu0 %v2131
        %v2133 = vpop.f32.mrb[0].mxu0
        %v2134 = vadd.f32 0.0, %v2133
        %v2135 = vpop.f32.mrb[0].mxu0
        %2136 = vmatprep.mubr.f32.mxu0 0.0
        %v2137 = vand.u32 %v981, 4294901760
        %v2138 = vsub.f32 %v981, %v2137
        %v2139 = vand.u32 %v2138, 4294901760
        %v2140 = vsub.f32 %v2138, %v2139
        %v2141 = vand.u32 %v2140, 4294901760
        %2142 = vmatmul.mubr.f32.gmra.mrb[0].mxu0 %v2141
        %v2143 = vpop.f32.mrb[0].mxu0
        %v2144 = vadd.f32 0.0, %v2143
        %v2145 = vpop.f32.mrb[0].mxu0
        %2146 = vmatprep.mubr.f32.mxu0 0.0
        %v2147 = vand.u32 %v984, 4294901760
        %v2148 = vsub.f32 %v984, %v2147
        %v2149 = vand.u32 %v2148, 4294901760
        %v2150 = vsub.f32 %v2148, %v2149
        %v2151 = vand.u32 %v2150, 4294901760
        %2152 = vmatmul.mubr.f32.gmra.mrb[0].mxu0 %v2151
        %v2153 = vpop.f32.mrb[0].mxu0
        %v2154 = vadd.f32 0.0, %v2153
        %v2155 = vpop.f32.mrb[0].mxu0
        %2156 = vmatprep.mubr.f32.mxu0 0.0
        %v2157 = vand.u32 %v987, 4294901760
        %v2158 = vsub.f32 %v987, %v2157
        %v2159 = vand.u32 %v2158, 4294901760
        %v2160 = vsub.f32 %v2158, %v2159
        %v2161 = vand.u32 %v2160, 4294901760
        %2162 = vmatmul.mubr.f32.gmra.mrb[0].mxu0 %v2161
        %v2163 = vpop.f32.mrb[0].mxu0
        %v2164 = vadd.f32 0.0, %v2163
        %v2165 = vpop.f32.mrb[0].mxu0
        %2166 = vmatprep.mubr.f32.mxu0 0.0
        %v2167 = vand.u32 %v990, 4294901760
        %v2168 = vsub.f32 %v990, %v2167
        %v2169 = vand.u32 %v2168, 4294901760
        %v2170 = vsub.f32 %v2168, %v2169
        %v2171 = vand.u32 %v2170, 4294901760
        %2172 = vmatmul.mubr.f32.gmra.mrb[0].mxu0 %v2171
        %v2173 = vpop.f32.mrb[0].mxu0
        %v2174 = vadd.f32 0.0, %v2173
        %v2175 = vpop.f32.mrb[0].mxu0
        %2176 = vmatprep.mubr.f32.mxu0 0.0
        %v2177 = vand.u32 %v993, 4294901760
        %v2178 = vsub.f32 %v993, %v2177
        %v2179 = vand.u32 %v2178, 4294901760
        %v2180 = vsub.f32 %v2178, %v2179
        %v2181 = vand.u32 %v2180, 4294901760
        %2182 = vmatmul.mubr.f32.gmra.mrb[0].mxu0 %v2181
        %v2183 = vpop.f32.mrb[0].mxu0
        %v2184 = vadd.f32 0.0, %v2183
        %v2185 = vpop.f32.mrb[0].mxu0
        %2186 = vmatprep.mubr.f32.mxu0 0.0
        %v2187 = vand.u32 %v996, 4294901760
        %v2188 = vsub.f32 %v996, %v2187
        %v2189 = vand.u32 %v2188, 4294901760
        %v2190 = vsub.f32 %v2188, %v2189
        %v2191 = vand.u32 %v2190, 4294901760
        %2192 = vmatmul.mubr.f32.gmra.mrb[0].mxu0 %v2191
        %v2193 = vpop.f32.mrb[0].mxu0
        %v2194 = vadd.f32 0.0, %v2193
        %v2195 = vpop.f32.mrb[0].mxu0
        %2196 = vmatprep.mubr.f32.mxu0 0.0
        %v2197 = vand.u32 %v999, 4294901760
        %v2198 = vsub.f32 %v999, %v2197
        %v2199 = vand.u32 %v2198, 4294901760
        %v2200 = vsub.f32 %v2198, %v2199
        %v2201 = vand.u32 %v2200, 4294901760
        %2202 = vmatmul.mubr.f32.gmra.mrb[0].mxu0 %v2201
        %v2203 = vpop.f32.mrb[0].mxu0
        %v2204 = vadd.f32 0.0, %v2203
        %v2205 = vpop.f32.mrb[0].mxu0
        %2206 = vmatprep.mubr.f32.mxu0 0.0
        %v2207 = vand.u32 %v1002, 4294901760
        %v2208 = vsub.f32 %v1002, %v2207
        %v2209 = vand.u32 %v2208, 4294901760
        %v2210 = vsub.f32 %v2208, %v2209
        %v2211 = vand.u32 %v2210, 4294901760
        %2212 = vmatmul.mubr.f32.gmra.mrb[0].mxu0 %v2211
        %v2213 = vpop.f32.mrb[0].mxu0
        %v2214 = vadd.f32 0.0, %v2213
        %v2215 = vpop.f32.mrb[0].mxu0
        %2216 = vmatprep.mubr.f32.mxu0 0.0
        %v2217 = vand.u32 %v1005, 4294901760
        %v2218 = vsub.f32 %v1005, %v2217
        %v2219 = vand.u32 %v2218, 4294901760
        %v2220 = vsub.f32 %v2218, %v2219
        %v2221 = vand.u32 %v2220, 4294901760
        %2222 = vmatmul.mubr.f32.gmra.mrb[0].mxu0 %v2221
        %v2223 = vpop.f32.mrb[0].mxu0
        %v2224 = vadd.f32 0.0, %v2223
        %v2225 = vpop.f32.mrb[0].mxu0
        %2226 = vmatprep.mubr.f32.mxu0 0.0
        %v2227 = vand.u32 %v1008, 4294901760
        %v2228 = vsub.f32 %v1008, %v2227
        %v2229 = vand.u32 %v2228, 4294901760
        %v2230 = vsub.f32 %v2228, %v2229
        %v2231 = vand.u32 %v2230, 4294901760
        %2232 = vmatmul.mubr.f32.gmra.mrb[0].mxu0 %v2231
        %v2233 = vpop.f32.mrb[0].mxu0
        %v2234 = vadd.f32 0.0, %v2233
        %v2235 = vpop.f32.mrb[0].mxu0
        %2236 = vmatprep.mubr.f32.mxu0 0.0
        %v2237 = vand.u32 %v1011, 4294901760
        %v2238 = vsub.f32 %v1011, %v2237
        %v2239 = vand.u32 %v2238, 4294901760
        %v2240 = vsub.f32 %v2238, %v2239
        %v2241 = vand.u32 %v2240, 4294901760
        %2242 = vmatmul.mubr.f32.gmra.mrb[0].mxu0 %v2241
        %v2243 = vpop.f32.mrb[0].mxu0
        %v2244 = vadd.f32 0.0, %v2243
        %v2245 = vpop.f32.mrb[0].mxu0
        %2246 = vmatprep.mubr.f32.mxu0 0.0
        %v2247 = vand.u32 %v1014, 4294901760
        %v2248 = vsub.f32 %v1014, %v2247
        %v2249 = vand.u32 %v2248, 4294901760
        %v2250 = vsub.f32 %v2248, %v2249
        %v2251 = vand.u32 %v2250, 4294901760
        %2252 = vmatmul.mubr.f32.gmra.mrb[0].mxu0 %v2251
        %v2253 = vpop.f32.mrb[0].mxu0
        %v2254 = vadd.f32 0.0, %v2253
        %v2255 = vpop.f32.mrb[0].mxu0
        %2256 = vmatprep.mubr.f32.mxu0 0.0
        %v2257 = vand.u32 %v1017, 4294901760
        %v2258 = vsub.f32 %v1017, %v2257
        %v2259 = vand.u32 %v2258, 4294901760
        %v2260 = vsub.f32 %v2258, %v2259
        %v2261 = vand.u32 %v2260, 4294901760
        %2262 = vmatmul.mubr.f32.gmra.mrb[0].mxu0 %v2261
        %v2263 = vpop.f32.mrb[0].mxu0
        %v2264 = vadd.f32 0.0, %v2263
        %v2265 = vpop.f32.mrb[0].mxu0
        %2266 = vmatprep.mubr.f32.mxu0 0.0
        %v2267 = vand.u32 %v1020, 4294901760
        %v2268 = vsub.f32 %v1020, %v2267
        %v2269 = vand.u32 %v2268, 4294901760
        %v2270 = vsub.f32 %v2268, %v2269
        %v2271 = vand.u32 %v2270, 4294901760
        %2272 = vmatmul.mubr.f32.gmra.mrb[0].mxu0 %v2271
        %v2273 = vpop.f32.mrb[0].mxu0
        %v2274 = vadd.f32 0.0, %v2273
        %v2275 = vpop.f32.mrb[0].mxu0
        %2276 = vmatprep.mubr.f32.mxu0 0.0
        %v2277 = vand.u32 %v1023, 4294901760
        %v2278 = vsub.f32 %v1023, %v2277
        %v2279 = vand.u32 %v2278, 4294901760
        %v2280 = vsub.f32 %v2278, %v2279
        %v2281 = vand.u32 %v2280, 4294901760
        %2282 = vmatmul.mubr.f32.gmra.mrb[0].mxu0 %v2281
        %v2283 = vpop.f32.mrb[0].mxu0
        %v2284 = vadd.f32 0.0, %v2283
        %v2285 = vpop.f32.mrb[0].mxu0
        %2286 = vmatprep.mubr.f32.mxu0 0.0
        %v2287 = vand.u32 %v1026, 4294901760
        %v2288 = vsub.f32 %v1026, %v2287
        %v2289 = vand.u32 %v2288, 4294901760
        %v2290 = vsub.f32 %v2288, %v2289
        %v2291 = vand.u32 %v2290, 4294901760
        %2292 = vmatmul.mubr.f32.gmra.mrb[0].mxu0 %v2291
        %v2293 = vpop.f32.mrb[0].mxu0
        %v2294 = vadd.f32 0.0, %v2293
        %v2295 = vpop.f32.mrb[0].mxu0
        %2296 = vmatprep.mubr.f32.mxu0 0.0
        %v2297 = vand.u32 %v1029, 4294901760
        %v2298 = vsub.f32 %v1029, %v2297
        %v2299 = vand.u32 %v2298, 4294901760
        %v2300 = vsub.f32 %v2298, %v2299
        %v2301 = vand.u32 %v2300, 4294901760
        %2302 = vmatmul.mubr.f32.gmra.mrb[0].mxu0 %v2301
        %v2303 = vpop.f32.mrb[0].mxu0
        %v2304 = vadd.f32 0.0, %v2303
        %v2305 = vpop.f32.mrb[0].mxu0
        %2306 = vmatprep.mubr.f32.mxu0 0.0
        %v2307 = vand.u32 %v1032, 4294901760
        %v2308 = vsub.f32 %v1032, %v2307
        %v2309 = vand.u32 %v2308, 4294901760
        %v2310 = vsub.f32 %v2308, %v2309
        %v2311 = vand.u32 %v2310, 4294901760
        %2312 = vmatmul.mubr.f32.gmra.mrb[0].mxu0 %v2311
        %v2313 = vpop.f32.mrb[0].mxu0
        %v2314 = vadd.f32 0.0, %v2313
        %v2315 = vpop.f32.mrb[0].mxu0
        %2316 = vmatprep.mubr.f32.mxu0 0.0
        %v2317 = vand.u32 %v1035, 4294901760
        %v2318 = vsub.f32 %v1035, %v2317
        %v2319 = vand.u32 %v2318, 4294901760
        %v2320 = vsub.f32 %v2318, %v2319
        %v2321 = vand.u32 %v2320, 4294901760
        %2322 = vmatmul.mubr.f32.gmra.mrb[0].mxu0 %v2321
        %v2323 = vpop.f32.mrb[0].mxu0
        %v2324 = vadd.f32 0.0, %v2323
        %v2325 = vpop.f32.mrb[0].mxu0
        %2326 = vmatprep.mubr.f32.mxu0 0.0
        %v2327 = vand.u32 %v1038, 4294901760
        %v2328 = vsub.f32 %v1038, %v2327
        %v2329 = vand.u32 %v2328, 4294901760
        %v2330 = vsub.f32 %v2328, %v2329
        %v2331 = vand.u32 %v2330, 4294901760
        %2332 = vmatmul.mubr.f32.gmra.mrb[0].mxu0 %v2331
        %v2333 = vpop.f32.mrb[0].mxu0
        %v2334 = vadd.f32 0.0, %v2333
        %v2335 = vpop.f32.mrb[0].mxu0
        %2336 = vmatprep.mubr.f32.mxu0 0.0
        %v2337 = vand.u32 %v1041, 4294901760
        %v2338 = vsub.f32 %v1041, %v2337
        %v2339 = vand.u32 %v2338, 4294901760
        %v2340 = vsub.f32 %v2338, %v2339
        %v2341 = vand.u32 %v2340, 4294901760
        %2342 = vmatmul.mubr.f32.gmra.mrb[0].mxu0 %v2341
        %v2343 = vpop.f32.mrb[0].mxu0
        %v2344 = vadd.f32 0.0, %v2343
        %v2345 = vpop.f32.mrb[0].mxu0
        %2346 = vmatprep.mubr.f32.mxu0 0.0
        %v2347 = vand.u32 %v1044, 4294901760
        %v2348 = vsub.f32 %v1044, %v2347
        %v2349 = vand.u32 %v2348, 4294901760
        %v2350 = vsub.f32 %v2348, %v2349
        %v2351 = vand.u32 %v2350, 4294901760
        %2352 = vmatmul.mubr.f32.gmra.mrb[0].mxu0 %v2351
        %v2353 = vpop.f32.mrb[0].mxu0
        %v2354 = vadd.f32 0.0, %v2353
        %v2355 = vpop.f32.mrb[0].mxu0
        %2356 = vmatprep.mubr.f32.mxu0 0.0
        %v2357 = vand.u32 %v1047, 4294901760
        %v2358 = vsub.f32 %v1047, %v2357
        %v2359 = vand.u32 %v2358, 4294901760
        %v2360 = vsub.f32 %v2358, %v2359
        %v2361 = vand.u32 %v2360, 4294901760
        %2362 = vmatmul.mubr.f32.gmra.mrb[0].mxu0 %v2361
        %v2363 = vpop.f32.mrb[0].mxu0
        %v2364 = vadd.f32 0.0, %v2363
        %v2365 = vpop.f32.mrb[0].mxu0
        %2366 = vmatprep.mubr.f32.mxu0 0.0
        %v2367 = vand.u32 %v1050, 4294901760
        %v2368 = vsub.f32 %v1050, %v2367
        %v2369 = vand.u32 %v2368, 4294901760
        %v2370 = vsub.f32 %v2368, %v2369
        %v2371 = vand.u32 %v2370, 4294901760
        %2372 = vmatmul.mubr.f32.gmra.mrb[0].mxu0 %v2371
        %v2373 = vpop.f32.mrb[0].mxu0
        %v2374 = vadd.f32 0.0, %v2373
        %v2375 = vpop.f32.mrb[0].mxu0
        %2376 = vmatprep.mubr.f32.mxu0 0.0
        %v2377 = vand.u32 %v1053, 4294901760
        %v2378 = vsub.f32 %v1053, %v2377
        %v2379 = vand.u32 %v2378, 4294901760
        %v2380 = vsub.f32 %v2378, %v2379
        %v2381 = vand.u32 %v2380, 4294901760
        %2382 = vmatmul.mubr.f32.gmra.mrb[0].mxu0 %v2381
        %v2383 = vpop.f32.mrb[0].mxu0
        %v2384 = vadd.f32 0.0, %v2383
        %v2385 = vpop.f32.mrb[0].mxu0
        %2386 = vmatprep.mubr.f32.mxu0 0.0
        %v2387 = vand.u32 %v1056, 4294901760
        %v2388 = vsub.f32 %v1056, %v2387
        %v2389 = vand.u32 %v2388, 4294901760
        %v2390 = vsub.f32 %v2388, %v2389
        %v2391 = vand.u32 %v2390, 4294901760
        %2392 = vmatmul.mubr.f32.gmra.mrb[0].mxu0 %v2391
        %v2393 = vpop.f32.mrb[0].mxu0
        %v2394 = vadd.f32 0.0, %v2393
        %v2395 = vpop.f32.mrb[0].mxu0
        %2396 = vmatprep.mubr.f32.mxu0 0.0
        %v2397 = vand.u32 %v1059, 4294901760
        %v2398 = vsub.f32 %v1059, %v2397
        %v2399 = vand.u32 %v2398, 4294901760
        %v2400 = vsub.f32 %v2398, %v2399
        %v2401 = vand.u32 %v2400, 4294901760
        %2402 = vmatmul.mubr.f32.gmra.mrb[0].mxu0 %v2401
        %v2403 = vpop.f32.mrb[0].mxu0
        %v2404 = vadd.f32 0.0, %v2403
        %v2405 = vpop.f32.mrb[0].mxu0
        %2406 = vmatprep.mubr.f32.mxu0 0.0
        %v2407 = vand.u32 %v1062, 4294901760
        %v2408 = vsub.f32 %v1062, %v2407
        %v2409 = vand.u32 %v2408, 4294901760
        %v2410 = vsub.f32 %v2408, %v2409
        %v2411 = vand.u32 %v2410, 4294901760
        %2412 = vmatmul.mubr.f32.gmra.mrb[0].mxu0 %v2411
        %v2413 = vpop.f32.mrb[0].mxu0
        %v2414 = vadd.f32 0.0, %v2413
        %v2415 = vpop.f32.mrb[0].mxu0
        %2416 = vdwg.mxu0
        %2417 = vmatprep.subr.mxu0 0.0
        %v2418 = vand.u32 %v415, 4294901760
        %v2419 = vsub.f32 %v415, %v2418
        %v2420 = vand.u32 %v2419, 4294901760
        %v2421 = vsub.f32 %v2419, %v2420
        %v2422 = vand.u32 %v2421, 4294901760
        %2423 = vmatpush1.msra.mxu0 %v2422
        %2424 = vmatprep.subr.mxu0 0.0
        %v2425 = vand.u32 %v416, 4294901760
        %v2426 = vsub.f32 %v416, %v2425
        %v2427 = vand.u32 %v2426, 4294901760
        %v2428 = vsub.f32 %v2426, %v2427
        %v2429 = vand.u32 %v2428, 4294901760
        %2430 = vmatpush1.msra.mxu0 %v2429
        %2431 = vmatprep.subr.mxu0 0.0
        %v2432 = vand.u32 %v417, 4294901760
        %v2433 = vsub.f32 %v417, %v2432
        %v2434 = vand.u32 %v2433, 4294901760
        %v2435 = vsub.f32 %v2433, %v2434
        %v2436 = vand.u32 %v2435, 4294901760
        %2437 = vmatpush1.msra.mxu0 %v2436
        %2438 = vmatprep.subr.mxu0 0.0
        %v2439 = vand.u32 %v418, 4294901760
        %v2440 = vsub.f32 %v418, %v2439
        %v2441 = vand.u32 %v2440, 4294901760
        %v2442 = vsub.f32 %v2440, %v2441
        %v2443 = vand.u32 %v2442, 4294901760
        %2444 = vmatpush1.msra.mxu0 %v2443
        %2445 = vmatprep.subr.mxu0 0.0
        %v2446 = vand.u32 %v419, 4294901760
        %v2447 = vsub.f32 %v419, %v2446
        %v2448 = vand.u32 %v2447, 4294901760
        %v2449 = vsub.f32 %v2447, %v2448
        %v2450 = vand.u32 %v2449, 4294901760
        %2451 = vmatpush1.msra.mxu0 %v2450
        %2452 = vmatprep.subr.mxu0 0.0
        %v2453 = vand.u32 %v420, 4294901760
        %v2454 = vsub.f32 %v420, %v2453
        %v2455 = vand.u32 %v2454, 4294901760
        %v2456 = vsub.f32 %v2454, %v2455
        %v2457 = vand.u32 %v2456, 4294901760
        %2458 = vmatpush1.msra.mxu0 %v2457
        %2459 = vmatprep.subr.mxu0 0.0
        %v2460 = vand.u32 %v421, 4294901760
        %v2461 = vsub.f32 %v421, %v2460
        %v2462 = vand.u32 %v2461, 4294901760
        %v2463 = vsub.f32 %v2461, %v2462
        %v2464 = vand.u32 %v2463, 4294901760
        %2465 = vmatpush1.msra.mxu0 %v2464
        %2466 = vmatprep.subr.mxu0 0.0
        %v2467 = vand.u32 %v422, 4294901760
        %v2468 = vsub.f32 %v422, %v2467
        %v2469 = vand.u32 %v2468, 4294901760
        %v2470 = vsub.f32 %v2468, %v2469
        %v2471 = vand.u32 %v2470, 4294901760
        %2472 = vmatpush1.msra.mxu0 %v2471
        %2473 = vmatprep.subr.mxu0 0.0
        %2474 = vmatpush1.msra.mxu0 0.0
        %2475 = vmatprep.subr.mxu0 0.0
        %2476 = vmatpush1.msra.mxu0 0.0
        %2477 = vmatprep.subr.mxu0 0.0
        %2478 = vmatpush1.msra.mxu0 0.0
        %2479 = vmatprep.subr.mxu0 0.0
        %2480 = vmatpush1.msra.mxu0 0.0
        %2481 = vmatprep.subr.mxu0 0.0
        %2482 = vmatpush1.msra.mxu0 0.0
        %2483 = vmatprep.subr.mxu0 0.0
        %2484 = vmatpush1.msra.mxu0 0.0
        %2485 = vmatprep.subr.mxu0 0.0
        %2486 = vmatpush1.msra.mxu0 0.0
        %2487 = vmatprep.subr.mxu0 0.0
        %2488 = vmatpush1.msra.mxu0 0.0
        %2489 = vmatprep.subr.mxu0 0.0
        %2490 = vmatpush1.msra.mxu0 0.0
        %2491 = vmatprep.subr.mxu0 0.0
        %2492 = vmatpush1.msra.mxu0 0.0
        %2493 = vmatprep.subr.mxu0 0.0
        %2494 = vmatpush1.msra.mxu0 0.0
        %2495 = vmatprep.subr.mxu0 0.0
        %2496 = vmatpush1.msra.mxu0 0.0
        %2497 = vmatprep.subr.mxu0 0.0
        %2498 = vmatpush1.msra.mxu0 0.0
        %2499 = vmatprep.subr.mxu0 0.0
        %2500 = vmatpush1.msra.mxu0 0.0
        %2501 = vmatprep.subr.mxu0 0.0
        %2502 = vmatpush1.msra.mxu0 0.0
        %2503 = vmatprep.subr.mxu0 0.0
        %2504 = vmatpush1.msra.mxu0 0.0
        %2505 = vmatprep.subr.mxu0 0.0
        %2506 = vmatpush1.msra.mxu0 0.0
        %2507 = vmatprep.subr.mxu0 0.0
        %2508 = vmatpush1.msra.mxu0 0.0
        %2509 = vmatprep.subr.mxu0 0.0
        %2510 = vmatpush1.msra.mxu0 0.0
        %2511 = vmatprep.subr.mxu0 0.0
        %2512 = vmatpush1.msra.mxu0 0.0
        %2513 = vmatprep.subr.mxu0 0.0
        %2514 = vmatpush1.msra.mxu0 0.0
        %2515 = vmatprep.subr.mxu0 0.0
        %2516 = vmatpush1.msra.mxu0 0.0
        %2517 = vmatprep.subr.mxu0 0.0
        %2518 = vmatpush1.msra.mxu0 0.0
        %2519 = vmatprep.subr.mxu0 0.0
        %2520 = vmatpush1.msra.mxu0 0.0
        %2521 = vmatprep.mubr.f32.mxu0 0.0
        %v2522 = vand.u32 %v681, 4294901760
        %2523 = vmatmul.mubr.f32.gmra.mrb[0].mxu0 %v2522
        %v2524 = vpop.f32.mrb[0].mxu0
        %v2525 = vadd.f32 %v1144, %v2524
        %v2526 = vpop.f32.mrb[0].mxu0
        %2527 = vmatprep.mubr.f32.mxu0 0.0
        %v2528 = vand.u32 %v684, 4294901760
        %2529 = vmatmul.mubr.f32.gmra.mrb[0].mxu0 %v2528
        %v2530 = vpop.f32.mrb[0].mxu0
        %v2531 = vadd.f32 %v1154, %v2530
        %v2532 = vpop.f32.mrb[0].mxu0
        %2533 = vmatprep.mubr.f32.mxu0 0.0
        %v2534 = vand.u32 %v687, 4294901760
        %2535 = vmatmul.mubr.f32.gmra.mrb[0].mxu0 %v2534
        %v2536 = vpop.f32.mrb[0].mxu0
        %v2537 = vadd.f32 %v1164, %v2536
        %v2538 = vpop.f32.mrb[0].mxu0
        %2539 = vmatprep.mubr.f32.mxu0 0.0
        %v2540 = vand.u32 %v690, 4294901760
        %2541 = vmatmul.mubr.f32.gmra.mrb[0].mxu0 %v2540
        %v2542 = vpop.f32.mrb[0].mxu0
        %v2543 = vadd.f32 %v1174, %v2542
        %v2544 = vpop.f32.mrb[0].mxu0
        %2545 = vmatprep.mubr.f32.mxu0 0.0
        %v2546 = vand.u32 %v693, 4294901760
        %2547 = vmatmul.mubr.f32.gmra.mrb[0].mxu0 %v2546
        %v2548 = vpop.f32.mrb[0].mxu0
        %v2549 = vadd.f32 %v1184, %v2548
        %v2550 = vpop.f32.mrb[0].mxu0
        %2551 = vmatprep.mubr.f32.mxu0 0.0
        %v2552 = vand.u32 %v696, 4294901760
        %2553 = vmatmul.mubr.f32.gmra.mrb[0].mxu0 %v2552
        %v2554 = vpop.f32.mrb[0].mxu0
        %v2555 = vadd.f32 %v1194, %v2554
        %v2556 = vpop.f32.mrb[0].mxu0
        %2557 = vmatprep.mubr.f32.mxu0 0.0
        %v2558 = vand.u32 %v699, 4294901760
        %2559 = vmatmul.mubr.f32.gmra.mrb[0].mxu0 %v2558
        %v2560 = vpop.f32.mrb[0].mxu0
        %v2561 = vadd.f32 %v1204, %v2560
        %v2562 = vpop.f32.mrb[0].mxu0
        %2563 = vmatprep.mubr.f32.mxu0 0.0
        %v2564 = vand.u32 %v702, 4294901760
        %2565 = vmatmul.mubr.f32.gmra.mrb[0].mxu0 %v2564
        %v2566 = vpop.f32.mrb[0].mxu0
        %v2567 = vadd.f32 %v1214, %v2566
        %v2568 = vpop.f32.mrb[0].mxu0
        %2569 = vmatprep.mubr.f32.mxu0 0.0
        %v2570 = vand.u32 %v705, 4294901760
        %2571 = vmatmul.mubr.f32.gmra.mrb[0].mxu0 %v2570
        %v2572 = vpop.f32.mrb[0].mxu0
        %v2573 = vadd.f32 %v1224, %v2572
        %v2574 = vpop.f32.mrb[0].mxu0
        %2575 = vmatprep.mubr.f32.mxu0 0.0
        %v2576 = vand.u32 %v708, 4294901760
        %2577 = vmatmul.mubr.f32.gmra.mrb[0].mxu0 %v2576
        %v2578 = vpop.f32.mrb[0].mxu0
        %v2579 = vadd.f32 %v1234, %v2578
        %v2580 = vpop.f32.mrb[0].mxu0
        %2581 = vmatprep.mubr.f32.mxu0 0.0
        %v2582 = vand.u32 %v711, 4294901760
        %2583 = vmatmul.mubr.f32.gmra.mrb[0].mxu0 %v2582
        %v2584 = vpop.f32.mrb[0].mxu0
        %v2585 = vadd.f32 %v1244, %v2584
        %v2586 = vpop.f32.mrb[0].mxu0
        %2587 = vmatprep.mubr.f32.mxu0 0.0
        %v2588 = vand.u32 %v714, 4294901760
        %2589 = vmatmul.mubr.f32.gmra.mrb[0].mxu0 %v2588
        %v2590 = vpop.f32.mrb[0].mxu0
        %v2591 = vadd.f32 %v1254, %v2590
        %v2592 = vpop.f32.mrb[0].mxu0
        %2593 = vmatprep.mubr.f32.mxu0 0.0
        %v2594 = vand.u32 %v717, 4294901760
        %2595 = vmatmul.mubr.f32.gmra.mrb[0].mxu0 %v2594
        %v2596 = vpop.f32.mrb[0].mxu0
        %v2597 = vadd.f32 %v1264, %v2596
        %v2598 = vpop.f32.mrb[0].mxu0
        %2599 = vmatprep.mubr.f32.mxu0 0.0
        %v2600 = vand.u32 %v720, 4294901760
        %2601 = vmatmul.mubr.f32.gmra.mrb[0].mxu0 %v2600
        %v2602 = vpop.f32.mrb[0].mxu0
        %v2603 = vadd.f32 %v1274, %v2602
        %v2604 = vpop.f32.mrb[0].mxu0
        %2605 = vmatprep.mubr.f32.mxu0 0.0
        %v2606 = vand.u32 %v723, 4294901760
        %2607 = vmatmul.mubr.f32.gmra.mrb[0].mxu0 %v2606
        %v2608 = vpop.f32.mrb[0].mxu0
        %v2609 = vadd.f32 %v1284, %v2608
        %v2610 = vpop.f32.mrb[0].mxu0
        %2611 = vmatprep.mubr.f32.mxu0 0.0
        %v2612 = vand.u32 %v726, 4294901760
        %2613 = vmatmul.mubr.f32.gmra.mrb[0].mxu0 %v2612
        %v2614 = vpop.f32.mrb[0].mxu0
        %v2615 = vadd.f32 %v1294, %v2614
        %v2616 = vpop.f32.mrb[0].mxu0
        %2617 = vmatprep.mubr.f32.mxu0 0.0
        %v2618 = vand.u32 %v729, 4294901760
        %2619 = vmatmul.mubr.f32.gmra.mrb[0].mxu0 %v2618
        %v2620 = vpop.f32.mrb[0].mxu0
        %v2621 = vadd.f32 %v1304, %v2620
        %v2622 = vpop.f32.mrb[0].mxu0
        %2623 = vmatprep.mubr.f32.mxu0 0.0
        %v2624 = vand.u32 %v732, 4294901760
        %2625 = vmatmul.mubr.f32.gmra.mrb[0].mxu0 %v2624
        %v2626 = vpop.f32.mrb[0].mxu0
        %v2627 = vadd.f32 %v1314, %v2626
        %v2628 = vpop.f32.mrb[0].mxu0
        %2629 = vmatprep.mubr.f32.mxu0 0.0
        %v2630 = vand.u32 %v735, 4294901760
        %2631 = vmatmul.mubr.f32.gmra.mrb[0].mxu0 %v2630
        %v2632 = vpop.f32.mrb[0].mxu0
        %v2633 = vadd.f32 %v1324, %v2632
        %v2634 = vpop.f32.mrb[0].mxu0
        %2635 = vmatprep.mubr.f32.mxu0 0.0
        %v2636 = vand.u32 %v738, 4294901760
        %2637 = vmatmul.mubr.f32.gmra.mrb[0].mxu0 %v2636
        %v2638 = vpop.f32.mrb[0].mxu0
        %v2639 = vadd.f32 %v1334, %v2638
        %v2640 = vpop.f32.mrb[0].mxu0
        %2641 = vmatprep.mubr.f32.mxu0 0.0
        %v2642 = vand.u32 %v741, 4294901760
        %2643 = vmatmul.mubr.f32.gmra.mrb[0].mxu0 %v2642
        %v2644 = vpop.f32.mrb[0].mxu0
        %v2645 = vadd.f32 %v1344, %v2644
        %v2646 = vpop.f32.mrb[0].mxu0
        %2647 = vmatprep.mubr.f32.mxu0 0.0
        %v2648 = vand.u32 %v744, 4294901760
        %2649 = vmatmul.mubr.f32.gmra.mrb[0].mxu0 %v2648
        %v2650 = vpop.f32.mrb[0].mxu0
        %v2651 = vadd.f32 %v1354, %v2650
        %v2652 = vpop.f32.mrb[0].mxu0
        %2653 = vmatprep.mubr.f32.mxu0 0.0
        %v2654 = vand.u32 %v747, 4294901760
        %2655 = vmatmul.mubr.f32.gmra.mrb[0].mxu0 %v2654
        %v2656 = vpop.f32.mrb[0].mxu0
        %v2657 = vadd.f32 %v1364, %v2656
        %v2658 = vpop.f32.mrb[0].mxu0
        %2659 = vmatprep.mubr.f32.mxu0 0.0
        %v2660 = vand.u32 %v750, 4294901760
        %2661 = vmatmul.mubr.f32.gmra.mrb[0].mxu0 %v2660
        %v2662 = vpop.f32.mrb[0].mxu0
        %v2663 = vadd.f32 %v1374, %v2662
        %v2664 = vpop.f32.mrb[0].mxu0
        %2665 = vmatprep.mubr.f32.mxu0 0.0
        %v2666 = vand.u32 %v753, 4294901760
        %2667 = vmatmul.mubr.f32.gmra.mrb[0].mxu0 %v2666
        %v2668 = vpop.f32.mrb[0].mxu0
        %v2669 = vadd.f32 %v1384, %v2668
        %v2670 = vpop.f32.mrb[0].mxu0
        %2671 = vmatprep.mubr.f32.mxu0 0.0
        %v2672 = vand.u32 %v756, 4294901760
        %2673 = vmatmul.mubr.f32.gmra.mrb[0].mxu0 %v2672
        %v2674 = vpop.f32.mrb[0].mxu0
        %v2675 = vadd.f32 %v1394, %v2674
        %v2676 = vpop.f32.mrb[0].mxu0
        %2677 = vmatprep.mubr.f32.mxu0 0.0
        %v2678 = vand.u32 %v759, 4294901760
        %2679 = vmatmul.mubr.f32.gmra.mrb[0].mxu0 %v2678
        %v2680 = vpop.f32.mrb[0].mxu0
        %v2681 = vadd.f32 %v1404, %v2680
        %v2682 = vpop.f32.mrb[0].mxu0
        %2683 = vmatprep.mubr.f32.mxu0 0.0
        %v2684 = vand.u32 %v762, 4294901760
        %2685 = vmatmul.mubr.f32.gmra.mrb[0].mxu0 %v2684
        %v2686 = vpop.f32.mrb[0].mxu0
        %v2687 = vadd.f32 %v1414, %v2686
        %v2688 = vpop.f32.mrb[0].mxu0
        %2689 = vmatprep.mubr.f32.mxu0 0.0
        %v2690 = vand.u32 %v765, 4294901760
        %2691 = vmatmul.mubr.f32.gmra.mrb[0].mxu0 %v2690
        %v2692 = vpop.f32.mrb[0].mxu0
        %v2693 = vadd.f32 %v1424, %v2692
        %v2694 = vpop.f32.mrb[0].mxu0
        %2695 = vmatprep.mubr.f32.mxu0 0.0
        %v2696 = vand.u32 %v768, 4294901760
        %2697 = vmatmul.mubr.f32.gmra.mrb[0].mxu0 %v2696
        %v2698 = vpop.f32.mrb[0].mxu0
        %v2699 = vadd.f32 %v1434, %v2698
        %v2700 = vpop.f32.mrb[0].mxu0
        %2701 = vmatprep.mubr.f32.mxu0 0.0
        %v2702 = vand.u32 %v771, 4294901760
        %2703 = vmatmul.mubr.f32.gmra.mrb[0].mxu0 %v2702
        %v2704 = vpop.f32.mrb[0].mxu0
        %v2705 = vadd.f32 %v1444, %v2704
        %v2706 = vpop.f32.mrb[0].mxu0
        %2707 = vmatprep.mubr.f32.mxu0 0.0
        %v2708 = vand.u32 %v774, 4294901760
        %2709 = vmatmul.mubr.f32.gmra.mrb[0].mxu0 %v2708
        %v2710 = vpop.f32.mrb[0].mxu0
        %v2711 = vadd.f32 %v1454, %v2710
        %v2712 = vpop.f32.mrb[0].mxu0
        %2713 = vmatprep.mubr.f32.mxu0 0.0
        %v2714 = vand.u32 %v777, 4294901760
        %2715 = vmatmul.mubr.f32.gmra.mrb[0].mxu0 %v2714
        %v2716 = vpop.f32.mrb[0].mxu0
        %v2717 = vadd.f32 %v1464, %v2716
        %v2718 = vpop.f32.mrb[0].mxu0
        %2719 = vmatprep.mubr.f32.mxu0 0.0
        %v2720 = vand.u32 %v780, 4294901760
        %2721 = vmatmul.mubr.f32.gmra.mrb[0].mxu0 %v2720
        %v2722 = vpop.f32.mrb[0].mxu0
        %v2723 = vadd.f32 %v1474, %v2722
        %v2724 = vpop.f32.mrb[0].mxu0
        %2725 = vmatprep.mubr.f32.mxu0 0.0
        %v2726 = vand.u32 %v783, 4294901760
        %2727 = vmatmul.mubr.f32.gmra.mrb[0].mxu0 %v2726
        %v2728 = vpop.f32.mrb[0].mxu0
        %v2729 = vadd.f32 %v1484, %v2728
        %v2730 = vpop.f32.mrb[0].mxu0
        %2731 = vmatprep.mubr.f32.mxu0 0.0
        %v2732 = vand.u32 %v786, 4294901760
        %2733 = vmatmul.mubr.f32.gmra.mrb[0].mxu0 %v2732
        %v2734 = vpop.f32.mrb[0].mxu0
        %v2735 = vadd.f32 %v1494, %v2734
        %v2736 = vpop.f32.mrb[0].mxu0
        %2737 = vmatprep.mubr.f32.mxu0 0.0
        %v2738 = vand.u32 %v789, 4294901760
        %2739 = vmatmul.mubr.f32.gmra.mrb[0].mxu0 %v2738
        %v2740 = vpop.f32.mrb[0].mxu0
        %v2741 = vadd.f32 %v1504, %v2740
        %v2742 = vpop.f32.mrb[0].mxu0
        %2743 = vmatprep.mubr.f32.mxu0 0.0
        %v2744 = vand.u32 %v792, 4294901760
        %2745 = vmatmul.mubr.f32.gmra.mrb[0].mxu0 %v2744
        %v2746 = vpop.f32.mrb[0].mxu0
        %v2747 = vadd.f32 %v1514, %v2746
        %v2748 = vpop.f32.mrb[0].mxu0
        %2749 = vmatprep.mubr.f32.mxu0 0.0
        %v2750 = vand.u32 %v795, 4294901760
        %2751 = vmatmul.mubr.f32.gmra.mrb[0].mxu0 %v2750
        %v2752 = vpop.f32.mrb[0].mxu0
        %v2753 = vadd.f32 %v1524, %v2752
        %v2754 = vpop.f32.mrb[0].mxu0
        %2755 = vmatprep.mubr.f32.mxu0 0.0
        %v2756 = vand.u32 %v798, 4294901760
        %2757 = vmatmul.mubr.f32.gmra.mrb[0].mxu0 %v2756
        %v2758 = vpop.f32.mrb[0].mxu0
        %v2759 = vadd.f32 %v1534, %v2758
        %v2760 = vpop.f32.mrb[0].mxu0
        %2761 = vmatprep.mubr.f32.mxu0 0.0
        %v2762 = vand.u32 %v801, 4294901760
        %2763 = vmatmul.mubr.f32.gmra.mrb[0].mxu0 %v2762
        %v2764 = vpop.f32.mrb[0].mxu0
        %v2765 = vadd.f32 %v1544, %v2764
        %v2766 = vpop.f32.mrb[0].mxu0
        %2767 = vmatprep.mubr.f32.mxu0 0.0
        %v2768 = vand.u32 %v804, 4294901760
        %2769 = vmatmul.mubr.f32.gmra.mrb[0].mxu0 %v2768
        %v2770 = vpop.f32.mrb[0].mxu0
        %v2771 = vadd.f32 %v1554, %v2770
        %v2772 = vpop.f32.mrb[0].mxu0
        %2773 = vmatprep.mubr.f32.mxu0 0.0
        %v2774 = vand.u32 %v807, 4294901760
        %2775 = vmatmul.mubr.f32.gmra.mrb[0].mxu0 %v2774
        %v2776 = vpop.f32.mrb[0].mxu0
        %v2777 = vadd.f32 %v1564, %v2776
        %v2778 = vpop.f32.mrb[0].mxu0
        %2779 = vmatprep.mubr.f32.mxu0 0.0
        %v2780 = vand.u32 %v810, 4294901760
        %2781 = vmatmul.mubr.f32.gmra.mrb[0].mxu0 %v2780
        %v2782 = vpop.f32.mrb[0].mxu0
        %v2783 = vadd.f32 %v1574, %v2782
        %v2784 = vpop.f32.mrb[0].mxu0
        %2785 = vmatprep.mubr.f32.mxu0 0.0
        %v2786 = vand.u32 %v813, 4294901760
        %2787 = vmatmul.mubr.f32.gmra.mrb[0].mxu0 %v2786
        %v2788 = vpop.f32.mrb[0].mxu0
        %v2789 = vadd.f32 %v1584, %v2788
        %v2790 = vpop.f32.mrb[0].mxu0
        %2791 = vmatprep.mubr.f32.mxu0 0.0
        %v2792 = vand.u32 %v816, 4294901760
        %2793 = vmatmul.mubr.f32.gmra.mrb[0].mxu0 %v2792
        %v2794 = vpop.f32.mrb[0].mxu0
        %v2795 = vadd.f32 %v1594, %v2794
        %v2796 = vpop.f32.mrb[0].mxu0
        %2797 = vmatprep.mubr.f32.mxu0 0.0
        %v2798 = vand.u32 %v819, 4294901760
        %2799 = vmatmul.mubr.f32.gmra.mrb[0].mxu0 %v2798
        %v2800 = vpop.f32.mrb[0].mxu0
        %v2801 = vadd.f32 %v1604, %v2800
        %v2802 = vpop.f32.mrb[0].mxu0
        %2803 = vmatprep.mubr.f32.mxu0 0.0
        %v2804 = vand.u32 %v822, 4294901760
        %2805 = vmatmul.mubr.f32.gmra.mrb[0].mxu0 %v2804
        %v2806 = vpop.f32.mrb[0].mxu0
        %v2807 = vadd.f32 %v1614, %v2806
        %v2808 = vpop.f32.mrb[0].mxu0
        %2809 = vmatprep.mubr.f32.mxu0 0.0
        %v2810 = vand.u32 %v825, 4294901760
        %2811 = vmatmul.mubr.f32.gmra.mrb[0].mxu0 %v2810
        %v2812 = vpop.f32.mrb[0].mxu0
        %v2813 = vadd.f32 %v1624, %v2812
        %v2814 = vpop.f32.mrb[0].mxu0
        %2815 = vmatprep.mubr.f32.mxu0 0.0
        %v2816 = vand.u32 %v828, 4294901760
        %2817 = vmatmul.mubr.f32.gmra.mrb[0].mxu0 %v2816
        %v2818 = vpop.f32.mrb[0].mxu0
        %v2819 = vadd.f32 %v1634, %v2818
        %v2820 = vpop.f32.mrb[0].mxu0
        %2821 = vmatprep.mubr.f32.mxu0 0.0
        %v2822 = vand.u32 %v831, 4294901760
        %2823 = vmatmul.mubr.f32.gmra.mrb[0].mxu0 %v2822
        %v2824 = vpop.f32.mrb[0].mxu0
        %v2825 = vadd.f32 %v1644, %v2824
        %v2826 = vpop.f32.mrb[0].mxu0
        %2827 = vmatprep.mubr.f32.mxu0 0.0
        %v2828 = vand.u32 %v834, 4294901760
        %2829 = vmatmul.mubr.f32.gmra.mrb[0].mxu0 %v2828
        %v2830 = vpop.f32.mrb[0].mxu0
        %v2831 = vadd.f32 %v1654, %v2830
        %v2832 = vpop.f32.mrb[0].mxu0
        %2833 = vmatprep.mubr.f32.mxu0 0.0
        %v2834 = vand.u32 %v837, 4294901760
        %2835 = vmatmul.mubr.f32.gmra.mrb[0].mxu0 %v2834
        %v2836 = vpop.f32.mrb[0].mxu0
        %v2837 = vadd.f32 %v1664, %v2836
        %v2838 = vpop.f32.mrb[0].mxu0
        %2839 = vmatprep.mubr.f32.mxu0 0.0
        %v2840 = vand.u32 %v840, 4294901760
        %2841 = vmatmul.mubr.f32.gmra.mrb[0].mxu0 %v2840
        %v2842 = vpop.f32.mrb[0].mxu0
        %v2843 = vadd.f32 %v1674, %v2842
        %v2844 = vpop.f32.mrb[0].mxu0
        %2845 = vmatprep.mubr.f32.mxu0 0.0
        %v2846 = vand.u32 %v843, 4294901760
        %2847 = vmatmul.mubr.f32.gmra.mrb[0].mxu0 %v2846
        %v2848 = vpop.f32.mrb[0].mxu0
        %v2849 = vadd.f32 %v1684, %v2848
        %v2850 = vpop.f32.mrb[0].mxu0
        %2851 = vmatprep.mubr.f32.mxu0 0.0
        %v2852 = vand.u32 %v846, 4294901760
        %2853 = vmatmul.mubr.f32.gmra.mrb[0].mxu0 %v2852
        %v2854 = vpop.f32.mrb[0].mxu0
        %v2855 = vadd.f32 %v1694, %v2854
        %v2856 = vpop.f32.mrb[0].mxu0
        %2857 = vmatprep.mubr.f32.mxu0 0.0
        %v2858 = vand.u32 %v849, 4294901760
        %2859 = vmatmul.mubr.f32.gmra.mrb[0].mxu0 %v2858
        %v2860 = vpop.f32.mrb[0].mxu0
        %v2861 = vadd.f32 %v1704, %v2860
        %v2862 = vpop.f32.mrb[0].mxu0
        %2863 = vmatprep.mubr.f32.mxu0 0.0
        %v2864 = vand.u32 %v852, 4294901760
        %2865 = vmatmul.mubr.f32.gmra.mrb[0].mxu0 %v2864
        %v2866 = vpop.f32.mrb[0].mxu0
        %v2867 = vadd.f32 %v1714, %v2866
        %v2868 = vpop.f32.mrb[0].mxu0
        %2869 = vmatprep.mubr.f32.mxu0 0.0
        %v2870 = vand.u32 %v855, 4294901760
        %2871 = vmatmul.mubr.f32.gmra.mrb[0].mxu0 %v2870
        %v2872 = vpop.f32.mrb[0].mxu0
        %v2873 = vadd.f32 %v1724, %v2872
        %v2874 = vpop.f32.mrb[0].mxu0
        %2875 = vmatprep.mubr.f32.mxu0 0.0
        %v2876 = vand.u32 %v858, 4294901760
        %2877 = vmatmul.mubr.f32.gmra.mrb[0].mxu0 %v2876
        %v2878 = vpop.f32.mrb[0].mxu0
        %v2879 = vadd.f32 %v1734, %v2878
        %v2880 = vpop.f32.mrb[0].mxu0
        %2881 = vmatprep.mubr.f32.mxu0 0.0
        %v2882 = vand.u32 %v861, 4294901760
        %2883 = vmatmul.mubr.f32.gmra.mrb[0].mxu0 %v2882
        %v2884 = vpop.f32.mrb[0].mxu0
        %v2885 = vadd.f32 %v1744, %v2884
        %v2886 = vpop.f32.mrb[0].mxu0
        %2887 = vmatprep.mubr.f32.mxu0 0.0
        %v2888 = vand.u32 %v864, 4294901760
        %2889 = vmatmul.mubr.f32.gmra.mrb[0].mxu0 %v2888
        %v2890 = vpop.f32.mrb[0].mxu0
        %v2891 = vadd.f32 %v1754, %v2890
        %v2892 = vpop.f32.mrb[0].mxu0
        %2893 = vmatprep.mubr.f32.mxu0 0.0
        %v2894 = vand.u32 %v867, 4294901760
        %2895 = vmatmul.mubr.f32.gmra.mrb[0].mxu0 %v2894
        %v2896 = vpop.f32.mrb[0].mxu0
        %v2897 = vadd.f32 %v1764, %v2896
        %v2898 = vpop.f32.mrb[0].mxu0
        %2899 = vmatprep.mubr.f32.mxu0 0.0
        %v2900 = vand.u32 %v870, 4294901760
        %2901 = vmatmul.mubr.f32.gmra.mrb[0].mxu0 %v2900
        %v2902 = vpop.f32.mrb[0].mxu0
        %v2903 = vadd.f32 %v1774, %v2902
        %v2904 = vpop.f32.mrb[0].mxu0
        %2905 = vmatprep.mubr.f32.mxu0 0.0
        %v2906 = vand.u32 %v873, 4294901760
        %2907 = vmatmul.mubr.f32.gmra.mrb[0].mxu0 %v2906
        %v2908 = vpop.f32.mrb[0].mxu0
        %v2909 = vadd.f32 %v1784, %v2908
        %v2910 = vpop.f32.mrb[0].mxu0
        %2911 = vmatprep.mubr.f32.mxu0 0.0
        %v2912 = vand.u32 %v876, 4294901760
        %2913 = vmatmul.mubr.f32.gmra.mrb[0].mxu0 %v2912
        %v2914 = vpop.f32.mrb[0].mxu0
        %v2915 = vadd.f32 %v1794, %v2914
        %v2916 = vpop.f32.mrb[0].mxu0
        %2917 = vmatprep.mubr.f32.mxu0 0.0
        %v2918 = vand.u32 %v879, 4294901760
        %2919 = vmatmul.mubr.f32.gmra.mrb[0].mxu0 %v2918
        %v2920 = vpop.f32.mrb[0].mxu0
        %v2921 = vadd.f32 %v1804, %v2920
        %v2922 = vpop.f32.mrb[0].mxu0
        %2923 = vmatprep.mubr.f32.mxu0 0.0
        %v2924 = vand.u32 %v882, 4294901760
        %2925 = vmatmul.mubr.f32.gmra.mrb[0].mxu0 %v2924
        %v2926 = vpop.f32.mrb[0].mxu0
        %v2927 = vadd.f32 %v1814, %v2926
        %v2928 = vpop.f32.mrb[0].mxu0
        %2929 = vmatprep.mubr.f32.mxu0 0.0
        %v2930 = vand.u32 %v885, 4294901760
        %2931 = vmatmul.mubr.f32.gmra.mrb[0].mxu0 %v2930
        %v2932 = vpop.f32.mrb[0].mxu0
        %v2933 = vadd.f32 %v1824, %v2932
        %v2934 = vpop.f32.mrb[0].mxu0
        %2935 = vmatprep.mubr.f32.mxu0 0.0
        %v2936 = vand.u32 %v888, 4294901760
        %2937 = vmatmul.mubr.f32.gmra.mrb[0].mxu0 %v2936
        %v2938 = vpop.f32.mrb[0].mxu0
        %v2939 = vadd.f32 %v1834, %v2938
        %v2940 = vpop.f32.mrb[0].mxu0
        %2941 = vmatprep.mubr.f32.mxu0 0.0
        %v2942 = vand.u32 %v891, 4294901760
        %2943 = vmatmul.mubr.f32.gmra.mrb[0].mxu0 %v2942
        %v2944 = vpop.f32.mrb[0].mxu0
        %v2945 = vadd.f32 %v1844, %v2944
        %v2946 = vpop.f32.mrb[0].mxu0
        %2947 = vmatprep.mubr.f32.mxu0 0.0
        %v2948 = vand.u32 %v894, 4294901760
        %2949 = vmatmul.mubr.f32.gmra.mrb[0].mxu0 %v2948
        %v2950 = vpop.f32.mrb[0].mxu0
        %v2951 = vadd.f32 %v1854, %v2950
        %v2952 = vpop.f32.mrb[0].mxu0
        %2953 = vmatprep.mubr.f32.mxu0 0.0
        %v2954 = vand.u32 %v897, 4294901760
        %2955 = vmatmul.mubr.f32.gmra.mrb[0].mxu0 %v2954
        %v2956 = vpop.f32.mrb[0].mxu0
        %v2957 = vadd.f32 %v1864, %v2956
        %v2958 = vpop.f32.mrb[0].mxu0
        %2959 = vmatprep.mubr.f32.mxu0 0.0
        %v2960 = vand.u32 %v900, 4294901760
        %2961 = vmatmul.mubr.f32.gmra.mrb[0].mxu0 %v2960
        %v2962 = vpop.f32.mrb[0].mxu0
        %v2963 = vadd.f32 %v1874, %v2962
        %v2964 = vpop.f32.mrb[0].mxu0
        %2965 = vmatprep.mubr.f32.mxu0 0.0
        %v2966 = vand.u32 %v903, 4294901760
        %2967 = vmatmul.mubr.f32.gmra.mrb[0].mxu0 %v2966
        %v2968 = vpop.f32.mrb[0].mxu0
        %v2969 = vadd.f32 %v1884, %v2968
        %v2970 = vpop.f32.mrb[0].mxu0
        %2971 = vmatprep.mubr.f32.mxu0 0.0
        %v2972 = vand.u32 %v906, 4294901760
        %2973 = vmatmul.mubr.f32.gmra.mrb[0].mxu0 %v2972
        %v2974 = vpop.f32.mrb[0].mxu0
        %v2975 = vadd.f32 %v1894, %v2974
        %v2976 = vpop.f32.mrb[0].mxu0
        %2977 = vmatprep.mubr.f32.mxu0 0.0
        %v2978 = vand.u32 %v909, 4294901760
        %2979 = vmatmul.mubr.f32.gmra.mrb[0].mxu0 %v2978
        %v2980 = vpop.f32.mrb[0].mxu0
        %v2981 = vadd.f32 %v1904, %v2980
        %v2982 = vpop.f32.mrb[0].mxu0
        %2983 = vmatprep.mubr.f32.mxu0 0.0
        %v2984 = vand.u32 %v912, 4294901760
        %2985 = vmatmul.mubr.f32.gmra.mrb[0].mxu0 %v2984
        %v2986 = vpop.f32.mrb[0].mxu0
        %v2987 = vadd.f32 %v1914, %v2986
        %v2988 = vpop.f32.mrb[0].mxu0
        %2989 = vmatprep.mubr.f32.mxu0 0.0
        %v2990 = vand.u32 %v915, 4294901760
        %2991 = vmatmul.mubr.f32.gmra.mrb[0].mxu0 %v2990
        %v2992 = vpop.f32.mrb[0].mxu0
        %v2993 = vadd.f32 %v1924, %v2992
        %v2994 = vpop.f32.mrb[0].mxu0
        %2995 = vmatprep.mubr.f32.mxu0 0.0
        %v2996 = vand.u32 %v918, 4294901760
        %2997 = vmatmul.mubr.f32.gmra.mrb[0].mxu0 %v2996
        %v2998 = vpop.f32.mrb[0].mxu0
        %v2999 = vadd.f32 %v1934, %v2998
        %v3000 = vpop.f32.mrb[0].mxu0
        %3001 = vmatprep.mubr.f32.mxu0 0.0
        %v3002 = vand.u32 %v921, 4294901760
        %3003 = vmatmul.mubr.f32.gmra.mrb[0].mxu0 %v3002
        %v3004 = vpop.f32.mrb[0].mxu0
        %v3005 = vadd.f32 %v1944, %v3004
        %v3006 = vpop.f32.mrb[0].mxu0
        %3007 = vmatprep.mubr.f32.mxu0 0.0
        %v3008 = vand.u32 %v924, 4294901760
        %3009 = vmatmul.mubr.f32.gmra.mrb[0].mxu0 %v3008
        %v3010 = vpop.f32.mrb[0].mxu0
        %v3011 = vadd.f32 %v1954, %v3010
        %v3012 = vpop.f32.mrb[0].mxu0
        %3013 = vmatprep.mubr.f32.mxu0 0.0
        %v3014 = vand.u32 %v927, 4294901760
        %3015 = vmatmul.mubr.f32.gmra.mrb[0].mxu0 %v3014
        %v3016 = vpop.f32.mrb[0].mxu0
        %v3017 = vadd.f32 %v1964, %v3016
        %v3018 = vpop.f32.mrb[0].mxu0
        %3019 = vmatprep.mubr.f32.mxu0 0.0
        %v3020 = vand.u32 %v930, 4294901760
        %3021 = vmatmul.mubr.f32.gmra.mrb[0].mxu0 %v3020
        %v3022 = vpop.f32.mrb[0].mxu0
        %v3023 = vadd.f32 %v1974, %v3022
        %v3024 = vpop.f32.mrb[0].mxu0
        %3025 = vmatprep.mubr.f32.mxu0 0.0
        %v3026 = vand.u32 %v933, 4294901760
        %3027 = vmatmul.mubr.f32.gmra.mrb[0].mxu0 %v3026
        %v3028 = vpop.f32.mrb[0].mxu0
        %v3029 = vadd.f32 %v1984, %v3028
        %v3030 = vpop.f32.mrb[0].mxu0
        %3031 = vmatprep.mubr.f32.mxu0 0.0
        %v3032 = vand.u32 %v936, 4294901760
        %3033 = vmatmul.mubr.f32.gmra.mrb[0].mxu0 %v3032
        %v3034 = vpop.f32.mrb[0].mxu0
        %v3035 = vadd.f32 %v1994, %v3034
        %v3036 = vpop.f32.mrb[0].mxu0
        %3037 = vmatprep.mubr.f32.mxu0 0.0
        %v3038 = vand.u32 %v939, 4294901760
        %3039 = vmatmul.mubr.f32.gmra.mrb[0].mxu0 %v3038
        %v3040 = vpop.f32.mrb[0].mxu0
        %v3041 = vadd.f32 %v2004, %v3040
        %v3042 = vpop.f32.mrb[0].mxu0
        %3043 = vmatprep.mubr.f32.mxu0 0.0
        %v3044 = vand.u32 %v942, 4294901760
        %3045 = vmatmul.mubr.f32.gmra.mrb[0].mxu0 %v3044
        %v3046 = vpop.f32.mrb[0].mxu0
        %v3047 = vadd.f32 %v2014, %v3046
        %v3048 = vpop.f32.mrb[0].mxu0
        %3049 = vmatprep.mubr.f32.mxu0 0.0
        %v3050 = vand.u32 %v945, 4294901760
        %3051 = vmatmul.mubr.f32.gmra.mrb[0].mxu0 %v3050
        %v3052 = vpop.f32.mrb[0].mxu0
        %v3053 = vadd.f32 %v2024, %v3052
        %v3054 = vpop.f32.mrb[0].mxu0
        %3055 = vmatprep.mubr.f32.mxu0 0.0
        %v3056 = vand.u32 %v948, 4294901760
        %3057 = vmatmul.mubr.f32.gmra.mrb[0].mxu0 %v3056
        %v3058 = vpop.f32.mrb[0].mxu0
        %v3059 = vadd.f32 %v2034, %v3058
        %v3060 = vpop.f32.mrb[0].mxu0
        %3061 = vmatprep.mubr.f32.mxu0 0.0
        %v3062 = vand.u32 %v951, 4294901760
        %3063 = vmatmul.mubr.f32.gmra.mrb[0].mxu0 %v3062
        %v3064 = vpop.f32.mrb[0].mxu0
        %v3065 = vadd.f32 %v2044, %v3064
        %v3066 = vpop.f32.mrb[0].mxu0
        %3067 = vmatprep.mubr.f32.mxu0 0.0
        %v3068 = vand.u32 %v954, 4294901760
        %3069 = vmatmul.mubr.f32.gmra.mrb[0].mxu0 %v3068
        %v3070 = vpop.f32.mrb[0].mxu0
        %v3071 = vadd.f32 %v2054, %v3070
        %v3072 = vpop.f32.mrb[0].mxu0
        %3073 = vmatprep.mubr.f32.mxu0 0.0
        %v3074 = vand.u32 %v957, 4294901760
        %3075 = vmatmul.mubr.f32.gmra.mrb[0].mxu0 %v3074
        %v3076 = vpop.f32.mrb[0].mxu0
        %v3077 = vadd.f32 %v2064, %v3076
        %v3078 = vpop.f32.mrb[0].mxu0
        %3079 = vmatprep.mubr.f32.mxu0 0.0
        %v3080 = vand.u32 %v960, 4294901760
        %3081 = vmatmul.mubr.f32.gmra.mrb[0].mxu0 %v3080
        %v3082 = vpop.f32.mrb[0].mxu0
        %v3083 = vadd.f32 %v2074, %v3082
        %v3084 = vpop.f32.mrb[0].mxu0
        %3085 = vmatprep.mubr.f32.mxu0 0.0
        %v3086 = vand.u32 %v963, 4294901760
        %3087 = vmatmul.mubr.f32.gmra.mrb[0].mxu0 %v3086
        %v3088 = vpop.f32.mrb[0].mxu0
        %v3089 = vadd.f32 %v2084, %v3088
        %v3090 = vpop.f32.mrb[0].mxu0
        %3091 = vmatprep.mubr.f32.mxu0 0.0
        %v3092 = vand.u32 %v966, 4294901760
        %3093 = vmatmul.mubr.f32.gmra.mrb[0].mxu0 %v3092
        %v3094 = vpop.f32.mrb[0].mxu0
        %v3095 = vadd.f32 %v2094, %v3094
        %v3096 = vpop.f32.mrb[0].mxu0
        %3097 = vmatprep.mubr.f32.mxu0 0.0
        %v3098 = vand.u32 %v969, 4294901760
        %3099 = vmatmul.mubr.f32.gmra.mrb[0].mxu0 %v3098
        %v3100 = vpop.f32.mrb[0].mxu0
        %v3101 = vadd.f32 %v2104, %v3100
        %v3102 = vpop.f32.mrb[0].mxu0
        %3103 = vmatprep.mubr.f32.mxu0 0.0
        %v3104 = vand.u32 %v972, 4294901760
        %3105 = vmatmul.mubr.f32.gmra.mrb[0].mxu0 %v3104
        %v3106 = vpop.f32.mrb[0].mxu0
        %v3107 = vadd.f32 %v2114, %v3106
        %v3108 = vpop.f32.mrb[0].mxu0
        %3109 = vmatprep.mubr.f32.mxu0 0.0
        %v3110 = vand.u32 %v975, 4294901760
        %3111 = vmatmul.mubr.f32.gmra.mrb[0].mxu0 %v3110
        %v3112 = vpop.f32.mrb[0].mxu0
        %v3113 = vadd.f32 %v2124, %v3112
        %v3114 = vpop.f32.mrb[0].mxu0
        %3115 = vmatprep.mubr.f32.mxu0 0.0
        %v3116 = vand.u32 %v978, 4294901760
        %3117 = vmatmul.mubr.f32.gmra.mrb[0].mxu0 %v3116
        %v3118 = vpop.f32.mrb[0].mxu0
        %v3119 = vadd.f32 %v2134, %v3118
        %v3120 = vpop.f32.mrb[0].mxu0
        %3121 = vmatprep.mubr.f32.mxu0 0.0
        %v3122 = vand.u32 %v981, 4294901760
        %3123 = vmatmul.mubr.f32.gmra.mrb[0].mxu0 %v3122
        %v3124 = vpop.f32.mrb[0].mxu0
        %v3125 = vadd.f32 %v2144, %v3124
        %v3126 = vpop.f32.mrb[0].mxu0
        %3127 = vmatprep.mubr.f32.mxu0 0.0
        %v3128 = vand.u32 %v984, 4294901760
        %3129 = vmatmul.mubr.f32.gmra.mrb[0].mxu0 %v3128
        %v3130 = vpop.f32.mrb[0].mxu0
        %v3131 = vadd.f32 %v2154, %v3130
        %v3132 = vpop.f32.mrb[0].mxu0
        %3133 = vmatprep.mubr.f32.mxu0 0.0
        %v3134 = vand.u32 %v987, 4294901760
        %3135 = vmatmul.mubr.f32.gmra.mrb[0].mxu0 %v3134
        %v3136 = vpop.f32.mrb[0].mxu0
        %v3137 = vadd.f32 %v2164, %v3136
        %v3138 = vpop.f32.mrb[0].mxu0
        %3139 = vmatprep.mubr.f32.mxu0 0.0
        %v3140 = vand.u32 %v990, 4294901760
        %3141 = vmatmul.mubr.f32.gmra.mrb[0].mxu0 %v3140
        %v3142 = vpop.f32.mrb[0].mxu0
        %v3143 = vadd.f32 %v2174, %v3142
        %v3144 = vpop.f32.mrb[0].mxu0
        %3145 = vmatprep.mubr.f32.mxu0 0.0
        %v3146 = vand.u32 %v993, 4294901760
        %3147 = vmatmul.mubr.f32.gmra.mrb[0].mxu0 %v3146
        %v3148 = vpop.f32.mrb[0].mxu0
        %v3149 = vadd.f32 %v2184, %v3148
        %v3150 = vpop.f32.mrb[0].mxu0
        %3151 = vmatprep.mubr.f32.mxu0 0.0
        %v3152 = vand.u32 %v996, 4294901760
        %3153 = vmatmul.mubr.f32.gmra.mrb[0].mxu0 %v3152
        %v3154 = vpop.f32.mrb[0].mxu0
        %v3155 = vadd.f32 %v2194, %v3154
        %v3156 = vpop.f32.mrb[0].mxu0
        %3157 = vmatprep.mubr.f32.mxu0 0.0
        %v3158 = vand.u32 %v999, 4294901760
        %3159 = vmatmul.mubr.f32.gmra.mrb[0].mxu0 %v3158
        %v3160 = vpop.f32.mrb[0].mxu0
        %v3161 = vadd.f32 %v2204, %v3160
        %v3162 = vpop.f32.mrb[0].mxu0
        %3163 = vmatprep.mubr.f32.mxu0 0.0
        %v3164 = vand.u32 %v1002, 4294901760
        %3165 = vmatmul.mubr.f32.gmra.mrb[0].mxu0 %v3164
        %v3166 = vpop.f32.mrb[0].mxu0
        %v3167 = vadd.f32 %v2214, %v3166
        %v3168 = vpop.f32.mrb[0].mxu0
        %3169 = vmatprep.mubr.f32.mxu0 0.0
        %v3170 = vand.u32 %v1005, 4294901760
        %3171 = vmatmul.mubr.f32.gmra.mrb[0].mxu0 %v3170
        %v3172 = vpop.f32.mrb[0].mxu0
        %v3173 = vadd.f32 %v2224, %v3172
        %v3174 = vpop.f32.mrb[0].mxu0
        %3175 = vmatprep.mubr.f32.mxu0 0.0
        %v3176 = vand.u32 %v1008, 4294901760
        %3177 = vmatmul.mubr.f32.gmra.mrb[0].mxu0 %v3176
        %v3178 = vpop.f32.mrb[0].mxu0
        %v3179 = vadd.f32 %v2234, %v3178
        %v3180 = vpop.f32.mrb[0].mxu0
        %3181 = vmatprep.mubr.f32.mxu0 0.0
        %v3182 = vand.u32 %v1011, 4294901760
        %3183 = vmatmul.mubr.f32.gmra.mrb[0].mxu0 %v3182
        %v3184 = vpop.f32.mrb[0].mxu0
        %v3185 = vadd.f32 %v2244, %v3184
        %v3186 = vpop.f32.mrb[0].mxu0
        %3187 = vmatprep.mubr.f32.mxu0 0.0
        %v3188 = vand.u32 %v1014, 4294901760
        %3189 = vmatmul.mubr.f32.gmra.mrb[0].mxu0 %v3188
        %v3190 = vpop.f32.mrb[0].mxu0
        %v3191 = vadd.f32 %v2254, %v3190
        %v3192 = vpop.f32.mrb[0].mxu0
        %3193 = vmatprep.mubr.f32.mxu0 0.0
        %v3194 = vand.u32 %v1017, 4294901760
        %3195 = vmatmul.mubr.f32.gmra.mrb[0].mxu0 %v3194
        %v3196 = vpop.f32.mrb[0].mxu0
        %v3197 = vadd.f32 %v2264, %v3196
        %v3198 = vpop.f32.mrb[0].mxu0
        %3199 = vmatprep.mubr.f32.mxu0 0.0
        %v3200 = vand.u32 %v1020, 4294901760
        %3201 = vmatmul.mubr.f32.gmra.mrb[0].mxu0 %v3200
        %v3202 = vpop.f32.mrb[0].mxu0
        %v3203 = vadd.f32 %v2274, %v3202
        %v3204 = vpop.f32.mrb[0].mxu0
        %3205 = vmatprep.mubr.f32.mxu0 0.0
        %v3206 = vand.u32 %v1023, 4294901760
        %3207 = vmatmul.mubr.f32.gmra.mrb[0].mxu0 %v3206
        %v3208 = vpop.f32.mrb[0].mxu0
        %v3209 = vadd.f32 %v2284, %v3208
        %v3210 = vpop.f32.mrb[0].mxu0
        %3211 = vmatprep.mubr.f32.mxu0 0.0
        %v3212 = vand.u32 %v1026, 4294901760
        %3213 = vmatmul.mubr.f32.gmra.mrb[0].mxu0 %v3212
        %v3214 = vpop.f32.mrb[0].mxu0
        %v3215 = vadd.f32 %v2294, %v3214
        %v3216 = vpop.f32.mrb[0].mxu0
        %3217 = vmatprep.mubr.f32.mxu0 0.0
        %v3218 = vand.u32 %v1029, 4294901760
        %3219 = vmatmul.mubr.f32.gmra.mrb[0].mxu0 %v3218
        %v3220 = vpop.f32.mrb[0].mxu0
        %v3221 = vadd.f32 %v2304, %v3220
        %v3222 = vpop.f32.mrb[0].mxu0
        %3223 = vmatprep.mubr.f32.mxu0 0.0
        %v3224 = vand.u32 %v1032, 4294901760
        %3225 = vmatmul.mubr.f32.gmra.mrb[0].mxu0 %v3224
        %v3226 = vpop.f32.mrb[0].mxu0
        %v3227 = vadd.f32 %v2314, %v3226
        %v3228 = vpop.f32.mrb[0].mxu0
        %3229 = vmatprep.mubr.f32.mxu0 0.0
        %v3230 = vand.u32 %v1035, 4294901760
        %3231 = vmatmul.mubr.f32.gmra.mrb[0].mxu0 %v3230
        %v3232 = vpop.f32.mrb[0].mxu0
        %v3233 = vadd.f32 %v2324, %v3232
        %v3234 = vpop.f32.mrb[0].mxu0
        %3235 = vmatprep.mubr.f32.mxu0 0.0
        %v3236 = vand.u32 %v1038, 4294901760
        %3237 = vmatmul.mubr.f32.gmra.mrb[0].mxu0 %v3236
        %v3238 = vpop.f32.mrb[0].mxu0
        %v3239 = vadd.f32 %v2334, %v3238
        %v3240 = vpop.f32.mrb[0].mxu0
        %3241 = vmatprep.mubr.f32.mxu0 0.0
        %v3242 = vand.u32 %v1041, 4294901760
        %3243 = vmatmul.mubr.f32.gmra.mrb[0].mxu0 %v3242
        %v3244 = vpop.f32.mrb[0].mxu0
        %v3245 = vadd.f32 %v2344, %v3244
        %v3246 = vpop.f32.mrb[0].mxu0
        %3247 = vmatprep.mubr.f32.mxu0 0.0
        %v3248 = vand.u32 %v1044, 4294901760
        %3249 = vmatmul.mubr.f32.gmra.mrb[0].mxu0 %v3248
        %v3250 = vpop.f32.mrb[0].mxu0
        %v3251 = vadd.f32 %v2354, %v3250
        %v3252 = vpop.f32.mrb[0].mxu0
        %3253 = vmatprep.mubr.f32.mxu0 0.0
        %v3254 = vand.u32 %v1047, 4294901760
        %3255 = vmatmul.mubr.f32.gmra.mrb[0].mxu0 %v3254
        %v3256 = vpop.f32.mrb[0].mxu0
        %v3257 = vadd.f32 %v2364, %v3256
        %v3258 = vpop.f32.mrb[0].mxu0
        %3259 = vmatprep.mubr.f32.mxu0 0.0
        %v3260 = vand.u32 %v1050, 4294901760
        %3261 = vmatmul.mubr.f32.gmra.mrb[0].mxu0 %v3260
        %v3262 = vpop.f32.mrb[0].mxu0
        %v3263 = vadd.f32 %v2374, %v3262
        %v3264 = vpop.f32.mrb[0].mxu0
        %3265 = vmatprep.mubr.f32.mxu0 0.0
        %v3266 = vand.u32 %v1053, 4294901760
        %3267 = vmatmul.mubr.f32.gmra.mrb[0].mxu0 %v3266
        %v3268 = vpop.f32.mrb[0].mxu0
        %v3269 = vadd.f32 %v2384, %v3268
        %v3270 = vpop.f32.mrb[0].mxu0
        %3271 = vmatprep.mubr.f32.mxu0 0.0
        %v3272 = vand.u32 %v1056, 4294901760
        %3273 = vmatmul.mubr.f32.gmra.mrb[0].mxu0 %v3272
        %v3274 = vpop.f32.mrb[0].mxu0
        %v3275 = vadd.f32 %v2394, %v3274
        %v3276 = vpop.f32.mrb[0].mxu0
        %3277 = vmatprep.mubr.f32.mxu0 0.0
        %v3278 = vand.u32 %v1059, 4294901760
        %3279 = vmatmul.mubr.f32.gmra.mrb[0].mxu0 %v3278
        %v3280 = vpop.f32.mrb[0].mxu0
        %v3281 = vadd.f32 %v2404, %v3280
        %v3282 = vpop.f32.mrb[0].mxu0
        %3283 = vmatprep.mubr.f32.mxu0 0.0
        %v3284 = vand.u32 %v1062, 4294901760
        %3285 = vmatmul.mubr.f32.gmra.mrb[0].mxu0 %v3284
        %v3286 = vpop.f32.mrb[0].mxu0
        %v3287 = vadd.f32 %v2414, %v3286
        %v3288 = vpop.f32.mrb[0].mxu0
        %3289 = vdwg.mxu0
        %3290 = vmatprep.subr.mxu0 0.0
        %v3291 = vand.u32 %v415, 4294901760
        %v3292 = vsub.f32 %v415, %v3291
        %3293 = vmatpush1.msra.mxu0 %v3292
        %3294 = vmatprep.subr.mxu0 0.0
        %v3295 = vand.u32 %v416, 4294901760
        %v3296 = vsub.f32 %v416, %v3295
        %3297 = vmatpush1.msra.mxu0 %v3296
        %3298 = vmatprep.subr.mxu0 0.0
        %v3299 = vand.u32 %v417, 4294901760
        %v3300 = vsub.f32 %v417, %v3299
        %3301 = vmatpush1.msra.mxu0 %v3300
        %3302 = vmatprep.subr.mxu0 0.0
        %v3303 = vand.u32 %v418, 4294901760
        %v3304 = vsub.f32 %v418, %v3303
        %3305 = vmatpush1.msra.mxu0 %v3304
        %3306 = vmatprep.subr.mxu0 0.0
        %v3307 = vand.u32 %v419, 4294901760
        %v3308 = vsub.f32 %v419, %v3307
        %3309 = vmatpush1.msra.mxu0 %v3308
        %3310 = vmatprep.subr.mxu0 0.0
        %v3311 = vand.u32 %v420, 4294901760
        %v3312 = vsub.f32 %v420, %v3311
        %3313 = vmatpush1.msra.mxu0 %v3312
        %3314 = vmatprep.subr.mxu0 0.0
        %v3315 = vand.u32 %v421, 4294901760
        %v3316 = vsub.f32 %v421, %v3315
        %3317 = vmatpush1.msra.mxu0 %v3316
        %3318 = vmatprep.subr.mxu0 0.0
        %v3319 = vand.u32 %v422, 4294901760
        %v3320 = vsub.f32 %v422, %v3319
        %3321 = vmatpush1.msra.mxu0 %v3320
        %3322 = vmatprep.subr.mxu0 0.0
        %3323 = vmatpush1.msra.mxu0 0.0
        %3324 = vmatprep.subr.mxu0 0.0
        %3325 = vmatpush1.msra.mxu0 0.0
        %3326 = vmatprep.subr.mxu0 0.0
        %3327 = vmatpush1.msra.mxu0 0.0
        %3328 = vmatprep.subr.mxu0 0.0
        %3329 = vmatpush1.msra.mxu0 0.0
        %3330 = vmatprep.subr.mxu0 0.0
        %3331 = vmatpush1.msra.mxu0 0.0
        %3332 = vmatprep.subr.mxu0 0.0
        %3333 = vmatpush1.msra.mxu0 0.0
        %3334 = vmatprep.subr.mxu0 0.0
        %3335 = vmatpush1.msra.mxu0 0.0
        %3336 = vmatprep.subr.mxu0 0.0
        %3337 = vmatpush1.msra.mxu0 0.0
        %3338 = vmatprep.subr.mxu0 0.0
        %3339 = vmatpush1.msra.mxu0 0.0
        %3340 = vmatprep.subr.mxu0 0.0
        %3341 = vmatpush1.msra.mxu0 0.0
        %3342 = vmatprep.subr.mxu0 0.0
        %3343 = vmatpush1.msra.mxu0 0.0
        %3344 = vmatprep.subr.mxu0 0.0
        %3345 = vmatpush1.msra.mxu0 0.0
        %3346 = vmatprep.subr.mxu0 0.0
        %3347 = vmatpush1.msra.mxu0 0.0
        %3348 = vmatprep.subr.mxu0 0.0
        %3349 = vmatpush1.msra.mxu0 0.0
        %3350 = vmatprep.subr.mxu0 0.0
        %3351 = vmatpush1.msra.mxu0 0.0
        %3352 = vmatprep.subr.mxu0 0.0
        %3353 = vmatpush1.msra.mxu0 0.0
        %3354 = vmatprep.subr.mxu0 0.0
        %3355 = vmatpush1.msra.mxu0 0.0
        %3356 = vmatprep.subr.mxu0 0.0
        %3357 = vmatpush1.msra.mxu0 0.0
        %3358 = vmatprep.subr.mxu0 0.0
        %3359 = vmatpush1.msra.mxu0 0.0
        %3360 = vmatprep.subr.mxu0 0.0
        %3361 = vmatpush1.msra.mxu0 0.0
        %3362 = vmatprep.subr.mxu0 0.0
        %3363 = vmatpush1.msra.mxu0 0.0
        %3364 = vmatprep.subr.mxu0 0.0
        %3365 = vmatpush1.msra.mxu0 0.0
        %3366 = vmatprep.subr.mxu0 0.0
        %3367 = vmatpush1.msra.mxu0 0.0
        %3368 = vmatprep.subr.mxu0 0.0
        %3369 = vmatpush1.msra.mxu0 0.0
        %3370 = vmatprep.mubr.f32.mxu0 0.0
        %v3371 = vand.u32 %v681, 4294901760
        %v3372 = vsub.f32 %v681, %v3371
        %3373 = vmatmul.mubr.f32.gmra.mrb[0].mxu0 %v3372
        %v3374 = vpop.f32.mrb[0].mxu0
        %v3375 = vadd.f32 %v2525, %v3374
        %v3376 = vpop.f32.mrb[0].mxu0
        %3377 = vmatprep.mubr.f32.mxu0 0.0
        %v3378 = vand.u32 %v684, 4294901760
        %v3379 = vsub.f32 %v684, %v3378
        %3380 = vmatmul.mubr.f32.gmra.mrb[0].mxu0 %v3379
        %v3381 = vpop.f32.mrb[0].mxu0
        %v3382 = vadd.f32 %v2531, %v3381
        %v3383 = vpop.f32.mrb[0].mxu0
        %3384 = vmatprep.mubr.f32.mxu0 0.0
        %v3385 = vand.u32 %v687, 4294901760
        %v3386 = vsub.f32 %v687, %v3385
        %3387 = vmatmul.mubr.f32.gmra.mrb[0].mxu0 %v3386
        %v3388 = vpop.f32.mrb[0].mxu0
        %v3389 = vadd.f32 %v2537, %v3388
        %v3390 = vpop.f32.mrb[0].mxu0
        %3391 = vmatprep.mubr.f32.mxu0 0.0
        %v3392 = vand.u32 %v690, 4294901760
        %v3393 = vsub.f32 %v690, %v3392
        %3394 = vmatmul.mubr.f32.gmra.mrb[0].mxu0 %v3393
        %v3395 = vpop.f32.mrb[0].mxu0
        %v3396 = vadd.f32 %v2543, %v3395
        %v3397 = vpop.f32.mrb[0].mxu0
        %3398 = vmatprep.mubr.f32.mxu0 0.0
        %v3399 = vand.u32 %v693, 4294901760
        %v3400 = vsub.f32 %v693, %v3399
        %3401 = vmatmul.mubr.f32.gmra.mrb[0].mxu0 %v3400
        %v3402 = vpop.f32.mrb[0].mxu0
        %v3403 = vadd.f32 %v2549, %v3402
        %v3404 = vpop.f32.mrb[0].mxu0
        %3405 = vmatprep.mubr.f32.mxu0 0.0
        %v3406 = vand.u32 %v696, 4294901760
        %v3407 = vsub.f32 %v696, %v3406
        %3408 = vmatmul.mubr.f32.gmra.mrb[0].mxu0 %v3407
        %v3409 = vpop.f32.mrb[0].mxu0
        %v3410 = vadd.f32 %v2555, %v3409
        %v3411 = vpop.f32.mrb[0].mxu0
        %3412 = vmatprep.mubr.f32.mxu0 0.0
        %v3413 = vand.u32 %v699, 4294901760
        %v3414 = vsub.f32 %v699, %v3413
        %3415 = vmatmul.mubr.f32.gmra.mrb[0].mxu0 %v3414
        %v3416 = vpop.f32.mrb[0].mxu0
        %v3417 = vadd.f32 %v2561, %v3416
        %v3418 = vpop.f32.mrb[0].mxu0
        %3419 = vmatprep.mubr.f32.mxu0 0.0
        %v3420 = vand.u32 %v702, 4294901760
        %v3421 = vsub.f32 %v702, %v3420
        %3422 = vmatmul.mubr.f32.gmra.mrb[0].mxu0 %v3421
        %v3423 = vpop.f32.mrb[0].mxu0
        %v3424 = vadd.f32 %v2567, %v3423
        %v3425 = vpop.f32.mrb[0].mxu0
        %3426 = vmatprep.mubr.f32.mxu0 0.0
        %v3427 = vand.u32 %v705, 4294901760
        %v3428 = vsub.f32 %v705, %v3427
        %3429 = vmatmul.mubr.f32.gmra.mrb[0].mxu0 %v3428
        %v3430 = vpop.f32.mrb[0].mxu0
        %v3431 = vadd.f32 %v2573, %v3430
        %v3432 = vpop.f32.mrb[0].mxu0
        %3433 = vmatprep.mubr.f32.mxu0 0.0
        %v3434 = vand.u32 %v708, 4294901760
        %v3435 = vsub.f32 %v708, %v3434
        %3436 = vmatmul.mubr.f32.gmra.mrb[0].mxu0 %v3435
        %v3437 = vpop.f32.mrb[0].mxu0
        %v3438 = vadd.f32 %v2579, %v3437
        %v3439 = vpop.f32.mrb[0].mxu0
        %3440 = vmatprep.mubr.f32.mxu0 0.0
        %v3441 = vand.u32 %v711, 4294901760
        %v3442 = vsub.f32 %v711, %v3441
        %3443 = vmatmul.mubr.f32.gmra.mrb[0].mxu0 %v3442
        %v3444 = vpop.f32.mrb[0].mxu0
        %v3445 = vadd.f32 %v2585, %v3444
        %v3446 = vpop.f32.mrb[0].mxu0
        %3447 = vmatprep.mubr.f32.mxu0 0.0
        %v3448 = vand.u32 %v714, 4294901760
        %v3449 = vsub.f32 %v714, %v3448
        %3450 = vmatmul.mubr.f32.gmra.mrb[0].mxu0 %v3449
        %v3451 = vpop.f32.mrb[0].mxu0
        %v3452 = vadd.f32 %v2591, %v3451
        %v3453 = vpop.f32.mrb[0].mxu0
        %3454 = vmatprep.mubr.f32.mxu0 0.0
        %v3455 = vand.u32 %v717, 4294901760
        %v3456 = vsub.f32 %v717, %v3455
        %3457 = vmatmul.mubr.f32.gmra.mrb[0].mxu0 %v3456
        %v3458 = vpop.f32.mrb[0].mxu0
        %v3459 = vadd.f32 %v2597, %v3458
        %v3460 = vpop.f32.mrb[0].mxu0
        %3461 = vmatprep.mubr.f32.mxu0 0.0
        %v3462 = vand.u32 %v720, 4294901760
        %v3463 = vsub.f32 %v720, %v3462
        %3464 = vmatmul.mubr.f32.gmra.mrb[0].mxu0 %v3463
        %v3465 = vpop.f32.mrb[0].mxu0
        %v3466 = vadd.f32 %v2603, %v3465
        %v3467 = vpop.f32.mrb[0].mxu0
        %3468 = vmatprep.mubr.f32.mxu0 0.0
        %v3469 = vand.u32 %v723, 4294901760
        %v3470 = vsub.f32 %v723, %v3469
        %3471 = vmatmul.mubr.f32.gmra.mrb[0].mxu0 %v3470
        %v3472 = vpop.f32.mrb[0].mxu0
        %v3473 = vadd.f32 %v2609, %v3472
        %v3474 = vpop.f32.mrb[0].mxu0
        %3475 = vmatprep.mubr.f32.mxu0 0.0
        %v3476 = vand.u32 %v726, 4294901760
        %v3477 = vsub.f32 %v726, %v3476
        %3478 = vmatmul.mubr.f32.gmra.mrb[0].mxu0 %v3477
        %v3479 = vpop.f32.mrb[0].mxu0
        %v3480 = vadd.f32 %v2615, %v3479
        %v3481 = vpop.f32.mrb[0].mxu0
        %3482 = vmatprep.mubr.f32.mxu0 0.0
        %v3483 = vand.u32 %v729, 4294901760
        %v3484 = vsub.f32 %v729, %v3483
        %3485 = vmatmul.mubr.f32.gmra.mrb[0].mxu0 %v3484
        %v3486 = vpop.f32.mrb[0].mxu0
        %v3487 = vadd.f32 %v2621, %v3486
        %v3488 = vpop.f32.mrb[0].mxu0
        %3489 = vmatprep.mubr.f32.mxu0 0.0
        %v3490 = vand.u32 %v732, 4294901760
        %v3491 = vsub.f32 %v732, %v3490
        %3492 = vmatmul.mubr.f32.gmra.mrb[0].mxu0 %v3491
        %v3493 = vpop.f32.mrb[0].mxu0
        %v3494 = vadd.f32 %v2627, %v3493
        %v3495 = vpop.f32.mrb[0].mxu0
        %3496 = vmatprep.mubr.f32.mxu0 0.0
        %v3497 = vand.u32 %v735, 4294901760
        %v3498 = vsub.f32 %v735, %v3497
        %3499 = vmatmul.mubr.f32.gmra.mrb[0].mxu0 %v3498
        %v3500 = vpop.f32.mrb[0].mxu0
        %v3501 = vadd.f32 %v2633, %v3500
        %v3502 = vpop.f32.mrb[0].mxu0
        %3503 = vmatprep.mubr.f32.mxu0 0.0
        %v3504 = vand.u32 %v738, 4294901760
        %v3505 = vsub.f32 %v738, %v3504
        %3506 = vmatmul.mubr.f32.gmra.mrb[0].mxu0 %v3505
        %v3507 = vpop.f32.mrb[0].mxu0
        %v3508 = vadd.f32 %v2639, %v3507
        %v3509 = vpop.f32.mrb[0].mxu0
        %3510 = vmatprep.mubr.f32.mxu0 0.0
        %v3511 = vand.u32 %v741, 4294901760
        %v3512 = vsub.f32 %v741, %v3511
        %3513 = vmatmul.mubr.f32.gmra.mrb[0].mxu0 %v3512
        %v3514 = vpop.f32.mrb[0].mxu0
        %v3515 = vadd.f32 %v2645, %v3514
        %v3516 = vpop.f32.mrb[0].mxu0
        %3517 = vmatprep.mubr.f32.mxu0 0.0
        %v3518 = vand.u32 %v744, 4294901760
        %v3519 = vsub.f32 %v744, %v3518
        %3520 = vmatmul.mubr.f32.gmra.mrb[0].mxu0 %v3519
        %v3521 = vpop.f32.mrb[0].mxu0
        %v3522 = vadd.f32 %v2651, %v3521
        %v3523 = vpop.f32.mrb[0].mxu0
        %3524 = vmatprep.mubr.f32.mxu0 0.0
        %v3525 = vand.u32 %v747, 4294901760
        %v3526 = vsub.f32 %v747, %v3525
        %3527 = vmatmul.mubr.f32.gmra.mrb[0].mxu0 %v3526
        %v3528 = vpop.f32.mrb[0].mxu0
        %v3529 = vadd.f32 %v2657, %v3528
        %v3530 = vpop.f32.mrb[0].mxu0
        %3531 = vmatprep.mubr.f32.mxu0 0.0
        %v3532 = vand.u32 %v750, 4294901760
        %v3533 = vsub.f32 %v750, %v3532
        %3534 = vmatmul.mubr.f32.gmra.mrb[0].mxu0 %v3533
        %v3535 = vpop.f32.mrb[0].mxu0
        %v3536 = vadd.f32 %v2663, %v3535
        %v3537 = vpop.f32.mrb[0].mxu0
        %3538 = vmatprep.mubr.f32.mxu0 0.0
        %v3539 = vand.u32 %v753, 4294901760
        %v3540 = vsub.f32 %v753, %v3539
        %3541 = vmatmul.mubr.f32.gmra.mrb[0].mxu0 %v3540
        %v3542 = vpop.f32.mrb[0].mxu0
        %v3543 = vadd.f32 %v2669, %v3542
        %v3544 = vpop.f32.mrb[0].mxu0
        %3545 = vmatprep.mubr.f32.mxu0 0.0
        %v3546 = vand.u32 %v756, 4294901760
        %v3547 = vsub.f32 %v756, %v3546
        %3548 = vmatmul.mubr.f32.gmra.mrb[0].mxu0 %v3547
        %v3549 = vpop.f32.mrb[0].mxu0
        %v3550 = vadd.f32 %v2675, %v3549
        %v3551 = vpop.f32.mrb[0].mxu0
        %3552 = vmatprep.mubr.f32.mxu0 0.0
        %v3553 = vand.u32 %v759, 4294901760
        %v3554 = vsub.f32 %v759, %v3553
        %3555 = vmatmul.mubr.f32.gmra.mrb[0].mxu0 %v3554
        %v3556 = vpop.f32.mrb[0].mxu0
        %v3557 = vadd.f32 %v2681, %v3556
        %v3558 = vpop.f32.mrb[0].mxu0
        %3559 = vmatprep.mubr.f32.mxu0 0.0
        %v3560 = vand.u32 %v762, 4294901760
        %v3561 = vsub.f32 %v762, %v3560
        %3562 = vmatmul.mubr.f32.gmra.mrb[0].mxu0 %v3561
        %v3563 = vpop.f32.mrb[0].mxu0
        %v3564 = vadd.f32 %v2687, %v3563
        %v3565 = vpop.f32.mrb[0].mxu0
        %3566 = vmatprep.mubr.f32.mxu0 0.0
        %v3567 = vand.u32 %v765, 4294901760
        %v3568 = vsub.f32 %v765, %v3567
        %3569 = vmatmul.mubr.f32.gmra.mrb[0].mxu0 %v3568
        %v3570 = vpop.f32.mrb[0].mxu0
        %v3571 = vadd.f32 %v2693, %v3570
        %v3572 = vpop.f32.mrb[0].mxu0
        %3573 = vmatprep.mubr.f32.mxu0 0.0
        %v3574 = vand.u32 %v768, 4294901760
        %v3575 = vsub.f32 %v768, %v3574
        %3576 = vmatmul.mubr.f32.gmra.mrb[0].mxu0 %v3575
        %v3577 = vpop.f32.mrb[0].mxu0
        %v3578 = vadd.f32 %v2699, %v3577
        %v3579 = vpop.f32.mrb[0].mxu0
        %3580 = vmatprep.mubr.f32.mxu0 0.0
        %v3581 = vand.u32 %v771, 4294901760
        %v3582 = vsub.f32 %v771, %v3581
        %3583 = vmatmul.mubr.f32.gmra.mrb[0].mxu0 %v3582
        %v3584 = vpop.f32.mrb[0].mxu0
        %v3585 = vadd.f32 %v2705, %v3584
        %v3586 = vpop.f32.mrb[0].mxu0
        %3587 = vmatprep.mubr.f32.mxu0 0.0
        %v3588 = vand.u32 %v774, 4294901760
        %v3589 = vsub.f32 %v774, %v3588
        %3590 = vmatmul.mubr.f32.gmra.mrb[0].mxu0 %v3589
        %v3591 = vpop.f32.mrb[0].mxu0
        %v3592 = vadd.f32 %v2711, %v3591
        %v3593 = vpop.f32.mrb[0].mxu0
        %3594 = vmatprep.mubr.f32.mxu0 0.0
        %v3595 = vand.u32 %v777, 4294901760
        %v3596 = vsub.f32 %v777, %v3595
        %3597 = vmatmul.mubr.f32.gmra.mrb[0].mxu0 %v3596
        %v3598 = vpop.f32.mrb[0].mxu0
        %v3599 = vadd.f32 %v2717, %v3598
        %v3600 = vpop.f32.mrb[0].mxu0
        %3601 = vmatprep.mubr.f32.mxu0 0.0
        %v3602 = vand.u32 %v780, 4294901760
        %v3603 = vsub.f32 %v780, %v3602
        %3604 = vmatmul.mubr.f32.gmra.mrb[0].mxu0 %v3603
        %v3605 = vpop.f32.mrb[0].mxu0
        %v3606 = vadd.f32 %v2723, %v3605
        %v3607 = vpop.f32.mrb[0].mxu0
        %3608 = vmatprep.mubr.f32.mxu0 0.0
        %v3609 = vand.u32 %v783, 4294901760
        %v3610 = vsub.f32 %v783, %v3609
        %3611 = vmatmul.mubr.f32.gmra.mrb[0].mxu0 %v3610
        %v3612 = vpop.f32.mrb[0].mxu0
        %v3613 = vadd.f32 %v2729, %v3612
        %v3614 = vpop.f32.mrb[0].mxu0
        %3615 = vmatprep.mubr.f32.mxu0 0.0
        %v3616 = vand.u32 %v786, 4294901760
        %v3617 = vsub.f32 %v786, %v3616
        %3618 = vmatmul.mubr.f32.gmra.mrb[0].mxu0 %v3617
        %v3619 = vpop.f32.mrb[0].mxu0
        %v3620 = vadd.f32 %v2735, %v3619
        %v3621 = vpop.f32.mrb[0].mxu0
        %3622 = vmatprep.mubr.f32.mxu0 0.0
        %v3623 = vand.u32 %v789, 4294901760
        %v3624 = vsub.f32 %v789, %v3623
        %3625 = vmatmul.mubr.f32.gmra.mrb[0].mxu0 %v3624
        %v3626 = vpop.f32.mrb[0].mxu0
        %v3627 = vadd.f32 %v2741, %v3626
        %v3628 = vpop.f32.mrb[0].mxu0
        %3629 = vmatprep.mubr.f32.mxu0 0.0
        %v3630 = vand.u32 %v792, 4294901760
        %v3631 = vsub.f32 %v792, %v3630
        %3632 = vmatmul.mubr.f32.gmra.mrb[0].mxu0 %v3631
        %v3633 = vpop.f32.mrb[0].mxu0
        %v3634 = vadd.f32 %v2747, %v3633
        %v3635 = vpop.f32.mrb[0].mxu0
        %3636 = vmatprep.mubr.f32.mxu0 0.0
        %v3637 = vand.u32 %v795, 4294901760
        %v3638 = vsub.f32 %v795, %v3637
        %3639 = vmatmul.mubr.f32.gmra.mrb[0].mxu0 %v3638
        %v3640 = vpop.f32.mrb[0].mxu0
        %v3641 = vadd.f32 %v2753, %v3640
        %v3642 = vpop.f32.mrb[0].mxu0
        %3643 = vmatprep.mubr.f32.mxu0 0.0
        %v3644 = vand.u32 %v798, 4294901760
        %v3645 = vsub.f32 %v798, %v3644
        %3646 = vmatmul.mubr.f32.gmra.mrb[0].mxu0 %v3645
        %v3647 = vpop.f32.mrb[0].mxu0
        %v3648 = vadd.f32 %v2759, %v3647
        %v3649 = vpop.f32.mrb[0].mxu0
        %3650 = vmatprep.mubr.f32.mxu0 0.0
        %v3651 = vand.u32 %v801, 4294901760
        %v3652 = vsub.f32 %v801, %v3651
        %3653 = vmatmul.mubr.f32.gmra.mrb[0].mxu0 %v3652
        %v3654 = vpop.f32.mrb[0].mxu0
        %v3655 = vadd.f32 %v2765, %v3654
        %v3656 = vpop.f32.mrb[0].mxu0
        %3657 = vmatprep.mubr.f32.mxu0 0.0
        %v3658 = vand.u32 %v804, 4294901760
        %v3659 = vsub.f32 %v804, %v3658
        %3660 = vmatmul.mubr.f32.gmra.mrb[0].mxu0 %v3659
        %v3661 = vpop.f32.mrb[0].mxu0
        %v3662 = vadd.f32 %v2771, %v3661
        %v3663 = vpop.f32.mrb[0].mxu0
        %3664 = vmatprep.mubr.f32.mxu0 0.0
        %v3665 = vand.u32 %v807, 4294901760
        %v3666 = vsub.f32 %v807, %v3665
        %3667 = vmatmul.mubr.f32.gmra.mrb[0].mxu0 %v3666
        %v3668 = vpop.f32.mrb[0].mxu0
        %v3669 = vadd.f32 %v2777, %v3668
        %v3670 = vpop.f32.mrb[0].mxu0
        %3671 = vmatprep.mubr.f32.mxu0 0.0
        %v3672 = vand.u32 %v810, 4294901760
        %v3673 = vsub.f32 %v810, %v3672
        %3674 = vmatmul.mubr.f32.gmra.mrb[0].mxu0 %v3673
        %v3675 = vpop.f32.mrb[0].mxu0
        %v3676 = vadd.f32 %v2783, %v3675
        %v3677 = vpop.f32.mrb[0].mxu0
        %3678 = vmatprep.mubr.f32.mxu0 0.0
        %v3679 = vand.u32 %v813, 4294901760
        %v3680 = vsub.f32 %v813, %v3679
        %3681 = vmatmul.mubr.f32.gmra.mrb[0].mxu0 %v3680
        %v3682 = vpop.f32.mrb[0].mxu0
        %v3683 = vadd.f32 %v2789, %v3682
        %v3684 = vpop.f32.mrb[0].mxu0
        %3685 = vmatprep.mubr.f32.mxu0 0.0
        %v3686 = vand.u32 %v816, 4294901760
        %v3687 = vsub.f32 %v816, %v3686
        %3688 = vmatmul.mubr.f32.gmra.mrb[0].mxu0 %v3687
        %v3689 = vpop.f32.mrb[0].mxu0
        %v3690 = vadd.f32 %v2795, %v3689
        %v3691 = vpop.f32.mrb[0].mxu0
        %3692 = vmatprep.mubr.f32.mxu0 0.0
        %v3693 = vand.u32 %v819, 4294901760
        %v3694 = vsub.f32 %v819, %v3693
        %3695 = vmatmul.mubr.f32.gmra.mrb[0].mxu0 %v3694
        %v3696 = vpop.f32.mrb[0].mxu0
        %v3697 = vadd.f32 %v2801, %v3696
        %v3698 = vpop.f32.mrb[0].mxu0
        %3699 = vmatprep.mubr.f32.mxu0 0.0
        %v3700 = vand.u32 %v822, 4294901760
        %v3701 = vsub.f32 %v822, %v3700
        %3702 = vmatmul.mubr.f32.gmra.mrb[0].mxu0 %v3701
        %v3703 = vpop.f32.mrb[0].mxu0
        %v3704 = vadd.f32 %v2807, %v3703
        %v3705 = vpop.f32.mrb[0].mxu0
        %3706 = vmatprep.mubr.f32.mxu0 0.0
        %v3707 = vand.u32 %v825, 4294901760
        %v3708 = vsub.f32 %v825, %v3707
        %3709 = vmatmul.mubr.f32.gmra.mrb[0].mxu0 %v3708
        %v3710 = vpop.f32.mrb[0].mxu0
        %v3711 = vadd.f32 %v2813, %v3710
        %v3712 = vpop.f32.mrb[0].mxu0
        %3713 = vmatprep.mubr.f32.mxu0 0.0
        %v3714 = vand.u32 %v828, 4294901760
        %v3715 = vsub.f32 %v828, %v3714
        %3716 = vmatmul.mubr.f32.gmra.mrb[0].mxu0 %v3715
        %v3717 = vpop.f32.mrb[0].mxu0
        %v3718 = vadd.f32 %v2819, %v3717
        %v3719 = vpop.f32.mrb[0].mxu0
        %3720 = vmatprep.mubr.f32.mxu0 0.0
        %v3721 = vand.u32 %v831, 4294901760
        %v3722 = vsub.f32 %v831, %v3721
        %3723 = vmatmul.mubr.f32.gmra.mrb[0].mxu0 %v3722
        %v3724 = vpop.f32.mrb[0].mxu0
        %v3725 = vadd.f32 %v2825, %v3724
        %v3726 = vpop.f32.mrb[0].mxu0
        %3727 = vmatprep.mubr.f32.mxu0 0.0
        %v3728 = vand.u32 %v834, 4294901760
        %v3729 = vsub.f32 %v834, %v3728
        %3730 = vmatmul.mubr.f32.gmra.mrb[0].mxu0 %v3729
        %v3731 = vpop.f32.mrb[0].mxu0
        %v3732 = vadd.f32 %v2831, %v3731
        %v3733 = vpop.f32.mrb[0].mxu0
        %3734 = vmatprep.mubr.f32.mxu0 0.0
        %v3735 = vand.u32 %v837, 4294901760
        %v3736 = vsub.f32 %v837, %v3735
        %3737 = vmatmul.mubr.f32.gmra.mrb[0].mxu0 %v3736
        %v3738 = vpop.f32.mrb[0].mxu0
        %v3739 = vadd.f32 %v2837, %v3738
        %v3740 = vpop.f32.mrb[0].mxu0
        %3741 = vmatprep.mubr.f32.mxu0 0.0
        %v3742 = vand.u32 %v840, 4294901760
        %v3743 = vsub.f32 %v840, %v3742
        %3744 = vmatmul.mubr.f32.gmra.mrb[0].mxu0 %v3743
        %v3745 = vpop.f32.mrb[0].mxu0
        %v3746 = vadd.f32 %v2843, %v3745
        %v3747 = vpop.f32.mrb[0].mxu0
        %3748 = vmatprep.mubr.f32.mxu0 0.0
        %v3749 = vand.u32 %v843, 4294901760
        %v3750 = vsub.f32 %v843, %v3749
        %3751 = vmatmul.mubr.f32.gmra.mrb[0].mxu0 %v3750
        %v3752 = vpop.f32.mrb[0].mxu0
        %v3753 = vadd.f32 %v2849, %v3752
        %v3754 = vpop.f32.mrb[0].mxu0
        %3755 = vmatprep.mubr.f32.mxu0 0.0
        %v3756 = vand.u32 %v846, 4294901760
        %v3757 = vsub.f32 %v846, %v3756
        %3758 = vmatmul.mubr.f32.gmra.mrb[0].mxu0 %v3757
        %v3759 = vpop.f32.mrb[0].mxu0
        %v3760 = vadd.f32 %v2855, %v3759
        %v3761 = vpop.f32.mrb[0].mxu0
        %3762 = vmatprep.mubr.f32.mxu0 0.0
        %v3763 = vand.u32 %v849, 4294901760
        %v3764 = vsub.f32 %v849, %v3763
        %3765 = vmatmul.mubr.f32.gmra.mrb[0].mxu0 %v3764
        %v3766 = vpop.f32.mrb[0].mxu0
        %v3767 = vadd.f32 %v2861, %v3766
        %v3768 = vpop.f32.mrb[0].mxu0
        %3769 = vmatprep.mubr.f32.mxu0 0.0
        %v3770 = vand.u32 %v852, 4294901760
        %v3771 = vsub.f32 %v852, %v3770
        %3772 = vmatmul.mubr.f32.gmra.mrb[0].mxu0 %v3771
        %v3773 = vpop.f32.mrb[0].mxu0
        %v3774 = vadd.f32 %v2867, %v3773
        %v3775 = vpop.f32.mrb[0].mxu0
        %3776 = vmatprep.mubr.f32.mxu0 0.0
        %v3777 = vand.u32 %v855, 4294901760
        %v3778 = vsub.f32 %v855, %v3777
        %3779 = vmatmul.mubr.f32.gmra.mrb[0].mxu0 %v3778
        %v3780 = vpop.f32.mrb[0].mxu0
        %v3781 = vadd.f32 %v2873, %v3780
        %v3782 = vpop.f32.mrb[0].mxu0
        %3783 = vmatprep.mubr.f32.mxu0 0.0
        %v3784 = vand.u32 %v858, 4294901760
        %v3785 = vsub.f32 %v858, %v3784
        %3786 = vmatmul.mubr.f32.gmra.mrb[0].mxu0 %v3785
        %v3787 = vpop.f32.mrb[0].mxu0
        %v3788 = vadd.f32 %v2879, %v3787
        %v3789 = vpop.f32.mrb[0].mxu0
        %3790 = vmatprep.mubr.f32.mxu0 0.0
        %v3791 = vand.u32 %v861, 4294901760
        %v3792 = vsub.f32 %v861, %v3791
        %3793 = vmatmul.mubr.f32.gmra.mrb[0].mxu0 %v3792
        %v3794 = vpop.f32.mrb[0].mxu0
        %v3795 = vadd.f32 %v2885, %v3794
        %v3796 = vpop.f32.mrb[0].mxu0
        %3797 = vmatprep.mubr.f32.mxu0 0.0
        %v3798 = vand.u32 %v864, 4294901760
        %v3799 = vsub.f32 %v864, %v3798
        %3800 = vmatmul.mubr.f32.gmra.mrb[0].mxu0 %v3799
        %v3801 = vpop.f32.mrb[0].mxu0
        %v3802 = vadd.f32 %v2891, %v3801
        %v3803 = vpop.f32.mrb[0].mxu0
        %3804 = vmatprep.mubr.f32.mxu0 0.0
        %v3805 = vand.u32 %v867, 4294901760
        %v3806 = vsub.f32 %v867, %v3805
        %3807 = vmatmul.mubr.f32.gmra.mrb[0].mxu0 %v3806
        %v3808 = vpop.f32.mrb[0].mxu0
        %v3809 = vadd.f32 %v2897, %v3808
        %v3810 = vpop.f32.mrb[0].mxu0
        %3811 = vmatprep.mubr.f32.mxu0 0.0
        %v3812 = vand.u32 %v870, 4294901760
        %v3813 = vsub.f32 %v870, %v3812
        %3814 = vmatmul.mubr.f32.gmra.mrb[0].mxu0 %v3813
        %v3815 = vpop.f32.mrb[0].mxu0
        %v3816 = vadd.f32 %v2903, %v3815
        %v3817 = vpop.f32.mrb[0].mxu0
        %3818 = vmatprep.mubr.f32.mxu0 0.0
        %v3819 = vand.u32 %v873, 4294901760
        %v3820 = vsub.f32 %v873, %v3819
        %3821 = vmatmul.mubr.f32.gmra.mrb[0].mxu0 %v3820
        %v3822 = vpop.f32.mrb[0].mxu0
        %v3823 = vadd.f32 %v2909, %v3822
        %v3824 = vpop.f32.mrb[0].mxu0
        %3825 = vmatprep.mubr.f32.mxu0 0.0
        %v3826 = vand.u32 %v876, 4294901760
        %v3827 = vsub.f32 %v876, %v3826
        %3828 = vmatmul.mubr.f32.gmra.mrb[0].mxu0 %v3827
        %v3829 = vpop.f32.mrb[0].mxu0
        %v3830 = vadd.f32 %v2915, %v3829
        %v3831 = vpop.f32.mrb[0].mxu0
        %3832 = vmatprep.mubr.f32.mxu0 0.0
        %v3833 = vand.u32 %v879, 4294901760
        %v3834 = vsub.f32 %v879, %v3833
        %3835 = vmatmul.mubr.f32.gmra.mrb[0].mxu0 %v3834
        %v3836 = vpop.f32.mrb[0].mxu0
        %v3837 = vadd.f32 %v2921, %v3836
        %v3838 = vpop.f32.mrb[0].mxu0
        %3839 = vmatprep.mubr.f32.mxu0 0.0
        %v3840 = vand.u32 %v882, 4294901760
        %v3841 = vsub.f32 %v882, %v3840
        %3842 = vmatmul.mubr.f32.gmra.mrb[0].mxu0 %v3841
        %v3843 = vpop.f32.mrb[0].mxu0
        %v3844 = vadd.f32 %v2927, %v3843
        %v3845 = vpop.f32.mrb[0].mxu0
        %3846 = vmatprep.mubr.f32.mxu0 0.0
        %v3847 = vand.u32 %v885, 4294901760
        %v3848 = vsub.f32 %v885, %v3847
        %3849 = vmatmul.mubr.f32.gmra.mrb[0].mxu0 %v3848
        %v3850 = vpop.f32.mrb[0].mxu0
        %v3851 = vadd.f32 %v2933, %v3850
        %v3852 = vpop.f32.mrb[0].mxu0
        %3853 = vmatprep.mubr.f32.mxu0 0.0
        %v3854 = vand.u32 %v888, 4294901760
        %v3855 = vsub.f32 %v888, %v3854
        %3856 = vmatmul.mubr.f32.gmra.mrb[0].mxu0 %v3855
        %v3857 = vpop.f32.mrb[0].mxu0
        %v3858 = vadd.f32 %v2939, %v3857
        %v3859 = vpop.f32.mrb[0].mxu0
        %3860 = vmatprep.mubr.f32.mxu0 0.0
        %v3861 = vand.u32 %v891, 4294901760
        %v3862 = vsub.f32 %v891, %v3861
        %3863 = vmatmul.mubr.f32.gmra.mrb[0].mxu0 %v3862
        %v3864 = vpop.f32.mrb[0].mxu0
        %v3865 = vadd.f32 %v2945, %v3864
        %v3866 = vpop.f32.mrb[0].mxu0
        %3867 = vmatprep.mubr.f32.mxu0 0.0
        %v3868 = vand.u32 %v894, 4294901760
        %v3869 = vsub.f32 %v894, %v3868
        %3870 = vmatmul.mubr.f32.gmra.mrb[0].mxu0 %v3869
        %v3871 = vpop.f32.mrb[0].mxu0
        %v3872 = vadd.f32 %v2951, %v3871
        %v3873 = vpop.f32.mrb[0].mxu0
        %3874 = vmatprep.mubr.f32.mxu0 0.0
        %v3875 = vand.u32 %v897, 4294901760
        %v3876 = vsub.f32 %v897, %v3875
        %3877 = vmatmul.mubr.f32.gmra.mrb[0].mxu0 %v3876
        %v3878 = vpop.f32.mrb[0].mxu0
        %v3879 = vadd.f32 %v2957, %v3878
        %v3880 = vpop.f32.mrb[0].mxu0
        %3881 = vmatprep.mubr.f32.mxu0 0.0
        %v3882 = vand.u32 %v900, 4294901760
        %v3883 = vsub.f32 %v900, %v3882
        %3884 = vmatmul.mubr.f32.gmra.mrb[0].mxu0 %v3883
        %v3885 = vpop.f32.mrb[0].mxu0
        %v3886 = vadd.f32 %v2963, %v3885
        %v3887 = vpop.f32.mrb[0].mxu0
        %3888 = vmatprep.mubr.f32.mxu0 0.0
        %v3889 = vand.u32 %v903, 4294901760
        %v3890 = vsub.f32 %v903, %v3889
        %3891 = vmatmul.mubr.f32.gmra.mrb[0].mxu0 %v3890
        %v3892 = vpop.f32.mrb[0].mxu0
        %v3893 = vadd.f32 %v2969, %v3892
        %v3894 = vpop.f32.mrb[0].mxu0
        %3895 = vmatprep.mubr.f32.mxu0 0.0
        %v3896 = vand.u32 %v906, 4294901760
        %v3897 = vsub.f32 %v906, %v3896
        %3898 = vmatmul.mubr.f32.gmra.mrb[0].mxu0 %v3897
        %v3899 = vpop.f32.mrb[0].mxu0
        %v3900 = vadd.f32 %v2975, %v3899
        %v3901 = vpop.f32.mrb[0].mxu0
        %3902 = vmatprep.mubr.f32.mxu0 0.0
        %v3903 = vand.u32 %v909, 4294901760
        %v3904 = vsub.f32 %v909, %v3903
        %3905 = vmatmul.mubr.f32.gmra.mrb[0].mxu0 %v3904
        %v3906 = vpop.f32.mrb[0].mxu0
        %v3907 = vadd.f32 %v2981, %v3906
        %v3908 = vpop.f32.mrb[0].mxu0
        %3909 = vmatprep.mubr.f32.mxu0 0.0
        %v3910 = vand.u32 %v912, 4294901760
        %v3911 = vsub.f32 %v912, %v3910
        %3912 = vmatmul.mubr.f32.gmra.mrb[0].mxu0 %v3911
        %v3913 = vpop.f32.mrb[0].mxu0
        %v3914 = vadd.f32 %v2987, %v3913
        %v3915 = vpop.f32.mrb[0].mxu0
        %3916 = vmatprep.mubr.f32.mxu0 0.0
        %v3917 = vand.u32 %v915, 4294901760
        %v3918 = vsub.f32 %v915, %v3917
        %3919 = vmatmul.mubr.f32.gmra.mrb[0].mxu0 %v3918
        %v3920 = vpop.f32.mrb[0].mxu0
        %v3921 = vadd.f32 %v2993, %v3920
        %v3922 = vpop.f32.mrb[0].mxu0
        %3923 = vmatprep.mubr.f32.mxu0 0.0
        %v3924 = vand.u32 %v918, 4294901760
        %v3925 = vsub.f32 %v918, %v3924
        %3926 = vmatmul.mubr.f32.gmra.mrb[0].mxu0 %v3925
        %v3927 = vpop.f32.mrb[0].mxu0
        %v3928 = vadd.f32 %v2999, %v3927
        %v3929 = vpop.f32.mrb[0].mxu0
        %3930 = vmatprep.mubr.f32.mxu0 0.0
        %v3931 = vand.u32 %v921, 4294901760
        %v3932 = vsub.f32 %v921, %v3931
        %3933 = vmatmul.mubr.f32.gmra.mrb[0].mxu0 %v3932
        %v3934 = vpop.f32.mrb[0].mxu0
        %v3935 = vadd.f32 %v3005, %v3934
        %v3936 = vpop.f32.mrb[0].mxu0
        %3937 = vmatprep.mubr.f32.mxu0 0.0
        %v3938 = vand.u32 %v924, 4294901760
        %v3939 = vsub.f32 %v924, %v3938
        %3940 = vmatmul.mubr.f32.gmra.mrb[0].mxu0 %v3939
        %v3941 = vpop.f32.mrb[0].mxu0
        %v3942 = vadd.f32 %v3011, %v3941
        %v3943 = vpop.f32.mrb[0].mxu0
        %3944 = vmatprep.mubr.f32.mxu0 0.0
        %v3945 = vand.u32 %v927, 4294901760
        %v3946 = vsub.f32 %v927, %v3945
        %3947 = vmatmul.mubr.f32.gmra.mrb[0].mxu0 %v3946
        %v3948 = vpop.f32.mrb[0].mxu0
        %v3949 = vadd.f32 %v3017, %v3948
        %v3950 = vpop.f32.mrb[0].mxu0
        %3951 = vmatprep.mubr.f32.mxu0 0.0
        %v3952 = vand.u32 %v930, 4294901760
        %v3953 = vsub.f32 %v930, %v3952
        %3954 = vmatmul.mubr.f32.gmra.mrb[0].mxu0 %v3953
        %v3955 = vpop.f32.mrb[0].mxu0
        %v3956 = vadd.f32 %v3023, %v3955
        %v3957 = vpop.f32.mrb[0].mxu0
        %3958 = vmatprep.mubr.f32.mxu0 0.0
        %v3959 = vand.u32 %v933, 4294901760
        %v3960 = vsub.f32 %v933, %v3959
        %3961 = vmatmul.mubr.f32.gmra.mrb[0].mxu0 %v3960
        %v3962 = vpop.f32.mrb[0].mxu0
        %v3963 = vadd.f32 %v3029, %v3962
        %v3964 = vpop.f32.mrb[0].mxu0
        %3965 = vmatprep.mubr.f32.mxu0 0.0
        %v3966 = vand.u32 %v936, 4294901760
        %v3967 = vsub.f32 %v936, %v3966
        %3968 = vmatmul.mubr.f32.gmra.mrb[0].mxu0 %v3967
        %v3969 = vpop.f32.mrb[0].mxu0
        %v3970 = vadd.f32 %v3035, %v3969
        %v3971 = vpop.f32.mrb[0].mxu0
        %3972 = vmatprep.mubr.f32.mxu0 0.0
        %v3973 = vand.u32 %v939, 4294901760
        %v3974 = vsub.f32 %v939, %v3973
        %3975 = vmatmul.mubr.f32.gmra.mrb[0].mxu0 %v3974
        %v3976 = vpop.f32.mrb[0].mxu0
        %v3977 = vadd.f32 %v3041, %v3976
        %v3978 = vpop.f32.mrb[0].mxu0
        %3979 = vmatprep.mubr.f32.mxu0 0.0
        %v3980 = vand.u32 %v942, 4294901760
        %v3981 = vsub.f32 %v942, %v3980
        %3982 = vmatmul.mubr.f32.gmra.mrb[0].mxu0 %v3981
        %v3983 = vpop.f32.mrb[0].mxu0
        %v3984 = vadd.f32 %v3047, %v3983
        %v3985 = vpop.f32.mrb[0].mxu0
        %3986 = vmatprep.mubr.f32.mxu0 0.0
        %v3987 = vand.u32 %v945, 4294901760
        %v3988 = vsub.f32 %v945, %v3987
        %3989 = vmatmul.mubr.f32.gmra.mrb[0].mxu0 %v3988
        %v3990 = vpop.f32.mrb[0].mxu0
        %v3991 = vadd.f32 %v3053, %v3990
        %v3992 = vpop.f32.mrb[0].mxu0
        %3993 = vmatprep.mubr.f32.mxu0 0.0
        %v3994 = vand.u32 %v948, 4294901760
        %v3995 = vsub.f32 %v948, %v3994
        %3996 = vmatmul.mubr.f32.gmra.mrb[0].mxu0 %v3995
        %v3997 = vpop.f32.mrb[0].mxu0
        %v3998 = vadd.f32 %v3059, %v3997
        %v3999 = vpop.f32.mrb[0].mxu0
        %4000 = vmatprep.mubr.f32.mxu0 0.0
        %v4001 = vand.u32 %v951, 4294901760
        %v4002 = vsub.f32 %v951, %v4001
        %4003 = vmatmul.mubr.f32.gmra.mrb[0].mxu0 %v4002
        %v4004 = vpop.f32.mrb[0].mxu0
        %v4005 = vadd.f32 %v3065, %v4004
        %v4006 = vpop.f32.mrb[0].mxu0
        %4007 = vmatprep.mubr.f32.mxu0 0.0
        %v4008 = vand.u32 %v954, 4294901760
        %v4009 = vsub.f32 %v954, %v4008
        %4010 = vmatmul.mubr.f32.gmra.mrb[0].mxu0 %v4009
        %v4011 = vpop.f32.mrb[0].mxu0
        %v4012 = vadd.f32 %v3071, %v4011
        %v4013 = vpop.f32.mrb[0].mxu0
        %4014 = vmatprep.mubr.f32.mxu0 0.0
        %v4015 = vand.u32 %v957, 4294901760
        %v4016 = vsub.f32 %v957, %v4015
        %4017 = vmatmul.mubr.f32.gmra.mrb[0].mxu0 %v4016
        %v4018 = vpop.f32.mrb[0].mxu0
        %v4019 = vadd.f32 %v3077, %v4018
        %v4020 = vpop.f32.mrb[0].mxu0
        %4021 = vmatprep.mubr.f32.mxu0 0.0
        %v4022 = vand.u32 %v960, 4294901760
        %v4023 = vsub.f32 %v960, %v4022
        %4024 = vmatmul.mubr.f32.gmra.mrb[0].mxu0 %v4023
        %v4025 = vpop.f32.mrb[0].mxu0
        %v4026 = vadd.f32 %v3083, %v4025
        %v4027 = vpop.f32.mrb[0].mxu0
        %4028 = vmatprep.mubr.f32.mxu0 0.0
        %v4029 = vand.u32 %v963, 4294901760
        %v4030 = vsub.f32 %v963, %v4029
        %4031 = vmatmul.mubr.f32.gmra.mrb[0].mxu0 %v4030
        %v4032 = vpop.f32.mrb[0].mxu0
        %v4033 = vadd.f32 %v3089, %v4032
        %v4034 = vpop.f32.mrb[0].mxu0
        %4035 = vmatprep.mubr.f32.mxu0 0.0
        %v4036 = vand.u32 %v966, 4294901760
        %v4037 = vsub.f32 %v966, %v4036
        %4038 = vmatmul.mubr.f32.gmra.mrb[0].mxu0 %v4037
        %v4039 = vpop.f32.mrb[0].mxu0
        %v4040 = vadd.f32 %v3095, %v4039
        %v4041 = vpop.f32.mrb[0].mxu0
        %4042 = vmatprep.mubr.f32.mxu0 0.0
        %v4043 = vand.u32 %v969, 4294901760
        %v4044 = vsub.f32 %v969, %v4043
        %4045 = vmatmul.mubr.f32.gmra.mrb[0].mxu0 %v4044
        %v4046 = vpop.f32.mrb[0].mxu0
        %v4047 = vadd.f32 %v3101, %v4046
        %v4048 = vpop.f32.mrb[0].mxu0
        %4049 = vmatprep.mubr.f32.mxu0 0.0
        %v4050 = vand.u32 %v972, 4294901760
        %v4051 = vsub.f32 %v972, %v4050
        %4052 = vmatmul.mubr.f32.gmra.mrb[0].mxu0 %v4051
        %v4053 = vpop.f32.mrb[0].mxu0
        %v4054 = vadd.f32 %v3107, %v4053
        %v4055 = vpop.f32.mrb[0].mxu0
        %4056 = vmatprep.mubr.f32.mxu0 0.0
        %v4057 = vand.u32 %v975, 4294901760
        %v4058 = vsub.f32 %v975, %v4057
        %4059 = vmatmul.mubr.f32.gmra.mrb[0].mxu0 %v4058
        %v4060 = vpop.f32.mrb[0].mxu0
        %v4061 = vadd.f32 %v3113, %v4060
        %v4062 = vpop.f32.mrb[0].mxu0
        %4063 = vmatprep.mubr.f32.mxu0 0.0
        %v4064 = vand.u32 %v978, 4294901760
        %v4065 = vsub.f32 %v978, %v4064
        %4066 = vmatmul.mubr.f32.gmra.mrb[0].mxu0 %v4065
        %v4067 = vpop.f32.mrb[0].mxu0
        %v4068 = vadd.f32 %v3119, %v4067
        %v4069 = vpop.f32.mrb[0].mxu0
        %4070 = vmatprep.mubr.f32.mxu0 0.0
        %v4071 = vand.u32 %v981, 4294901760
        %v4072 = vsub.f32 %v981, %v4071
        %4073 = vmatmul.mubr.f32.gmra.mrb[0].mxu0 %v4072
        %v4074 = vpop.f32.mrb[0].mxu0
        %v4075 = vadd.f32 %v3125, %v4074
        %v4076 = vpop.f32.mrb[0].mxu0
        %4077 = vmatprep.mubr.f32.mxu0 0.0
        %v4078 = vand.u32 %v984, 4294901760
        %v4079 = vsub.f32 %v984, %v4078
        %4080 = vmatmul.mubr.f32.gmra.mrb[0].mxu0 %v4079
        %v4081 = vpop.f32.mrb[0].mxu0
        %v4082 = vadd.f32 %v3131, %v4081
        %v4083 = vpop.f32.mrb[0].mxu0
        %4084 = vmatprep.mubr.f32.mxu0 0.0
        %v4085 = vand.u32 %v987, 4294901760
        %v4086 = vsub.f32 %v987, %v4085
        %4087 = vmatmul.mubr.f32.gmra.mrb[0].mxu0 %v4086
        %v4088 = vpop.f32.mrb[0].mxu0
        %v4089 = vadd.f32 %v3137, %v4088
        %v4090 = vpop.f32.mrb[0].mxu0
        %4091 = vmatprep.mubr.f32.mxu0 0.0
        %v4092 = vand.u32 %v990, 4294901760
        %v4093 = vsub.f32 %v990, %v4092
        %4094 = vmatmul.mubr.f32.gmra.mrb[0].mxu0 %v4093
        %v4095 = vpop.f32.mrb[0].mxu0
        %v4096 = vadd.f32 %v3143, %v4095
        %v4097 = vpop.f32.mrb[0].mxu0
        %4098 = vmatprep.mubr.f32.mxu0 0.0
        %v4099 = vand.u32 %v993, 4294901760
        %v4100 = vsub.f32 %v993, %v4099
        %4101 = vmatmul.mubr.f32.gmra.mrb[0].mxu0 %v4100
        %v4102 = vpop.f32.mrb[0].mxu0
        %v4103 = vadd.f32 %v3149, %v4102
        %v4104 = vpop.f32.mrb[0].mxu0
        %4105 = vmatprep.mubr.f32.mxu0 0.0
        %v4106 = vand.u32 %v996, 4294901760
        %v4107 = vsub.f32 %v996, %v4106
        %4108 = vmatmul.mubr.f32.gmra.mrb[0].mxu0 %v4107
        %v4109 = vpop.f32.mrb[0].mxu0
        %v4110 = vadd.f32 %v3155, %v4109
        %v4111 = vpop.f32.mrb[0].mxu0
        %4112 = vmatprep.mubr.f32.mxu0 0.0
        %v4113 = vand.u32 %v999, 4294901760
        %v4114 = vsub.f32 %v999, %v4113
        %4115 = vmatmul.mubr.f32.gmra.mrb[0].mxu0 %v4114
        %v4116 = vpop.f32.mrb[0].mxu0
        %v4117 = vadd.f32 %v3161, %v4116
        %v4118 = vpop.f32.mrb[0].mxu0
        %4119 = vmatprep.mubr.f32.mxu0 0.0
        %v4120 = vand.u32 %v1002, 4294901760
        %v4121 = vsub.f32 %v1002, %v4120
        %4122 = vmatmul.mubr.f32.gmra.mrb[0].mxu0 %v4121
        %v4123 = vpop.f32.mrb[0].mxu0
        %v4124 = vadd.f32 %v3167, %v4123
        %v4125 = vpop.f32.mrb[0].mxu0
        %4126 = vmatprep.mubr.f32.mxu0 0.0
        %v4127 = vand.u32 %v1005, 4294901760
        %v4128 = vsub.f32 %v1005, %v4127
        %4129 = vmatmul.mubr.f32.gmra.mrb[0].mxu0 %v4128
        %v4130 = vpop.f32.mrb[0].mxu0
        %v4131 = vadd.f32 %v3173, %v4130
        %v4132 = vpop.f32.mrb[0].mxu0
        %4133 = vmatprep.mubr.f32.mxu0 0.0
        %v4134 = vand.u32 %v1008, 4294901760
        %v4135 = vsub.f32 %v1008, %v4134
        %4136 = vmatmul.mubr.f32.gmra.mrb[0].mxu0 %v4135
        %v4137 = vpop.f32.mrb[0].mxu0
        %v4138 = vadd.f32 %v3179, %v4137
        %v4139 = vpop.f32.mrb[0].mxu0
        %4140 = vmatprep.mubr.f32.mxu0 0.0
        %v4141 = vand.u32 %v1011, 4294901760
        %v4142 = vsub.f32 %v1011, %v4141
        %4143 = vmatmul.mubr.f32.gmra.mrb[0].mxu0 %v4142
        %v4144 = vpop.f32.mrb[0].mxu0
        %v4145 = vadd.f32 %v3185, %v4144
        %v4146 = vpop.f32.mrb[0].mxu0
        %4147 = vmatprep.mubr.f32.mxu0 0.0
        %v4148 = vand.u32 %v1014, 4294901760
        %v4149 = vsub.f32 %v1014, %v4148
        %4150 = vmatmul.mubr.f32.gmra.mrb[0].mxu0 %v4149
        %v4151 = vpop.f32.mrb[0].mxu0
        %v4152 = vadd.f32 %v3191, %v4151
        %v4153 = vpop.f32.mrb[0].mxu0
        %4154 = vmatprep.mubr.f32.mxu0 0.0
        %v4155 = vand.u32 %v1017, 4294901760
        %v4156 = vsub.f32 %v1017, %v4155
        %4157 = vmatmul.mubr.f32.gmra.mrb[0].mxu0 %v4156
        %v4158 = vpop.f32.mrb[0].mxu0
        %v4159 = vadd.f32 %v3197, %v4158
        %v4160 = vpop.f32.mrb[0].mxu0
        %4161 = vmatprep.mubr.f32.mxu0 0.0
        %v4162 = vand.u32 %v1020, 4294901760
        %v4163 = vsub.f32 %v1020, %v4162
        %4164 = vmatmul.mubr.f32.gmra.mrb[0].mxu0 %v4163
        %v4165 = vpop.f32.mrb[0].mxu0
        %v4166 = vadd.f32 %v3203, %v4165
        %v4167 = vpop.f32.mrb[0].mxu0
        %4168 = vmatprep.mubr.f32.mxu0 0.0
        %v4169 = vand.u32 %v1023, 4294901760
        %v4170 = vsub.f32 %v1023, %v4169
        %4171 = vmatmul.mubr.f32.gmra.mrb[0].mxu0 %v4170
        %v4172 = vpop.f32.mrb[0].mxu0
        %v4173 = vadd.f32 %v3209, %v4172
        %v4174 = vpop.f32.mrb[0].mxu0
        %4175 = vmatprep.mubr.f32.mxu0 0.0
        %v4176 = vand.u32 %v1026, 4294901760
        %v4177 = vsub.f32 %v1026, %v4176
        %4178 = vmatmul.mubr.f32.gmra.mrb[0].mxu0 %v4177
        %v4179 = vpop.f32.mrb[0].mxu0
        %v4180 = vadd.f32 %v3215, %v4179
        %v4181 = vpop.f32.mrb[0].mxu0
        %4182 = vmatprep.mubr.f32.mxu0 0.0
        %v4183 = vand.u32 %v1029, 4294901760
        %v4184 = vsub.f32 %v1029, %v4183
        %4185 = vmatmul.mubr.f32.gmra.mrb[0].mxu0 %v4184
        %v4186 = vpop.f32.mrb[0].mxu0
        %v4187 = vadd.f32 %v3221, %v4186
        %v4188 = vpop.f32.mrb[0].mxu0
        %4189 = vmatprep.mubr.f32.mxu0 0.0
        %v4190 = vand.u32 %v1032, 4294901760
        %v4191 = vsub.f32 %v1032, %v4190
        %4192 = vmatmul.mubr.f32.gmra.mrb[0].mxu0 %v4191
        %v4193 = vpop.f32.mrb[0].mxu0
        %v4194 = vadd.f32 %v3227, %v4193
        %v4195 = vpop.f32.mrb[0].mxu0
        %4196 = vmatprep.mubr.f32.mxu0 0.0
        %v4197 = vand.u32 %v1035, 4294901760
        %v4198 = vsub.f32 %v1035, %v4197
        %4199 = vmatmul.mubr.f32.gmra.mrb[0].mxu0 %v4198
        %v4200 = vpop.f32.mrb[0].mxu0
        %v4201 = vadd.f32 %v3233, %v4200
        %v4202 = vpop.f32.mrb[0].mxu0
        %4203 = vmatprep.mubr.f32.mxu0 0.0
        %v4204 = vand.u32 %v1038, 4294901760
        %v4205 = vsub.f32 %v1038, %v4204
        %4206 = vmatmul.mubr.f32.gmra.mrb[0].mxu0 %v4205
        %v4207 = vpop.f32.mrb[0].mxu0
        %v4208 = vadd.f32 %v3239, %v4207
        %v4209 = vpop.f32.mrb[0].mxu0
        %4210 = vmatprep.mubr.f32.mxu0 0.0
        %v4211 = vand.u32 %v1041, 4294901760
        %v4212 = vsub.f32 %v1041, %v4211
        %4213 = vmatmul.mubr.f32.gmra.mrb[0].mxu0 %v4212
        %v4214 = vpop.f32.mrb[0].mxu0
        %v4215 = vadd.f32 %v3245, %v4214
        %v4216 = vpop.f32.mrb[0].mxu0
        %4217 = vmatprep.mubr.f32.mxu0 0.0
        %v4218 = vand.u32 %v1044, 4294901760
        %v4219 = vsub.f32 %v1044, %v4218
        %4220 = vmatmul.mubr.f32.gmra.mrb[0].mxu0 %v4219
        %v4221 = vpop.f32.mrb[0].mxu0
        %v4222 = vadd.f32 %v3251, %v4221
        %v4223 = vpop.f32.mrb[0].mxu0
        %4224 = vmatprep.mubr.f32.mxu0 0.0
        %v4225 = vand.u32 %v1047, 4294901760
        %v4226 = vsub.f32 %v1047, %v4225
        %4227 = vmatmul.mubr.f32.gmra.mrb[0].mxu0 %v4226
        %v4228 = vpop.f32.mrb[0].mxu0
        %v4229 = vadd.f32 %v3257, %v4228
        %v4230 = vpop.f32.mrb[0].mxu0
        %4231 = vmatprep.mubr.f32.mxu0 0.0
        %v4232 = vand.u32 %v1050, 4294901760
        %v4233 = vsub.f32 %v1050, %v4232
        %4234 = vmatmul.mubr.f32.gmra.mrb[0].mxu0 %v4233
        %v4235 = vpop.f32.mrb[0].mxu0
        %v4236 = vadd.f32 %v3263, %v4235
        %v4237 = vpop.f32.mrb[0].mxu0
        %4238 = vmatprep.mubr.f32.mxu0 0.0
        %v4239 = vand.u32 %v1053, 4294901760
        %v4240 = vsub.f32 %v1053, %v4239
        %4241 = vmatmul.mubr.f32.gmra.mrb[0].mxu0 %v4240
        %v4242 = vpop.f32.mrb[0].mxu0
        %v4243 = vadd.f32 %v3269, %v4242
        %v4244 = vpop.f32.mrb[0].mxu0
        %4245 = vmatprep.mubr.f32.mxu0 0.0
        %v4246 = vand.u32 %v1056, 4294901760
        %v4247 = vsub.f32 %v1056, %v4246
        %4248 = vmatmul.mubr.f32.gmra.mrb[0].mxu0 %v4247
        %v4249 = vpop.f32.mrb[0].mxu0
        %v4250 = vadd.f32 %v3275, %v4249
        %v4251 = vpop.f32.mrb[0].mxu0
        %4252 = vmatprep.mubr.f32.mxu0 0.0
        %v4253 = vand.u32 %v1059, 4294901760
        %v4254 = vsub.f32 %v1059, %v4253
        %4255 = vmatmul.mubr.f32.gmra.mrb[0].mxu0 %v4254
        %v4256 = vpop.f32.mrb[0].mxu0
        %v4257 = vadd.f32 %v3281, %v4256
        %v4258 = vpop.f32.mrb[0].mxu0
        %4259 = vmatprep.mubr.f32.mxu0 0.0
        %v4260 = vand.u32 %v1062, 4294901760
        %v4261 = vsub.f32 %v1062, %v4260
        %4262 = vmatmul.mubr.f32.gmra.mrb[0].mxu0 %v4261
        %v4263 = vpop.f32.mrb[0].mxu0
        %v4264 = vadd.f32 %v3287, %v4263
        %v4265 = vpop.f32.mrb[0].mxu0
        %4266 = vdwg.mxu0
        %4267 = vmatprep.subr.mxu0 0.0
        %v4268 = vand.u32 %v415, 4294901760
        %4269 = vmatpush1.msra.mxu0 %v4268
        %4270 = vmatprep.subr.mxu0 0.0
        %v4271 = vand.u32 %v416, 4294901760
        %4272 = vmatpush1.msra.mxu0 %v4271
        %4273 = vmatprep.subr.mxu0 0.0
        %v4274 = vand.u32 %v417, 4294901760
        %4275 = vmatpush1.msra.mxu0 %v4274
        %4276 = vmatprep.subr.mxu0 0.0
        %v4277 = vand.u32 %v418, 4294901760
        %4278 = vmatpush1.msra.mxu0 %v4277
        %4279 = vmatprep.subr.mxu0 0.0
        %v4280 = vand.u32 %v419, 4294901760
        %4281 = vmatpush1.msra.mxu0 %v4280
        %4282 = vmatprep.subr.mxu0 0.0
        %v4283 = vand.u32 %v420, 4294901760
        %4284 = vmatpush1.msra.mxu0 %v4283
        %4285 = vmatprep.subr.mxu0 0.0
        %v4286 = vand.u32 %v421, 4294901760
        %4287 = vmatpush1.msra.mxu0 %v4286
        %4288 = vmatprep.subr.mxu0 0.0
        %v4289 = vand.u32 %v422, 4294901760
        %4290 = vmatpush1.msra.mxu0 %v4289
        %4291 = vmatprep.subr.mxu0 0.0
        %4292 = vmatpush1.msra.mxu0 0.0
        %4293 = vmatprep.subr.mxu0 0.0
        %4294 = vmatpush1.msra.mxu0 0.0
        %4295 = vmatprep.subr.mxu0 0.0
        %4296 = vmatpush1.msra.mxu0 0.0
        %4297 = vmatprep.subr.mxu0 0.0
        %4298 = vmatpush1.msra.mxu0 0.0
        %4299 = vmatprep.subr.mxu0 0.0
        %4300 = vmatpush1.msra.mxu0 0.0
        %4301 = vmatprep.subr.mxu0 0.0
        %4302 = vmatpush1.msra.mxu0 0.0
        %4303 = vmatprep.subr.mxu0 0.0
        %4304 = vmatpush1.msra.mxu0 0.0
        %4305 = vmatprep.subr.mxu0 0.0
        %4306 = vmatpush1.msra.mxu0 0.0
        %4307 = vmatprep.subr.mxu0 0.0
        %4308 = vmatpush1.msra.mxu0 0.0
        %4309 = vmatprep.subr.mxu0 0.0
        %4310 = vmatpush1.msra.mxu0 0.0
        %4311 = vmatprep.subr.mxu0 0.0
        %4312 = vmatpush1.msra.mxu0 0.0
        %4313 = vmatprep.subr.mxu0 0.0
        %4314 = vmatpush1.msra.mxu0 0.0
        %4315 = vmatprep.subr.mxu0 0.0
        %4316 = vmatpush1.msra.mxu0 0.0
        %4317 = vmatprep.subr.mxu0 0.0
        %4318 = vmatpush1.msra.mxu0 0.0
        %4319 = vmatprep.subr.mxu0 0.0
        %4320 = vmatpush1.msra.mxu0 0.0
        %4321 = vmatprep.subr.mxu0 0.0
        %4322 = vmatpush1.msra.mxu0 0.0
        %4323 = vmatprep.subr.mxu0 0.0
        %4324 = vmatpush1.msra.mxu0 0.0
        %4325 = vmatprep.subr.mxu0 0.0
        %4326 = vmatpush1.msra.mxu0 0.0
        %4327 = vmatprep.subr.mxu0 0.0
        %4328 = vmatpush1.msra.mxu0 0.0
        %4329 = vmatprep.subr.mxu0 0.0
        %4330 = vmatpush1.msra.mxu0 0.0
        %4331 = vmatprep.subr.mxu0 0.0
        %4332 = vmatpush1.msra.mxu0 0.0
        %4333 = vmatprep.subr.mxu0 0.0
        %4334 = vmatpush1.msra.mxu0 0.0
        %4335 = vmatprep.subr.mxu0 0.0
        %4336 = vmatpush1.msra.mxu0 0.0
        %4337 = vmatprep.subr.mxu0 0.0
        %4338 = vmatpush1.msra.mxu0 0.0
        %4339 = vmatprep.mubr.f32.mxu0 0.0
        %v4340 = vand.u32 %v681, 4294901760
        %v4341 = vsub.f32 %v681, %v4340
        %v4342 = vand.u32 %v4341, 4294901760
        %4343 = vmatmul.mubr.f32.gmra.mrb[0].mxu0 %v4342
        %v4344 = vpop.f32.mrb[0].mxu0
        %v4345 = vadd.f32 %v3375, %v4344
        %v4346 = vpop.f32.mrb[0].mxu0
        %4347 = vmatprep.mubr.f32.mxu0 0.0
        %v4348 = vand.u32 %v684, 4294901760
        %v4349 = vsub.f32 %v684, %v4348
        %v4350 = vand.u32 %v4349, 4294901760
        %4351 = vmatmul.mubr.f32.gmra.mrb[0].mxu0 %v4350
        %v4352 = vpop.f32.mrb[0].mxu0
        %v4353 = vadd.f32 %v3382, %v4352
        %v4354 = vpop.f32.mrb[0].mxu0
        %4355 = vmatprep.mubr.f32.mxu0 0.0
        %v4356 = vand.u32 %v687, 4294901760
        %v4357 = vsub.f32 %v687, %v4356
        %v4358 = vand.u32 %v4357, 4294901760
        %4359 = vmatmul.mubr.f32.gmra.mrb[0].mxu0 %v4358
        %v4360 = vpop.f32.mrb[0].mxu0
        %v4361 = vadd.f32 %v3389, %v4360
        %v4362 = vpop.f32.mrb[0].mxu0
        %4363 = vmatprep.mubr.f32.mxu0 0.0
        %v4364 = vand.u32 %v690, 4294901760
        %v4365 = vsub.f32 %v690, %v4364
        %v4366 = vand.u32 %v4365, 4294901760
        %4367 = vmatmul.mubr.f32.gmra.mrb[0].mxu0 %v4366
        %v4368 = vpop.f32.mrb[0].mxu0
        %v4369 = vadd.f32 %v3396, %v4368
        %v4370 = vpop.f32.mrb[0].mxu0
        %4371 = vmatprep.mubr.f32.mxu0 0.0
        %v4372 = vand.u32 %v693, 4294901760
        %v4373 = vsub.f32 %v693, %v4372
        %v4374 = vand.u32 %v4373, 4294901760
        %4375 = vmatmul.mubr.f32.gmra.mrb[0].mxu0 %v4374
        %v4376 = vpop.f32.mrb[0].mxu0
        %v4377 = vadd.f32 %v3403, %v4376
        %v4378 = vpop.f32.mrb[0].mxu0
        %4379 = vmatprep.mubr.f32.mxu0 0.0
        %v4380 = vand.u32 %v696, 4294901760
        %v4381 = vsub.f32 %v696, %v4380
        %v4382 = vand.u32 %v4381, 4294901760
        %4383 = vmatmul.mubr.f32.gmra.mrb[0].mxu0 %v4382
        %v4384 = vpop.f32.mrb[0].mxu0
        %v4385 = vadd.f32 %v3410, %v4384
        %v4386 = vpop.f32.mrb[0].mxu0
        %4387 = vmatprep.mubr.f32.mxu0 0.0
        %v4388 = vand.u32 %v699, 4294901760
        %v4389 = vsub.f32 %v699, %v4388
        %v4390 = vand.u32 %v4389, 4294901760
        %4391 = vmatmul.mubr.f32.gmra.mrb[0].mxu0 %v4390
        %v4392 = vpop.f32.mrb[0].mxu0
        %v4393 = vadd.f32 %v3417, %v4392
        %v4394 = vpop.f32.mrb[0].mxu0
        %4395 = vmatprep.mubr.f32.mxu0 0.0
        %v4396 = vand.u32 %v702, 4294901760
        %v4397 = vsub.f32 %v702, %v4396
        %v4398 = vand.u32 %v4397, 4294901760
        %4399 = vmatmul.mubr.f32.gmra.mrb[0].mxu0 %v4398
        %v4400 = vpop.f32.mrb[0].mxu0
        %v4401 = vadd.f32 %v3424, %v4400
        %v4402 = vpop.f32.mrb[0].mxu0
        %4403 = vmatprep.mubr.f32.mxu0 0.0
        %v4404 = vand.u32 %v705, 4294901760
        %v4405 = vsub.f32 %v705, %v4404
        %v4406 = vand.u32 %v4405, 4294901760
        %4407 = vmatmul.mubr.f32.gmra.mrb[0].mxu0 %v4406
        %v4408 = vpop.f32.mrb[0].mxu0
        %v4409 = vadd.f32 %v3431, %v4408
        %v4410 = vpop.f32.mrb[0].mxu0
        %4411 = vmatprep.mubr.f32.mxu0 0.0
        %v4412 = vand.u32 %v708, 4294901760
        %v4413 = vsub.f32 %v708, %v4412
        %v4414 = vand.u32 %v4413, 4294901760
        %4415 = vmatmul.mubr.f32.gmra.mrb[0].mxu0 %v4414
        %v4416 = vpop.f32.mrb[0].mxu0
        %v4417 = vadd.f32 %v3438, %v4416
        %v4418 = vpop.f32.mrb[0].mxu0
        %4419 = vmatprep.mubr.f32.mxu0 0.0
        %v4420 = vand.u32 %v711, 4294901760
        %v4421 = vsub.f32 %v711, %v4420
        %v4422 = vand.u32 %v4421, 4294901760
        %4423 = vmatmul.mubr.f32.gmra.mrb[0].mxu0 %v4422
        %v4424 = vpop.f32.mrb[0].mxu0
        %v4425 = vadd.f32 %v3445, %v4424
        %v4426 = vpop.f32.mrb[0].mxu0
        %4427 = vmatprep.mubr.f32.mxu0 0.0
        %v4428 = vand.u32 %v714, 4294901760
        %v4429 = vsub.f32 %v714, %v4428
        %v4430 = vand.u32 %v4429, 4294901760
        %4431 = vmatmul.mubr.f32.gmra.mrb[0].mxu0 %v4430
        %v4432 = vpop.f32.mrb[0].mxu0
        %v4433 = vadd.f32 %v3452, %v4432
        %v4434 = vpop.f32.mrb[0].mxu0
        %4435 = vmatprep.mubr.f32.mxu0 0.0
        %v4436 = vand.u32 %v717, 4294901760
        %v4437 = vsub.f32 %v717, %v4436
        %v4438 = vand.u32 %v4437, 4294901760
        %4439 = vmatmul.mubr.f32.gmra.mrb[0].mxu0 %v4438
        %v4440 = vpop.f32.mrb[0].mxu0
        %v4441 = vadd.f32 %v3459, %v4440
        %v4442 = vpop.f32.mrb[0].mxu0
        %4443 = vmatprep.mubr.f32.mxu0 0.0
        %v4444 = vand.u32 %v720, 4294901760
        %v4445 = vsub.f32 %v720, %v4444
        %v4446 = vand.u32 %v4445, 4294901760
        %4447 = vmatmul.mubr.f32.gmra.mrb[0].mxu0 %v4446
        %v4448 = vpop.f32.mrb[0].mxu0
        %v4449 = vadd.f32 %v3466, %v4448
        %v4450 = vpop.f32.mrb[0].mxu0
        %4451 = vmatprep.mubr.f32.mxu0 0.0
        %v4452 = vand.u32 %v723, 4294901760
        %v4453 = vsub.f32 %v723, %v4452
        %v4454 = vand.u32 %v4453, 4294901760
        %4455 = vmatmul.mubr.f32.gmra.mrb[0].mxu0 %v4454
        %v4456 = vpop.f32.mrb[0].mxu0
        %v4457 = vadd.f32 %v3473, %v4456
        %v4458 = vpop.f32.mrb[0].mxu0
        %4459 = vmatprep.mubr.f32.mxu0 0.0
        %v4460 = vand.u32 %v726, 4294901760
        %v4461 = vsub.f32 %v726, %v4460
        %v4462 = vand.u32 %v4461, 4294901760
        %4463 = vmatmul.mubr.f32.gmra.mrb[0].mxu0 %v4462
        %v4464 = vpop.f32.mrb[0].mxu0
        %v4465 = vadd.f32 %v3480, %v4464
        %v4466 = vpop.f32.mrb[0].mxu0
        %4467 = vmatprep.mubr.f32.mxu0 0.0
        %v4468 = vand.u32 %v729, 4294901760
        %v4469 = vsub.f32 %v729, %v4468
        %v4470 = vand.u32 %v4469, 4294901760
        %4471 = vmatmul.mubr.f32.gmra.mrb[0].mxu0 %v4470
        %v4472 = vpop.f32.mrb[0].mxu0
        %v4473 = vadd.f32 %v3487, %v4472
        %v4474 = vpop.f32.mrb[0].mxu0
        %4475 = vmatprep.mubr.f32.mxu0 0.0
        %v4476 = vand.u32 %v732, 4294901760
        %v4477 = vsub.f32 %v732, %v4476
        %v4478 = vand.u32 %v4477, 4294901760
        %4479 = vmatmul.mubr.f32.gmra.mrb[0].mxu0 %v4478
        %v4480 = vpop.f32.mrb[0].mxu0
        %v4481 = vadd.f32 %v3494, %v4480
        %v4482 = vpop.f32.mrb[0].mxu0
        %4483 = vmatprep.mubr.f32.mxu0 0.0
        %v4484 = vand.u32 %v735, 4294901760
        %v4485 = vsub.f32 %v735, %v4484
        %v4486 = vand.u32 %v4485, 4294901760
        %4487 = vmatmul.mubr.f32.gmra.mrb[0].mxu0 %v4486
        %v4488 = vpop.f32.mrb[0].mxu0
        %v4489 = vadd.f32 %v3501, %v4488
        %v4490 = vpop.f32.mrb[0].mxu0
        %4491 = vmatprep.mubr.f32.mxu0 0.0
        %v4492 = vand.u32 %v738, 4294901760
        %v4493 = vsub.f32 %v738, %v4492
        %v4494 = vand.u32 %v4493, 4294901760
        %4495 = vmatmul.mubr.f32.gmra.mrb[0].mxu0 %v4494
        %v4496 = vpop.f32.mrb[0].mxu0
        %v4497 = vadd.f32 %v3508, %v4496
        %v4498 = vpop.f32.mrb[0].mxu0
        %4499 = vmatprep.mubr.f32.mxu0 0.0
        %v4500 = vand.u32 %v741, 4294901760
        %v4501 = vsub.f32 %v741, %v4500
        %v4502 = vand.u32 %v4501, 4294901760
        %4503 = vmatmul.mubr.f32.gmra.mrb[0].mxu0 %v4502
        %v4504 = vpop.f32.mrb[0].mxu0
        %v4505 = vadd.f32 %v3515, %v4504
        %v4506 = vpop.f32.mrb[0].mxu0
        %4507 = vmatprep.mubr.f32.mxu0 0.0
        %v4508 = vand.u32 %v744, 4294901760
        %v4509 = vsub.f32 %v744, %v4508
        %v4510 = vand.u32 %v4509, 4294901760
        %4511 = vmatmul.mubr.f32.gmra.mrb[0].mxu0 %v4510
        %v4512 = vpop.f32.mrb[0].mxu0
        %v4513 = vadd.f32 %v3522, %v4512
        %v4514 = vpop.f32.mrb[0].mxu0
        %4515 = vmatprep.mubr.f32.mxu0 0.0
        %v4516 = vand.u32 %v747, 4294901760
        %v4517 = vsub.f32 %v747, %v4516
        %v4518 = vand.u32 %v4517, 4294901760
        %4519 = vmatmul.mubr.f32.gmra.mrb[0].mxu0 %v4518
        %v4520 = vpop.f32.mrb[0].mxu0
        %v4521 = vadd.f32 %v3529, %v4520
        %v4522 = vpop.f32.mrb[0].mxu0
        %4523 = vmatprep.mubr.f32.mxu0 0.0
        %v4524 = vand.u32 %v750, 4294901760
        %v4525 = vsub.f32 %v750, %v4524
        %v4526 = vand.u32 %v4525, 4294901760
        %4527 = vmatmul.mubr.f32.gmra.mrb[0].mxu0 %v4526
        %v4528 = vpop.f32.mrb[0].mxu0
        %v4529 = vadd.f32 %v3536, %v4528
        %v4530 = vpop.f32.mrb[0].mxu0
        %4531 = vmatprep.mubr.f32.mxu0 0.0
        %v4532 = vand.u32 %v753, 4294901760
        %v4533 = vsub.f32 %v753, %v4532
        %v4534 = vand.u32 %v4533, 4294901760
        %4535 = vmatmul.mubr.f32.gmra.mrb[0].mxu0 %v4534
        %v4536 = vpop.f32.mrb[0].mxu0
        %v4537 = vadd.f32 %v3543, %v4536
        %v4538 = vpop.f32.mrb[0].mxu0
        %4539 = vmatprep.mubr.f32.mxu0 0.0
        %v4540 = vand.u32 %v756, 4294901760
        %v4541 = vsub.f32 %v756, %v4540
        %v4542 = vand.u32 %v4541, 4294901760
        %4543 = vmatmul.mubr.f32.gmra.mrb[0].mxu0 %v4542
        %v4544 = vpop.f32.mrb[0].mxu0
        %v4545 = vadd.f32 %v3550, %v4544
        %v4546 = vpop.f32.mrb[0].mxu0
        %4547 = vmatprep.mubr.f32.mxu0 0.0
        %v4548 = vand.u32 %v759, 4294901760
        %v4549 = vsub.f32 %v759, %v4548
        %v4550 = vand.u32 %v4549, 4294901760
        %4551 = vmatmul.mubr.f32.gmra.mrb[0].mxu0 %v4550
        %v4552 = vpop.f32.mrb[0].mxu0
        %v4553 = vadd.f32 %v3557, %v4552
        %v4554 = vpop.f32.mrb[0].mxu0
        %4555 = vmatprep.mubr.f32.mxu0 0.0
        %v4556 = vand.u32 %v762, 4294901760
        %v4557 = vsub.f32 %v762, %v4556
        %v4558 = vand.u32 %v4557, 4294901760
        %4559 = vmatmul.mubr.f32.gmra.mrb[0].mxu0 %v4558
        %v4560 = vpop.f32.mrb[0].mxu0
        %v4561 = vadd.f32 %v3564, %v4560
        %v4562 = vpop.f32.mrb[0].mxu0
        %4563 = vmatprep.mubr.f32.mxu0 0.0
        %v4564 = vand.u32 %v765, 4294901760
        %v4565 = vsub.f32 %v765, %v4564
        %v4566 = vand.u32 %v4565, 4294901760
        %4567 = vmatmul.mubr.f32.gmra.mrb[0].mxu0 %v4566
        %v4568 = vpop.f32.mrb[0].mxu0
        %v4569 = vadd.f32 %v3571, %v4568
        %v4570 = vpop.f32.mrb[0].mxu0
        %4571 = vmatprep.mubr.f32.mxu0 0.0
        %v4572 = vand.u32 %v768, 4294901760
        %v4573 = vsub.f32 %v768, %v4572
        %v4574 = vand.u32 %v4573, 4294901760
        %4575 = vmatmul.mubr.f32.gmra.mrb[0].mxu0 %v4574
        %v4576 = vpop.f32.mrb[0].mxu0
        %v4577 = vadd.f32 %v3578, %v4576
        %v4578 = vpop.f32.mrb[0].mxu0
        %4579 = vmatprep.mubr.f32.mxu0 0.0
        %v4580 = vand.u32 %v771, 4294901760
        %v4581 = vsub.f32 %v771, %v4580
        %v4582 = vand.u32 %v4581, 4294901760
        %4583 = vmatmul.mubr.f32.gmra.mrb[0].mxu0 %v4582
        %v4584 = vpop.f32.mrb[0].mxu0
        %v4585 = vadd.f32 %v3585, %v4584
        %v4586 = vpop.f32.mrb[0].mxu0
        %4587 = vmatprep.mubr.f32.mxu0 0.0
        %v4588 = vand.u32 %v774, 4294901760
        %v4589 = vsub.f32 %v774, %v4588
        %v4590 = vand.u32 %v4589, 4294901760
        %4591 = vmatmul.mubr.f32.gmra.mrb[0].mxu0 %v4590
        %v4592 = vpop.f32.mrb[0].mxu0
        %v4593 = vadd.f32 %v3592, %v4592
        %v4594 = vpop.f32.mrb[0].mxu0
        %4595 = vmatprep.mubr.f32.mxu0 0.0
        %v4596 = vand.u32 %v777, 4294901760
        %v4597 = vsub.f32 %v777, %v4596
        %v4598 = vand.u32 %v4597, 4294901760
        %4599 = vmatmul.mubr.f32.gmra.mrb[0].mxu0 %v4598
        %v4600 = vpop.f32.mrb[0].mxu0
        %v4601 = vadd.f32 %v3599, %v4600
        %v4602 = vpop.f32.mrb[0].mxu0
        %4603 = vmatprep.mubr.f32.mxu0 0.0
        %v4604 = vand.u32 %v780, 4294901760
        %v4605 = vsub.f32 %v780, %v4604
        %v4606 = vand.u32 %v4605, 4294901760
        %4607 = vmatmul.mubr.f32.gmra.mrb[0].mxu0 %v4606
        %v4608 = vpop.f32.mrb[0].mxu0
        %v4609 = vadd.f32 %v3606, %v4608
        %v4610 = vpop.f32.mrb[0].mxu0
        %4611 = vmatprep.mubr.f32.mxu0 0.0
        %v4612 = vand.u32 %v783, 4294901760
        %v4613 = vsub.f32 %v783, %v4612
        %v4614 = vand.u32 %v4613, 4294901760
        %4615 = vmatmul.mubr.f32.gmra.mrb[0].mxu0 %v4614
        %v4616 = vpop.f32.mrb[0].mxu0
        %v4617 = vadd.f32 %v3613, %v4616
        %v4618 = vpop.f32.mrb[0].mxu0
        %4619 = vmatprep.mubr.f32.mxu0 0.0
        %v4620 = vand.u32 %v786, 4294901760
        %v4621 = vsub.f32 %v786, %v4620
        %v4622 = vand.u32 %v4621, 4294901760
        %4623 = vmatmul.mubr.f32.gmra.mrb[0].mxu0 %v4622
        %v4624 = vpop.f32.mrb[0].mxu0
        %v4625 = vadd.f32 %v3620, %v4624
        %v4626 = vpop.f32.mrb[0].mxu0
        %4627 = vmatprep.mubr.f32.mxu0 0.0
        %v4628 = vand.u32 %v789, 4294901760
        %v4629 = vsub.f32 %v789, %v4628
        %v4630 = vand.u32 %v4629, 4294901760
        %4631 = vmatmul.mubr.f32.gmra.mrb[0].mxu0 %v4630
        %v4632 = vpop.f32.mrb[0].mxu0
        %v4633 = vadd.f32 %v3627, %v4632
        %v4634 = vpop.f32.mrb[0].mxu0
        %4635 = vmatprep.mubr.f32.mxu0 0.0
        %v4636 = vand.u32 %v792, 4294901760
        %v4637 = vsub.f32 %v792, %v4636
        %v4638 = vand.u32 %v4637, 4294901760
        %4639 = vmatmul.mubr.f32.gmra.mrb[0].mxu0 %v4638
        %v4640 = vpop.f32.mrb[0].mxu0
        %v4641 = vadd.f32 %v3634, %v4640
        %v4642 = vpop.f32.mrb[0].mxu0
        %4643 = vmatprep.mubr.f32.mxu0 0.0
        %v4644 = vand.u32 %v795, 4294901760
        %v4645 = vsub.f32 %v795, %v4644
        %v4646 = vand.u32 %v4645, 4294901760
        %4647 = vmatmul.mubr.f32.gmra.mrb[0].mxu0 %v4646
        %v4648 = vpop.f32.mrb[0].mxu0
        %v4649 = vadd.f32 %v3641, %v4648
        %v4650 = vpop.f32.mrb[0].mxu0
        %4651 = vmatprep.mubr.f32.mxu0 0.0
        %v4652 = vand.u32 %v798, 4294901760
        %v4653 = vsub.f32 %v798, %v4652
        %v4654 = vand.u32 %v4653, 4294901760
        %4655 = vmatmul.mubr.f32.gmra.mrb[0].mxu0 %v4654
        %v4656 = vpop.f32.mrb[0].mxu0
        %v4657 = vadd.f32 %v3648, %v4656
        %v4658 = vpop.f32.mrb[0].mxu0
        %4659 = vmatprep.mubr.f32.mxu0 0.0
        %v4660 = vand.u32 %v801, 4294901760
        %v4661 = vsub.f32 %v801, %v4660
        %v4662 = vand.u32 %v4661, 4294901760
        %4663 = vmatmul.mubr.f32.gmra.mrb[0].mxu0 %v4662
        %v4664 = vpop.f32.mrb[0].mxu0
        %v4665 = vadd.f32 %v3655, %v4664
        %v4666 = vpop.f32.mrb[0].mxu0
        %4667 = vmatprep.mubr.f32.mxu0 0.0
        %v4668 = vand.u32 %v804, 4294901760
        %v4669 = vsub.f32 %v804, %v4668
        %v4670 = vand.u32 %v4669, 4294901760
        %4671 = vmatmul.mubr.f32.gmra.mrb[0].mxu0 %v4670
        %v4672 = vpop.f32.mrb[0].mxu0
        %v4673 = vadd.f32 %v3662, %v4672
        %v4674 = vpop.f32.mrb[0].mxu0
        %4675 = vmatprep.mubr.f32.mxu0 0.0
        %v4676 = vand.u32 %v807, 4294901760
        %v4677 = vsub.f32 %v807, %v4676
        %v4678 = vand.u32 %v4677, 4294901760
        %4679 = vmatmul.mubr.f32.gmra.mrb[0].mxu0 %v4678
        %v4680 = vpop.f32.mrb[0].mxu0
        %v4681 = vadd.f32 %v3669, %v4680
        %v4682 = vpop.f32.mrb[0].mxu0
        %4683 = vmatprep.mubr.f32.mxu0 0.0
        %v4684 = vand.u32 %v810, 4294901760
        %v4685 = vsub.f32 %v810, %v4684
        %v4686 = vand.u32 %v4685, 4294901760
        %4687 = vmatmul.mubr.f32.gmra.mrb[0].mxu0 %v4686
        %v4688 = vpop.f32.mrb[0].mxu0
        %v4689 = vadd.f32 %v3676, %v4688
        %v4690 = vpop.f32.mrb[0].mxu0
        %4691 = vmatprep.mubr.f32.mxu0 0.0
        %v4692 = vand.u32 %v813, 4294901760
        %v4693 = vsub.f32 %v813, %v4692
        %v4694 = vand.u32 %v4693, 4294901760
        %4695 = vmatmul.mubr.f32.gmra.mrb[0].mxu0 %v4694
        %v4696 = vpop.f32.mrb[0].mxu0
        %v4697 = vadd.f32 %v3683, %v4696
        %v4698 = vpop.f32.mrb[0].mxu0
        %4699 = vmatprep.mubr.f32.mxu0 0.0
        %v4700 = vand.u32 %v816, 4294901760
        %v4701 = vsub.f32 %v816, %v4700
        %v4702 = vand.u32 %v4701, 4294901760
        %4703 = vmatmul.mubr.f32.gmra.mrb[0].mxu0 %v4702
        %v4704 = vpop.f32.mrb[0].mxu0
        %v4705 = vadd.f32 %v3690, %v4704
        %v4706 = vpop.f32.mrb[0].mxu0
        %4707 = vmatprep.mubr.f32.mxu0 0.0
        %v4708 = vand.u32 %v819, 4294901760
        %v4709 = vsub.f32 %v819, %v4708
        %v4710 = vand.u32 %v4709, 4294901760
        %4711 = vmatmul.mubr.f32.gmra.mrb[0].mxu0 %v4710
        %v4712 = vpop.f32.mrb[0].mxu0
        %v4713 = vadd.f32 %v3697, %v4712
        %v4714 = vpop.f32.mrb[0].mxu0
        %4715 = vmatprep.mubr.f32.mxu0 0.0
        %v4716 = vand.u32 %v822, 4294901760
        %v4717 = vsub.f32 %v822, %v4716
        %v4718 = vand.u32 %v4717, 4294901760
        %4719 = vmatmul.mubr.f32.gmra.mrb[0].mxu0 %v4718
        %v4720 = vpop.f32.mrb[0].mxu0
        %v4721 = vadd.f32 %v3704, %v4720
        %v4722 = vpop.f32.mrb[0].mxu0
        %4723 = vmatprep.mubr.f32.mxu0 0.0
        %v4724 = vand.u32 %v825, 4294901760
        %v4725 = vsub.f32 %v825, %v4724
        %v4726 = vand.u32 %v4725, 4294901760
        %4727 = vmatmul.mubr.f32.gmra.mrb[0].mxu0 %v4726
        %v4728 = vpop.f32.mrb[0].mxu0
        %v4729 = vadd.f32 %v3711, %v4728
        %v4730 = vpop.f32.mrb[0].mxu0
        %4731 = vmatprep.mubr.f32.mxu0 0.0
        %v4732 = vand.u32 %v828, 4294901760
        %v4733 = vsub.f32 %v828, %v4732
        %v4734 = vand.u32 %v4733, 4294901760
        %4735 = vmatmul.mubr.f32.gmra.mrb[0].mxu0 %v4734
        %v4736 = vpop.f32.mrb[0].mxu0
        %v4737 = vadd.f32 %v3718, %v4736
        %v4738 = vpop.f32.mrb[0].mxu0
        %4739 = vmatprep.mubr.f32.mxu0 0.0
        %v4740 = vand.u32 %v831, 4294901760
        %v4741 = vsub.f32 %v831, %v4740
        %v4742 = vand.u32 %v4741, 4294901760
        %4743 = vmatmul.mubr.f32.gmra.mrb[0].mxu0 %v4742
        %v4744 = vpop.f32.mrb[0].mxu0
        %v4745 = vadd.f32 %v3725, %v4744
        %v4746 = vpop.f32.mrb[0].mxu0
        %4747 = vmatprep.mubr.f32.mxu0 0.0
        %v4748 = vand.u32 %v834, 4294901760
        %v4749 = vsub.f32 %v834, %v4748
        %v4750 = vand.u32 %v4749, 4294901760
        %4751 = vmatmul.mubr.f32.gmra.mrb[0].mxu0 %v4750
        %v4752 = vpop.f32.mrb[0].mxu0
        %v4753 = vadd.f32 %v3732, %v4752
        %v4754 = vpop.f32.mrb[0].mxu0
        %4755 = vmatprep.mubr.f32.mxu0 0.0
        %v4756 = vand.u32 %v837, 4294901760
        %v4757 = vsub.f32 %v837, %v4756
        %v4758 = vand.u32 %v4757, 4294901760
        %4759 = vmatmul.mubr.f32.gmra.mrb[0].mxu0 %v4758
        %v4760 = vpop.f32.mrb[0].mxu0
        %v4761 = vadd.f32 %v3739, %v4760
        %v4762 = vpop.f32.mrb[0].mxu0
        %4763 = vmatprep.mubr.f32.mxu0 0.0
        %v4764 = vand.u32 %v840, 4294901760
        %v4765 = vsub.f32 %v840, %v4764
        %v4766 = vand.u32 %v4765, 4294901760
        %4767 = vmatmul.mubr.f32.gmra.mrb[0].mxu0 %v4766
        %v4768 = vpop.f32.mrb[0].mxu0
        %v4769 = vadd.f32 %v3746, %v4768
        %v4770 = vpop.f32.mrb[0].mxu0
        %4771 = vmatprep.mubr.f32.mxu0 0.0
        %v4772 = vand.u32 %v843, 4294901760
        %v4773 = vsub.f32 %v843, %v4772
        %v4774 = vand.u32 %v4773, 4294901760
        %4775 = vmatmul.mubr.f32.gmra.mrb[0].mxu0 %v4774
        %v4776 = vpop.f32.mrb[0].mxu0
        %v4777 = vadd.f32 %v3753, %v4776
        %v4778 = vpop.f32.mrb[0].mxu0
        %4779 = vmatprep.mubr.f32.mxu0 0.0
        %v4780 = vand.u32 %v846, 4294901760
        %v4781 = vsub.f32 %v846, %v4780
        %v4782 = vand.u32 %v4781, 4294901760
        %4783 = vmatmul.mubr.f32.gmra.mrb[0].mxu0 %v4782
        %v4784 = vpop.f32.mrb[0].mxu0
        %v4785 = vadd.f32 %v3760, %v4784
        %v4786 = vpop.f32.mrb[0].mxu0
        %4787 = vmatprep.mubr.f32.mxu0 0.0
        %v4788 = vand.u32 %v849, 4294901760
        %v4789 = vsub.f32 %v849, %v4788
        %v4790 = vand.u32 %v4789, 4294901760
        %4791 = vmatmul.mubr.f32.gmra.mrb[0].mxu0 %v4790
        %v4792 = vpop.f32.mrb[0].mxu0
        %v4793 = vadd.f32 %v3767, %v4792
        %v4794 = vpop.f32.mrb[0].mxu0
        %4795 = vmatprep.mubr.f32.mxu0 0.0
        %v4796 = vand.u32 %v852, 4294901760
        %v4797 = vsub.f32 %v852, %v4796
        %v4798 = vand.u32 %v4797, 4294901760
        %4799 = vmatmul.mubr.f32.gmra.mrb[0].mxu0 %v4798
        %v4800 = vpop.f32.mrb[0].mxu0
        %v4801 = vadd.f32 %v3774, %v4800
        %v4802 = vpop.f32.mrb[0].mxu0
        %4803 = vmatprep.mubr.f32.mxu0 0.0
        %v4804 = vand.u32 %v855, 4294901760
        %v4805 = vsub.f32 %v855, %v4804
        %v4806 = vand.u32 %v4805, 4294901760
        %4807 = vmatmul.mubr.f32.gmra.mrb[0].mxu0 %v4806
        %v4808 = vpop.f32.mrb[0].mxu0
        %v4809 = vadd.f32 %v3781, %v4808
        %v4810 = vpop.f32.mrb[0].mxu0
        %4811 = vmatprep.mubr.f32.mxu0 0.0
        %v4812 = vand.u32 %v858, 4294901760
        %v4813 = vsub.f32 %v858, %v4812
        %v4814 = vand.u32 %v4813, 4294901760
        %4815 = vmatmul.mubr.f32.gmra.mrb[0].mxu0 %v4814
        %v4816 = vpop.f32.mrb[0].mxu0
        %v4817 = vadd.f32 %v3788, %v4816
        %v4818 = vpop.f32.mrb[0].mxu0
        %4819 = vmatprep.mubr.f32.mxu0 0.0
        %v4820 = vand.u32 %v861, 4294901760
        %v4821 = vsub.f32 %v861, %v4820
        %v4822 = vand.u32 %v4821, 4294901760
        %4823 = vmatmul.mubr.f32.gmra.mrb[0].mxu0 %v4822
        %v4824 = vpop.f32.mrb[0].mxu0
        %v4825 = vadd.f32 %v3795, %v4824
        %v4826 = vpop.f32.mrb[0].mxu0
        %4827 = vmatprep.mubr.f32.mxu0 0.0
        %v4828 = vand.u32 %v864, 4294901760
        %v4829 = vsub.f32 %v864, %v4828
        %v4830 = vand.u32 %v4829, 4294901760
        %4831 = vmatmul.mubr.f32.gmra.mrb[0].mxu0 %v4830
        %v4832 = vpop.f32.mrb[0].mxu0
        %v4833 = vadd.f32 %v3802, %v4832
        %v4834 = vpop.f32.mrb[0].mxu0
        %4835 = vmatprep.mubr.f32.mxu0 0.0
        %v4836 = vand.u32 %v867, 4294901760
        %v4837 = vsub.f32 %v867, %v4836
        %v4838 = vand.u32 %v4837, 4294901760
        %4839 = vmatmul.mubr.f32.gmra.mrb[0].mxu0 %v4838
        %v4840 = vpop.f32.mrb[0].mxu0
        %v4841 = vadd.f32 %v3809, %v4840
        %v4842 = vpop.f32.mrb[0].mxu0
        %4843 = vmatprep.mubr.f32.mxu0 0.0
        %v4844 = vand.u32 %v870, 4294901760
        %v4845 = vsub.f32 %v870, %v4844
        %v4846 = vand.u32 %v4845, 4294901760
        %4847 = vmatmul.mubr.f32.gmra.mrb[0].mxu0 %v4846
        %v4848 = vpop.f32.mrb[0].mxu0
        %v4849 = vadd.f32 %v3816, %v4848
        %v4850 = vpop.f32.mrb[0].mxu0
        %4851 = vmatprep.mubr.f32.mxu0 0.0
        %v4852 = vand.u32 %v873, 4294901760
        %v4853 = vsub.f32 %v873, %v4852
        %v4854 = vand.u32 %v4853, 4294901760
        %4855 = vmatmul.mubr.f32.gmra.mrb[0].mxu0 %v4854
        %v4856 = vpop.f32.mrb[0].mxu0
        %v4857 = vadd.f32 %v3823, %v4856
        %v4858 = vpop.f32.mrb[0].mxu0
        %4859 = vmatprep.mubr.f32.mxu0 0.0
        %v4860 = vand.u32 %v876, 4294901760
        %v4861 = vsub.f32 %v876, %v4860
        %v4862 = vand.u32 %v4861, 4294901760
        %4863 = vmatmul.mubr.f32.gmra.mrb[0].mxu0 %v4862
        %v4864 = vpop.f32.mrb[0].mxu0
        %v4865 = vadd.f32 %v3830, %v4864
        %v4866 = vpop.f32.mrb[0].mxu0
        %4867 = vmatprep.mubr.f32.mxu0 0.0
        %v4868 = vand.u32 %v879, 4294901760
        %v4869 = vsub.f32 %v879, %v4868
        %v4870 = vand.u32 %v4869, 4294901760
        %4871 = vmatmul.mubr.f32.gmra.mrb[0].mxu0 %v4870
        %v4872 = vpop.f32.mrb[0].mxu0
        %v4873 = vadd.f32 %v3837, %v4872
        %v4874 = vpop.f32.mrb[0].mxu0
        %4875 = vmatprep.mubr.f32.mxu0 0.0
        %v4876 = vand.u32 %v882, 4294901760
        %v4877 = vsub.f32 %v882, %v4876
        %v4878 = vand.u32 %v4877, 4294901760
        %4879 = vmatmul.mubr.f32.gmra.mrb[0].mxu0 %v4878
        %v4880 = vpop.f32.mrb[0].mxu0
        %v4881 = vadd.f32 %v3844, %v4880
        %v4882 = vpop.f32.mrb[0].mxu0
        %4883 = vmatprep.mubr.f32.mxu0 0.0
        %v4884 = vand.u32 %v885, 4294901760
        %v4885 = vsub.f32 %v885, %v4884
        %v4886 = vand.u32 %v4885, 4294901760
        %4887 = vmatmul.mubr.f32.gmra.mrb[0].mxu0 %v4886
        %v4888 = vpop.f32.mrb[0].mxu0
        %v4889 = vadd.f32 %v3851, %v4888
        %v4890 = vpop.f32.mrb[0].mxu0
        %4891 = vmatprep.mubr.f32.mxu0 0.0
        %v4892 = vand.u32 %v888, 4294901760
        %v4893 = vsub.f32 %v888, %v4892
        %v4894 = vand.u32 %v4893, 4294901760
        %4895 = vmatmul.mubr.f32.gmra.mrb[0].mxu0 %v4894
        %v4896 = vpop.f32.mrb[0].mxu0
        %v4897 = vadd.f32 %v3858, %v4896
        %v4898 = vpop.f32.mrb[0].mxu0
        %4899 = vmatprep.mubr.f32.mxu0 0.0
        %v4900 = vand.u32 %v891, 4294901760
        %v4901 = vsub.f32 %v891, %v4900
        %v4902 = vand.u32 %v4901, 4294901760
        %4903 = vmatmul.mubr.f32.gmra.mrb[0].mxu0 %v4902
        %v4904 = vpop.f32.mrb[0].mxu0
        %v4905 = vadd.f32 %v3865, %v4904
        %v4906 = vpop.f32.mrb[0].mxu0
        %4907 = vmatprep.mubr.f32.mxu0 0.0
        %v4908 = vand.u32 %v894, 4294901760
        %v4909 = vsub.f32 %v894, %v4908
        %v4910 = vand.u32 %v4909, 4294901760
        %4911 = vmatmul.mubr.f32.gmra.mrb[0].mxu0 %v4910
        %v4912 = vpop.f32.mrb[0].mxu0
        %v4913 = vadd.f32 %v3872, %v4912
        %v4914 = vpop.f32.mrb[0].mxu0
        %4915 = vmatprep.mubr.f32.mxu0 0.0
        %v4916 = vand.u32 %v897, 4294901760
        %v4917 = vsub.f32 %v897, %v4916
        %v4918 = vand.u32 %v4917, 4294901760
        %4919 = vmatmul.mubr.f32.gmra.mrb[0].mxu0 %v4918
        %v4920 = vpop.f32.mrb[0].mxu0
        %v4921 = vadd.f32 %v3879, %v4920
        %v4922 = vpop.f32.mrb[0].mxu0
        %4923 = vmatprep.mubr.f32.mxu0 0.0
        %v4924 = vand.u32 %v900, 4294901760
        %v4925 = vsub.f32 %v900, %v4924
        %v4926 = vand.u32 %v4925, 4294901760
        %4927 = vmatmul.mubr.f32.gmra.mrb[0].mxu0 %v4926
        %v4928 = vpop.f32.mrb[0].mxu0
        %v4929 = vadd.f32 %v3886, %v4928
        %v4930 = vpop.f32.mrb[0].mxu0
        %4931 = vmatprep.mubr.f32.mxu0 0.0
        %v4932 = vand.u32 %v903, 4294901760
        %v4933 = vsub.f32 %v903, %v4932
        %v4934 = vand.u32 %v4933, 4294901760
        %4935 = vmatmul.mubr.f32.gmra.mrb[0].mxu0 %v4934
        %v4936 = vpop.f32.mrb[0].mxu0
        %v4937 = vadd.f32 %v3893, %v4936
        %v4938 = vpop.f32.mrb[0].mxu0
        %4939 = vmatprep.mubr.f32.mxu0 0.0
        %v4940 = vand.u32 %v906, 4294901760
        %v4941 = vsub.f32 %v906, %v4940
        %v4942 = vand.u32 %v4941, 4294901760
        %4943 = vmatmul.mubr.f32.gmra.mrb[0].mxu0 %v4942
        %v4944 = vpop.f32.mrb[0].mxu0
        %v4945 = vadd.f32 %v3900, %v4944
        %v4946 = vpop.f32.mrb[0].mxu0
        %4947 = vmatprep.mubr.f32.mxu0 0.0
        %v4948 = vand.u32 %v909, 4294901760
        %v4949 = vsub.f32 %v909, %v4948
        %v4950 = vand.u32 %v4949, 4294901760
        %4951 = vmatmul.mubr.f32.gmra.mrb[0].mxu0 %v4950
        %v4952 = vpop.f32.mrb[0].mxu0
        %v4953 = vadd.f32 %v3907, %v4952
        %v4954 = vpop.f32.mrb[0].mxu0
        %4955 = vmatprep.mubr.f32.mxu0 0.0
        %v4956 = vand.u32 %v912, 4294901760
        %v4957 = vsub.f32 %v912, %v4956
        %v4958 = vand.u32 %v4957, 4294901760
        %4959 = vmatmul.mubr.f32.gmra.mrb[0].mxu0 %v4958
        %v4960 = vpop.f32.mrb[0].mxu0
        %v4961 = vadd.f32 %v3914, %v4960
        %v4962 = vpop.f32.mrb[0].mxu0
        %4963 = vmatprep.mubr.f32.mxu0 0.0
        %v4964 = vand.u32 %v915, 4294901760
        %v4965 = vsub.f32 %v915, %v4964
        %v4966 = vand.u32 %v4965, 4294901760
        %4967 = vmatmul.mubr.f32.gmra.mrb[0].mxu0 %v4966
        %v4968 = vpop.f32.mrb[0].mxu0
        %v4969 = vadd.f32 %v3921, %v4968
        %v4970 = vpop.f32.mrb[0].mxu0
        %4971 = vmatprep.mubr.f32.mxu0 0.0
        %v4972 = vand.u32 %v918, 4294901760
        %v4973 = vsub.f32 %v918, %v4972
        %v4974 = vand.u32 %v4973, 4294901760
        %4975 = vmatmul.mubr.f32.gmra.mrb[0].mxu0 %v4974
        %v4976 = vpop.f32.mrb[0].mxu0
        %v4977 = vadd.f32 %v3928, %v4976
        %v4978 = vpop.f32.mrb[0].mxu0
        %4979 = vmatprep.mubr.f32.mxu0 0.0
        %v4980 = vand.u32 %v921, 4294901760
        %v4981 = vsub.f32 %v921, %v4980
        %v4982 = vand.u32 %v4981, 4294901760
        %4983 = vmatmul.mubr.f32.gmra.mrb[0].mxu0 %v4982
        %v4984 = vpop.f32.mrb[0].mxu0
        %v4985 = vadd.f32 %v3935, %v4984
        %v4986 = vpop.f32.mrb[0].mxu0
        %4987 = vmatprep.mubr.f32.mxu0 0.0
        %v4988 = vand.u32 %v924, 4294901760
        %v4989 = vsub.f32 %v924, %v4988
        %v4990 = vand.u32 %v4989, 4294901760
        %4991 = vmatmul.mubr.f32.gmra.mrb[0].mxu0 %v4990
        %v4992 = vpop.f32.mrb[0].mxu0
        %v4993 = vadd.f32 %v3942, %v4992
        %v4994 = vpop.f32.mrb[0].mxu0
        %4995 = vmatprep.mubr.f32.mxu0 0.0
        %v4996 = vand.u32 %v927, 4294901760
        %v4997 = vsub.f32 %v927, %v4996
        %v4998 = vand.u32 %v4997, 4294901760
        %4999 = vmatmul.mubr.f32.gmra.mrb[0].mxu0 %v4998
        %v5000 = vpop.f32.mrb[0].mxu0
        %v5001 = vadd.f32 %v3949, %v5000
        %v5002 = vpop.f32.mrb[0].mxu0
        %5003 = vmatprep.mubr.f32.mxu0 0.0
        %v5004 = vand.u32 %v930, 4294901760
        %v5005 = vsub.f32 %v930, %v5004
        %v5006 = vand.u32 %v5005, 4294901760
        %5007 = vmatmul.mubr.f32.gmra.mrb[0].mxu0 %v5006
        %v5008 = vpop.f32.mrb[0].mxu0
        %v5009 = vadd.f32 %v3956, %v5008
        %v5010 = vpop.f32.mrb[0].mxu0
        %5011 = vmatprep.mubr.f32.mxu0 0.0
        %v5012 = vand.u32 %v933, 4294901760
        %v5013 = vsub.f32 %v933, %v5012
        %v5014 = vand.u32 %v5013, 4294901760
        %5015 = vmatmul.mubr.f32.gmra.mrb[0].mxu0 %v5014
        %v5016 = vpop.f32.mrb[0].mxu0
        %v5017 = vadd.f32 %v3963, %v5016
        %v5018 = vpop.f32.mrb[0].mxu0
        %5019 = vmatprep.mubr.f32.mxu0 0.0
        %v5020 = vand.u32 %v936, 4294901760
        %v5021 = vsub.f32 %v936, %v5020
        %v5022 = vand.u32 %v5021, 4294901760
        %5023 = vmatmul.mubr.f32.gmra.mrb[0].mxu0 %v5022
        %v5024 = vpop.f32.mrb[0].mxu0
        %v5025 = vadd.f32 %v3970, %v5024
        %v5026 = vpop.f32.mrb[0].mxu0
        %5027 = vmatprep.mubr.f32.mxu0 0.0
        %v5028 = vand.u32 %v939, 4294901760
        %v5029 = vsub.f32 %v939, %v5028
        %v5030 = vand.u32 %v5029, 4294901760
        %5031 = vmatmul.mubr.f32.gmra.mrb[0].mxu0 %v5030
        %v5032 = vpop.f32.mrb[0].mxu0
        %v5033 = vadd.f32 %v3977, %v5032
        %v5034 = vpop.f32.mrb[0].mxu0
        %5035 = vmatprep.mubr.f32.mxu0 0.0
        %v5036 = vand.u32 %v942, 4294901760
        %v5037 = vsub.f32 %v942, %v5036
        %v5038 = vand.u32 %v5037, 4294901760
        %5039 = vmatmul.mubr.f32.gmra.mrb[0].mxu0 %v5038
        %v5040 = vpop.f32.mrb[0].mxu0
        %v5041 = vadd.f32 %v3984, %v5040
        %v5042 = vpop.f32.mrb[0].mxu0
        %5043 = vmatprep.mubr.f32.mxu0 0.0
        %v5044 = vand.u32 %v945, 4294901760
        %v5045 = vsub.f32 %v945, %v5044
        %v5046 = vand.u32 %v5045, 4294901760
        %5047 = vmatmul.mubr.f32.gmra.mrb[0].mxu0 %v5046
        %v5048 = vpop.f32.mrb[0].mxu0
        %v5049 = vadd.f32 %v3991, %v5048
        %v5050 = vpop.f32.mrb[0].mxu0
        %5051 = vmatprep.mubr.f32.mxu0 0.0
        %v5052 = vand.u32 %v948, 4294901760
        %v5053 = vsub.f32 %v948, %v5052
        %v5054 = vand.u32 %v5053, 4294901760
        %5055 = vmatmul.mubr.f32.gmra.mrb[0].mxu0 %v5054
        %v5056 = vpop.f32.mrb[0].mxu0
        %v5057 = vadd.f32 %v3998, %v5056
        %v5058 = vpop.f32.mrb[0].mxu0
        %5059 = vmatprep.mubr.f32.mxu0 0.0
        %v5060 = vand.u32 %v951, 4294901760
        %v5061 = vsub.f32 %v951, %v5060
        %v5062 = vand.u32 %v5061, 4294901760
        %5063 = vmatmul.mubr.f32.gmra.mrb[0].mxu0 %v5062
        %v5064 = vpop.f32.mrb[0].mxu0
        %v5065 = vadd.f32 %v4005, %v5064
        %v5066 = vpop.f32.mrb[0].mxu0
        %5067 = vmatprep.mubr.f32.mxu0 0.0
        %v5068 = vand.u32 %v954, 4294901760
        %v5069 = vsub.f32 %v954, %v5068
        %v5070 = vand.u32 %v5069, 4294901760
        %5071 = vmatmul.mubr.f32.gmra.mrb[0].mxu0 %v5070
        %v5072 = vpop.f32.mrb[0].mxu0
        %v5073 = vadd.f32 %v4012, %v5072
        %v5074 = vpop.f32.mrb[0].mxu0
        %5075 = vmatprep.mubr.f32.mxu0 0.0
        %v5076 = vand.u32 %v957, 4294901760
        %v5077 = vsub.f32 %v957, %v5076
        %v5078 = vand.u32 %v5077, 4294901760
        %5079 = vmatmul.mubr.f32.gmra.mrb[0].mxu0 %v5078
        %v5080 = vpop.f32.mrb[0].mxu0
        %v5081 = vadd.f32 %v4019, %v5080
        %v5082 = vpop.f32.mrb[0].mxu0
        %5083 = vmatprep.mubr.f32.mxu0 0.0
        %v5084 = vand.u32 %v960, 4294901760
        %v5085 = vsub.f32 %v960, %v5084
        %v5086 = vand.u32 %v5085, 4294901760
        %5087 = vmatmul.mubr.f32.gmra.mrb[0].mxu0 %v5086
        %v5088 = vpop.f32.mrb[0].mxu0
        %v5089 = vadd.f32 %v4026, %v5088
        %v5090 = vpop.f32.mrb[0].mxu0
        %5091 = vmatprep.mubr.f32.mxu0 0.0
        %v5092 = vand.u32 %v963, 4294901760
        %v5093 = vsub.f32 %v963, %v5092
        %v5094 = vand.u32 %v5093, 4294901760
        %5095 = vmatmul.mubr.f32.gmra.mrb[0].mxu0 %v5094
        %v5096 = vpop.f32.mrb[0].mxu0
        %v5097 = vadd.f32 %v4033, %v5096
        %v5098 = vpop.f32.mrb[0].mxu0
        %5099 = vmatprep.mubr.f32.mxu0 0.0
        %v5100 = vand.u32 %v966, 4294901760
        %v5101 = vsub.f32 %v966, %v5100
        %v5102 = vand.u32 %v5101, 4294901760
        %5103 = vmatmul.mubr.f32.gmra.mrb[0].mxu0 %v5102
        %v5104 = vpop.f32.mrb[0].mxu0
        %v5105 = vadd.f32 %v4040, %v5104
        %v5106 = vpop.f32.mrb[0].mxu0
        %5107 = vmatprep.mubr.f32.mxu0 0.0
        %v5108 = vand.u32 %v969, 4294901760
        %v5109 = vsub.f32 %v969, %v5108
        %v5110 = vand.u32 %v5109, 4294901760
        %5111 = vmatmul.mubr.f32.gmra.mrb[0].mxu0 %v5110
        %v5112 = vpop.f32.mrb[0].mxu0
        %v5113 = vadd.f32 %v4047, %v5112
        %v5114 = vpop.f32.mrb[0].mxu0
        %5115 = vmatprep.mubr.f32.mxu0 0.0
        %v5116 = vand.u32 %v972, 4294901760
        %v5117 = vsub.f32 %v972, %v5116
        %v5118 = vand.u32 %v5117, 4294901760
        %5119 = vmatmul.mubr.f32.gmra.mrb[0].mxu0 %v5118
        %v5120 = vpop.f32.mrb[0].mxu0
        %v5121 = vadd.f32 %v4054, %v5120
        %v5122 = vpop.f32.mrb[0].mxu0
        %5123 = vmatprep.mubr.f32.mxu0 0.0
        %v5124 = vand.u32 %v975, 4294901760
        %v5125 = vsub.f32 %v975, %v5124
        %v5126 = vand.u32 %v5125, 4294901760
        %5127 = vmatmul.mubr.f32.gmra.mrb[0].mxu0 %v5126
        %v5128 = vpop.f32.mrb[0].mxu0
        %v5129 = vadd.f32 %v4061, %v5128
        %v5130 = vpop.f32.mrb[0].mxu0
        %5131 = vmatprep.mubr.f32.mxu0 0.0
        %v5132 = vand.u32 %v978, 4294901760
        %v5133 = vsub.f32 %v978, %v5132
        %v5134 = vand.u32 %v5133, 4294901760
        %5135 = vmatmul.mubr.f32.gmra.mrb[0].mxu0 %v5134
        %v5136 = vpop.f32.mrb[0].mxu0
        %v5137 = vadd.f32 %v4068, %v5136
        %v5138 = vpop.f32.mrb[0].mxu0
        %5139 = vmatprep.mubr.f32.mxu0 0.0
        %v5140 = vand.u32 %v981, 4294901760
        %v5141 = vsub.f32 %v981, %v5140
        %v5142 = vand.u32 %v5141, 4294901760
        %5143 = vmatmul.mubr.f32.gmra.mrb[0].mxu0 %v5142
        %v5144 = vpop.f32.mrb[0].mxu0
        %v5145 = vadd.f32 %v4075, %v5144
        %v5146 = vpop.f32.mrb[0].mxu0
        %5147 = vmatprep.mubr.f32.mxu0 0.0
        %v5148 = vand.u32 %v984, 4294901760
        %v5149 = vsub.f32 %v984, %v5148
        %v5150 = vand.u32 %v5149, 4294901760
        %5151 = vmatmul.mubr.f32.gmra.mrb[0].mxu0 %v5150
        %v5152 = vpop.f32.mrb[0].mxu0
        %v5153 = vadd.f32 %v4082, %v5152
        %v5154 = vpop.f32.mrb[0].mxu0
        %5155 = vmatprep.mubr.f32.mxu0 0.0
        %v5156 = vand.u32 %v987, 4294901760
        %v5157 = vsub.f32 %v987, %v5156
        %v5158 = vand.u32 %v5157, 4294901760
        %5159 = vmatmul.mubr.f32.gmra.mrb[0].mxu0 %v5158
        %v5160 = vpop.f32.mrb[0].mxu0
        %v5161 = vadd.f32 %v4089, %v5160
        %v5162 = vpop.f32.mrb[0].mxu0
        %5163 = vmatprep.mubr.f32.mxu0 0.0
        %v5164 = vand.u32 %v990, 4294901760
        %v5165 = vsub.f32 %v990, %v5164
        %v5166 = vand.u32 %v5165, 4294901760
        %5167 = vmatmul.mubr.f32.gmra.mrb[0].mxu0 %v5166
        %v5168 = vpop.f32.mrb[0].mxu0
        %v5169 = vadd.f32 %v4096, %v5168
        %v5170 = vpop.f32.mrb[0].mxu0
        %5171 = vmatprep.mubr.f32.mxu0 0.0
        %v5172 = vand.u32 %v993, 4294901760
        %v5173 = vsub.f32 %v993, %v5172
        %v5174 = vand.u32 %v5173, 4294901760
        %5175 = vmatmul.mubr.f32.gmra.mrb[0].mxu0 %v5174
        %v5176 = vpop.f32.mrb[0].mxu0
        %v5177 = vadd.f32 %v4103, %v5176
        %v5178 = vpop.f32.mrb[0].mxu0
        %5179 = vmatprep.mubr.f32.mxu0 0.0
        %v5180 = vand.u32 %v996, 4294901760
        %v5181 = vsub.f32 %v996, %v5180
        %v5182 = vand.u32 %v5181, 4294901760
        %5183 = vmatmul.mubr.f32.gmra.mrb[0].mxu0 %v5182
        %v5184 = vpop.f32.mrb[0].mxu0
        %v5185 = vadd.f32 %v4110, %v5184
        %v5186 = vpop.f32.mrb[0].mxu0
        %5187 = vmatprep.mubr.f32.mxu0 0.0
        %v5188 = vand.u32 %v999, 4294901760
        %v5189 = vsub.f32 %v999, %v5188
        %v5190 = vand.u32 %v5189, 4294901760
        %5191 = vmatmul.mubr.f32.gmra.mrb[0].mxu0 %v5190
        %v5192 = vpop.f32.mrb[0].mxu0
        %v5193 = vadd.f32 %v4117, %v5192
        %v5194 = vpop.f32.mrb[0].mxu0
        %5195 = vmatprep.mubr.f32.mxu0 0.0
        %v5196 = vand.u32 %v1002, 4294901760
        %v5197 = vsub.f32 %v1002, %v5196
        %v5198 = vand.u32 %v5197, 4294901760
        %5199 = vmatmul.mubr.f32.gmra.mrb[0].mxu0 %v5198
        %v5200 = vpop.f32.mrb[0].mxu0
        %v5201 = vadd.f32 %v4124, %v5200
        %v5202 = vpop.f32.mrb[0].mxu0
        %5203 = vmatprep.mubr.f32.mxu0 0.0
        %v5204 = vand.u32 %v1005, 4294901760
        %v5205 = vsub.f32 %v1005, %v5204
        %v5206 = vand.u32 %v5205, 4294901760
        %5207 = vmatmul.mubr.f32.gmra.mrb[0].mxu0 %v5206
        %v5208 = vpop.f32.mrb[0].mxu0
        %v5209 = vadd.f32 %v4131, %v5208
        %v5210 = vpop.f32.mrb[0].mxu0
        %5211 = vmatprep.mubr.f32.mxu0 0.0
        %v5212 = vand.u32 %v1008, 4294901760
        %v5213 = vsub.f32 %v1008, %v5212
        %v5214 = vand.u32 %v5213, 4294901760
        %5215 = vmatmul.mubr.f32.gmra.mrb[0].mxu0 %v5214
        %v5216 = vpop.f32.mrb[0].mxu0
        %v5217 = vadd.f32 %v4138, %v5216
        %v5218 = vpop.f32.mrb[0].mxu0
        %5219 = vmatprep.mubr.f32.mxu0 0.0
        %v5220 = vand.u32 %v1011, 4294901760
        %v5221 = vsub.f32 %v1011, %v5220
        %v5222 = vand.u32 %v5221, 4294901760
        %5223 = vmatmul.mubr.f32.gmra.mrb[0].mxu0 %v5222
        %v5224 = vpop.f32.mrb[0].mxu0
        %v5225 = vadd.f32 %v4145, %v5224
        %v5226 = vpop.f32.mrb[0].mxu0
        %5227 = vmatprep.mubr.f32.mxu0 0.0
        %v5228 = vand.u32 %v1014, 4294901760
        %v5229 = vsub.f32 %v1014, %v5228
        %v5230 = vand.u32 %v5229, 4294901760
        %5231 = vmatmul.mubr.f32.gmra.mrb[0].mxu0 %v5230
        %v5232 = vpop.f32.mrb[0].mxu0
        %v5233 = vadd.f32 %v4152, %v5232
        %v5234 = vpop.f32.mrb[0].mxu0
        %5235 = vmatprep.mubr.f32.mxu0 0.0
        %v5236 = vand.u32 %v1017, 4294901760
        %v5237 = vsub.f32 %v1017, %v5236
        %v5238 = vand.u32 %v5237, 4294901760
        %5239 = vmatmul.mubr.f32.gmra.mrb[0].mxu0 %v5238
        %v5240 = vpop.f32.mrb[0].mxu0
        %v5241 = vadd.f32 %v4159, %v5240
        %v5242 = vpop.f32.mrb[0].mxu0
        %5243 = vmatprep.mubr.f32.mxu0 0.0
        %v5244 = vand.u32 %v1020, 4294901760
        %v5245 = vsub.f32 %v1020, %v5244
        %v5246 = vand.u32 %v5245, 4294901760
        %5247 = vmatmul.mubr.f32.gmra.mrb[0].mxu0 %v5246
        %v5248 = vpop.f32.mrb[0].mxu0
        %v5249 = vadd.f32 %v4166, %v5248
        %v5250 = vpop.f32.mrb[0].mxu0
        %5251 = vmatprep.mubr.f32.mxu0 0.0
        %v5252 = vand.u32 %v1023, 4294901760
        %v5253 = vsub.f32 %v1023, %v5252
        %v5254 = vand.u32 %v5253, 4294901760
        %5255 = vmatmul.mubr.f32.gmra.mrb[0].mxu0 %v5254
        %v5256 = vpop.f32.mrb[0].mxu0
        %v5257 = vadd.f32 %v4173, %v5256
        %v5258 = vpop.f32.mrb[0].mxu0
        %5259 = vmatprep.mubr.f32.mxu0 0.0
        %v5260 = vand.u32 %v1026, 4294901760
        %v5261 = vsub.f32 %v1026, %v5260
        %v5262 = vand.u32 %v5261, 4294901760
        %5263 = vmatmul.mubr.f32.gmra.mrb[0].mxu0 %v5262
        %v5264 = vpop.f32.mrb[0].mxu0
        %v5265 = vadd.f32 %v4180, %v5264
        %v5266 = vpop.f32.mrb[0].mxu0
        %5267 = vmatprep.mubr.f32.mxu0 0.0
        %v5268 = vand.u32 %v1029, 4294901760
        %v5269 = vsub.f32 %v1029, %v5268
        %v5270 = vand.u32 %v5269, 4294901760
        %5271 = vmatmul.mubr.f32.gmra.mrb[0].mxu0 %v5270
        %v5272 = vpop.f32.mrb[0].mxu0
        %v5273 = vadd.f32 %v4187, %v5272
        %v5274 = vpop.f32.mrb[0].mxu0
        %5275 = vmatprep.mubr.f32.mxu0 0.0
        %v5276 = vand.u32 %v1032, 4294901760
        %v5277 = vsub.f32 %v1032, %v5276
        %v5278 = vand.u32 %v5277, 4294901760
        %5279 = vmatmul.mubr.f32.gmra.mrb[0].mxu0 %v5278
        %v5280 = vpop.f32.mrb[0].mxu0
        %v5281 = vadd.f32 %v4194, %v5280
        %v5282 = vpop.f32.mrb[0].mxu0
        %5283 = vmatprep.mubr.f32.mxu0 0.0
        %v5284 = vand.u32 %v1035, 4294901760
        %v5285 = vsub.f32 %v1035, %v5284
        %v5286 = vand.u32 %v5285, 4294901760
        %5287 = vmatmul.mubr.f32.gmra.mrb[0].mxu0 %v5286
        %v5288 = vpop.f32.mrb[0].mxu0
        %v5289 = vadd.f32 %v4201, %v5288
        %v5290 = vpop.f32.mrb[0].mxu0
        %5291 = vmatprep.mubr.f32.mxu0 0.0
        %v5292 = vand.u32 %v1038, 4294901760
        %v5293 = vsub.f32 %v1038, %v5292
        %v5294 = vand.u32 %v5293, 4294901760
        %5295 = vmatmul.mubr.f32.gmra.mrb[0].mxu0 %v5294
        %v5296 = vpop.f32.mrb[0].mxu0
        %v5297 = vadd.f32 %v4208, %v5296
        %v5298 = vpop.f32.mrb[0].mxu0
        %5299 = vmatprep.mubr.f32.mxu0 0.0
        %v5300 = vand.u32 %v1041, 4294901760
        %v5301 = vsub.f32 %v1041, %v5300
        %v5302 = vand.u32 %v5301, 4294901760
        %5303 = vmatmul.mubr.f32.gmra.mrb[0].mxu0 %v5302
        %v5304 = vpop.f32.mrb[0].mxu0
        %v5305 = vadd.f32 %v4215, %v5304
        %v5306 = vpop.f32.mrb[0].mxu0
        %5307 = vmatprep.mubr.f32.mxu0 0.0
        %v5308 = vand.u32 %v1044, 4294901760
        %v5309 = vsub.f32 %v1044, %v5308
        %v5310 = vand.u32 %v5309, 4294901760
        %5311 = vmatmul.mubr.f32.gmra.mrb[0].mxu0 %v5310
        %v5312 = vpop.f32.mrb[0].mxu0
        %v5313 = vadd.f32 %v4222, %v5312
        %v5314 = vpop.f32.mrb[0].mxu0
        %5315 = vmatprep.mubr.f32.mxu0 0.0
        %v5316 = vand.u32 %v1047, 4294901760
        %v5317 = vsub.f32 %v1047, %v5316
        %v5318 = vand.u32 %v5317, 4294901760
        %5319 = vmatmul.mubr.f32.gmra.mrb[0].mxu0 %v5318
        %v5320 = vpop.f32.mrb[0].mxu0
        %v5321 = vadd.f32 %v4229, %v5320
        %v5322 = vpop.f32.mrb[0].mxu0
        %5323 = vmatprep.mubr.f32.mxu0 0.0
        %v5324 = vand.u32 %v1050, 4294901760
        %v5325 = vsub.f32 %v1050, %v5324
        %v5326 = vand.u32 %v5325, 4294901760
        %5327 = vmatmul.mubr.f32.gmra.mrb[0].mxu0 %v5326
        %v5328 = vpop.f32.mrb[0].mxu0
        %v5329 = vadd.f32 %v4236, %v5328
        %v5330 = vpop.f32.mrb[0].mxu0
        %5331 = vmatprep.mubr.f32.mxu0 0.0
        %v5332 = vand.u32 %v1053, 4294901760
        %v5333 = vsub.f32 %v1053, %v5332
        %v5334 = vand.u32 %v5333, 4294901760
        %5335 = vmatmul.mubr.f32.gmra.mrb[0].mxu0 %v5334
        %v5336 = vpop.f32.mrb[0].mxu0
        %v5337 = vadd.f32 %v4243, %v5336
        %v5338 = vpop.f32.mrb[0].mxu0
        %5339 = vmatprep.mubr.f32.mxu0 0.0
        %v5340 = vand.u32 %v1056, 4294901760
        %v5341 = vsub.f32 %v1056, %v5340
        %v5342 = vand.u32 %v5341, 4294901760
        %5343 = vmatmul.mubr.f32.gmra.mrb[0].mxu0 %v5342
        %v5344 = vpop.f32.mrb[0].mxu0
        %v5345 = vadd.f32 %v4250, %v5344
        %v5346 = vpop.f32.mrb[0].mxu0
        %5347 = vmatprep.mubr.f32.mxu0 0.0
        %v5348 = vand.u32 %v1059, 4294901760
        %v5349 = vsub.f32 %v1059, %v5348
        %v5350 = vand.u32 %v5349, 4294901760
        %5351 = vmatmul.mubr.f32.gmra.mrb[0].mxu0 %v5350
        %v5352 = vpop.f32.mrb[0].mxu0
        %v5353 = vadd.f32 %v4257, %v5352
        %v5354 = vpop.f32.mrb[0].mxu0
        %5355 = vmatprep.mubr.f32.mxu0 0.0
        %v5356 = vand.u32 %v1062, 4294901760
        %v5357 = vsub.f32 %v1062, %v5356
        %v5358 = vand.u32 %v5357, 4294901760
        %5359 = vmatmul.mubr.f32.gmra.mrb[0].mxu0 %v5358
        %v5360 = vpop.f32.mrb[0].mxu0
        %v5361 = vadd.f32 %v4264, %v5360
        %v5362 = vpop.f32.mrb[0].mxu0
        %5363 = vdwg.mxu0
        %5364 = vmatprep.subr.mxu0 0.0
        %v5365 = vand.u32 %v415, 4294901760
        %v5366 = vsub.f32 %v415, %v5365
        %v5367 = vand.u32 %v5366, 4294901760
        %5368 = vmatpush1.msra.mxu0 %v5367
        %5369 = vmatprep.subr.mxu0 0.0
        %v5370 = vand.u32 %v416, 4294901760
        %v5371 = vsub.f32 %v416, %v5370
        %v5372 = vand.u32 %v5371, 4294901760
        %5373 = vmatpush1.msra.mxu0 %v5372
        %5374 = vmatprep.subr.mxu0 0.0
        %v5375 = vand.u32 %v417, 4294901760
        %v5376 = vsub.f32 %v417, %v5375
        %v5377 = vand.u32 %v5376, 4294901760
        %5378 = vmatpush1.msra.mxu0 %v5377
        %5379 = vmatprep.subr.mxu0 0.0
        %v5380 = vand.u32 %v418, 4294901760
        %v5381 = vsub.f32 %v418, %v5380
        %v5382 = vand.u32 %v5381, 4294901760
        %5383 = vmatpush1.msra.mxu0 %v5382
        %5384 = vmatprep.subr.mxu0 0.0
        %v5385 = vand.u32 %v419, 4294901760
        %v5386 = vsub.f32 %v419, %v5385
        %v5387 = vand.u32 %v5386, 4294901760
        %5388 = vmatpush1.msra.mxu0 %v5387
        %5389 = vmatprep.subr.mxu0 0.0
        %v5390 = vand.u32 %v420, 4294901760
        %v5391 = vsub.f32 %v420, %v5390
        %v5392 = vand.u32 %v5391, 4294901760
        %5393 = vmatpush1.msra.mxu0 %v5392
        %5394 = vmatprep.subr.mxu0 0.0
        %v5395 = vand.u32 %v421, 4294901760
        %v5396 = vsub.f32 %v421, %v5395
        %v5397 = vand.u32 %v5396, 4294901760
        %5398 = vmatpush1.msra.mxu0 %v5397
        %5399 = vmatprep.subr.mxu0 0.0
        %v5400 = vand.u32 %v422, 4294901760
        %v5401 = vsub.f32 %v422, %v5400
        %v5402 = vand.u32 %v5401, 4294901760
        %5403 = vmatpush1.msra.mxu0 %v5402
        %5404 = vmatprep.subr.mxu0 0.0
        %5405 = vmatpush1.msra.mxu0 0.0
        %5406 = vmatprep.subr.mxu0 0.0
        %5407 = vmatpush1.msra.mxu0 0.0
        %5408 = vmatprep.subr.mxu0 0.0
        %5409 = vmatpush1.msra.mxu0 0.0
        %5410 = vmatprep.subr.mxu0 0.0
        %5411 = vmatpush1.msra.mxu0 0.0
        %5412 = vmatprep.subr.mxu0 0.0
        %5413 = vmatpush1.msra.mxu0 0.0
        %5414 = vmatprep.subr.mxu0 0.0
        %5415 = vmatpush1.msra.mxu0 0.0
        %5416 = vmatprep.subr.mxu0 0.0
        %5417 = vmatpush1.msra.mxu0 0.0
        %5418 = vmatprep.subr.mxu0 0.0
        %5419 = vmatpush1.msra.mxu0 0.0
        %5420 = vmatprep.subr.mxu0 0.0
        %5421 = vmatpush1.msra.mxu0 0.0
        %5422 = vmatprep.subr.mxu0 0.0
        %5423 = vmatpush1.msra.mxu0 0.0
        %5424 = vmatprep.subr.mxu0 0.0
        %5425 = vmatpush1.msra.mxu0 0.0
        %5426 = vmatprep.subr.mxu0 0.0
        %5427 = vmatpush1.msra.mxu0 0.0
        %5428 = vmatprep.subr.mxu0 0.0
        %5429 = vmatpush1.msra.mxu0 0.0
        %5430 = vmatprep.subr.mxu0 0.0
        %5431 = vmatpush1.msra.mxu0 0.0
        %5432 = vmatprep.subr.mxu0 0.0
        %5433 = vmatpush1.msra.mxu0 0.0
        %5434 = vmatprep.subr.mxu0 0.0
        %5435 = vmatpush1.msra.mxu0 0.0
        %5436 = vmatprep.subr.mxu0 0.0
        %5437 = vmatpush1.msra.mxu0 0.0
        %5438 = vmatprep.subr.mxu0 0.0
        %5439 = vmatpush1.msra.mxu0 0.0
        %5440 = vmatprep.subr.mxu0 0.0
        %5441 = vmatpush1.msra.mxu0 0.0
        %5442 = vmatprep.subr.mxu0 0.0
        %5443 = vmatpush1.msra.mxu0 0.0
        %5444 = vmatprep.subr.mxu0 0.0
        %5445 = vmatpush1.msra.mxu0 0.0
        %5446 = vmatprep.subr.mxu0 0.0
        %5447 = vmatpush1.msra.mxu0 0.0
        %5448 = vmatprep.subr.mxu0 0.0
        %5449 = vmatpush1.msra.mxu0 0.0
        %5450 = vmatprep.subr.mxu0 0.0
        %5451 = vmatpush1.msra.mxu0 0.0
        %5452 = vmatprep.mubr.f32.mxu0 0.0
        %v5453 = vand.u32 %v681, 4294901760
        %5454 = vmatmul.mubr.f32.gmra.mrb[0].mxu0 %v5453
        %v5455 = vpop.f32.mrb[0].mxu0
        %v5456 = vadd.f32 %v4345, %v5455
        %v5457 = vpop.f32.mrb[0].mxu0
        %5458 = vmatprep.mubr.f32.mxu0 0.0
        %v5459 = vand.u32 %v684, 4294901760
        %5460 = vmatmul.mubr.f32.gmra.mrb[0].mxu0 %v5459
        %v5461 = vpop.f32.mrb[0].mxu0
        %v5462 = vadd.f32 %v4353, %v5461
        %v5463 = vpop.f32.mrb[0].mxu0
        %5464 = vmatprep.mubr.f32.mxu0 0.0
        %v5465 = vand.u32 %v687, 4294901760
        %5466 = vmatmul.mubr.f32.gmra.mrb[0].mxu0 %v5465
        %v5467 = vpop.f32.mrb[0].mxu0
        %v5468 = vadd.f32 %v4361, %v5467
        %v5469 = vpop.f32.mrb[0].mxu0
        %5470 = vmatprep.mubr.f32.mxu0 0.0
        %v5471 = vand.u32 %v690, 4294901760
        %5472 = vmatmul.mubr.f32.gmra.mrb[0].mxu0 %v5471
        %v5473 = vpop.f32.mrb[0].mxu0
        %v5474 = vadd.f32 %v4369, %v5473
        %v5475 = vpop.f32.mrb[0].mxu0
        %5476 = vmatprep.mubr.f32.mxu0 0.0
        %v5477 = vand.u32 %v693, 4294901760
        %5478 = vmatmul.mubr.f32.gmra.mrb[0].mxu0 %v5477
        %v5479 = vpop.f32.mrb[0].mxu0
        %v5480 = vadd.f32 %v4377, %v5479
        %v5481 = vpop.f32.mrb[0].mxu0
        %5482 = vmatprep.mubr.f32.mxu0 0.0
        %v5483 = vand.u32 %v696, 4294901760
        %5484 = vmatmul.mubr.f32.gmra.mrb[0].mxu0 %v5483
        %v5485 = vpop.f32.mrb[0].mxu0
        %v5486 = vadd.f32 %v4385, %v5485
        %v5487 = vpop.f32.mrb[0].mxu0
        %5488 = vmatprep.mubr.f32.mxu0 0.0
        %v5489 = vand.u32 %v699, 4294901760
        %5490 = vmatmul.mubr.f32.gmra.mrb[0].mxu0 %v5489
        %v5491 = vpop.f32.mrb[0].mxu0
        %v5492 = vadd.f32 %v4393, %v5491
        %v5493 = vpop.f32.mrb[0].mxu0
        %5494 = vmatprep.mubr.f32.mxu0 0.0
        %v5495 = vand.u32 %v702, 4294901760
        %5496 = vmatmul.mubr.f32.gmra.mrb[0].mxu0 %v5495
        %v5497 = vpop.f32.mrb[0].mxu0
        %v5498 = vadd.f32 %v4401, %v5497
        %v5499 = vpop.f32.mrb[0].mxu0
        %5500 = vmatprep.mubr.f32.mxu0 0.0
        %v5501 = vand.u32 %v705, 4294901760
        %5502 = vmatmul.mubr.f32.gmra.mrb[0].mxu0 %v5501
        %v5503 = vpop.f32.mrb[0].mxu0
        %v5504 = vadd.f32 %v4409, %v5503
        %v5505 = vpop.f32.mrb[0].mxu0
        %5506 = vmatprep.mubr.f32.mxu0 0.0
        %v5507 = vand.u32 %v708, 4294901760
        %5508 = vmatmul.mubr.f32.gmra.mrb[0].mxu0 %v5507
        %v5509 = vpop.f32.mrb[0].mxu0
        %v5510 = vadd.f32 %v4417, %v5509
        %v5511 = vpop.f32.mrb[0].mxu0
        %5512 = vmatprep.mubr.f32.mxu0 0.0
        %v5513 = vand.u32 %v711, 4294901760
        %5514 = vmatmul.mubr.f32.gmra.mrb[0].mxu0 %v5513
        %v5515 = vpop.f32.mrb[0].mxu0
        %v5516 = vadd.f32 %v4425, %v5515
        %v5517 = vpop.f32.mrb[0].mxu0
        %5518 = vmatprep.mubr.f32.mxu0 0.0
        %v5519 = vand.u32 %v714, 4294901760
        %5520 = vmatmul.mubr.f32.gmra.mrb[0].mxu0 %v5519
        %v5521 = vpop.f32.mrb[0].mxu0
        %v5522 = vadd.f32 %v4433, %v5521
        %v5523 = vpop.f32.mrb[0].mxu0
        %5524 = vmatprep.mubr.f32.mxu0 0.0
        %v5525 = vand.u32 %v717, 4294901760
        %5526 = vmatmul.mubr.f32.gmra.mrb[0].mxu0 %v5525
        %v5527 = vpop.f32.mrb[0].mxu0
        %v5528 = vadd.f32 %v4441, %v5527
        %v5529 = vpop.f32.mrb[0].mxu0
        %5530 = vmatprep.mubr.f32.mxu0 0.0
        %v5531 = vand.u32 %v720, 4294901760
        %5532 = vmatmul.mubr.f32.gmra.mrb[0].mxu0 %v5531
        %v5533 = vpop.f32.mrb[0].mxu0
        %v5534 = vadd.f32 %v4449, %v5533
        %v5535 = vpop.f32.mrb[0].mxu0
        %5536 = vmatprep.mubr.f32.mxu0 0.0
        %v5537 = vand.u32 %v723, 4294901760
        %5538 = vmatmul.mubr.f32.gmra.mrb[0].mxu0 %v5537
        %v5539 = vpop.f32.mrb[0].mxu0
        %v5540 = vadd.f32 %v4457, %v5539
        %v5541 = vpop.f32.mrb[0].mxu0
        %5542 = vmatprep.mubr.f32.mxu0 0.0
        %v5543 = vand.u32 %v726, 4294901760
        %5544 = vmatmul.mubr.f32.gmra.mrb[0].mxu0 %v5543
        %v5545 = vpop.f32.mrb[0].mxu0
        %v5546 = vadd.f32 %v4465, %v5545
        %v5547 = vpop.f32.mrb[0].mxu0
        %5548 = vmatprep.mubr.f32.mxu0 0.0
        %v5549 = vand.u32 %v729, 4294901760
        %5550 = vmatmul.mubr.f32.gmra.mrb[0].mxu0 %v5549
        %v5551 = vpop.f32.mrb[0].mxu0
        %v5552 = vadd.f32 %v4473, %v5551
        %v5553 = vpop.f32.mrb[0].mxu0
        %5554 = vmatprep.mubr.f32.mxu0 0.0
        %v5555 = vand.u32 %v732, 4294901760
        %5556 = vmatmul.mubr.f32.gmra.mrb[0].mxu0 %v5555
        %v5557 = vpop.f32.mrb[0].mxu0
        %v5558 = vadd.f32 %v4481, %v5557
        %v5559 = vpop.f32.mrb[0].mxu0
        %5560 = vmatprep.mubr.f32.mxu0 0.0
        %v5561 = vand.u32 %v735, 4294901760
        %5562 = vmatmul.mubr.f32.gmra.mrb[0].mxu0 %v5561
        %v5563 = vpop.f32.mrb[0].mxu0
        %v5564 = vadd.f32 %v4489, %v5563
        %v5565 = vpop.f32.mrb[0].mxu0
        %5566 = vmatprep.mubr.f32.mxu0 0.0
        %v5567 = vand.u32 %v738, 4294901760
        %5568 = vmatmul.mubr.f32.gmra.mrb[0].mxu0 %v5567
        %v5569 = vpop.f32.mrb[0].mxu0
        %v5570 = vadd.f32 %v4497, %v5569
        %v5571 = vpop.f32.mrb[0].mxu0
        %5572 = vmatprep.mubr.f32.mxu0 0.0
        %v5573 = vand.u32 %v741, 4294901760
        %5574 = vmatmul.mubr.f32.gmra.mrb[0].mxu0 %v5573
        %v5575 = vpop.f32.mrb[0].mxu0
        %v5576 = vadd.f32 %v4505, %v5575
        %v5577 = vpop.f32.mrb[0].mxu0
        %5578 = vmatprep.mubr.f32.mxu0 0.0
        %v5579 = vand.u32 %v744, 4294901760
        %5580 = vmatmul.mubr.f32.gmra.mrb[0].mxu0 %v5579
        %v5581 = vpop.f32.mrb[0].mxu0
        %v5582 = vadd.f32 %v4513, %v5581
        %v5583 = vpop.f32.mrb[0].mxu0
        %5584 = vmatprep.mubr.f32.mxu0 0.0
        %v5585 = vand.u32 %v747, 4294901760
        %5586 = vmatmul.mubr.f32.gmra.mrb[0].mxu0 %v5585
        %v5587 = vpop.f32.mrb[0].mxu0
        %v5588 = vadd.f32 %v4521, %v5587
        %v5589 = vpop.f32.mrb[0].mxu0
        %5590 = vmatprep.mubr.f32.mxu0 0.0
        %v5591 = vand.u32 %v750, 4294901760
        %5592 = vmatmul.mubr.f32.gmra.mrb[0].mxu0 %v5591
        %v5593 = vpop.f32.mrb[0].mxu0
        %v5594 = vadd.f32 %v4529, %v5593
        %v5595 = vpop.f32.mrb[0].mxu0
        %5596 = vmatprep.mubr.f32.mxu0 0.0
        %v5597 = vand.u32 %v753, 4294901760
        %5598 = vmatmul.mubr.f32.gmra.mrb[0].mxu0 %v5597
        %v5599 = vpop.f32.mrb[0].mxu0
        %v5600 = vadd.f32 %v4537, %v5599
        %v5601 = vpop.f32.mrb[0].mxu0
        %5602 = vmatprep.mubr.f32.mxu0 0.0
        %v5603 = vand.u32 %v756, 4294901760
        %5604 = vmatmul.mubr.f32.gmra.mrb[0].mxu0 %v5603
        %v5605 = vpop.f32.mrb[0].mxu0
        %v5606 = vadd.f32 %v4545, %v5605
        %v5607 = vpop.f32.mrb[0].mxu0
        %5608 = vmatprep.mubr.f32.mxu0 0.0
        %v5609 = vand.u32 %v759, 4294901760
        %5610 = vmatmul.mubr.f32.gmra.mrb[0].mxu0 %v5609
        %v5611 = vpop.f32.mrb[0].mxu0
        %v5612 = vadd.f32 %v4553, %v5611
        %v5613 = vpop.f32.mrb[0].mxu0
        %5614 = vmatprep.mubr.f32.mxu0 0.0
        %v5615 = vand.u32 %v762, 4294901760
        %5616 = vmatmul.mubr.f32.gmra.mrb[0].mxu0 %v5615
        %v5617 = vpop.f32.mrb[0].mxu0
        %v5618 = vadd.f32 %v4561, %v5617
        %v5619 = vpop.f32.mrb[0].mxu0
        %5620 = vmatprep.mubr.f32.mxu0 0.0
        %v5621 = vand.u32 %v765, 4294901760
        %5622 = vmatmul.mubr.f32.gmra.mrb[0].mxu0 %v5621
        %v5623 = vpop.f32.mrb[0].mxu0
        %v5624 = vadd.f32 %v4569, %v5623
        %v5625 = vpop.f32.mrb[0].mxu0
        %5626 = vmatprep.mubr.f32.mxu0 0.0
        %v5627 = vand.u32 %v768, 4294901760
        %5628 = vmatmul.mubr.f32.gmra.mrb[0].mxu0 %v5627
        %v5629 = vpop.f32.mrb[0].mxu0
        %v5630 = vadd.f32 %v4577, %v5629
        %v5631 = vpop.f32.mrb[0].mxu0
        %5632 = vmatprep.mubr.f32.mxu0 0.0
        %v5633 = vand.u32 %v771, 4294901760
        %5634 = vmatmul.mubr.f32.gmra.mrb[0].mxu0 %v5633
        %v5635 = vpop.f32.mrb[0].mxu0
        %v5636 = vadd.f32 %v4585, %v5635
        %v5637 = vpop.f32.mrb[0].mxu0
        %5638 = vmatprep.mubr.f32.mxu0 0.0
        %v5639 = vand.u32 %v774, 4294901760
        %5640 = vmatmul.mubr.f32.gmra.mrb[0].mxu0 %v5639
        %v5641 = vpop.f32.mrb[0].mxu0
        %v5642 = vadd.f32 %v4593, %v5641
        %v5643 = vpop.f32.mrb[0].mxu0
        %5644 = vmatprep.mubr.f32.mxu0 0.0
        %v5645 = vand.u32 %v777, 4294901760
        %5646 = vmatmul.mubr.f32.gmra.mrb[0].mxu0 %v5645
        %v5647 = vpop.f32.mrb[0].mxu0
        %v5648 = vadd.f32 %v4601, %v5647
        %v5649 = vpop.f32.mrb[0].mxu0
        %5650 = vmatprep.mubr.f32.mxu0 0.0
        %v5651 = vand.u32 %v780, 4294901760
        %5652 = vmatmul.mubr.f32.gmra.mrb[0].mxu0 %v5651
        %v5653 = vpop.f32.mrb[0].mxu0
        %v5654 = vadd.f32 %v4609, %v5653
        %v5655 = vpop.f32.mrb[0].mxu0
        %5656 = vmatprep.mubr.f32.mxu0 0.0
        %v5657 = vand.u32 %v783, 4294901760
        %5658 = vmatmul.mubr.f32.gmra.mrb[0].mxu0 %v5657
        %v5659 = vpop.f32.mrb[0].mxu0
        %v5660 = vadd.f32 %v4617, %v5659
        %v5661 = vpop.f32.mrb[0].mxu0
        %5662 = vmatprep.mubr.f32.mxu0 0.0
        %v5663 = vand.u32 %v786, 4294901760
        %5664 = vmatmul.mubr.f32.gmra.mrb[0].mxu0 %v5663
        %v5665 = vpop.f32.mrb[0].mxu0
        %v5666 = vadd.f32 %v4625, %v5665
        %v5667 = vpop.f32.mrb[0].mxu0
        %5668 = vmatprep.mubr.f32.mxu0 0.0
        %v5669 = vand.u32 %v789, 4294901760
        %5670 = vmatmul.mubr.f32.gmra.mrb[0].mxu0 %v5669
        %v5671 = vpop.f32.mrb[0].mxu0
        %v5672 = vadd.f32 %v4633, %v5671
        %v5673 = vpop.f32.mrb[0].mxu0
        %5674 = vmatprep.mubr.f32.mxu0 0.0
        %v5675 = vand.u32 %v792, 4294901760
        %5676 = vmatmul.mubr.f32.gmra.mrb[0].mxu0 %v5675
        %v5677 = vpop.f32.mrb[0].mxu0
        %v5678 = vadd.f32 %v4641, %v5677
        %v5679 = vpop.f32.mrb[0].mxu0
        %5680 = vmatprep.mubr.f32.mxu0 0.0
        %v5681 = vand.u32 %v795, 4294901760
        %5682 = vmatmul.mubr.f32.gmra.mrb[0].mxu0 %v5681
        %v5683 = vpop.f32.mrb[0].mxu0
        %v5684 = vadd.f32 %v4649, %v5683
        %v5685 = vpop.f32.mrb[0].mxu0
        %5686 = vmatprep.mubr.f32.mxu0 0.0
        %v5687 = vand.u32 %v798, 4294901760
        %5688 = vmatmul.mubr.f32.gmra.mrb[0].mxu0 %v5687
        %v5689 = vpop.f32.mrb[0].mxu0
        %v5690 = vadd.f32 %v4657, %v5689
        %v5691 = vpop.f32.mrb[0].mxu0
        %5692 = vmatprep.mubr.f32.mxu0 0.0
        %v5693 = vand.u32 %v801, 4294901760
        %5694 = vmatmul.mubr.f32.gmra.mrb[0].mxu0 %v5693
        %v5695 = vpop.f32.mrb[0].mxu0
        %v5696 = vadd.f32 %v4665, %v5695
        %v5697 = vpop.f32.mrb[0].mxu0
        %5698 = vmatprep.mubr.f32.mxu0 0.0
        %v5699 = vand.u32 %v804, 4294901760
        %5700 = vmatmul.mubr.f32.gmra.mrb[0].mxu0 %v5699
        %v5701 = vpop.f32.mrb[0].mxu0
        %v5702 = vadd.f32 %v4673, %v5701
        %v5703 = vpop.f32.mrb[0].mxu0
        %5704 = vmatprep.mubr.f32.mxu0 0.0
        %v5705 = vand.u32 %v807, 4294901760
        %5706 = vmatmul.mubr.f32.gmra.mrb[0].mxu0 %v5705
        %v5707 = vpop.f32.mrb[0].mxu0
        %v5708 = vadd.f32 %v4681, %v5707
        %v5709 = vpop.f32.mrb[0].mxu0
        %5710 = vmatprep.mubr.f32.mxu0 0.0
        %v5711 = vand.u32 %v810, 4294901760
        %5712 = vmatmul.mubr.f32.gmra.mrb[0].mxu0 %v5711
        %v5713 = vpop.f32.mrb[0].mxu0
        %v5714 = vadd.f32 %v4689, %v5713
        %v5715 = vpop.f32.mrb[0].mxu0
        %5716 = vmatprep.mubr.f32.mxu0 0.0
        %v5717 = vand.u32 %v813, 4294901760
        %5718 = vmatmul.mubr.f32.gmra.mrb[0].mxu0 %v5717
        %v5719 = vpop.f32.mrb[0].mxu0
        %v5720 = vadd.f32 %v4697, %v5719
        %v5721 = vpop.f32.mrb[0].mxu0
        %5722 = vmatprep.mubr.f32.mxu0 0.0
        %v5723 = vand.u32 %v816, 4294901760
        %5724 = vmatmul.mubr.f32.gmra.mrb[0].mxu0 %v5723
        %v5725 = vpop.f32.mrb[0].mxu0
        %v5726 = vadd.f32 %v4705, %v5725
        %v5727 = vpop.f32.mrb[0].mxu0
        %5728 = vmatprep.mubr.f32.mxu0 0.0
        %v5729 = vand.u32 %v819, 4294901760
        %5730 = vmatmul.mubr.f32.gmra.mrb[0].mxu0 %v5729
        %v5731 = vpop.f32.mrb[0].mxu0
        %v5732 = vadd.f32 %v4713, %v5731
        %v5733 = vpop.f32.mrb[0].mxu0
        %5734 = vmatprep.mubr.f32.mxu0 0.0
        %v5735 = vand.u32 %v822, 4294901760
        %5736 = vmatmul.mubr.f32.gmra.mrb[0].mxu0 %v5735
        %v5737 = vpop.f32.mrb[0].mxu0
        %v5738 = vadd.f32 %v4721, %v5737
        %v5739 = vpop.f32.mrb[0].mxu0
        %5740 = vmatprep.mubr.f32.mxu0 0.0
        %v5741 = vand.u32 %v825, 4294901760
        %5742 = vmatmul.mubr.f32.gmra.mrb[0].mxu0 %v5741
        %v5743 = vpop.f32.mrb[0].mxu0
        %v5744 = vadd.f32 %v4729, %v5743
        %v5745 = vpop.f32.mrb[0].mxu0
        %5746 = vmatprep.mubr.f32.mxu0 0.0
        %v5747 = vand.u32 %v828, 4294901760
        %5748 = vmatmul.mubr.f32.gmra.mrb[0].mxu0 %v5747
        %v5749 = vpop.f32.mrb[0].mxu0
        %v5750 = vadd.f32 %v4737, %v5749
        %v5751 = vpop.f32.mrb[0].mxu0
        %5752 = vmatprep.mubr.f32.mxu0 0.0
        %v5753 = vand.u32 %v831, 4294901760
        %5754 = vmatmul.mubr.f32.gmra.mrb[0].mxu0 %v5753
        %v5755 = vpop.f32.mrb[0].mxu0
        %v5756 = vadd.f32 %v4745, %v5755
        %v5757 = vpop.f32.mrb[0].mxu0
        %5758 = vmatprep.mubr.f32.mxu0 0.0
        %v5759 = vand.u32 %v834, 4294901760
        %5760 = vmatmul.mubr.f32.gmra.mrb[0].mxu0 %v5759
        %v5761 = vpop.f32.mrb[0].mxu0
        %v5762 = vadd.f32 %v4753, %v5761
        %v5763 = vpop.f32.mrb[0].mxu0
        %5764 = vmatprep.mubr.f32.mxu0 0.0
        %v5765 = vand.u32 %v837, 4294901760
        %5766 = vmatmul.mubr.f32.gmra.mrb[0].mxu0 %v5765
        %v5767 = vpop.f32.mrb[0].mxu0
        %v5768 = vadd.f32 %v4761, %v5767
        %v5769 = vpop.f32.mrb[0].mxu0
        %5770 = vmatprep.mubr.f32.mxu0 0.0
        %v5771 = vand.u32 %v840, 4294901760
        %5772 = vmatmul.mubr.f32.gmra.mrb[0].mxu0 %v5771
        %v5773 = vpop.f32.mrb[0].mxu0
        %v5774 = vadd.f32 %v4769, %v5773
        %v5775 = vpop.f32.mrb[0].mxu0
        %5776 = vmatprep.mubr.f32.mxu0 0.0
        %v5777 = vand.u32 %v843, 4294901760
        %5778 = vmatmul.mubr.f32.gmra.mrb[0].mxu0 %v5777
        %v5779 = vpop.f32.mrb[0].mxu0
        %v5780 = vadd.f32 %v4777, %v5779
        %v5781 = vpop.f32.mrb[0].mxu0
        %5782 = vmatprep.mubr.f32.mxu0 0.0
        %v5783 = vand.u32 %v846, 4294901760
        %5784 = vmatmul.mubr.f32.gmra.mrb[0].mxu0 %v5783
        %v5785 = vpop.f32.mrb[0].mxu0
        %v5786 = vadd.f32 %v4785, %v5785
        %v5787 = vpop.f32.mrb[0].mxu0
        %5788 = vmatprep.mubr.f32.mxu0 0.0
        %v5789 = vand.u32 %v849, 4294901760
        %5790 = vmatmul.mubr.f32.gmra.mrb[0].mxu0 %v5789
        %v5791 = vpop.f32.mrb[0].mxu0
        %v5792 = vadd.f32 %v4793, %v5791
        %v5793 = vpop.f32.mrb[0].mxu0
        %5794 = vmatprep.mubr.f32.mxu0 0.0
        %v5795 = vand.u32 %v852, 4294901760
        %5796 = vmatmul.mubr.f32.gmra.mrb[0].mxu0 %v5795
        %v5797 = vpop.f32.mrb[0].mxu0
        %v5798 = vadd.f32 %v4801, %v5797
        %v5799 = vpop.f32.mrb[0].mxu0
        %5800 = vmatprep.mubr.f32.mxu0 0.0
        %v5801 = vand.u32 %v855, 4294901760
        %5802 = vmatmul.mubr.f32.gmra.mrb[0].mxu0 %v5801
        %v5803 = vpop.f32.mrb[0].mxu0
        %v5804 = vadd.f32 %v4809, %v5803
        %v5805 = vpop.f32.mrb[0].mxu0
        %5806 = vmatprep.mubr.f32.mxu0 0.0
        %v5807 = vand.u32 %v858, 4294901760
        %5808 = vmatmul.mubr.f32.gmra.mrb[0].mxu0 %v5807
        %v5809 = vpop.f32.mrb[0].mxu0
        %v5810 = vadd.f32 %v4817, %v5809
        %v5811 = vpop.f32.mrb[0].mxu0
        %5812 = vmatprep.mubr.f32.mxu0 0.0
        %v5813 = vand.u32 %v861, 4294901760
        %5814 = vmatmul.mubr.f32.gmra.mrb[0].mxu0 %v5813
        %v5815 = vpop.f32.mrb[0].mxu0
        %v5816 = vadd.f32 %v4825, %v5815
        %v5817 = vpop.f32.mrb[0].mxu0
        %5818 = vmatprep.mubr.f32.mxu0 0.0
        %v5819 = vand.u32 %v864, 4294901760
        %5820 = vmatmul.mubr.f32.gmra.mrb[0].mxu0 %v5819
        %v5821 = vpop.f32.mrb[0].mxu0
        %v5822 = vadd.f32 %v4833, %v5821
        %v5823 = vpop.f32.mrb[0].mxu0
        %5824 = vmatprep.mubr.f32.mxu0 0.0
        %v5825 = vand.u32 %v867, 4294901760
        %5826 = vmatmul.mubr.f32.gmra.mrb[0].mxu0 %v5825
        %v5827 = vpop.f32.mrb[0].mxu0
        %v5828 = vadd.f32 %v4841, %v5827
        %v5829 = vpop.f32.mrb[0].mxu0
        %5830 = vmatprep.mubr.f32.mxu0 0.0
        %v5831 = vand.u32 %v870, 4294901760
        %5832 = vmatmul.mubr.f32.gmra.mrb[0].mxu0 %v5831
        %v5833 = vpop.f32.mrb[0].mxu0
        %v5834 = vadd.f32 %v4849, %v5833
        %v5835 = vpop.f32.mrb[0].mxu0
        %5836 = vmatprep.mubr.f32.mxu0 0.0
        %v5837 = vand.u32 %v873, 4294901760
        %5838 = vmatmul.mubr.f32.gmra.mrb[0].mxu0 %v5837
        %v5839 = vpop.f32.mrb[0].mxu0
        %v5840 = vadd.f32 %v4857, %v5839
        %v5841 = vpop.f32.mrb[0].mxu0
        %5842 = vmatprep.mubr.f32.mxu0 0.0
        %v5843 = vand.u32 %v876, 4294901760
        %5844 = vmatmul.mubr.f32.gmra.mrb[0].mxu0 %v5843
        %v5845 = vpop.f32.mrb[0].mxu0
        %v5846 = vadd.f32 %v4865, %v5845
        %v5847 = vpop.f32.mrb[0].mxu0
        %5848 = vmatprep.mubr.f32.mxu0 0.0
        %v5849 = vand.u32 %v879, 4294901760
        %5850 = vmatmul.mubr.f32.gmra.mrb[0].mxu0 %v5849
        %v5851 = vpop.f32.mrb[0].mxu0
        %v5852 = vadd.f32 %v4873, %v5851
        %v5853 = vpop.f32.mrb[0].mxu0
        %5854 = vmatprep.mubr.f32.mxu0 0.0
        %v5855 = vand.u32 %v882, 4294901760
        %5856 = vmatmul.mubr.f32.gmra.mrb[0].mxu0 %v5855
        %v5857 = vpop.f32.mrb[0].mxu0
        %v5858 = vadd.f32 %v4881, %v5857
        %v5859 = vpop.f32.mrb[0].mxu0
        %5860 = vmatprep.mubr.f32.mxu0 0.0
        %v5861 = vand.u32 %v885, 4294901760
        %5862 = vmatmul.mubr.f32.gmra.mrb[0].mxu0 %v5861
        %v5863 = vpop.f32.mrb[0].mxu0
        %v5864 = vadd.f32 %v4889, %v5863
        %v5865 = vpop.f32.mrb[0].mxu0
        %5866 = vmatprep.mubr.f32.mxu0 0.0
        %v5867 = vand.u32 %v888, 4294901760
        %5868 = vmatmul.mubr.f32.gmra.mrb[0].mxu0 %v5867
        %v5869 = vpop.f32.mrb[0].mxu0
        %v5870 = vadd.f32 %v4897, %v5869
        %v5871 = vpop.f32.mrb[0].mxu0
        %5872 = vmatprep.mubr.f32.mxu0 0.0
        %v5873 = vand.u32 %v891, 4294901760
        %5874 = vmatmul.mubr.f32.gmra.mrb[0].mxu0 %v5873
        %v5875 = vpop.f32.mrb[0].mxu0
        %v5876 = vadd.f32 %v4905, %v5875
        %v5877 = vpop.f32.mrb[0].mxu0
        %5878 = vmatprep.mubr.f32.mxu0 0.0
        %v5879 = vand.u32 %v894, 4294901760
        %5880 = vmatmul.mubr.f32.gmra.mrb[0].mxu0 %v5879
        %v5881 = vpop.f32.mrb[0].mxu0
        %v5882 = vadd.f32 %v4913, %v5881
        %v5883 = vpop.f32.mrb[0].mxu0
        %5884 = vmatprep.mubr.f32.mxu0 0.0
        %v5885 = vand.u32 %v897, 4294901760
        %5886 = vmatmul.mubr.f32.gmra.mrb[0].mxu0 %v5885
        %v5887 = vpop.f32.mrb[0].mxu0
        %v5888 = vadd.f32 %v4921, %v5887
        %v5889 = vpop.f32.mrb[0].mxu0
        %5890 = vmatprep.mubr.f32.mxu0 0.0
        %v5891 = vand.u32 %v900, 4294901760
        %5892 = vmatmul.mubr.f32.gmra.mrb[0].mxu0 %v5891
        %v5893 = vpop.f32.mrb[0].mxu0
        %v5894 = vadd.f32 %v4929, %v5893
        %v5895 = vpop.f32.mrb[0].mxu0
        %5896 = vmatprep.mubr.f32.mxu0 0.0
        %v5897 = vand.u32 %v903, 4294901760
        %5898 = vmatmul.mubr.f32.gmra.mrb[0].mxu0 %v5897
        %v5899 = vpop.f32.mrb[0].mxu0
        %v5900 = vadd.f32 %v4937, %v5899
        %v5901 = vpop.f32.mrb[0].mxu0
        %5902 = vmatprep.mubr.f32.mxu0 0.0
        %v5903 = vand.u32 %v906, 4294901760
        %5904 = vmatmul.mubr.f32.gmra.mrb[0].mxu0 %v5903
        %v5905 = vpop.f32.mrb[0].mxu0
        %v5906 = vadd.f32 %v4945, %v5905
        %v5907 = vpop.f32.mrb[0].mxu0
        %5908 = vmatprep.mubr.f32.mxu0 0.0
        %v5909 = vand.u32 %v909, 4294901760
        %5910 = vmatmul.mubr.f32.gmra.mrb[0].mxu0 %v5909
        %v5911 = vpop.f32.mrb[0].mxu0
        %v5912 = vadd.f32 %v4953, %v5911
        %v5913 = vpop.f32.mrb[0].mxu0
        %5914 = vmatprep.mubr.f32.mxu0 0.0
        %v5915 = vand.u32 %v912, 4294901760
        %5916 = vmatmul.mubr.f32.gmra.mrb[0].mxu0 %v5915
        %v5917 = vpop.f32.mrb[0].mxu0
        %v5918 = vadd.f32 %v4961, %v5917
        %v5919 = vpop.f32.mrb[0].mxu0
        %5920 = vmatprep.mubr.f32.mxu0 0.0
        %v5921 = vand.u32 %v915, 4294901760
        %5922 = vmatmul.mubr.f32.gmra.mrb[0].mxu0 %v5921
        %v5923 = vpop.f32.mrb[0].mxu0
        %v5924 = vadd.f32 %v4969, %v5923
        %v5925 = vpop.f32.mrb[0].mxu0
        %5926 = vmatprep.mubr.f32.mxu0 0.0
        %v5927 = vand.u32 %v918, 4294901760
        %5928 = vmatmul.mubr.f32.gmra.mrb[0].mxu0 %v5927
        %v5929 = vpop.f32.mrb[0].mxu0
        %v5930 = vadd.f32 %v4977, %v5929
        %v5931 = vpop.f32.mrb[0].mxu0
        %5932 = vmatprep.mubr.f32.mxu0 0.0
        %v5933 = vand.u32 %v921, 4294901760
        %5934 = vmatmul.mubr.f32.gmra.mrb[0].mxu0 %v5933
        %v5935 = vpop.f32.mrb[0].mxu0
        %v5936 = vadd.f32 %v4985, %v5935
        %v5937 = vpop.f32.mrb[0].mxu0
        %5938 = vmatprep.mubr.f32.mxu0 0.0
        %v5939 = vand.u32 %v924, 4294901760
        %5940 = vmatmul.mubr.f32.gmra.mrb[0].mxu0 %v5939
        %v5941 = vpop.f32.mrb[0].mxu0
        %v5942 = vadd.f32 %v4993, %v5941
        %v5943 = vpop.f32.mrb[0].mxu0
        %5944 = vmatprep.mubr.f32.mxu0 0.0
        %v5945 = vand.u32 %v927, 4294901760
        %5946 = vmatmul.mubr.f32.gmra.mrb[0].mxu0 %v5945
        %v5947 = vpop.f32.mrb[0].mxu0
        %v5948 = vadd.f32 %v5001, %v5947
        %v5949 = vpop.f32.mrb[0].mxu0
        %5950 = vmatprep.mubr.f32.mxu0 0.0
        %v5951 = vand.u32 %v930, 4294901760
        %5952 = vmatmul.mubr.f32.gmra.mrb[0].mxu0 %v5951
        %v5953 = vpop.f32.mrb[0].mxu0
        %v5954 = vadd.f32 %v5009, %v5953
        %v5955 = vpop.f32.mrb[0].mxu0
        %5956 = vmatprep.mubr.f32.mxu0 0.0
        %v5957 = vand.u32 %v933, 4294901760
        %5958 = vmatmul.mubr.f32.gmra.mrb[0].mxu0 %v5957
        %v5959 = vpop.f32.mrb[0].mxu0
        %v5960 = vadd.f32 %v5017, %v5959
        %v5961 = vpop.f32.mrb[0].mxu0
        %5962 = vmatprep.mubr.f32.mxu0 0.0
        %v5963 = vand.u32 %v936, 4294901760
        %5964 = vmatmul.mubr.f32.gmra.mrb[0].mxu0 %v5963
        %v5965 = vpop.f32.mrb[0].mxu0
        %v5966 = vadd.f32 %v5025, %v5965
        %v5967 = vpop.f32.mrb[0].mxu0
        %5968 = vmatprep.mubr.f32.mxu0 0.0
        %v5969 = vand.u32 %v939, 4294901760
        %5970 = vmatmul.mubr.f32.gmra.mrb[0].mxu0 %v5969
        %v5971 = vpop.f32.mrb[0].mxu0
        %v5972 = vadd.f32 %v5033, %v5971
        %v5973 = vpop.f32.mrb[0].mxu0
        %5974 = vmatprep.mubr.f32.mxu0 0.0
        %v5975 = vand.u32 %v942, 4294901760
        %5976 = vmatmul.mubr.f32.gmra.mrb[0].mxu0 %v5975
        %v5977 = vpop.f32.mrb[0].mxu0
        %v5978 = vadd.f32 %v5041, %v5977
        %v5979 = vpop.f32.mrb[0].mxu0
        %5980 = vmatprep.mubr.f32.mxu0 0.0
        %v5981 = vand.u32 %v945, 4294901760
        %5982 = vmatmul.mubr.f32.gmra.mrb[0].mxu0 %v5981
        %v5983 = vpop.f32.mrb[0].mxu0
        %v5984 = vadd.f32 %v5049, %v5983
        %v5985 = vpop.f32.mrb[0].mxu0
        %5986 = vmatprep.mubr.f32.mxu0 0.0
        %v5987 = vand.u32 %v948, 4294901760
        %5988 = vmatmul.mubr.f32.gmra.mrb[0].mxu0 %v5987
        %v5989 = vpop.f32.mrb[0].mxu0
        %v5990 = vadd.f32 %v5057, %v5989
        %v5991 = vpop.f32.mrb[0].mxu0
        %5992 = vmatprep.mubr.f32.mxu0 0.0
        %v5993 = vand.u32 %v951, 4294901760
        %5994 = vmatmul.mubr.f32.gmra.mrb[0].mxu0 %v5993
        %v5995 = vpop.f32.mrb[0].mxu0
        %v5996 = vadd.f32 %v5065, %v5995
        %v5997 = vpop.f32.mrb[0].mxu0
        %5998 = vmatprep.mubr.f32.mxu0 0.0
        %v5999 = vand.u32 %v954, 4294901760
        %6000 = vmatmul.mubr.f32.gmra.mrb[0].mxu0 %v5999
        %v6001 = vpop.f32.mrb[0].mxu0
        %v6002 = vadd.f32 %v5073, %v6001
        %v6003 = vpop.f32.mrb[0].mxu0
        %6004 = vmatprep.mubr.f32.mxu0 0.0
        %v6005 = vand.u32 %v957, 4294901760
        %6006 = vmatmul.mubr.f32.gmra.mrb[0].mxu0 %v6005
        %v6007 = vpop.f32.mrb[0].mxu0
        %v6008 = vadd.f32 %v5081, %v6007
        %v6009 = vpop.f32.mrb[0].mxu0
        %6010 = vmatprep.mubr.f32.mxu0 0.0
        %v6011 = vand.u32 %v960, 4294901760
        %6012 = vmatmul.mubr.f32.gmra.mrb[0].mxu0 %v6011
        %v6013 = vpop.f32.mrb[0].mxu0
        %v6014 = vadd.f32 %v5089, %v6013
        %v6015 = vpop.f32.mrb[0].mxu0
        %6016 = vmatprep.mubr.f32.mxu0 0.0
        %v6017 = vand.u32 %v963, 4294901760
        %6018 = vmatmul.mubr.f32.gmra.mrb[0].mxu0 %v6017
        %v6019 = vpop.f32.mrb[0].mxu0
        %v6020 = vadd.f32 %v5097, %v6019
        %v6021 = vpop.f32.mrb[0].mxu0
        %6022 = vmatprep.mubr.f32.mxu0 0.0
        %v6023 = vand.u32 %v966, 4294901760
        %6024 = vmatmul.mubr.f32.gmra.mrb[0].mxu0 %v6023
        %v6025 = vpop.f32.mrb[0].mxu0
        %v6026 = vadd.f32 %v5105, %v6025
        %v6027 = vpop.f32.mrb[0].mxu0
        %6028 = vmatprep.mubr.f32.mxu0 0.0
        %v6029 = vand.u32 %v969, 4294901760
        %6030 = vmatmul.mubr.f32.gmra.mrb[0].mxu0 %v6029
        %v6031 = vpop.f32.mrb[0].mxu0
        %v6032 = vadd.f32 %v5113, %v6031
        %v6033 = vpop.f32.mrb[0].mxu0
        %6034 = vmatprep.mubr.f32.mxu0 0.0
        %v6035 = vand.u32 %v972, 4294901760
        %6036 = vmatmul.mubr.f32.gmra.mrb[0].mxu0 %v6035
        %v6037 = vpop.f32.mrb[0].mxu0
        %v6038 = vadd.f32 %v5121, %v6037
        %v6039 = vpop.f32.mrb[0].mxu0
        %6040 = vmatprep.mubr.f32.mxu0 0.0
        %v6041 = vand.u32 %v975, 4294901760
        %6042 = vmatmul.mubr.f32.gmra.mrb[0].mxu0 %v6041
        %v6043 = vpop.f32.mrb[0].mxu0
        %v6044 = vadd.f32 %v5129, %v6043
        %v6045 = vpop.f32.mrb[0].mxu0
        %6046 = vmatprep.mubr.f32.mxu0 0.0
        %v6047 = vand.u32 %v978, 4294901760
        %6048 = vmatmul.mubr.f32.gmra.mrb[0].mxu0 %v6047
        %v6049 = vpop.f32.mrb[0].mxu0
        %v6050 = vadd.f32 %v5137, %v6049
        %v6051 = vpop.f32.mrb[0].mxu0
        %6052 = vmatprep.mubr.f32.mxu0 0.0
        %v6053 = vand.u32 %v981, 4294901760
        %6054 = vmatmul.mubr.f32.gmra.mrb[0].mxu0 %v6053
        %v6055 = vpop.f32.mrb[0].mxu0
        %v6056 = vadd.f32 %v5145, %v6055
        %v6057 = vpop.f32.mrb[0].mxu0
        %6058 = vmatprep.mubr.f32.mxu0 0.0
        %v6059 = vand.u32 %v984, 4294901760
        %6060 = vmatmul.mubr.f32.gmra.mrb[0].mxu0 %v6059
        %v6061 = vpop.f32.mrb[0].mxu0
        %v6062 = vadd.f32 %v5153, %v6061
        %v6063 = vpop.f32.mrb[0].mxu0
        %6064 = vmatprep.mubr.f32.mxu0 0.0
        %v6065 = vand.u32 %v987, 4294901760
        %6066 = vmatmul.mubr.f32.gmra.mrb[0].mxu0 %v6065
        %v6067 = vpop.f32.mrb[0].mxu0
        %v6068 = vadd.f32 %v5161, %v6067
        %v6069 = vpop.f32.mrb[0].mxu0
        %6070 = vmatprep.mubr.f32.mxu0 0.0
        %v6071 = vand.u32 %v990, 4294901760
        %6072 = vmatmul.mubr.f32.gmra.mrb[0].mxu0 %v6071
        %v6073 = vpop.f32.mrb[0].mxu0
        %v6074 = vadd.f32 %v5169, %v6073
        %v6075 = vpop.f32.mrb[0].mxu0
        %6076 = vmatprep.mubr.f32.mxu0 0.0
        %v6077 = vand.u32 %v993, 4294901760
        %6078 = vmatmul.mubr.f32.gmra.mrb[0].mxu0 %v6077
        %v6079 = vpop.f32.mrb[0].mxu0
        %v6080 = vadd.f32 %v5177, %v6079
        %v6081 = vpop.f32.mrb[0].mxu0
        %6082 = vmatprep.mubr.f32.mxu0 0.0
        %v6083 = vand.u32 %v996, 4294901760
        %6084 = vmatmul.mubr.f32.gmra.mrb[0].mxu0 %v6083
        %v6085 = vpop.f32.mrb[0].mxu0
        %v6086 = vadd.f32 %v5185, %v6085
        %v6087 = vpop.f32.mrb[0].mxu0
        %6088 = vmatprep.mubr.f32.mxu0 0.0
        %v6089 = vand.u32 %v999, 4294901760
        %6090 = vmatmul.mubr.f32.gmra.mrb[0].mxu0 %v6089
        %v6091 = vpop.f32.mrb[0].mxu0
        %v6092 = vadd.f32 %v5193, %v6091
        %v6093 = vpop.f32.mrb[0].mxu0
        %6094 = vmatprep.mubr.f32.mxu0 0.0
        %v6095 = vand.u32 %v1002, 4294901760
        %6096 = vmatmul.mubr.f32.gmra.mrb[0].mxu0 %v6095
        %v6097 = vpop.f32.mrb[0].mxu0
        %v6098 = vadd.f32 %v5201, %v6097
        %v6099 = vpop.f32.mrb[0].mxu0
        %6100 = vmatprep.mubr.f32.mxu0 0.0
        %v6101 = vand.u32 %v1005, 4294901760
        %6102 = vmatmul.mubr.f32.gmra.mrb[0].mxu0 %v6101
        %v6103 = vpop.f32.mrb[0].mxu0
        %v6104 = vadd.f32 %v5209, %v6103
        %v6105 = vpop.f32.mrb[0].mxu0
        %6106 = vmatprep.mubr.f32.mxu0 0.0
        %v6107 = vand.u32 %v1008, 4294901760
        %6108 = vmatmul.mubr.f32.gmra.mrb[0].mxu0 %v6107
        %v6109 = vpop.f32.mrb[0].mxu0
        %v6110 = vadd.f32 %v5217, %v6109
        %v6111 = vpop.f32.mrb[0].mxu0
        %6112 = vmatprep.mubr.f32.mxu0 0.0
        %v6113 = vand.u32 %v1011, 4294901760
        %6114 = vmatmul.mubr.f32.gmra.mrb[0].mxu0 %v6113
        %v6115 = vpop.f32.mrb[0].mxu0
        %v6116 = vadd.f32 %v5225, %v6115
        %v6117 = vpop.f32.mrb[0].mxu0
        %6118 = vmatprep.mubr.f32.mxu0 0.0
        %v6119 = vand.u32 %v1014, 4294901760
        %6120 = vmatmul.mubr.f32.gmra.mrb[0].mxu0 %v6119
        %v6121 = vpop.f32.mrb[0].mxu0
        %v6122 = vadd.f32 %v5233, %v6121
        %v6123 = vpop.f32.mrb[0].mxu0
        %6124 = vmatprep.mubr.f32.mxu0 0.0
        %v6125 = vand.u32 %v1017, 4294901760
        %6126 = vmatmul.mubr.f32.gmra.mrb[0].mxu0 %v6125
        %v6127 = vpop.f32.mrb[0].mxu0
        %v6128 = vadd.f32 %v5241, %v6127
        %v6129 = vpop.f32.mrb[0].mxu0
        %6130 = vmatprep.mubr.f32.mxu0 0.0
        %v6131 = vand.u32 %v1020, 4294901760
        %6132 = vmatmul.mubr.f32.gmra.mrb[0].mxu0 %v6131
        %v6133 = vpop.f32.mrb[0].mxu0
        %v6134 = vadd.f32 %v5249, %v6133
        %v6135 = vpop.f32.mrb[0].mxu0
        %6136 = vmatprep.mubr.f32.mxu0 0.0
        %v6137 = vand.u32 %v1023, 4294901760
        %6138 = vmatmul.mubr.f32.gmra.mrb[0].mxu0 %v6137
        %v6139 = vpop.f32.mrb[0].mxu0
        %v6140 = vadd.f32 %v5257, %v6139
        %v6141 = vpop.f32.mrb[0].mxu0
        %6142 = vmatprep.mubr.f32.mxu0 0.0
        %v6143 = vand.u32 %v1026, 4294901760
        %6144 = vmatmul.mubr.f32.gmra.mrb[0].mxu0 %v6143
        %v6145 = vpop.f32.mrb[0].mxu0
        %v6146 = vadd.f32 %v5265, %v6145
        %v6147 = vpop.f32.mrb[0].mxu0
        %6148 = vmatprep.mubr.f32.mxu0 0.0
        %v6149 = vand.u32 %v1029, 4294901760
        %6150 = vmatmul.mubr.f32.gmra.mrb[0].mxu0 %v6149
        %v6151 = vpop.f32.mrb[0].mxu0
        %v6152 = vadd.f32 %v5273, %v6151
        %v6153 = vpop.f32.mrb[0].mxu0
        %6154 = vmatprep.mubr.f32.mxu0 0.0
        %v6155 = vand.u32 %v1032, 4294901760
        %6156 = vmatmul.mubr.f32.gmra.mrb[0].mxu0 %v6155
        %v6157 = vpop.f32.mrb[0].mxu0
        %v6158 = vadd.f32 %v5281, %v6157
        %v6159 = vpop.f32.mrb[0].mxu0
        %6160 = vmatprep.mubr.f32.mxu0 0.0
        %v6161 = vand.u32 %v1035, 4294901760
        %6162 = vmatmul.mubr.f32.gmra.mrb[0].mxu0 %v6161
        %v6163 = vpop.f32.mrb[0].mxu0
        %v6164 = vadd.f32 %v5289, %v6163
        %v6165 = vpop.f32.mrb[0].mxu0
        %6166 = vmatprep.mubr.f32.mxu0 0.0
        %v6167 = vand.u32 %v1038, 4294901760
        %6168 = vmatmul.mubr.f32.gmra.mrb[0].mxu0 %v6167
        %v6169 = vpop.f32.mrb[0].mxu0
        %v6170 = vadd.f32 %v5297, %v6169
        %v6171 = vpop.f32.mrb[0].mxu0
        %6172 = vmatprep.mubr.f32.mxu0 0.0
        %v6173 = vand.u32 %v1041, 4294901760
        %6174 = vmatmul.mubr.f32.gmra.mrb[0].mxu0 %v6173
        %v6175 = vpop.f32.mrb[0].mxu0
        %v6176 = vadd.f32 %v5305, %v6175
        %v6177 = vpop.f32.mrb[0].mxu0
        %6178 = vmatprep.mubr.f32.mxu0 0.0
        %v6179 = vand.u32 %v1044, 4294901760
        %6180 = vmatmul.mubr.f32.gmra.mrb[0].mxu0 %v6179
        %v6181 = vpop.f32.mrb[0].mxu0
        %v6182 = vadd.f32 %v5313, %v6181
        %v6183 = vpop.f32.mrb[0].mxu0
        %6184 = vmatprep.mubr.f32.mxu0 0.0
        %v6185 = vand.u32 %v1047, 4294901760
        %6186 = vmatmul.mubr.f32.gmra.mrb[0].mxu0 %v6185
        %v6187 = vpop.f32.mrb[0].mxu0
        %v6188 = vadd.f32 %v5321, %v6187
        %v6189 = vpop.f32.mrb[0].mxu0
        %6190 = vmatprep.mubr.f32.mxu0 0.0
        %v6191 = vand.u32 %v1050, 4294901760
        %6192 = vmatmul.mubr.f32.gmra.mrb[0].mxu0 %v6191
        %v6193 = vpop.f32.mrb[0].mxu0
        %v6194 = vadd.f32 %v5329, %v6193
        %v6195 = vpop.f32.mrb[0].mxu0
        %6196 = vmatprep.mubr.f32.mxu0 0.0
        %v6197 = vand.u32 %v1053, 4294901760
        %6198 = vmatmul.mubr.f32.gmra.mrb[0].mxu0 %v6197
        %v6199 = vpop.f32.mrb[0].mxu0
        %v6200 = vadd.f32 %v5337, %v6199
        %v6201 = vpop.f32.mrb[0].mxu0
        %6202 = vmatprep.mubr.f32.mxu0 0.0
        %v6203 = vand.u32 %v1056, 4294901760
        %6204 = vmatmul.mubr.f32.gmra.mrb[0].mxu0 %v6203
        %v6205 = vpop.f32.mrb[0].mxu0
        %v6206 = vadd.f32 %v5345, %v6205
        %v6207 = vpop.f32.mrb[0].mxu0
        %6208 = vmatprep.mubr.f32.mxu0 0.0
        %v6209 = vand.u32 %v1059, 4294901760
        %6210 = vmatmul.mubr.f32.gmra.mrb[0].mxu0 %v6209
        %v6211 = vpop.f32.mrb[0].mxu0
        %v6212 = vadd.f32 %v5353, %v6211
        %v6213 = vpop.f32.mrb[0].mxu0
        %6214 = vmatprep.mubr.f32.mxu0 0.0
        %v6215 = vand.u32 %v1062, 4294901760
        %6216 = vmatmul.mubr.f32.gmra.mrb[0].mxu0 %v6215
        %v6217 = vpop.f32.mrb[0].mxu0
        %v6218 = vadd.f32 %v5361, %v6217
        %v6219 = vpop.f32.mrb[0].mxu0
        %6220 = vdwg.mxu0
        %6221 = vmatprep.subr.mxu0 0.0
        %v6222 = vand.u32 %v415, 4294901760
        %6223 = vmatpush1.msra.mxu0 %v6222
        %6224 = vmatprep.subr.mxu0 0.0
        %v6225 = vand.u32 %v416, 4294901760
        %6226 = vmatpush1.msra.mxu0 %v6225
        %6227 = vmatprep.subr.mxu0 0.0
        %v6228 = vand.u32 %v417, 4294901760
        %6229 = vmatpush1.msra.mxu0 %v6228
        %6230 = vmatprep.subr.mxu0 0.0
        %v6231 = vand.u32 %v418, 4294901760
        %6232 = vmatpush1.msra.mxu0 %v6231
        %6233 = vmatprep.subr.mxu0 0.0
        %v6234 = vand.u32 %v419, 4294901760
        %6235 = vmatpush1.msra.mxu0 %v6234
        %6236 = vmatprep.subr.mxu0 0.0
        %v6237 = vand.u32 %v420, 4294901760
        %6238 = vmatpush1.msra.mxu0 %v6237
        %6239 = vmatprep.subr.mxu0 0.0
        %v6240 = vand.u32 %v421, 4294901760
        %6241 = vmatpush1.msra.mxu0 %v6240
        %6242 = vmatprep.subr.mxu0 0.0
        %v6243 = vand.u32 %v422, 4294901760
        %6244 = vmatpush1.msra.mxu0 %v6243
        %6245 = vmatprep.subr.mxu0 0.0
        %6246 = vmatpush1.msra.mxu0 0.0
        %6247 = vmatprep.subr.mxu0 0.0
        %6248 = vmatpush1.msra.mxu0 0.0
        %6249 = vmatprep.subr.mxu0 0.0
        %6250 = vmatpush1.msra.mxu0 0.0
        %6251 = vmatprep.subr.mxu0 0.0
        %6252 = vmatpush1.msra.mxu0 0.0
        %6253 = vmatprep.subr.mxu0 0.0
        %6254 = vmatpush1.msra.mxu0 0.0
        %6255 = vmatprep.subr.mxu0 0.0
        %6256 = vmatpush1.msra.mxu0 0.0
        %6257 = vmatprep.subr.mxu0 0.0
        %6258 = vmatpush1.msra.mxu0 0.0
        %6259 = vmatprep.subr.mxu0 0.0
        %6260 = vmatpush1.msra.mxu0 0.0
        %6261 = vmatprep.subr.mxu0 0.0
        %6262 = vmatpush1.msra.mxu0 0.0
        %6263 = vmatprep.subr.mxu0 0.0
        %6264 = vmatpush1.msra.mxu0 0.0
        %6265 = vmatprep.subr.mxu0 0.0
        %6266 = vmatpush1.msra.mxu0 0.0
        %6267 = vmatprep.subr.mxu0 0.0
        %6268 = vmatpush1.msra.mxu0 0.0
        %6269 = vmatprep.subr.mxu0 0.0
        %6270 = vmatpush1.msra.mxu0 0.0
        %6271 = vmatprep.subr.mxu0 0.0
        %6272 = vmatpush1.msra.mxu0 0.0
        %6273 = vmatprep.subr.mxu0 0.0
        %6274 = vmatpush1.msra.mxu0 0.0
        %6275 = vmatprep.subr.mxu0 0.0
        %6276 = vmatpush1.msra.mxu0 0.0
        %6277 = vmatprep.subr.mxu0 0.0
        %6278 = vmatpush1.msra.mxu0 0.0
        %6279 = vmatprep.subr.mxu0 0.0
        %6280 = vmatpush1.msra.mxu0 0.0
        %6281 = vmatprep.subr.mxu0 0.0
        %6282 = vmatpush1.msra.mxu0 0.0
        %6283 = vmatprep.subr.mxu0 0.0
        %6284 = vmatpush1.msra.mxu0 0.0
        %6285 = vmatprep.subr.mxu0 0.0
        %6286 = vmatpush1.msra.mxu0 0.0
        %6287 = vmatprep.subr.mxu0 0.0
        %6288 = vmatpush1.msra.mxu0 0.0
        %6289 = vmatprep.subr.mxu0 0.0
        %6290 = vmatpush1.msra.mxu0 0.0
        %6291 = vmatprep.subr.mxu0 0.0
        %6292 = vmatpush1.msra.mxu0 0.0
        %6293 = vmatprep.mubr.f32.mxu0 0.0
        %v6294 = vand.u32 %v681, 4294901760
        %6295 = vmatmul.mubr.f32.gmra.mrb[0].mxu0 %v6294
        %v6296 = vpop.f32.mrb[0].mxu0
        %v6297 = vadd.f32 %v5456, %v6296
        %v6298 = vpop.f32.mrb[0].mxu0
        %6299 = vmatprep.mubr.f32.mxu0 0.0
        %v6300 = vand.u32 %v684, 4294901760
        %6301 = vmatmul.mubr.f32.gmra.mrb[0].mxu0 %v6300
        %v6302 = vpop.f32.mrb[0].mxu0
        %v6303 = vadd.f32 %v5462, %v6302
        %v6304 = vpop.f32.mrb[0].mxu0
        %6305 = vmatprep.mubr.f32.mxu0 0.0
        %v6306 = vand.u32 %v687, 4294901760
        %6307 = vmatmul.mubr.f32.gmra.mrb[0].mxu0 %v6306
        %v6308 = vpop.f32.mrb[0].mxu0
        %v6309 = vadd.f32 %v5468, %v6308
        %v6310 = vpop.f32.mrb[0].mxu0
        %6311 = vmatprep.mubr.f32.mxu0 0.0
        %v6312 = vand.u32 %v690, 4294901760
        %6313 = vmatmul.mubr.f32.gmra.mrb[0].mxu0 %v6312
        %v6314 = vpop.f32.mrb[0].mxu0
        %v6315 = vadd.f32 %v5474, %v6314
        %v6316 = vpop.f32.mrb[0].mxu0
        %6317 = vmatprep.mubr.f32.mxu0 0.0
        %v6318 = vand.u32 %v693, 4294901760
        %6319 = vmatmul.mubr.f32.gmra.mrb[0].mxu0 %v6318
        %v6320 = vpop.f32.mrb[0].mxu0
        %v6321 = vadd.f32 %v5480, %v6320
        %v6322 = vpop.f32.mrb[0].mxu0
        %6323 = vmatprep.mubr.f32.mxu0 0.0
        %v6324 = vand.u32 %v696, 4294901760
        %6325 = vmatmul.mubr.f32.gmra.mrb[0].mxu0 %v6324
        %v6326 = vpop.f32.mrb[0].mxu0
        %v6327 = vadd.f32 %v5486, %v6326
        %v6328 = vpop.f32.mrb[0].mxu0
        %6329 = vmatprep.mubr.f32.mxu0 0.0
        %v6330 = vand.u32 %v699, 4294901760
        %6331 = vmatmul.mubr.f32.gmra.mrb[0].mxu0 %v6330
        %v6332 = vpop.f32.mrb[0].mxu0
        %v6333 = vadd.f32 %v5492, %v6332
        %v6334 = vpop.f32.mrb[0].mxu0
        %6335 = vmatprep.mubr.f32.mxu0 0.0
        %v6336 = vand.u32 %v702, 4294901760
        %6337 = vmatmul.mubr.f32.gmra.mrb[0].mxu0 %v6336
        %v6338 = vpop.f32.mrb[0].mxu0
        %v6339 = vadd.f32 %v5498, %v6338
        %v6340 = vpop.f32.mrb[0].mxu0
        %6341 = vmatprep.mubr.f32.mxu0 0.0
        %v6342 = vand.u32 %v705, 4294901760
        %6343 = vmatmul.mubr.f32.gmra.mrb[0].mxu0 %v6342
        %v6344 = vpop.f32.mrb[0].mxu0
        %v6345 = vadd.f32 %v5504, %v6344
        %v6346 = vpop.f32.mrb[0].mxu0
        %6347 = vmatprep.mubr.f32.mxu0 0.0
        %v6348 = vand.u32 %v708, 4294901760
        %6349 = vmatmul.mubr.f32.gmra.mrb[0].mxu0 %v6348
        %v6350 = vpop.f32.mrb[0].mxu0
        %v6351 = vadd.f32 %v5510, %v6350
        %v6352 = vpop.f32.mrb[0].mxu0
        %6353 = vmatprep.mubr.f32.mxu0 0.0
        %v6354 = vand.u32 %v711, 4294901760
        %6355 = vmatmul.mubr.f32.gmra.mrb[0].mxu0 %v6354
        %v6356 = vpop.f32.mrb[0].mxu0
        %v6357 = vadd.f32 %v5516, %v6356
        %v6358 = vpop.f32.mrb[0].mxu0
        %6359 = vmatprep.mubr.f32.mxu0 0.0
        %v6360 = vand.u32 %v714, 4294901760
        %6361 = vmatmul.mubr.f32.gmra.mrb[0].mxu0 %v6360
        %v6362 = vpop.f32.mrb[0].mxu0
        %v6363 = vadd.f32 %v5522, %v6362
        %v6364 = vpop.f32.mrb[0].mxu0
        %6365 = vmatprep.mubr.f32.mxu0 0.0
        %v6366 = vand.u32 %v717, 4294901760
        %6367 = vmatmul.mubr.f32.gmra.mrb[0].mxu0 %v6366
        %v6368 = vpop.f32.mrb[0].mxu0
        %v6369 = vadd.f32 %v5528, %v6368
        %v6370 = vpop.f32.mrb[0].mxu0
        %6371 = vmatprep.mubr.f32.mxu0 0.0
        %v6372 = vand.u32 %v720, 4294901760
        %6373 = vmatmul.mubr.f32.gmra.mrb[0].mxu0 %v6372
        %v6374 = vpop.f32.mrb[0].mxu0
        %v6375 = vadd.f32 %v5534, %v6374
        %v6376 = vpop.f32.mrb[0].mxu0
        %6377 = vmatprep.mubr.f32.mxu0 0.0
        %v6378 = vand.u32 %v723, 4294901760
        %6379 = vmatmul.mubr.f32.gmra.mrb[0].mxu0 %v6378
        %v6380 = vpop.f32.mrb[0].mxu0
        %v6381 = vadd.f32 %v5540, %v6380
        %v6382 = vpop.f32.mrb[0].mxu0
        %6383 = vmatprep.mubr.f32.mxu0 0.0
        %v6384 = vand.u32 %v726, 4294901760
        %6385 = vmatmul.mubr.f32.gmra.mrb[0].mxu0 %v6384
        %v6386 = vpop.f32.mrb[0].mxu0
        %v6387 = vadd.f32 %v5546, %v6386
        %v6388 = vpop.f32.mrb[0].mxu0
        %6389 = vmatprep.mubr.f32.mxu0 0.0
        %v6390 = vand.u32 %v729, 4294901760
        %6391 = vmatmul.mubr.f32.gmra.mrb[0].mxu0 %v6390
        %v6392 = vpop.f32.mrb[0].mxu0
        %v6393 = vadd.f32 %v5552, %v6392
        %v6394 = vpop.f32.mrb[0].mxu0
        %6395 = vmatprep.mubr.f32.mxu0 0.0
        %v6396 = vand.u32 %v732, 4294901760
        %6397 = vmatmul.mubr.f32.gmra.mrb[0].mxu0 %v6396
        %v6398 = vpop.f32.mrb[0].mxu0
        %v6399 = vadd.f32 %v5558, %v6398
        %v6400 = vpop.f32.mrb[0].mxu0
        %6401 = vmatprep.mubr.f32.mxu0 0.0
        %v6402 = vand.u32 %v735, 4294901760
        %6403 = vmatmul.mubr.f32.gmra.mrb[0].mxu0 %v6402
        %v6404 = vpop.f32.mrb[0].mxu0
        %v6405 = vadd.f32 %v5564, %v6404
        %v6406 = vpop.f32.mrb[0].mxu0
        %6407 = vmatprep.mubr.f32.mxu0 0.0
        %v6408 = vand.u32 %v738, 4294901760
        %6409 = vmatmul.mubr.f32.gmra.mrb[0].mxu0 %v6408
        %v6410 = vpop.f32.mrb[0].mxu0
        %v6411 = vadd.f32 %v5570, %v6410
        %v6412 = vpop.f32.mrb[0].mxu0
        %6413 = vmatprep.mubr.f32.mxu0 0.0
        %v6414 = vand.u32 %v741, 4294901760
        %6415 = vmatmul.mubr.f32.gmra.mrb[0].mxu0 %v6414
        %v6416 = vpop.f32.mrb[0].mxu0
        %v6417 = vadd.f32 %v5576, %v6416
        %v6418 = vpop.f32.mrb[0].mxu0
        %6419 = vmatprep.mubr.f32.mxu0 0.0
        %v6420 = vand.u32 %v744, 4294901760
        %6421 = vmatmul.mubr.f32.gmra.mrb[0].mxu0 %v6420
        %v6422 = vpop.f32.mrb[0].mxu0
        %v6423 = vadd.f32 %v5582, %v6422
        %v6424 = vpop.f32.mrb[0].mxu0
        %6425 = vmatprep.mubr.f32.mxu0 0.0
        %v6426 = vand.u32 %v747, 4294901760
        %6427 = vmatmul.mubr.f32.gmra.mrb[0].mxu0 %v6426
        %v6428 = vpop.f32.mrb[0].mxu0
        %v6429 = vadd.f32 %v5588, %v6428
        %v6430 = vpop.f32.mrb[0].mxu0
        %6431 = vmatprep.mubr.f32.mxu0 0.0
        %v6432 = vand.u32 %v750, 4294901760
        %6433 = vmatmul.mubr.f32.gmra.mrb[0].mxu0 %v6432
        %v6434 = vpop.f32.mrb[0].mxu0
        %v6435 = vadd.f32 %v5594, %v6434
        %v6436 = vpop.f32.mrb[0].mxu0
        %6437 = vmatprep.mubr.f32.mxu0 0.0
        %v6438 = vand.u32 %v753, 4294901760
        %6439 = vmatmul.mubr.f32.gmra.mrb[0].mxu0 %v6438
        %v6440 = vpop.f32.mrb[0].mxu0
        %v6441 = vadd.f32 %v5600, %v6440
        %v6442 = vpop.f32.mrb[0].mxu0
        %6443 = vmatprep.mubr.f32.mxu0 0.0
        %v6444 = vand.u32 %v756, 4294901760
        %6445 = vmatmul.mubr.f32.gmra.mrb[0].mxu0 %v6444
        %v6446 = vpop.f32.mrb[0].mxu0
        %v6447 = vadd.f32 %v5606, %v6446
        %v6448 = vpop.f32.mrb[0].mxu0
        %6449 = vmatprep.mubr.f32.mxu0 0.0
        %v6450 = vand.u32 %v759, 4294901760
        %6451 = vmatmul.mubr.f32.gmra.mrb[0].mxu0 %v6450
        %v6452 = vpop.f32.mrb[0].mxu0
        %v6453 = vadd.f32 %v5612, %v6452
        %v6454 = vpop.f32.mrb[0].mxu0
        %6455 = vmatprep.mubr.f32.mxu0 0.0
        %v6456 = vand.u32 %v762, 4294901760
        %6457 = vmatmul.mubr.f32.gmra.mrb[0].mxu0 %v6456
        %v6458 = vpop.f32.mrb[0].mxu0
        %v6459 = vadd.f32 %v5618, %v6458
        %v6460 = vpop.f32.mrb[0].mxu0
        %6461 = vmatprep.mubr.f32.mxu0 0.0
        %v6462 = vand.u32 %v765, 4294901760
        %6463 = vmatmul.mubr.f32.gmra.mrb[0].mxu0 %v6462
        %v6464 = vpop.f32.mrb[0].mxu0
        %v6465 = vadd.f32 %v5624, %v6464
        %v6466 = vpop.f32.mrb[0].mxu0
        %6467 = vmatprep.mubr.f32.mxu0 0.0
        %v6468 = vand.u32 %v768, 4294901760
        %6469 = vmatmul.mubr.f32.gmra.mrb[0].mxu0 %v6468
        %v6470 = vpop.f32.mrb[0].mxu0
        %v6471 = vadd.f32 %v5630, %v6470
        %v6472 = vpop.f32.mrb[0].mxu0
        %6473 = vmatprep.mubr.f32.mxu0 0.0
        %v6474 = vand.u32 %v771, 4294901760
        %6475 = vmatmul.mubr.f32.gmra.mrb[0].mxu0 %v6474
        %v6476 = vpop.f32.mrb[0].mxu0
        %v6477 = vadd.f32 %v5636, %v6476
        %v6478 = vpop.f32.mrb[0].mxu0
        %6479 = vmatprep.mubr.f32.mxu0 0.0
        %v6480 = vand.u32 %v774, 4294901760
        %6481 = vmatmul.mubr.f32.gmra.mrb[0].mxu0 %v6480
        %v6482 = vpop.f32.mrb[0].mxu0
        %v6483 = vadd.f32 %v5642, %v6482
        %v6484 = vpop.f32.mrb[0].mxu0
        %6485 = vmatprep.mubr.f32.mxu0 0.0
        %v6486 = vand.u32 %v777, 4294901760
        %6487 = vmatmul.mubr.f32.gmra.mrb[0].mxu0 %v6486
        %v6488 = vpop.f32.mrb[0].mxu0
        %v6489 = vadd.f32 %v5648, %v6488
        %v6490 = vpop.f32.mrb[0].mxu0
        %6491 = vmatprep.mubr.f32.mxu0 0.0
        %v6492 = vand.u32 %v780, 4294901760
        %6493 = vmatmul.mubr.f32.gmra.mrb[0].mxu0 %v6492
        %v6494 = vpop.f32.mrb[0].mxu0
        %v6495 = vadd.f32 %v5654, %v6494
        %v6496 = vpop.f32.mrb[0].mxu0
        %6497 = vmatprep.mubr.f32.mxu0 0.0
        %v6498 = vand.u32 %v783, 4294901760
        %6499 = vmatmul.mubr.f32.gmra.mrb[0].mxu0 %v6498
        %v6500 = vpop.f32.mrb[0].mxu0
        %v6501 = vadd.f32 %v5660, %v6500
        %v6502 = vpop.f32.mrb[0].mxu0
        %6503 = vmatprep.mubr.f32.mxu0 0.0
        %v6504 = vand.u32 %v786, 4294901760
        %6505 = vmatmul.mubr.f32.gmra.mrb[0].mxu0 %v6504
        %v6506 = vpop.f32.mrb[0].mxu0
        %v6507 = vadd.f32 %v5666, %v6506
        %v6508 = vpop.f32.mrb[0].mxu0
        %6509 = vmatprep.mubr.f32.mxu0 0.0
        %v6510 = vand.u32 %v789, 4294901760
        %6511 = vmatmul.mubr.f32.gmra.mrb[0].mxu0 %v6510
        %v6512 = vpop.f32.mrb[0].mxu0
        %v6513 = vadd.f32 %v5672, %v6512
        %v6514 = vpop.f32.mrb[0].mxu0
        %6515 = vmatprep.mubr.f32.mxu0 0.0
        %v6516 = vand.u32 %v792, 4294901760
        %6517 = vmatmul.mubr.f32.gmra.mrb[0].mxu0 %v6516
        %v6518 = vpop.f32.mrb[0].mxu0
        %v6519 = vadd.f32 %v5678, %v6518
        %v6520 = vpop.f32.mrb[0].mxu0
        %6521 = vmatprep.mubr.f32.mxu0 0.0
        %v6522 = vand.u32 %v795, 4294901760
        %6523 = vmatmul.mubr.f32.gmra.mrb[0].mxu0 %v6522
        %v6524 = vpop.f32.mrb[0].mxu0
        %v6525 = vadd.f32 %v5684, %v6524
        %v6526 = vpop.f32.mrb[0].mxu0
        %6527 = vmatprep.mubr.f32.mxu0 0.0
        %v6528 = vand.u32 %v798, 4294901760
        %6529 = vmatmul.mubr.f32.gmra.mrb[0].mxu0 %v6528
        %v6530 = vpop.f32.mrb[0].mxu0
        %v6531 = vadd.f32 %v5690, %v6530
        %v6532 = vpop.f32.mrb[0].mxu0
        %6533 = vmatprep.mubr.f32.mxu0 0.0
        %v6534 = vand.u32 %v801, 4294901760
        %6535 = vmatmul.mubr.f32.gmra.mrb[0].mxu0 %v6534
        %v6536 = vpop.f32.mrb[0].mxu0
        %v6537 = vadd.f32 %v5696, %v6536
        %v6538 = vpop.f32.mrb[0].mxu0
        %6539 = vmatprep.mubr.f32.mxu0 0.0
        %v6540 = vand.u32 %v804, 4294901760
        %6541 = vmatmul.mubr.f32.gmra.mrb[0].mxu0 %v6540
        %v6542 = vpop.f32.mrb[0].mxu0
        %v6543 = vadd.f32 %v5702, %v6542
        %v6544 = vpop.f32.mrb[0].mxu0
        %6545 = vmatprep.mubr.f32.mxu0 0.0
        %v6546 = vand.u32 %v807, 4294901760
        %6547 = vmatmul.mubr.f32.gmra.mrb[0].mxu0 %v6546
        %v6548 = vpop.f32.mrb[0].mxu0
        %v6549 = vadd.f32 %v5708, %v6548
        %v6550 = vpop.f32.mrb[0].mxu0
        %6551 = vmatprep.mubr.f32.mxu0 0.0
        %v6552 = vand.u32 %v810, 4294901760
        %6553 = vmatmul.mubr.f32.gmra.mrb[0].mxu0 %v6552
        %v6554 = vpop.f32.mrb[0].mxu0
        %v6555 = vadd.f32 %v5714, %v6554
        %v6556 = vpop.f32.mrb[0].mxu0
        %6557 = vmatprep.mubr.f32.mxu0 0.0
        %v6558 = vand.u32 %v813, 4294901760
        %6559 = vmatmul.mubr.f32.gmra.mrb[0].mxu0 %v6558
        %v6560 = vpop.f32.mrb[0].mxu0
        %v6561 = vadd.f32 %v5720, %v6560
        %v6562 = vpop.f32.mrb[0].mxu0
        %6563 = vmatprep.mubr.f32.mxu0 0.0
        %v6564 = vand.u32 %v816, 4294901760
        %6565 = vmatmul.mubr.f32.gmra.mrb[0].mxu0 %v6564
        %v6566 = vpop.f32.mrb[0].mxu0
        %v6567 = vadd.f32 %v5726, %v6566
        %v6568 = vpop.f32.mrb[0].mxu0
        %6569 = vmatprep.mubr.f32.mxu0 0.0
        %v6570 = vand.u32 %v819, 4294901760
        %6571 = vmatmul.mubr.f32.gmra.mrb[0].mxu0 %v6570
        %v6572 = vpop.f32.mrb[0].mxu0
        %v6573 = vadd.f32 %v5732, %v6572
        %v6574 = vpop.f32.mrb[0].mxu0
        %6575 = vmatprep.mubr.f32.mxu0 0.0
        %v6576 = vand.u32 %v822, 4294901760
        %6577 = vmatmul.mubr.f32.gmra.mrb[0].mxu0 %v6576
        %v6578 = vpop.f32.mrb[0].mxu0
        %v6579 = vadd.f32 %v5738, %v6578
        %v6580 = vpop.f32.mrb[0].mxu0
        %6581 = vmatprep.mubr.f32.mxu0 0.0
        %v6582 = vand.u32 %v825, 4294901760
        %6583 = vmatmul.mubr.f32.gmra.mrb[0].mxu0 %v6582
        %v6584 = vpop.f32.mrb[0].mxu0
        %v6585 = vadd.f32 %v5744, %v6584
        %v6586 = vpop.f32.mrb[0].mxu0
        %6587 = vmatprep.mubr.f32.mxu0 0.0
        %v6588 = vand.u32 %v828, 4294901760
        %6589 = vmatmul.mubr.f32.gmra.mrb[0].mxu0 %v6588
        %v6590 = vpop.f32.mrb[0].mxu0
        %v6591 = vadd.f32 %v5750, %v6590
        %v6592 = vpop.f32.mrb[0].mxu0
        %6593 = vmatprep.mubr.f32.mxu0 0.0
        %v6594 = vand.u32 %v831, 4294901760
        %6595 = vmatmul.mubr.f32.gmra.mrb[0].mxu0 %v6594
        %v6596 = vpop.f32.mrb[0].mxu0
        %v6597 = vadd.f32 %v5756, %v6596
        %v6598 = vpop.f32.mrb[0].mxu0
        %6599 = vmatprep.mubr.f32.mxu0 0.0
        %v6600 = vand.u32 %v834, 4294901760
        %6601 = vmatmul.mubr.f32.gmra.mrb[0].mxu0 %v6600
        %v6602 = vpop.f32.mrb[0].mxu0
        %v6603 = vadd.f32 %v5762, %v6602
        %v6604 = vpop.f32.mrb[0].mxu0
        %6605 = vmatprep.mubr.f32.mxu0 0.0
        %v6606 = vand.u32 %v837, 4294901760
        %6607 = vmatmul.mubr.f32.gmra.mrb[0].mxu0 %v6606
        %v6608 = vpop.f32.mrb[0].mxu0
        %v6609 = vadd.f32 %v5768, %v6608
        %v6610 = vpop.f32.mrb[0].mxu0
        %6611 = vmatprep.mubr.f32.mxu0 0.0
        %v6612 = vand.u32 %v840, 4294901760
        %6613 = vmatmul.mubr.f32.gmra.mrb[0].mxu0 %v6612
        %v6614 = vpop.f32.mrb[0].mxu0
        %v6615 = vadd.f32 %v5774, %v6614
        %v6616 = vpop.f32.mrb[0].mxu0
        %6617 = vmatprep.mubr.f32.mxu0 0.0
        %v6618 = vand.u32 %v843, 4294901760
        %6619 = vmatmul.mubr.f32.gmra.mrb[0].mxu0 %v6618
        %v6620 = vpop.f32.mrb[0].mxu0
        %v6621 = vadd.f32 %v5780, %v6620
        %v6622 = vpop.f32.mrb[0].mxu0
        %6623 = vmatprep.mubr.f32.mxu0 0.0
        %v6624 = vand.u32 %v846, 4294901760
        %6625 = vmatmul.mubr.f32.gmra.mrb[0].mxu0 %v6624
        %v6626 = vpop.f32.mrb[0].mxu0
        %v6627 = vadd.f32 %v5786, %v6626
        %v6628 = vpop.f32.mrb[0].mxu0
        %6629 = vmatprep.mubr.f32.mxu0 0.0
        %v6630 = vand.u32 %v849, 4294901760
        %6631 = vmatmul.mubr.f32.gmra.mrb[0].mxu0 %v6630
        %v6632 = vpop.f32.mrb[0].mxu0
        %v6633 = vadd.f32 %v5792, %v6632
        %v6634 = vpop.f32.mrb[0].mxu0
        %6635 = vmatprep.mubr.f32.mxu0 0.0
        %v6636 = vand.u32 %v852, 4294901760
        %6637 = vmatmul.mubr.f32.gmra.mrb[0].mxu0 %v6636
        %v6638 = vpop.f32.mrb[0].mxu0
        %v6639 = vadd.f32 %v5798, %v6638
        %v6640 = vpop.f32.mrb[0].mxu0
        %6641 = vmatprep.mubr.f32.mxu0 0.0
        %v6642 = vand.u32 %v855, 4294901760
        %6643 = vmatmul.mubr.f32.gmra.mrb[0].mxu0 %v6642
        %v6644 = vpop.f32.mrb[0].mxu0
        %v6645 = vadd.f32 %v5804, %v6644
        %v6646 = vpop.f32.mrb[0].mxu0
        %6647 = vmatprep.mubr.f32.mxu0 0.0
        %v6648 = vand.u32 %v858, 4294901760
        %6649 = vmatmul.mubr.f32.gmra.mrb[0].mxu0 %v6648
        %v6650 = vpop.f32.mrb[0].mxu0
        %v6651 = vadd.f32 %v5810, %v6650
        %v6652 = vpop.f32.mrb[0].mxu0
        %6653 = vmatprep.mubr.f32.mxu0 0.0
        %v6654 = vand.u32 %v861, 4294901760
        %6655 = vmatmul.mubr.f32.gmra.mrb[0].mxu0 %v6654
        %v6656 = vpop.f32.mrb[0].mxu0
        %v6657 = vadd.f32 %v5816, %v6656
        %v6658 = vpop.f32.mrb[0].mxu0
        %6659 = vmatprep.mubr.f32.mxu0 0.0
        %v6660 = vand.u32 %v864, 4294901760
        %6661 = vmatmul.mubr.f32.gmra.mrb[0].mxu0 %v6660
        %v6662 = vpop.f32.mrb[0].mxu0
        %v6663 = vadd.f32 %v5822, %v6662
        %v6664 = vpop.f32.mrb[0].mxu0
        %6665 = vmatprep.mubr.f32.mxu0 0.0
        %v6666 = vand.u32 %v867, 4294901760
        %6667 = vmatmul.mubr.f32.gmra.mrb[0].mxu0 %v6666
        %v6668 = vpop.f32.mrb[0].mxu0
        %v6669 = vadd.f32 %v5828, %v6668
        %v6670 = vpop.f32.mrb[0].mxu0
        %6671 = vmatprep.mubr.f32.mxu0 0.0
        %v6672 = vand.u32 %v870, 4294901760
        %6673 = vmatmul.mubr.f32.gmra.mrb[0].mxu0 %v6672
        %v6674 = vpop.f32.mrb[0].mxu0
        %v6675 = vadd.f32 %v5834, %v6674
        %v6676 = vpop.f32.mrb[0].mxu0
        %6677 = vmatprep.mubr.f32.mxu0 0.0
        %v6678 = vand.u32 %v873, 4294901760
        %6679 = vmatmul.mubr.f32.gmra.mrb[0].mxu0 %v6678
        %v6680 = vpop.f32.mrb[0].mxu0
        %v6681 = vadd.f32 %v5840, %v6680
        %v6682 = vpop.f32.mrb[0].mxu0
        %6683 = vmatprep.mubr.f32.mxu0 0.0
        %v6684 = vand.u32 %v876, 4294901760
        %6685 = vmatmul.mubr.f32.gmra.mrb[0].mxu0 %v6684
        %v6686 = vpop.f32.mrb[0].mxu0
        %v6687 = vadd.f32 %v5846, %v6686
        %v6688 = vpop.f32.mrb[0].mxu0
        %6689 = vmatprep.mubr.f32.mxu0 0.0
        %v6690 = vand.u32 %v879, 4294901760
        %6691 = vmatmul.mubr.f32.gmra.mrb[0].mxu0 %v6690
        %v6692 = vpop.f32.mrb[0].mxu0
        %v6693 = vadd.f32 %v5852, %v6692
        %v6694 = vpop.f32.mrb[0].mxu0
        %6695 = vmatprep.mubr.f32.mxu0 0.0
        %v6696 = vand.u32 %v882, 4294901760
        %6697 = vmatmul.mubr.f32.gmra.mrb[0].mxu0 %v6696
        %v6698 = vpop.f32.mrb[0].mxu0
        %v6699 = vadd.f32 %v5858, %v6698
        %v6700 = vpop.f32.mrb[0].mxu0
        %6701 = vmatprep.mubr.f32.mxu0 0.0
        %v6702 = vand.u32 %v885, 4294901760
        %6703 = vmatmul.mubr.f32.gmra.mrb[0].mxu0 %v6702
        %v6704 = vpop.f32.mrb[0].mxu0
        %v6705 = vadd.f32 %v5864, %v6704
        %v6706 = vpop.f32.mrb[0].mxu0
        %6707 = vmatprep.mubr.f32.mxu0 0.0
        %v6708 = vand.u32 %v888, 4294901760
        %6709 = vmatmul.mubr.f32.gmra.mrb[0].mxu0 %v6708
        %v6710 = vpop.f32.mrb[0].mxu0
        %v6711 = vadd.f32 %v5870, %v6710
        %v6712 = vpop.f32.mrb[0].mxu0
        %6713 = vmatprep.mubr.f32.mxu0 0.0
        %v6714 = vand.u32 %v891, 4294901760
        %6715 = vmatmul.mubr.f32.gmra.mrb[0].mxu0 %v6714
        %v6716 = vpop.f32.mrb[0].mxu0
        %v6717 = vadd.f32 %v5876, %v6716
        %v6718 = vpop.f32.mrb[0].mxu0
        %6719 = vmatprep.mubr.f32.mxu0 0.0
        %v6720 = vand.u32 %v894, 4294901760
        %6721 = vmatmul.mubr.f32.gmra.mrb[0].mxu0 %v6720
        %v6722 = vpop.f32.mrb[0].mxu0
        %v6723 = vadd.f32 %v5882, %v6722
        %v6724 = vpop.f32.mrb[0].mxu0
        %6725 = vmatprep.mubr.f32.mxu0 0.0
        %v6726 = vand.u32 %v897, 4294901760
        %6727 = vmatmul.mubr.f32.gmra.mrb[0].mxu0 %v6726
        %v6728 = vpop.f32.mrb[0].mxu0
        %v6729 = vadd.f32 %v5888, %v6728
        %v6730 = vpop.f32.mrb[0].mxu0
        %6731 = vmatprep.mubr.f32.mxu0 0.0
        %v6732 = vand.u32 %v900, 4294901760
        %6733 = vmatmul.mubr.f32.gmra.mrb[0].mxu0 %v6732
        %v6734 = vpop.f32.mrb[0].mxu0
        %v6735 = vadd.f32 %v5894, %v6734
        %v6736 = vpop.f32.mrb[0].mxu0
        %6737 = vmatprep.mubr.f32.mxu0 0.0
        %v6738 = vand.u32 %v903, 4294901760
        %6739 = vmatmul.mubr.f32.gmra.mrb[0].mxu0 %v6738
        %v6740 = vpop.f32.mrb[0].mxu0
        %v6741 = vadd.f32 %v5900, %v6740
        %v6742 = vpop.f32.mrb[0].mxu0
        %6743 = vmatprep.mubr.f32.mxu0 0.0
        %v6744 = vand.u32 %v906, 4294901760
        %6745 = vmatmul.mubr.f32.gmra.mrb[0].mxu0 %v6744
        %v6746 = vpop.f32.mrb[0].mxu0
        %v6747 = vadd.f32 %v5906, %v6746
        %v6748 = vpop.f32.mrb[0].mxu0
        %6749 = vmatprep.mubr.f32.mxu0 0.0
        %v6750 = vand.u32 %v909, 4294901760
        %6751 = vmatmul.mubr.f32.gmra.mrb[0].mxu0 %v6750
        %v6752 = vpop.f32.mrb[0].mxu0
        %v6753 = vadd.f32 %v5912, %v6752
        %v6754 = vpop.f32.mrb[0].mxu0
        %6755 = vmatprep.mubr.f32.mxu0 0.0
        %v6756 = vand.u32 %v912, 4294901760
        %6757 = vmatmul.mubr.f32.gmra.mrb[0].mxu0 %v6756
        %v6758 = vpop.f32.mrb[0].mxu0
        %v6759 = vadd.f32 %v5918, %v6758
        %v6760 = vpop.f32.mrb[0].mxu0
        %6761 = vmatprep.mubr.f32.mxu0 0.0
        %v6762 = vand.u32 %v915, 4294901760
        %6763 = vmatmul.mubr.f32.gmra.mrb[0].mxu0 %v6762
        %v6764 = vpop.f32.mrb[0].mxu0
        %v6765 = vadd.f32 %v5924, %v6764
        %v6766 = vpop.f32.mrb[0].mxu0
        %6767 = vmatprep.mubr.f32.mxu0 0.0
        %v6768 = vand.u32 %v918, 4294901760
        %6769 = vmatmul.mubr.f32.gmra.mrb[0].mxu0 %v6768
        %v6770 = vpop.f32.mrb[0].mxu0
        %v6771 = vadd.f32 %v5930, %v6770
        %v6772 = vpop.f32.mrb[0].mxu0
        %6773 = vmatprep.mubr.f32.mxu0 0.0
        %v6774 = vand.u32 %v921, 4294901760
        %6775 = vmatmul.mubr.f32.gmra.mrb[0].mxu0 %v6774
        %v6776 = vpop.f32.mrb[0].mxu0
        %v6777 = vadd.f32 %v5936, %v6776
        %v6778 = vpop.f32.mrb[0].mxu0
        %6779 = vmatprep.mubr.f32.mxu0 0.0
        %v6780 = vand.u32 %v924, 4294901760
        %6781 = vmatmul.mubr.f32.gmra.mrb[0].mxu0 %v6780
        %v6782 = vpop.f32.mrb[0].mxu0
        %v6783 = vadd.f32 %v5942, %v6782
        %v6784 = vpop.f32.mrb[0].mxu0
        %6785 = vmatprep.mubr.f32.mxu0 0.0
        %v6786 = vand.u32 %v927, 4294901760
        %6787 = vmatmul.mubr.f32.gmra.mrb[0].mxu0 %v6786
        %v6788 = vpop.f32.mrb[0].mxu0
        %v6789 = vadd.f32 %v5948, %v6788
        %v6790 = vpop.f32.mrb[0].mxu0
        %6791 = vmatprep.mubr.f32.mxu0 0.0
        %v6792 = vand.u32 %v930, 4294901760
        %6793 = vmatmul.mubr.f32.gmra.mrb[0].mxu0 %v6792
        %v6794 = vpop.f32.mrb[0].mxu0
        %v6795 = vadd.f32 %v5954, %v6794
        %v6796 = vpop.f32.mrb[0].mxu0
        %6797 = vmatprep.mubr.f32.mxu0 0.0
        %v6798 = vand.u32 %v933, 4294901760
        %6799 = vmatmul.mubr.f32.gmra.mrb[0].mxu0 %v6798
        %v6800 = vpop.f32.mrb[0].mxu0
        %v6801 = vadd.f32 %v5960, %v6800
        %v6802 = vpop.f32.mrb[0].mxu0
        %6803 = vmatprep.mubr.f32.mxu0 0.0
        %v6804 = vand.u32 %v936, 4294901760
        %6805 = vmatmul.mubr.f32.gmra.mrb[0].mxu0 %v6804
        %v6806 = vpop.f32.mrb[0].mxu0
        %v6807 = vadd.f32 %v5966, %v6806
        %v6808 = vpop.f32.mrb[0].mxu0
        %6809 = vmatprep.mubr.f32.mxu0 0.0
        %v6810 = vand.u32 %v939, 4294901760
        %6811 = vmatmul.mubr.f32.gmra.mrb[0].mxu0 %v6810
        %v6812 = vpop.f32.mrb[0].mxu0
        %v6813 = vadd.f32 %v5972, %v6812
        %v6814 = vpop.f32.mrb[0].mxu0
        %6815 = vmatprep.mubr.f32.mxu0 0.0
        %v6816 = vand.u32 %v942, 4294901760
        %6817 = vmatmul.mubr.f32.gmra.mrb[0].mxu0 %v6816
        %v6818 = vpop.f32.mrb[0].mxu0
        %v6819 = vadd.f32 %v5978, %v6818
        %v6820 = vpop.f32.mrb[0].mxu0
        %6821 = vmatprep.mubr.f32.mxu0 0.0
        %v6822 = vand.u32 %v945, 4294901760
        %6823 = vmatmul.mubr.f32.gmra.mrb[0].mxu0 %v6822
        %v6824 = vpop.f32.mrb[0].mxu0
        %v6825 = vadd.f32 %v5984, %v6824
        %v6826 = vpop.f32.mrb[0].mxu0
        %6827 = vmatprep.mubr.f32.mxu0 0.0
        %v6828 = vand.u32 %v948, 4294901760
        %6829 = vmatmul.mubr.f32.gmra.mrb[0].mxu0 %v6828
        %v6830 = vpop.f32.mrb[0].mxu0
        %v6831 = vadd.f32 %v5990, %v6830
        %v6832 = vpop.f32.mrb[0].mxu0
        %6833 = vmatprep.mubr.f32.mxu0 0.0
        %v6834 = vand.u32 %v951, 4294901760
        %6835 = vmatmul.mubr.f32.gmra.mrb[0].mxu0 %v6834
        %v6836 = vpop.f32.mrb[0].mxu0
        %v6837 = vadd.f32 %v5996, %v6836
        %v6838 = vpop.f32.mrb[0].mxu0
        %6839 = vmatprep.mubr.f32.mxu0 0.0
        %v6840 = vand.u32 %v954, 4294901760
        %6841 = vmatmul.mubr.f32.gmra.mrb[0].mxu0 %v6840
        %v6842 = vpop.f32.mrb[0].mxu0
        %v6843 = vadd.f32 %v6002, %v6842
        %v6844 = vpop.f32.mrb[0].mxu0
        %6845 = vmatprep.mubr.f32.mxu0 0.0
        %v6846 = vand.u32 %v957, 4294901760
        %6847 = vmatmul.mubr.f32.gmra.mrb[0].mxu0 %v6846
        %v6848 = vpop.f32.mrb[0].mxu0
        %v6849 = vadd.f32 %v6008, %v6848
        %v6850 = vpop.f32.mrb[0].mxu0
        %6851 = vmatprep.mubr.f32.mxu0 0.0
        %v6852 = vand.u32 %v960, 4294901760
        %6853 = vmatmul.mubr.f32.gmra.mrb[0].mxu0 %v6852
        %v6854 = vpop.f32.mrb[0].mxu0
        %v6855 = vadd.f32 %v6014, %v6854
        %v6856 = vpop.f32.mrb[0].mxu0
        %6857 = vmatprep.mubr.f32.mxu0 0.0
        %v6858 = vand.u32 %v963, 4294901760
        %6859 = vmatmul.mubr.f32.gmra.mrb[0].mxu0 %v6858
        %v6860 = vpop.f32.mrb[0].mxu0
        %v6861 = vadd.f32 %v6020, %v6860
        %v6862 = vpop.f32.mrb[0].mxu0
        %6863 = vmatprep.mubr.f32.mxu0 0.0
        %v6864 = vand.u32 %v966, 4294901760
        %6865 = vmatmul.mubr.f32.gmra.mrb[0].mxu0 %v6864
        %v6866 = vpop.f32.mrb[0].mxu0
        %v6867 = vadd.f32 %v6026, %v6866
        %v6868 = vpop.f32.mrb[0].mxu0
        %6869 = vmatprep.mubr.f32.mxu0 0.0
        %v6870 = vand.u32 %v969, 4294901760
        %6871 = vmatmul.mubr.f32.gmra.mrb[0].mxu0 %v6870
        %v6872 = vpop.f32.mrb[0].mxu0
        %v6873 = vadd.f32 %v6032, %v6872
        %v6874 = vpop.f32.mrb[0].mxu0
        %6875 = vmatprep.mubr.f32.mxu0 0.0
        %v6876 = vand.u32 %v972, 4294901760
        %6877 = vmatmul.mubr.f32.gmra.mrb[0].mxu0 %v6876
        %v6878 = vpop.f32.mrb[0].mxu0
        %v6879 = vadd.f32 %v6038, %v6878
        %v6880 = vpop.f32.mrb[0].mxu0
        %6881 = vmatprep.mubr.f32.mxu0 0.0
        %v6882 = vand.u32 %v975, 4294901760
        %6883 = vmatmul.mubr.f32.gmra.mrb[0].mxu0 %v6882
        %v6884 = vpop.f32.mrb[0].mxu0
        %v6885 = vadd.f32 %v6044, %v6884
        %v6886 = vpop.f32.mrb[0].mxu0
        %6887 = vmatprep.mubr.f32.mxu0 0.0
        %v6888 = vand.u32 %v978, 4294901760
        %6889 = vmatmul.mubr.f32.gmra.mrb[0].mxu0 %v6888
        %v6890 = vpop.f32.mrb[0].mxu0
        %v6891 = vadd.f32 %v6050, %v6890
        %v6892 = vpop.f32.mrb[0].mxu0
        %6893 = vmatprep.mubr.f32.mxu0 0.0
        %v6894 = vand.u32 %v981, 4294901760
        %6895 = vmatmul.mubr.f32.gmra.mrb[0].mxu0 %v6894
        %v6896 = vpop.f32.mrb[0].mxu0
        %v6897 = vadd.f32 %v6056, %v6896
        %v6898 = vpop.f32.mrb[0].mxu0
        %6899 = vmatprep.mubr.f32.mxu0 0.0
        %v6900 = vand.u32 %v984, 4294901760
        %6901 = vmatmul.mubr.f32.gmra.mrb[0].mxu0 %v6900
        %v6902 = vpop.f32.mrb[0].mxu0
        %v6903 = vadd.f32 %v6062, %v6902
        %v6904 = vpop.f32.mrb[0].mxu0
        %6905 = vmatprep.mubr.f32.mxu0 0.0
        %v6906 = vand.u32 %v987, 4294901760
        %6907 = vmatmul.mubr.f32.gmra.mrb[0].mxu0 %v6906
        %v6908 = vpop.f32.mrb[0].mxu0
        %v6909 = vadd.f32 %v6068, %v6908
        %v6910 = vpop.f32.mrb[0].mxu0
        %6911 = vmatprep.mubr.f32.mxu0 0.0
        %v6912 = vand.u32 %v990, 4294901760
        %6913 = vmatmul.mubr.f32.gmra.mrb[0].mxu0 %v6912
        %v6914 = vpop.f32.mrb[0].mxu0
        %v6915 = vadd.f32 %v6074, %v6914
        %v6916 = vpop.f32.mrb[0].mxu0
        %6917 = vmatprep.mubr.f32.mxu0 0.0
        %v6918 = vand.u32 %v993, 4294901760
        %6919 = vmatmul.mubr.f32.gmra.mrb[0].mxu0 %v6918
        %v6920 = vpop.f32.mrb[0].mxu0
        %v6921 = vadd.f32 %v6080, %v6920
        %v6922 = vpop.f32.mrb[0].mxu0
        %6923 = vmatprep.mubr.f32.mxu0 0.0
        %v6924 = vand.u32 %v996, 4294901760
        %6925 = vmatmul.mubr.f32.gmra.mrb[0].mxu0 %v6924
        %v6926 = vpop.f32.mrb[0].mxu0
        %v6927 = vadd.f32 %v6086, %v6926
        %v6928 = vpop.f32.mrb[0].mxu0
        %6929 = vmatprep.mubr.f32.mxu0 0.0
        %v6930 = vand.u32 %v999, 4294901760
        %6931 = vmatmul.mubr.f32.gmra.mrb[0].mxu0 %v6930
        %v6932 = vpop.f32.mrb[0].mxu0
        %v6933 = vadd.f32 %v6092, %v6932
        %v6934 = vpop.f32.mrb[0].mxu0
        %6935 = vmatprep.mubr.f32.mxu0 0.0
        %v6936 = vand.u32 %v1002, 4294901760
        %6937 = vmatmul.mubr.f32.gmra.mrb[0].mxu0 %v6936
        %v6938 = vpop.f32.mrb[0].mxu0
        %v6939 = vadd.f32 %v6098, %v6938
        %v6940 = vpop.f32.mrb[0].mxu0
        %6941 = vmatprep.mubr.f32.mxu0 0.0
        %v6942 = vand.u32 %v1005, 4294901760
        %6943 = vmatmul.mubr.f32.gmra.mrb[0].mxu0 %v6942
        %v6944 = vpop.f32.mrb[0].mxu0
        %v6945 = vadd.f32 %v6104, %v6944
        %v6946 = vpop.f32.mrb[0].mxu0
        %6947 = vmatprep.mubr.f32.mxu0 0.0
        %v6948 = vand.u32 %v1008, 4294901760
        %6949 = vmatmul.mubr.f32.gmra.mrb[0].mxu0 %v6948
        %v6950 = vpop.f32.mrb[0].mxu0
        %v6951 = vadd.f32 %v6110, %v6950
        %v6952 = vpop.f32.mrb[0].mxu0
        %6953 = vmatprep.mubr.f32.mxu0 0.0
        %v6954 = vand.u32 %v1011, 4294901760
        %6955 = vmatmul.mubr.f32.gmra.mrb[0].mxu0 %v6954
        %v6956 = vpop.f32.mrb[0].mxu0
        %v6957 = vadd.f32 %v6116, %v6956
        %v6958 = vpop.f32.mrb[0].mxu0
        %6959 = vmatprep.mubr.f32.mxu0 0.0
        %v6960 = vand.u32 %v1014, 4294901760
        %6961 = vmatmul.mubr.f32.gmra.mrb[0].mxu0 %v6960
        %v6962 = vpop.f32.mrb[0].mxu0
        %v6963 = vadd.f32 %v6122, %v6962
        %v6964 = vpop.f32.mrb[0].mxu0
        %6965 = vmatprep.mubr.f32.mxu0 0.0
        %v6966 = vand.u32 %v1017, 4294901760
        %6967 = vmatmul.mubr.f32.gmra.mrb[0].mxu0 %v6966
        %v6968 = vpop.f32.mrb[0].mxu0
        %v6969 = vadd.f32 %v6128, %v6968
        %v6970 = vpop.f32.mrb[0].mxu0
        %6971 = vmatprep.mubr.f32.mxu0 0.0
        %v6972 = vand.u32 %v1020, 4294901760
        %6973 = vmatmul.mubr.f32.gmra.mrb[0].mxu0 %v6972
        %v6974 = vpop.f32.mrb[0].mxu0
        %v6975 = vadd.f32 %v6134, %v6974
        %v6976 = vpop.f32.mrb[0].mxu0
        %6977 = vmatprep.mubr.f32.mxu0 0.0
        %v6978 = vand.u32 %v1023, 4294901760
        %6979 = vmatmul.mubr.f32.gmra.mrb[0].mxu0 %v6978
        %v6980 = vpop.f32.mrb[0].mxu0
        %v6981 = vadd.f32 %v6140, %v6980
        %v6982 = vpop.f32.mrb[0].mxu0
        %6983 = vmatprep.mubr.f32.mxu0 0.0
        %v6984 = vand.u32 %v1026, 4294901760
        %6985 = vmatmul.mubr.f32.gmra.mrb[0].mxu0 %v6984
        %v6986 = vpop.f32.mrb[0].mxu0
        %v6987 = vadd.f32 %v6146, %v6986
        %v6988 = vpop.f32.mrb[0].mxu0
        %6989 = vmatprep.mubr.f32.mxu0 0.0
        %v6990 = vand.u32 %v1029, 4294901760
        %6991 = vmatmul.mubr.f32.gmra.mrb[0].mxu0 %v6990
        %v6992 = vpop.f32.mrb[0].mxu0
        %v6993 = vadd.f32 %v6152, %v6992
        %v6994 = vpop.f32.mrb[0].mxu0
        %6995 = vmatprep.mubr.f32.mxu0 0.0
        %v6996 = vand.u32 %v1032, 4294901760
        %6997 = vmatmul.mubr.f32.gmra.mrb[0].mxu0 %v6996
        %v6998 = vpop.f32.mrb[0].mxu0
        %v6999 = vadd.f32 %v6158, %v6998
        %v7000 = vpop.f32.mrb[0].mxu0
        %7001 = vmatprep.mubr.f32.mxu0 0.0
        %v7002 = vand.u32 %v1035, 4294901760
        %7003 = vmatmul.mubr.f32.gmra.mrb[0].mxu0 %v7002
        %v7004 = vpop.f32.mrb[0].mxu0
        %v7005 = vadd.f32 %v6164, %v7004
        %v7006 = vpop.f32.mrb[0].mxu0
        %7007 = vmatprep.mubr.f32.mxu0 0.0
        %v7008 = vand.u32 %v1038, 4294901760
        %7009 = vmatmul.mubr.f32.gmra.mrb[0].mxu0 %v7008
        %v7010 = vpop.f32.mrb[0].mxu0
        %v7011 = vadd.f32 %v6170, %v7010
        %v7012 = vpop.f32.mrb[0].mxu0
        %7013 = vmatprep.mubr.f32.mxu0 0.0
        %v7014 = vand.u32 %v1041, 4294901760
        %7015 = vmatmul.mubr.f32.gmra.mrb[0].mxu0 %v7014
        %v7016 = vpop.f32.mrb[0].mxu0
        %v7017 = vadd.f32 %v6176, %v7016
        %v7018 = vpop.f32.mrb[0].mxu0
        %7019 = vmatprep.mubr.f32.mxu0 0.0
        %v7020 = vand.u32 %v1044, 4294901760
        %7021 = vmatmul.mubr.f32.gmra.mrb[0].mxu0 %v7020
        %v7022 = vpop.f32.mrb[0].mxu0
        %v7023 = vadd.f32 %v6182, %v7022
        %v7024 = vpop.f32.mrb[0].mxu0
        %7025 = vmatprep.mubr.f32.mxu0 0.0
        %v7026 = vand.u32 %v1047, 4294901760
        %7027 = vmatmul.mubr.f32.gmra.mrb[0].mxu0 %v7026
        %v7028 = vpop.f32.mrb[0].mxu0
        %v7029 = vadd.f32 %v6188, %v7028
        %v7030 = vpop.f32.mrb[0].mxu0
        %7031 = vmatprep.mubr.f32.mxu0 0.0
        %v7032 = vand.u32 %v1050, 4294901760
        %7033 = vmatmul.mubr.f32.gmra.mrb[0].mxu0 %v7032
        %v7034 = vpop.f32.mrb[0].mxu0
        %v7035 = vadd.f32 %v6194, %v7034
        %v7036 = vpop.f32.mrb[0].mxu0
        %7037 = vmatprep.mubr.f32.mxu0 0.0
        %v7038 = vand.u32 %v1053, 4294901760
        %7039 = vmatmul.mubr.f32.gmra.mrb[0].mxu0 %v7038
        %v7040 = vpop.f32.mrb[0].mxu0
        %v7041 = vadd.f32 %v6200, %v7040
        %v7042 = vpop.f32.mrb[0].mxu0
        %7043 = vmatprep.mubr.f32.mxu0 0.0
        %v7044 = vand.u32 %v1056, 4294901760
        %7045 = vmatmul.mubr.f32.gmra.mrb[0].mxu0 %v7044
        %v7046 = vpop.f32.mrb[0].mxu0
        %v7047 = vadd.f32 %v6206, %v7046
        %v7048 = vpop.f32.mrb[0].mxu0
        %7049 = vmatprep.mubr.f32.mxu0 0.0
        %v7050 = vand.u32 %v1059, 4294901760
        %7051 = vmatmul.mubr.f32.gmra.mrb[0].mxu0 %v7050
        %v7052 = vpop.f32.mrb[0].mxu0
        %v7053 = vadd.f32 %v6212, %v7052
        %v7054 = vpop.f32.mrb[0].mxu0
        %7055 = vmatprep.mubr.f32.mxu0 0.0
        %v7056 = vand.u32 %v1062, 4294901760
        %7057 = vmatmul.mubr.f32.gmra.mrb[0].mxu0 %v7056
        %v7058 = vpop.f32.mrb[0].mxu0
        %v7059 = vadd.f32 %v6218, %v7058
        %v7060 = vpop.f32.mrb[0].mxu0
        %7061 = vdwg.mxu0
        %7062 = vst [vmem:[%s174] sm:$0xff] %v6297
        %7063 = vst [vmem:[%s174 + $0x8] sm:$0xff] %v6303
        %7064 = vst [vmem:[%s174 + $0x10] sm:$0xff] %v6309
        %7065 = vst [vmem:[%s174 + $0x18] sm:$0xff] %v6315
        %7066 = vst [vmem:[%s174 + $0x20] sm:$0xff] %v6321
        %7067 = vst [vmem:[%s174 + $0x28] sm:$0xff] %v6327
        %7068 = vst [vmem:[%s174 + $0x30] sm:$0xff] %v6333
        %7069 = vst [vmem:[%s174 + $0x38] sm:$0xff] %v6339
        %7070 = vst [vmem:[%s174 + $0x40] sm:$0xff] %v6345
        %7071 = vst [vmem:[%s174 + $0x48] sm:$0xff] %v6351
        %7072 = vst [vmem:[%s174 + $0x50] sm:$0xff] %v6357
        %7073 = vst [vmem:[%s174 + $0x58] sm:$0xff] %v6363
        %7074 = vst [vmem:[%s174 + $0x60] sm:$0xff] %v6369
        %7075 = vst [vmem:[%s174 + $0x68] sm:$0xff] %v6375
        %7076 = vst [vmem:[%s174 + $0x70] sm:$0xff] %v6381
        %7077 = vst [vmem:[%s174 + $0x78] sm:$0xff] %v6387
        %7078 = vst [vmem:[%s174 + $0x80] sm:$0xff] %v6393
        %7079 = vst [vmem:[%s174 + $0x88] sm:$0xff] %v6399
        %7080 = vst [vmem:[%s174 + $0x90] sm:$0xff] %v6405
        %7081 = vst [vmem:[%s174 + $0x98] sm:$0xff] %v6411
        %7082 = vst [vmem:[%s174 + $0xa0] sm:$0xff] %v6417
        %7083 = vst [vmem:[%s174 + $0xa8] sm:$0xff] %v6423
        %7084 = vst [vmem:[%s174 + $0xb0] sm:$0xff] %v6429
        %7085 = vst [vmem:[%s174 + $0xb8] sm:$0xff] %v6435
        %7086 = vst [vmem:[%s174 + $0xc0] sm:$0xff] %v6441
        %7087 = vst [vmem:[%s174 + $0xc8] sm:$0xff] %v6447
        %7088 = vst [vmem:[%s174 + $0xd0] sm:$0xff] %v6453
        %7089 = vst [vmem:[%s174 + $0xd8] sm:$0xff] %v6459
        %7090 = vst [vmem:[%s174 + $0xe0] sm:$0xff] %v6465
        %7091 = vst [vmem:[%s174 + $0xe8] sm:$0xff] %v6471
        %7092 = vst [vmem:[%s174 + $0xf0] sm:$0xff] %v6477
        %7093 = vst [vmem:[%s174 + $0xf8] sm:$0xff] %v6483
        %7094 = vst [vmem:[%s174 + $0x100] sm:$0xff] %v6489
        %7095 = vst [vmem:[%s174 + $0x108] sm:$0xff] %v6495
        %7096 = vst [vmem:[%s174 + $0x110] sm:$0xff] %v6501
        %7097 = vst [vmem:[%s174 + $0x118] sm:$0xff] %v6507
        %7098 = vst [vmem:[%s174 + $0x120] sm:$0xff] %v6513
        %7099 = vst [vmem:[%s174 + $0x128] sm:$0xff] %v6519
        %7100 = vst [vmem:[%s174 + $0x130] sm:$0xff] %v6525
        %7101 = vst [vmem:[%s174 + $0x138] sm:$0xff] %v6531
        %7102 = vst [vmem:[%s174 + $0x140] sm:$0xff] %v6537
        %7103 = vst [vmem:[%s174 + $0x148] sm:$0xff] %v6543
        %7104 = vst [vmem:[%s174 + $0x150] sm:$0xff] %v6549
        %7105 = vst [vmem:[%s174 + $0x158] sm:$0xff] %v6555
        %7106 = vst [vmem:[%s174 + $0x160] sm:$0xff] %v6561
        %7107 = vst [vmem:[%s174 + $0x168] sm:$0xff] %v6567
        %7108 = vst [vmem:[%s174 + $0x170] sm:$0xff] %v6573
        %7109 = vst [vmem:[%s174 + $0x178] sm:$0xff] %v6579
        %7110 = vst [vmem:[%s174 + $0x180] sm:$0xff] %v6585
        %7111 = vst [vmem:[%s174 + $0x188] sm:$0xff] %v6591
        %7112 = vst [vmem:[%s174 + $0x190] sm:$0xff] %v6597
        %7113 = vst [vmem:[%s174 + $0x198] sm:$0xff] %v6603
        %7114 = vst [vmem:[%s174 + $0x1a0] sm:$0xff] %v6609
        %7115 = vst [vmem:[%s174 + $0x1a8] sm:$0xff] %v6615
        %7116 = vst [vmem:[%s174 + $0x1b0] sm:$0xff] %v6621
        %7117 = vst [vmem:[%s174 + $0x1b8] sm:$0xff] %v6627
        %7118 = vst [vmem:[%s174 + $0x1c0] sm:$0xff] %v6633
        %7119 = vst [vmem:[%s174 + $0x1c8] sm:$0xff] %v6639
        %7120 = vst [vmem:[%s174 + $0x1d0] sm:$0xff] %v6645
        %7121 = vst [vmem:[%s174 + $0x1d8] sm:$0xff] %v6651
        %7122 = vst [vmem:[%s174 + $0x1e0] sm:$0xff] %v6657
        %7123 = vst [vmem:[%s174 + $0x1e8] sm:$0xff] %v6663
        %7124 = vst [vmem:[%s174 + $0x1f0] sm:$0xff] %v6669
        %7125 = vst [vmem:[%s174 + $0x1f8] sm:$0xff] %v6675
        %7126 = vst [vmem:[%s174 + $0x200] sm:$0xff] %v6681
        %7127 = vst [vmem:[%s174 + $0x208] sm:$0xff] %v6687
        %7128 = vst [vmem:[%s174 + $0x210] sm:$0xff] %v6693
        %7129 = vst [vmem:[%s174 + $0x218] sm:$0xff] %v6699
        %7130 = vst [vmem:[%s174 + $0x220] sm:$0xff] %v6705
        %7131 = vst [vmem:[%s174 + $0x228] sm:$0xff] %v6711
        %7132 = vst [vmem:[%s174 + $0x230] sm:$0xff] %v6717
        %7133 = vst [vmem:[%s174 + $0x238] sm:$0xff] %v6723
        %7134 = vst [vmem:[%s174 + $0x240] sm:$0xff] %v6729
        %7135 = vst [vmem:[%s174 + $0x248] sm:$0xff] %v6735
        %7136 = vst [vmem:[%s174 + $0x250] sm:$0xff] %v6741
        %7137 = vst [vmem:[%s174 + $0x258] sm:$0xff] %v6747
        %7138 = vst [vmem:[%s174 + $0x260] sm:$0xff] %v6753
        %7139 = vst [vmem:[%s174 + $0x268] sm:$0xff] %v6759
        %7140 = vst [vmem:[%s174 + $0x270] sm:$0xff] %v6765
        %7141 = vst [vmem:[%s174 + $0x278] sm:$0xff] %v6771
        %7142 = vst [vmem:[%s174 + $0x280] sm:$0xff] %v6777
        %7143 = vst [vmem:[%s174 + $0x288] sm:$0xff] %v6783
        %7144 = vst [vmem:[%s174 + $0x290] sm:$0xff] %v6789
        %7145 = vst [vmem:[%s174 + $0x298] sm:$0xff] %v6795
        %7146 = vst [vmem:[%s174 + $0x2a0] sm:$0xff] %v6801
        %7147 = vst [vmem:[%s174 + $0x2a8] sm:$0xff] %v6807
        %7148 = vst [vmem:[%s174 + $0x2b0] sm:$0xff] %v6813
        %7149 = vst [vmem:[%s174 + $0x2b8] sm:$0xff] %v6819
        %7150 = vst [vmem:[%s174 + $0x2c0] sm:$0xff] %v6825
        %7151 = vst [vmem:[%s174 + $0x2c8] sm:$0xff] %v6831
        %7152 = vst [vmem:[%s174 + $0x2d0] sm:$0xff] %v6837
        %7153 = vst [vmem:[%s174 + $0x2d8] sm:$0xff] %v6843
        %7154 = vst [vmem:[%s174 + $0x2e0] sm:$0xff] %v6849
        %7155 = vst [vmem:[%s174 + $0x2e8] sm:$0xff] %v6855
        %7156 = vst [vmem:[%s174 + $0x2f0] sm:$0xff] %v6861
        %7157 = vst [vmem:[%s174 + $0x2f8] sm:$0xff] %v6867
        %7158 = vst [vmem:[%s174 + $0x300] sm:$0xff] %v6873
        %7159 = vst [vmem:[%s174 + $0x308] sm:$0xff] %v6879
        %7160 = vst [vmem:[%s174 + $0x310] sm:$0xff] %v6885
        %7161 = vst [vmem:[%s174 + $0x318] sm:$0xff] %v6891
        %7162 = vst [vmem:[%s174 + $0x320] sm:$0xff] %v6897
        %7163 = vst [vmem:[%s174 + $0x328] sm:$0xff] %v6903
        %7164 = vst [vmem:[%s174 + $0x330] sm:$0xff] %v6909
        %7165 = vst [vmem:[%s174 + $0x338] sm:$0xff] %v6915
        %7166 = vst [vmem:[%s174 + $0x340] sm:$0xff] %v6921
        %7167 = vst [vmem:[%s174 + $0x348] sm:$0xff] %v6927
        %7168 = vst [vmem:[%s174 + $0x350] sm:$0xff] %v6933
        %7169 = vst [vmem:[%s174 + $0x358] sm:$0xff] %v6939
        %7170 = vst [vmem:[%s174 + $0x360] sm:$0xff] %v6945
        %7171 = vst [vmem:[%s174 + $0x368] sm:$0xff] %v6951
        %7172 = vst [vmem:[%s174 + $0x370] sm:$0xff] %v6957
        %7173 = vst [vmem:[%s174 + $0x378] sm:$0xff] %v6963
        %7174 = vst [vmem:[%s174 + $0x380] sm:$0xff] %v6969
        %7175 = vst [vmem:[%s174 + $0x388] sm:$0xff] %v6975
        %7176 = vst [vmem:[%s174 + $0x390] sm:$0xff] %v6981
        %7177 = vst [vmem:[%s174 + $0x398] sm:$0xff] %v6987
        %7178 = vst [vmem:[%s174 + $0x3a0] sm:$0xff] %v6993
        %7179 = vst [vmem:[%s174 + $0x3a8] sm:$0xff] %v6999
        %7180 = vst [vmem:[%s174 + $0x3b0] sm:$0xff] %v7005
        %7181 = vst [vmem:[%s174 + $0x3b8] sm:$0xff] %v7011
        %7182 = vst [vmem:[%s174 + $0x3c0] sm:$0xff] %v7017
        %7183 = vst [vmem:[%s174 + $0x3c8] sm:$0xff] %v7023
        %7184 = vst [vmem:[%s174 + $0x3d0] sm:$0xff] %v7029
        %7185 = vst [vmem:[%s174 + $0x3d8] sm:$0xff] %v7035
        %7186 = vst [vmem:[%s174 + $0x3e0] sm:$0xff] %v7041
        %7187 = vst [vmem:[%s174 + $0x3e8] sm:$0xff] %v7047
        %7188 = vst [vmem:[%s174 + $0x3f0] sm:$0xff] %v7053
        %7189 = vst [vmem:[%s174 + $0x3f8] sm:$0xff] %v7059
        %s7190 = sand.u32 %s75, 1
        %s7191 = scalar_lea.sflag [#allocation4], %s7190
        %s7192 = sand.u32 %s75, 1
        %s7193 = smul.addr %s7192, 1024
        %s7194 = scalar_lea.vmem [#allocation7], %s7193
        // Predicated region
        $region37: #{tpu_custom_call.1} parent=27 // pred_check
          %p7195 = pneg %p85
        $region38: #{tpu_custom_call.1} parent=27 // pred_check_branch
          %7197 = sbr.rel (%p7195) target = $region40
        $region39: #{tpu_custom_call.1} parent=27 // pred_region
          %s7198 = smul.u32 128, %s20
          %s7200 = ssub.s32 16384, 16384
          %7201 = vsyncadd %s7191, %s7200
          %s7202 = smul.addr %s7198, 128
          %s7203 = scalar_lea.hbm %s2, %s7202
          %s7204 = sshll.u32 %s7194, 4
          %s7205 = int_to_ptr.vmem [resolvable:$true] %s7204
          %7210 = dma.vmem_to_hbm [thread:$0]  %s7205, 16384, %s7203, %s7191, 128, 128, 8
        $region40: #{tpu_custom_call.1} parent=27 // pred_fallthru
          _
      $region28: #{tpu_custom_call.1} parent=5 // pred_fallthru
        _
      %p7211 = scmp.le.s32.totalorder 2, %s15
      // Predicated region
      $region41: #{tpu_custom_call.1} parent=5 // pred_check
        %p7212 = pneg %p7211
      $region42: #{tpu_custom_call.1} parent=5 // pred_check_branch
        %7214 = sbr.rel (%p7212) target = $region44
      $region43: #{tpu_custom_call.1} parent=5 // pred_region
        %s7215 = ssub.s32 %s15, 2
        // Predicated region
        $region45: #{tpu_custom_call.1} parent=43 // pred_check
          %p7216 = pneg %p91
        $region46: #{tpu_custom_call.1} parent=43 // pred_check_branch
          %7218 = sbr.rel (%p7216) target = $region48
        $region47: #{tpu_custom_call.1} parent=43 // pred_region
          %s7219 = sand.u32 %s76, 1
          %s7220 = scalar_lea.sflag [#allocation4], %s7219
          %s7221 = sand.u32 %s76, 1
          %s7222 = smul.addr %s7221, 1024
          %s7223 = scalar_lea.vmem [#allocation7], %s7222
          %7224 = dma.done %s7220, 16384
        $region48: #{tpu_custom_call.1} parent=43 // pred_fallthru
          _
      $region44: #{tpu_custom_call.1} parent=5 // pred_fallthru
        _
    $region6: #{tpu_custom_call.1} parent=1 // loop_footer
      %s19 = sadd.s32 1, %s15
    $region7: #{tpu_custom_call.1} parent=1 // loop_footer_branch
      %14 = sbr.rel target = $region3
    $region8: #{tpu_custom_call.1} parent=1 // loop_exit
      _
    %7225 = vsyncpa [#allocation3], 1
    %s7226 = scalar_lea.sflag [#allocation3], 1
    %7227 = vsyncpa %s7226, 1
    %7228 = vsyncpa [#allocation6], 1
    %7229 = vsyncpa [#allocation4], 1
    %s7230 = scalar_lea.sflag [#allocation4], 1
    %7231 = vsyncpa %s7230, 1

</llo_original>
